<compile_context>
chip_gen: v7x
topology: tpu7x:2x2x1
jax: 0.10.0
libtpu: 0.0.40
codegen_flags: <defaults>
</compile_context>

<pallas_src>
import functools

import numpy as np
import jax
import jax.numpy as jnp
from jax.experimental import pallas as pl
from jax.experimental.pallas import tpu as pltpu

_NCLS = 10
_NPAD = 128        # logits padded to a lane-dense 128-wide block


# ---------------------------------------------------------------------------
# Fused forward kernel: B_TILE images per grid step, everything stays in VMEM.
# Row layout: stacked slabs with per-image row stride 14; rows past the valid
# range of a layer are "garbage" rows that are never read by valid outputs.
# ---------------------------------------------------------------------------
def _fused_cnn_kernel(x_ref, m1_ref, b1_ref, m2_ref, b2_ref, m3_ref, b3_ref,
                      se_ref, so_ref, wfc_ref, bfc_ref,
                      out_ref, p1_ref, a2_ref):
    f32, bf16 = jnp.float32, jnp.bfloat16
    R = x_ref.shape[0]            # B_TILE * 14 stacked rows
    B = out_ref.shape[0]          # B_TILE

    def mm(a, b):
        return jnp.dot(a.astype(bf16), b.astype(bf16), preferred_element_type=f32)

    # ---- layer1: Conv2d(1,16,k=5,pad=2) (+BN scale); the 2x2 pool window is
    #      packed into lanes, so pool1 = 4-way element-wise max, then bias+ReLU.
    x0 = x_ref[:, 0:160]          # receptive-field rows starting at 2y'
    x1 = x_ref[:, 160:320]        # receptive-field rows starting at 2y'+1
    acc = jnp.maximum(mm(x0, m1_ref[0]), mm(x0, m1_ref[1]))
    acc = jnp.maximum(acc, mm(x1, m1_ref[0]))
    acc = jnp.maximum(acc, mm(x1, m1_ref[1]))
    p1_ref[0:R, :] = jnp.maximum(acc + b1_ref[...], 0.0).astype(bf16)   # (R, 256)
    # Zero the overhang rows read by the row-shifted slices below (required so
    # no uninitialized NaN/Inf reaches the pool2 selector matmuls via 0*garbage).
    p1_ref[R:R + 8, :] = jnp.zeros((8, p1_ref.shape[1]), bf16)

    # ---- layer2: Conv2d(16,32,k=3) + BN + ReLU; in-kernel row-im2col, K=768 ----
    p1c = jnp.concatenate(
        [p1_ref[0:R, :], p1_ref[1:R + 1, :], p1_ref[2:R + 2, :]], axis=1)
    a2 = jnp.maximum(mm(p1c, m2_ref[...]) + b2_ref[...], 0.0)           # (R, 384)
    a2_ref[0:R, :] = a2.astype(bf16)
    a2_ref[R:R + 8, :] = jnp.zeros((8, a2_ref.shape[1]), bf16)

    # ---- layer3: Conv2d(32,64,k=3) + BN + ReLU, split by output-W parity;
    #      pool2 W-direction = element-wise max of the two parity slabs. ----
    a2c = jnp.concatenate(
        [a2_ref[0:R, :], a2_ref[1:R + 1, :], a2_ref[2:R + 2, :]], axis=1)
    q_even = jnp.maximum(mm(a2c, m3_ref[0]) + b3_ref[...], 0.0)         # (R, 320)
    q_odd = jnp.maximum(mm(a2c, m3_ref[1]) + b3_ref[...], 0.0)          # (R, 320)
    wq = jnp.maximum(q_even, q_odd).astype(bf16)                        # (R, 320)

    # ---- pool2 H-direction via 0/1 row selectors, then fc as one K=1600 matmul ----
    q2 = jnp.maximum(mm(se_ref[...], wq), mm(so_ref[...], wq))          # (5*B, 320)
    fc_in = jnp.concatenate([q2[h * B:(h + 1) * B, :] for h in range(5)], axis=1)
    out_ref[...] = bfc_ref[...] + mm(fc_in, wfc_ref[...])               # (B, 128)


# ---------------------------------------------------------------------------
# pallas_call wrapper
# ---------------------------------------------------------------------------
def _const_spec(arr):
    nd = arr.ndim
    return pl.BlockSpec(arr.shape, lambda g, _nd=nd: (0,) * _nd)


def _fused_forward(xcat, pk, b_tile):
    rows = b_tile * 14
    nblk = xcat.shape[0] // rows
    weights = (pk["m1"], pk["b1"], pk["m2"], pk["b2"], pk["m3"], pk["b3"],
               pk["se"], pk["so"], pk["wfc"], pk["bfc"])
    return pl.pallas_call(
        _fused_cnn_kernel,
        out_shape=jax.ShapeDtypeStruct((nblk * b_tile, _NPAD), jnp.float32),
        grid=(nblk,),
        in_specs=[pl.BlockSpec((rows, 320), lambda g: (g, 0))]
                 + [_const_spec(w) for w in weights],
        out_specs=pl.BlockSpec((b_tile, _NPAD), lambda g: (g, 0)),
        scratch_shapes=[
            pltpu.VMEM((rows + 8, 256), jnp.bfloat16),   # pool1 slab (+overhang)
            pltpu.VMEM((rows + 8, 384), jnp.bfloat16),   # conv2 slab (+overhang)
        ],
        compiler_params=pltpu.CompilerParams(
            dimension_semantics=("parallel",),
            vmem_limit_bytes=32 * 1024 * 1024,
        ),
    )(xcat, *weights)


def _im2col_pairs(x_nchw):
    """(B,1,28,28) f32 -> (B*14, 320) bf16 height-im2col of H row PAIRS:
    row b*14+y', lane p*160 + i*32 + x  =  padded_x[b, 2*y'+p+i, x]."""
    b = x_nchw.shape[0]
    xp = jnp.pad(x_nchw[:, 0].astype(jnp.float32), ((0, 0), (2, 2), (2, 2)))
    xc = jnp.concatenate([xp[:, i:i + 28, :] for i in range(5)], axis=2)  # (B,28,160)
    return xc.reshape(b, 14, 320).reshape(b * 14, 320).astype(jnp.bfloat16)


@functools.partial(jax.jit, static_argnames=("b_tile",))
def cnn_fmnist_forward(x_nchw, packed, b_tile=8):
    """x_nchw: (B, 1, 28, 28) float32 -> logits (B, 10).  BN in eval mode."""
    assert b_tile % 8 == 0
    batch = x_nchw.shape[0]
    pad = (-batch) % b_tile
    if pad:
        x_nchw = jnp.pad(x_nchw, ((0, pad), (0, 0), (0, 0), (0, 0)))
    xcat = _im2col_pairs(x_nchw)
    out = _fused_forward(xcat, packed, b_tile)
    return out[:batch, :_NCLS]


# ---------------------------------------------------------------------------
# Host-side parameter packing: fold BN, build banded conv slabs & selectors.
# ---------------------------------------------------------------------------
def prepare_params(p, b_tile=8, eps=1e-5):
    def npf(a):
        return np.asarray(a, np.float32)

    def bn_fold(conv_b, bn):
        gamma, beta, mean, var = (npf(t) for t in bn)
        s = gamma / np.sqrt(var + eps)
        return s, (npf(conv_b) - mean) * s + beta

    s1, bb1 = bn_fold(p["b1"], p["bn1"])
    s2, bb2 = bn_fold(p["b2"], p["bn2"])
    s3, bb3 = bn_fold(p["b3"], p["bn3"])
    w1s = npf(p["w1"]) * s1[:, None, None, None]          # (16, 1, 5, 5)
    w2s = npf(p["w2"]) * s2[:, None, None, None]          # (32, 16, 3, 3)
    w3s = npf(p["w3"]) * s3[:, None, None, None]          # (64, 32, 3, 3)
    wfc, bfc = npf(p["wfc"]), npf(p["bfc"])                # (10, 1600), (10,)

    # conv1: height-im2col weights (K = 5*32 = 160), one slab per output-W
    # parity; output lanes (w' in [0,16), co) -- w' >= 14 columns stay zero.
    m1 = np.zeros((2, 5, 32, 16, 16), np.float32)          # (par, i, x, w', co)
    for par in range(2):
        for wp in range(14):
            for i in range(5):
                for j in range(5):
                    m1[par, i, 2 * wp + par + j, wp, :] = w1s[:, 0, i, j]
    m1 = m1.reshape(2, 160, 256)

    # conv2: banded weights, K concatenated over the 3 kernel-row offsets.
    # input lanes (w1 in [0,16), ci); output lanes (w2 in [0,12), c2).
    m2 = np.zeros((3, 16, 16, 12, 32), np.float32)         # (i, w1, ci, w2, c2)
    for i in range(3):
        for wo in range(12):
            for j in range(3):
                m2[i, wo + j, :, wo, :] = w2s[:, :, i, j].T
    m2 = m2.reshape(3 * 256, 384)

    # conv3: banded weights, K-concat over 3 row offsets, one slab per output-W
    # parity; input lanes (w2, c2); output lanes (w3' in [0,5), c3).
    m3 = np.zeros((2, 3, 12, 32, 5, 64), np.float32)       # (par, i, w2, c2, w3', c3)
    for par in range(2):
        for wp in range(5):
            for i in range(3):
                for j in range(3):
                    m3[par, i, 2 * wp + par + j, :, wp, :] = w3s[:, :, i, j].T
    m3 = m3.reshape(2, 3 * 384, 320)

    # pool2 H-direction 0/1 row selectors; output rows ordered (h', image).
    rows = b_tile * 14
    se = np.zeros((5 * b_tile, rows), np.float32)
    so = np.zeros((5 * b_tile, rows), np.float32)
    for h in range(5):
        for b in range(b_tile):
            se[h * b_tile + b, b * 14 + 2 * h] = 1.0
            so[h * b_tile + b, b * 14 + 2 * h + 1] = 1.0

    # fc: PyTorch flatten order is (c3, h, w3'); kernel fc-input lanes are
    # (h, w3', c3); classes padded 10 -> 128 for a lane-dense output block.
    wfc_k = np.zeros((5, 5, 64, _NPAD), np.float32)        # (h, w3', c3, o)
    for h in range(5):
        for wp in range(5):
            wfc_k[h, wp, :, :_NCLS] = wfc[:, np.arange(64) * 25 + h * 5 + wp].T
    wfc_k = wfc_k.reshape(1600, _NPAD)

    b1f = np.zeros((1, 256), np.float32)
    b1f[0, :224] = np.tile(bb1, 14)                        # w' >= 14 pad cols stay 0
    b2f = np.tile(bb2, 12).reshape(1, 384)
    b3f = np.tile(bb3, 5).reshape(1, 320)
    bfcf = np.zeros((1, _NPAD), np.float32)
    bfcf[0, :_NCLS] = bfc

    bf16 = jnp.bfloat16
    return {
        "m1": jnp.asarray(m1, bf16), "b1": jnp.asarray(b1f),
        "m2": jnp.asarray(m2, bf16), "b2": jnp.asarray(b2f),
        "m3": jnp.asarray(m3, bf16), "b3": jnp.asarray(b3f),
        "se": jnp.asarray(se, bf16), "so": jnp.asarray(so, bf16),
        "wfc": jnp.asarray(wfc_k, bf16), "bfc": jnp.asarray(bfcf),
    }


# ---------------------------------------------------------------------------
# Pure-JAX reference (eval-mode module semantics) and deterministic init.
# ---------------------------------------------------------------------------
def reference_forward(x, p, eps=1e-5):
    def conv_bn_relu(x, w, b, bn, padding):
        y = jax.lax.conv_general_dilated(
            x, w, (1, 1), padding, dimension_numbers=("NCHW", "OIHW", "NCHW"))
        y = y + b[None, :, None, None]
        gamma, beta, mean, var = bn
        y = (y - mean[None, :, None, None]) * (
            gamma[None, :, None, None]
            / jnp.sqrt(var[None, :, None, None] + eps)) + beta[None, :, None, None]
        return jnp.maximum(y, 0.0)

    def maxpool2(x):
        b, c, h, w = x.shape
        return x.reshape(b, c, h // 2, 2, w // 2, 2).max(axis=(3, 5))

    y = conv_bn_relu(x, p["w1"], p["b1"], p["bn1"], [(2, 2), (2, 2)])
    y = maxpool2(y)
    y = conv_bn_relu(y, p["w2"], p["b2"], p["bn2"], [(0, 0), (0, 0)])
    y = conv_bn_relu(y, p["w3"], p["b3"], p["bn3"], [(0, 0), (0, 0)])
    y = maxpool2(y)
    y = y.reshape(y.shape[0], -1)
    return y @ p["wfc"].T + p["bfc"]


def init_params(key):
    ks = jax.random.split(key, 11)
    f32 = jnp.float32

    def conv_init(k, shape, fan_in):
        return jax.random.normal(k, shape, f32) * (1.0 / jnp.sqrt(fan_in))

    def bn_init(k, c):
        kg, kb, km, kv = jax.random.split(k, 4)
        return (jnp.abs(jax.random.normal(kg, (c,), f32)) * 0.1 + 1.0,   # gamma
                jax.random.normal(kb, (c,), f32) * 0.05,                 # beta
                jax.random.normal(km, (c,), f32) * 0.05,                 # running_mean
                jnp.abs(jax.random.normal(kv, (c,), f32)) * 0.1 + 1.0)   # running_var

    p = {}
    p["w1"] = conv_init(ks[0], (16, 1, 5, 5), 1 * 5 * 5)
    p["b1"] = jax.random.normal(ks[1], (16,), f32) * 0.05
    p["bn1"] = bn_init(ks[2], 16)
    p["w2"] = conv_init(ks[3], (32, 16, 3, 3), 16 * 3 * 3)
    p["b2"] = jax.random.normal(ks[4], (32,), f32) * 0.05
    p["bn2"] = bn_init(ks[5], 32)
    p["w3"] = conv_init(ks[6], (64, 32, 3, 3), 32 * 3 * 3)
    p["b3"] = jax.random.normal(ks[7], (64,), f32) * 0.05
    p["bn3"] = bn_init(ks[8], 64)
    p["wfc"] = conv_init(ks[9], (10, 5 * 5 * 64), 5 * 5 * 64)
    p["bfc"] = jax.random.normal(ks[10], (10,), f32) * 0.05
    return p


if __name__ == "__main__":
    key = jax.random.PRNGKey(0)
    k_x, k_p = jax.random.split(key)
    # FMNIST-shaped input (28x28x1 is implied by fc = Linear(5*5*64, 10)).
    # batch=16, B_TILE=8 -> grid=(2,) so both v7x TensorCores get work.
    x = jax.random.normal(k_x, (16, 1, 28, 28), jnp.float32)
    params = init_params(k_p)
    packed = prepare_params(params, b_tile=8)       # one-time host-side fold/pack

    logits = cnn_fmnist_forward(x, packed, b_tile=8)
    logits = jax.block_until_ready(logits)
    assert logits.shape == (16, 10) and logits.dtype == jnp.float32
    assert bool(jnp.all(jnp.isfinite(logits)))

    ref = reference_forward(x, params)
    err = float(jnp.max(jnp.abs(logits - ref)))
    assert err < 0.25, f"max |kernel - reference| = {err}"   # bf16 matmul tolerance
    print("KERNEL_OK")
</pallas_src>

<mosaic_0001>
module attributes {stable_mosaic.version = 11 : i64} {
  func.func @_fused_cnn_kernel(%arg0: i32, %arg1: memref<112x320xbf16, #tpu.memory_space<vmem>>, %arg2: memref<2x160x256xbf16, #tpu.memory_space<vmem>>, %arg3: memref<1x256xf32, #tpu.memory_space<vmem>>, %arg4: memref<768x384xbf16, #tpu.memory_space<vmem>>, %arg5: memref<1x384xf32, #tpu.memory_space<vmem>>, %arg6: memref<2x1152x320xbf16, #tpu.memory_space<vmem>>, %arg7: memref<1x320xf32, #tpu.memory_space<vmem>>, %arg8: memref<40x112xbf16, #tpu.memory_space<vmem>>, %arg9: memref<40x112xbf16, #tpu.memory_space<vmem>>, %arg10: memref<1600x128xbf16, #tpu.memory_space<vmem>>, %arg11: memref<1x128xf32, #tpu.memory_space<vmem>>, %arg12: memref<8x128xf32, #tpu.memory_space<vmem>>, %arg13: memref<120x256xbf16, #tpu.memory_space<vmem>>, %arg14: memref<120x384xbf16, #tpu.memory_space<vmem>>) attributes {dimension_semantics = [#tpu.dimension_semantics<parallel>], iteration_bounds = array<i64: 2>, scalar_prefetch = 0 : i64, scratch_operands = 2 : i64, tpu.core_type = #tpu.core_type<tc>, window_params = [{transform_indices = @transform_0, window_bounds = array<i64: 112, 320>}, {pipeline_mode = #tpu.pipeline_mode<synchronous>, transform_indices = @transform_1, window_bounds = array<i64: 2, 160, 256>}, {pipeline_mode = #tpu.pipeline_mode<synchronous>, transform_indices = @transform_2, window_bounds = array<i64: 1, 256>}, {pipeline_mode = #tpu.pipeline_mode<synchronous>, transform_indices = @transform_3, window_bounds = array<i64: 768, 384>}, {pipeline_mode = #tpu.pipeline_mode<synchronous>, transform_indices = @transform_4, window_bounds = array<i64: 1, 384>}, {pipeline_mode = #tpu.pipeline_mode<synchronous>, transform_indices = @transform_5, window_bounds = array<i64: 2, 1152, 320>}, {pipeline_mode = #tpu.pipeline_mode<synchronous>, transform_indices = @transform_6, window_bounds = array<i64: 1, 320>}, {pipeline_mode = #tpu.pipeline_mode<synchronous>, transform_indices = @transform_7, window_bounds = array<i64: 40, 112>}, {pipeline_mode = #tpu.pipeline_mode<synchronous>, transform_indices = @transform_8, window_bounds = array<i64: 40, 112>}, {pipeline_mode = #tpu.pipeline_mode<synchronous>, transform_indices = @transform_9, window_bounds = array<i64: 1600, 128>}, {pipeline_mode = #tpu.pipeline_mode<synchronous>, transform_indices = @transform_10, window_bounds = array<i64: 1, 128>}, {transform_indices = @transform_11, window_bounds = array<i64: 8, 128>}]} {
    %c0 = arith.constant 0 : index
    %c0_0 = arith.constant 0 : index
    %0 = vector.load %arg1[%c0, %c0_0] : memref<112x320xbf16, #tpu.memory_space<vmem>>, vector<112x160xbf16>
    %c0_1 = arith.constant 0 : index
    %c160 = arith.constant 160 : index
    %1 = vector.load %arg1[%c0_1, %c160] : memref<112x320xbf16, #tpu.memory_space<vmem>>, vector<112x160xbf16>
    %c0_2 = arith.constant 0 : index
    %c0_3 = arith.constant 0 : index
    %c0_4 = arith.constant 0 : index
    %2 = vector.load %arg2[%c0_2, %c0_3, %c0_4] : memref<2x160x256xbf16, #tpu.memory_space<vmem>>, vector<1x160x256xbf16>
    %3 = vector.shape_cast %2 : vector<1x160x256xbf16> to vector<160x256xbf16>
    %cst = arith.constant dense<0.000000e+00> : vector<112x256xf32>
    %4 = tpu.matmul %0, %3, %cst {dimension_numbers = #tpu.dot_dimension_numbers<[1], [0], [0], [1], [0, 0, 1, 1], [], []>} : vector<112x160xbf16>, vector<160x256xbf16>, vector<112x256xf32> -> vector<112x256xf32>
    %c1 = arith.constant 1 : index
    %c0_5 = arith.constant 0 : index
    %c0_6 = arith.constant 0 : index
    %5 = vector.load %arg2[%c1, %c0_5, %c0_6] : memref<2x160x256xbf16, #tpu.memory_space<vmem>>, vector<1x160x256xbf16>
    %6 = vector.shape_cast %5 : vector<1x160x256xbf16> to vector<160x256xbf16>
    %cst_7 = arith.constant dense<0.000000e+00> : vector<112x256xf32>
    %7 = tpu.matmul %0, %6, %cst_7 {dimension_numbers = #tpu.dot_dimension_numbers<[1], [0], [0], [1], [0, 0, 1, 1], [], []>} : vector<112x160xbf16>, vector<160x256xbf16>, vector<112x256xf32> -> vector<112x256xf32>
    %8 = arith.maximumf %4, %7 : vector<112x256xf32>
    %c0_8 = arith.constant 0 : index
    %c0_9 = arith.constant 0 : index
    %c0_10 = arith.constant 0 : index
    %9 = vector.load %arg2[%c0_8, %c0_9, %c0_10] : memref<2x160x256xbf16, #tpu.memory_space<vmem>>, vector<1x160x256xbf16>
    %10 = vector.shape_cast %9 : vector<1x160x256xbf16> to vector<160x256xbf16>
    %cst_11 = arith.constant dense<0.000000e+00> : vector<112x256xf32>
    %11 = tpu.matmul %1, %10, %cst_11 {dimension_numbers = #tpu.dot_dimension_numbers<[1], [0], [0], [1], [0, 0, 1, 1], [], []>} : vector<112x160xbf16>, vector<160x256xbf16>, vector<112x256xf32> -> vector<112x256xf32>
    %12 = arith.maximumf %8, %11 : vector<112x256xf32>
    %c1_12 = arith.constant 1 : index
    %c0_13 = arith.constant 0 : index
    %c0_14 = arith.constant 0 : index
    %13 = vector.load %arg2[%c1_12, %c0_13, %c0_14] : memref<2x160x256xbf16, #tpu.memory_space<vmem>>, vector<1x160x256xbf16>
    %14 = vector.shape_cast %13 : vector<1x160x256xbf16> to vector<160x256xbf16>
    %cst_15 = arith.constant dense<0.000000e+00> : vector<112x256xf32>
    %15 = tpu.matmul %1, %14, %cst_15 {dimension_numbers = #tpu.dot_dimension_numbers<[1], [0], [0], [1], [0, 0, 1, 1], [], []>} : vector<112x160xbf16>, vector<160x256xbf16>, vector<112x256xf32> -> vector<112x256xf32>
    %16 = arith.maximumf %12, %15 : vector<112x256xf32>
    %c0_16 = arith.constant 0 : index
    %c0_17 = arith.constant 0 : index
    %17 = vector.load %arg3[%c0_16, %c0_17] : memref<1x256xf32, #tpu.memory_space<vmem>>, vector<1x256xf32>
    %18 = vector.broadcast %17 : vector<1x256xf32> to vector<112x256xf32>
    %19 = arith.addf %16, %18 : vector<112x256xf32>
    %cst_18 = arith.constant 0.000000e+00 : f32
    %20 = vector.broadcast %cst_18 : f32 to vector<112x256xf32>
    %21 = arith.maximumf %19, %20 : vector<112x256xf32>
    %22 = arith.truncf %21 : vector<112x256xf32> to vector<112x256xbf16>
    %c0_19 = arith.constant 0 : index
    %c0_20 = arith.constant 0 : index
    %23 = vector.load %arg13[%c0_19, %c0_20] : memref<120x256xbf16, #tpu.memory_space<vmem>>, vector<112x256xbf16>
    tpu.vector_store %arg13[%c0_19, %c0_20], %22 {strides = array<i32>} : memref<120x256xbf16, #tpu.memory_space<vmem>>, vector<112x256xbf16>,
    %cst_21 = arith.constant 0.000000e+00 : bf16
    %24 = vector.broadcast %cst_21 : bf16 to vector<8x256xbf16>
    %c112 = arith.constant 112 : index
    %c0_22 = arith.constant 0 : index
    %25 = vector.load %arg13[%c112, %c0_22] : memref<120x256xbf16, #tpu.memory_space<vmem>>, vector<8x256xbf16>
    tpu.vector_store %arg13[%c112, %c0_22], %24 {strides = array<i32>} : memref<120x256xbf16, #tpu.memory_space<vmem>>, vector<8x256xbf16>,
    %c0_23 = arith.constant 0 : index
    %c0_24 = arith.constant 0 : index
    %26 = vector.load %arg13[%c0_23, %c0_24] : memref<120x256xbf16, #tpu.memory_space<vmem>>, vector<112x256xbf16>
    %c1_25 = arith.constant 1 : index
    %c0_26 = arith.constant 0 : index
    %27 = vector.load %arg13[%c1_25, %c0_26] : memref<120x256xbf16, #tpu.memory_space<vmem>>, vector<112x256xbf16>
    %c2 = arith.constant 2 : index
    %c0_27 = arith.constant 0 : index
    %28 = vector.load %arg13[%c2, %c0_27] : memref<120x256xbf16, #tpu.memory_space<vmem>>, vector<112x256xbf16>
    %29 = tpu.concatenate %26, %27, %28 in 1 : vector<112x256xbf16>, vector<112x256xbf16>, vector<112x256xbf16> -> vector<112x768xbf16>
    %c0_28 = arith.constant 0 : index
    %c0_29 = arith.constant 0 : index
    %30 = vector.load %arg4[%c0_28, %c0_29] : memref<768x384xbf16, #tpu.memory_space<vmem>>, vector<768x384xbf16>
    %cst_30 = arith.constant dense<0.000000e+00> : vector<112x384xf32>
    %31 = tpu.matmul %29, %30, %cst_30 {dimension_numbers = #tpu.dot_dimension_numbers<[1], [0], [0], [1], [0, 0, 1, 1], [], []>} : vector<112x768xbf16>, vector<768x384xbf16>, vector<112x384xf32> -> vector<112x384xf32>
    %c0_31 = arith.constant 0 : index
    %c0_32 = arith.constant 0 : index
    %32 = vector.load %arg5[%c0_31, %c0_32] : memref<1x384xf32, #tpu.memory_space<vmem>>, vector<1x384xf32>
    %33 = vector.broadcast %32 : vector<1x384xf32> to vector<112x384xf32>
    %34 = arith.addf %31, %33 : vector<112x384xf32>
    %cst_33 = arith.constant 0.000000e+00 : f32
    %35 = vector.broadcast %cst_33 : f32 to vector<112x384xf32>
    %36 = arith.maximumf %34, %35 : vector<112x384xf32>
    %37 = arith.truncf %36 : vector<112x384xf32> to vector<112x384xbf16>
    %c0_34 = arith.constant 0 : index
    %c0_35 = arith.constant 0 : index
    %38 = vector.load %arg14[%c0_34, %c0_35] : memref<120x384xbf16, #tpu.memory_space<vmem>>, vector<112x384xbf16>
    tpu.vector_store %arg14[%c0_34, %c0_35], %37 {strides = array<i32>} : memref<120x384xbf16, #tpu.memory_space<vmem>>, vector<112x384xbf16>,
    %cst_36 = arith.constant 0.000000e+00 : bf16
    %39 = vector.broadcast %cst_36 : bf16 to vector<8x384xbf16>
    %c112_37 = arith.constant 112 : index
    %c0_38 = arith.constant 0 : index
    %40 = vector.load %arg14[%c112_37, %c0_38] : memref<120x384xbf16, #tpu.memory_space<vmem>>, vector<8x384xbf16>
    tpu.vector_store %arg14[%c112_37, %c0_38], %39 {strides = array<i32>} : memref<120x384xbf16, #tpu.memory_space<vmem>>, vector<8x384xbf16>,
    %c0_39 = arith.constant 0 : index
    %c0_40 = arith.constant 0 : index
    %41 = vector.load %arg14[%c0_39, %c0_40] : memref<120x384xbf16, #tpu.memory_space<vmem>>, vector<112x384xbf16>
    %c1_41 = arith.constant 1 : index
    %c0_42 = arith.constant 0 : index
    %42 = vector.load %arg14[%c1_41, %c0_42] : memref<120x384xbf16, #tpu.memory_space<vmem>>, vector<112x384xbf16>
    %c2_43 = arith.constant 2 : index
    %c0_44 = arith.constant 0 : index
    %43 = vector.load %arg14[%c2_43, %c0_44] : memref<120x384xbf16, #tpu.memory_space<vmem>>, vector<112x384xbf16>
    %44 = tpu.concatenate %41, %42, %43 in 1 : vector<112x384xbf16>, vector<112x384xbf16>, vector<112x384xbf16> -> vector<112x1152xbf16>
    %c0_45 = arith.constant 0 : index
    %c0_46 = arith.constant 0 : index
    %c0_47 = arith.constant 0 : index
    %45 = vector.load %arg6[%c0_45, %c0_46, %c0_47] : memref<2x1152x320xbf16, #tpu.memory_space<vmem>>, vector<1x1152x320xbf16>
    %46 = vector.shape_cast %45 : vector<1x1152x320xbf16> to vector<1152x320xbf16>
    %cst_48 = arith.constant dense<0.000000e+00> : vector<112x320xf32>
    %47 = tpu.matmul %44, %46, %cst_48 {dimension_numbers = #tpu.dot_dimension_numbers<[1], [0], [0], [1], [0, 0, 1, 1], [], []>} : vector<112x1152xbf16>, vector<1152x320xbf16>, vector<112x320xf32> -> vector<112x320xf32>
    %c0_49 = arith.constant 0 : index
    %c0_50 = arith.constant 0 : index
    %48 = vector.load %arg7[%c0_49, %c0_50] : memref<1x320xf32, #tpu.memory_space<vmem>>, vector<1x320xf32>
    %49 = vector.broadcast %48 : vector<1x320xf32> to vector<112x320xf32>
    %50 = arith.addf %47, %49 : vector<112x320xf32>
    %cst_51 = arith.constant 0.000000e+00 : f32
    %51 = vector.broadcast %cst_51 : f32 to vector<112x320xf32>
    %52 = arith.maximumf %50, %51 : vector<112x320xf32>
    %c1_52 = arith.constant 1 : index
    %c0_53 = arith.constant 0 : index
    %c0_54 = arith.constant 0 : index
    %53 = vector.load %arg6[%c1_52, %c0_53, %c0_54] : memref<2x1152x320xbf16, #tpu.memory_space<vmem>>, vector<1x1152x320xbf16>
    %54 = vector.shape_cast %53 : vector<1x1152x320xbf16> to vector<1152x320xbf16>
    %cst_55 = arith.constant dense<0.000000e+00> : vector<112x320xf32>
    %55 = tpu.matmul %44, %54, %cst_55 {dimension_numbers = #tpu.dot_dimension_numbers<[1], [0], [0], [1], [0, 0, 1, 1], [], []>} : vector<112x1152xbf16>, vector<1152x320xbf16>, vector<112x320xf32> -> vector<112x320xf32>
    %c0_56 = arith.constant 0 : index
    %c0_57 = arith.constant 0 : index
    %56 = vector.load %arg7[%c0_56, %c0_57] : memref<1x320xf32, #tpu.memory_space<vmem>>, vector<1x320xf32>
    %57 = vector.broadcast %56 : vector<1x320xf32> to vector<112x320xf32>
    %58 = arith.addf %55, %57 : vector<112x320xf32>
    %cst_58 = arith.constant 0.000000e+00 : f32
    %59 = vector.broadcast %cst_58 : f32 to vector<112x320xf32>
    %60 = arith.maximumf %58, %59 : vector<112x320xf32>
    %61 = arith.maximumf %52, %60 : vector<112x320xf32>
    %62 = arith.truncf %61 : vector<112x320xf32> to vector<112x320xbf16>
    %c0_59 = arith.constant 0 : index
    %c0_60 = arith.constant 0 : index
    %63 = vector.load %arg8[%c0_59, %c0_60] : memref<40x112xbf16, #tpu.memory_space<vmem>>, vector<40x112xbf16>
    %cst_61 = arith.constant dense<0.000000e+00> : vector<40x320xf32>
    %64 = tpu.matmul %63, %62, %cst_61 {dimension_numbers = #tpu.dot_dimension_numbers<[1], [0], [0], [1], [0, 0, 1, 1], [], []>} : vector<40x112xbf16>, vector<112x320xbf16>, vector<40x320xf32> -> vector<40x320xf32>
    %c0_62 = arith.constant 0 : index
    %c0_63 = arith.constant 0 : index
    %65 = vector.load %arg9[%c0_62, %c0_63] : memref<40x112xbf16, #tpu.memory_space<vmem>>, vector<40x112xbf16>
    %cst_64 = arith.constant dense<0.000000e+00> : vector<40x320xf32>
    %66 = tpu.matmul %65, %62, %cst_64 {dimension_numbers = #tpu.dot_dimension_numbers<[1], [0], [0], [1], [0, 0, 1, 1], [], []>} : vector<40x112xbf16>, vector<112x320xbf16>, vector<40x320xf32> -> vector<40x320xf32>
    %67 = arith.maximumf %64, %66 : vector<40x320xf32>
    %68 = vector.extract_strided_slice %67 {offsets = [0, 0], sizes = [8, 320], strides = [1, 1]} : vector<40x320xf32> to vector<8x320xf32>
    %69 = vector.extract_strided_slice %67 {offsets = [8, 0], sizes = [8, 320], strides = [1, 1]} : vector<40x320xf32> to vector<8x320xf32>
    %70 = vector.extract_strided_slice %67 {offsets = [16, 0], sizes = [8, 320], strides = [1, 1]} : vector<40x320xf32> to vector<8x320xf32>
    %71 = vector.extract_strided_slice %67 {offsets = [24, 0], sizes = [8, 320], strides = [1, 1]} : vector<40x320xf32> to vector<8x320xf32>
    %72 = vector.extract_strided_slice %67 {offsets = [32, 0], sizes = [8, 320], strides = [1, 1]} : vector<40x320xf32> to vector<8x320xf32>
    %73 = tpu.concatenate %68, %69, %70, %71, %72 in 1 : vector<8x320xf32>, vector<8x320xf32>, vector<8x320xf32>, vector<8x320xf32>, vector<8x320xf32> -> vector<8x1600xf32>
    %c0_65 = arith.constant 0 : index
    %c0_66 = arith.constant 0 : index
    %74 = vector.load %arg11[%c0_65, %c0_66] : memref<1x128xf32, #tpu.memory_space<vmem>>, vector<1x128xf32>
    %c0_67 = arith.constant 0 : index
    %c0_68 = arith.constant 0 : index
    %75 = vector.load %arg10[%c0_67, %c0_68] : memref<1600x128xbf16, #tpu.memory_space<vmem>>, vector<1600x128xbf16>
    %76 = arith.truncf %73 : vector<8x1600xf32> to vector<8x1600xbf16>
    %cst_69 = arith.constant dense<0.000000e+00> : vector<8x128xf32>
    %77 = tpu.matmul %76, %75, %cst_69 {dimension_numbers = #tpu.dot_dimension_numbers<[1], [0], [0], [1], [0, 0, 1, 1], [], []>} : vector<8x1600xbf16>, vector<1600x128xbf16>, vector<8x128xf32> -> vector<8x128xf32>
    %78 = vector.broadcast %74 : vector<1x128xf32> to vector<8x128xf32>
    %79 = arith.addf %78, %77 : vector<8x128xf32>
    %c0_70 = arith.constant 0 : index
    %c0_71 = arith.constant 0 : index
    %80 = vector.load %arg12[%c0_70, %c0_71] : memref<8x128xf32, #tpu.memory_space<vmem>>, vector<8x128xf32>
    tpu.vector_store %arg12[%c0_70, %c0_71], %79 {strides = array<i32>} : memref<8x128xf32, #tpu.memory_space<vmem>>, vector<8x128xf32>,
    return
  }
  func.func @transform_0(%arg0: i32) -> (i32, i32) {
    %c0_i32 = arith.constant 0 : i32
    %c0_i32_0 = arith.constant 0 : i32
    return %arg0, %c0_i32 : i32, i32
  }
  func.func @transform_1(%arg0: i32) -> (i32, i32, i32) {
    %c0_i32 = arith.constant 0 : i32
    %c0_i32_0 = arith.constant 0 : i32
    %c0_i32_1 = arith.constant 0 : i32
    %c0_i32_2 = arith.constant 0 : i32
    return %c0_i32, %c0_i32_0, %c0_i32_1 : i32, i32, i32
  }
  func.func @transform_2(%arg0: i32) -> (i32, i32) {
    %c0_i32 = arith.constant 0 : i32
    %c0_i32_0 = arith.constant 0 : i32
    %c0_i32_1 = arith.constant 0 : i32
    return %c0_i32, %c0_i32_0 : i32, i32
  }
  func.func @transform_3(%arg0: i32) -> (i32, i32) {
    %c0_i32 = arith.constant 0 : i32
    %c0_i32_0 = arith.constant 0 : i32
    %c0_i32_1 = arith.constant 0 : i32
    return %c0_i32, %c0_i32_0 : i32, i32
  }
  func.func @transform_4(%arg0: i32) -> (i32, i32) {
    %c0_i32 = arith.constant 0 : i32
    %c0_i32_0 = arith.constant 0 : i32
    %c0_i32_1 = arith.constant 0 : i32
    return %c0_i32, %c0_i32_0 : i32, i32
  }
  func.func @transform_5(%arg0: i32) -> (i32, i32, i32) {
    %c0_i32 = arith.constant 0 : i32
    %c0_i32_0 = arith.constant 0 : i32
    %c0_i32_1 = arith.constant 0 : i32
    %c0_i32_2 = arith.constant 0 : i32
    return %c0_i32, %c0_i32_0, %c0_i32_1 : i32, i32, i32
  }
  func.func @transform_6(%arg0: i32) -> (i32, i32) {
    %c0_i32 = arith.constant 0 : i32
    %c0_i32_0 = arith.constant 0 : i32
    %c0_i32_1 = arith.constant 0 : i32
    return %c0_i32, %c0_i32_0 : i32, i32
  }
  func.func @transform_7(%arg0: i32) -> (i32, i32) {
    %c0_i32 = arith.constant 0 : i32
    %c0_i32_0 = arith.constant 0 : i32
    %c0_i32_1 = arith.constant 0 : i32
    return %c0_i32, %c0_i32_0 : i32, i32
  }
  func.func @transform_8(%arg0: i32) -> (i32, i32) {
    %c0_i32 = arith.constant 0 : i32
    %c0_i32_0 = arith.constant 0 : i32
    %c0_i32_1 = arith.constant 0 : i32
    return %c0_i32, %c0_i32_0 : i32, i32
  }
  func.func @transform_9(%arg0: i32) -> (i32, i32) {
    %c0_i32 = arith.constant 0 : i32
    %c0_i32_0 = arith.constant 0 : i32
    %c0_i32_1 = arith.constant 0 : i32
    return %c0_i32, %c0_i32_0 : i32, i32
  }
  func.func @transform_10(%arg0: i32) -> (i32, i32) {
    %c0_i32 = arith.constant 0 : i32
    %c0_i32_0 = arith.constant 0 : i32
    %c0_i32_1 = arith.constant 0 : i32
    return %c0_i32, %c0_i32_0 : i32, i32
  }
  func.func @transform_11(%arg0: i32) -> (i32, i32) {
    %c0_i32 = arith.constant 0 : i32
    %c0_i32_0 = arith.constant 0 : i32
    return %arg0, %c0_i32 : i32, i32
  }
}

</mosaic_0001>

<llo_original>
// kernel: cnn_fmnist_forward.1
$region0: #{cnn_fmnist_forward.1}
  #allocation0 [shape = 'u32[]', space=smem, size = 0x4, offset = 0x4, fixed_abs, tag = 'smem constant byte address 0x4 - core index']
  #allocation1 [shape = 'u32[144,128]{1,0:T(1,128)}', space=vmem, size = 0x12000, scoped, tag = 'internal scratch']
  #allocation2 [shape = 'bf16[120,256]{1,0:T(8,128)(2,1)}', space=vmem, size = 0xf000, scoped, tag = 'scratch operand']
  #allocation3 [shape = 'bf16[120,384]{1,0:T(8,128)(2,1)}', space=vmem, size = 0x16800, scoped, tag = 'scratch operand']
  %s0 = inlined_call_operand.vmem [shape: bf16[224,320], index: 0, kind: input, shape index: {}]
  %s1 = inlined_call_operand.vmem [shape: bf16[2,160,256], index: 1, kind: input, shape index: {}]
  %s2 = inlined_call_operand.vmem [shape: f32[1,256], index: 2, kind: input, shape index: {}]
  %s3 = inlined_call_operand.vmem [shape: bf16[768,384], index: 3, kind: input, shape index: {}]
  %s4 = inlined_call_operand.vmem [shape: f32[1,384], index: 4, kind: input, shape index: {}]
  %s5 = inlined_call_operand.vmem [shape: bf16[2,1152,320], index: 5, kind: input, shape index: {}]
  %s6 = inlined_call_operand.vmem [shape: f32[1,320], index: 6, kind: input, shape index: {}]
  %s7 = inlined_call_operand.vmem [shape: bf16[40,112], index: 7, kind: input, shape index: {}]
  %s8 = inlined_call_operand.vmem [shape: bf16[40,112], index: 8, kind: input, shape index: {}]
  %s9 = inlined_call_operand.vmem [shape: bf16[1600,128], index: 9, kind: input, shape index: {}]
  %s10 = inlined_call_operand.vmem [shape: f32[1,128], index: 10, kind: input, shape index: {}]
  %s11 = inlined_call_operand.hbm [shape: f32[16,128], index: 11, kind: output, shape index: {}]
  %s12 = sld [smem:[#allocation0]]
  $region77: #{cnn_fmnist_forward.1} parent=0
    _
  %s14 = ssub.s32 1, %s12
  %s15 = scalar_select 0, %s14, %s12
  $region1: #{cnn_fmnist_forward.1} parent=0
    #allocation4 [shape = 'u8[8192]{0}', space=vmem, size = 0x2000, scoped, tag = 'output window, operand 0']
    #allocation5 [shape = 's32[2]{0}', space=sflag, size = 0x8, scoped, tag = 'scoped memory for cnn_fmnist_forward.1']
    %16 = vsyncpa [#allocation5], 0
    %s17 = scalar_lea.sflag [#allocation5], 1
    %18 = vsyncpa %s17, 0
    loop: start=0, step=1, limit=4
    $region2: #{cnn_fmnist_forward.1} parent=1 // loop_pre_header
      _
    $region3: #{cnn_fmnist_forward.1} parent=1 // loop_header
      %s20 = sphi 0, %s24
      %p21 = scmp.ge.s32.totalorder %s20, 4
      %s30 = sphi 0, %s32
      %s33 = sphi 0, %s30
      %s34 = sphi 0, %s33
      %s50 = sphi 0, %s34
      %s54 = sphi 0, %s54
      %s56 = sphi 0, %s54
      %s57 = sphi 0, %s56
      %s71 = sphi 0, %s57
      %s75 = sphi 0, %s75
      %s77 = sphi 0, %s75
      %s78 = sphi 0, %s77
      %s92 = sphi 0, %s78
      %s96 = sphi 0, %s96
      %s98 = sphi 0, %s96
      %s99 = sphi 0, %s98
      %s113 = sphi 0, %s99
      %s117 = sphi 0, %s117
      %s119 = sphi 0, %s117
      %s120 = sphi 0, %s119
      %s134 = sphi 0, %s120
      %s138 = sphi 0, %s138
      %s140 = sphi 0, %s138
      %s141 = sphi 0, %s140
      %s155 = sphi 0, %s141
      %s159 = sphi 0, %s159
      %s161 = sphi 0, %s159
      %s162 = sphi 0, %s161
      %s176 = sphi 0, %s162
      %s180 = sphi 0, %s180
      %s182 = sphi 0, %s180
      %s183 = sphi 0, %s182
      %s197 = sphi 0, %s183
      %s201 = sphi 0, %s201
      %s203 = sphi 0, %s201
      %s204 = sphi 0, %s203
      %s218 = sphi 0, %s204
      %s222 = sphi 0, %s222
      %s224 = sphi 0, %s222
      %s225 = sphi 0, %s224
      %s239 = sphi 0, %s225
      %s243 = sphi 0, %s243
      %s245 = sphi 0, %s243
      %s246 = sphi 0, %s245
      %s260 = sphi 0, %s246
      %s266 = sphi 0, %s268
      %s269 = sphi 0, %s266
      %s270 = sphi 0, %s269
      %s286 = sphi 0, %s270
    $region4: #{cnn_fmnist_forward.1} parent=1 // loop_header_branch
      %23 = sbr.rel (%p21) target = $region8
    $region5: #{cnn_fmnist_forward.1} parent=1 // loop_body
      %s25 = ssub.s32 %s20, 1
      %s26 = ssub.s32 %s20, 2
      %s27 = sadd.s32 %s20, 1
      %s28 = ssub.s32 %s20, %s27
      %p29 = scmp.eq.s32.totalorder %s28, 0
      %s31 = sadd.s32 %s30, 1
      %s32 = scalar_select %p29, %s30, %s31
      %p35 = pneg %p29
      %p36 = scmp.eq.s32.totalorder %s20, 1
      %p37 = por %p35, %p36
      %p38 = scmp.ne.s32.totalorder %s30, %s33
      %p39 = scmp.eq.s32.totalorder %s20, 0
      %p40 = por %p38, %p39
      %p41 = scmp.ne.s32.totalorder %s30, %s33
      %p42 = scmp.eq.s32.totalorder %s25, 1
      %p43 = por %p41, %p42
      %p44 = scmp.ne.s32.totalorder %s33, %s34
      %p45 = scmp.eq.s32.totalorder %s25, 0
      %p46 = por %p44, %p45
      %p47 = scmp.ne.s32.totalorder %s33, %s34
      %p48 = scmp.eq.s32.totalorder %s26, 1
      %p49 = por %p47, %p48
      %p51 = scmp.ne.s32.totalorder %s34, %s50
      %p52 = scmp.eq.s32.totalorder %s26, 0
      %p53 = por %p51, %p52
      %s55 = sadd.s32 %s54, 1
      %p58 = scmp.eq.s32.totalorder %s20, 1
      %p59 = scmp.ne.s32.totalorder %s54, %s56
      %p60 = scmp.eq.s32.totalorder %s20, 0
      %p61 = por %p59, %p60
      %p62 = scmp.ne.s32.totalorder %s54, %s56
      %p63 = scmp.eq.s32.totalorder %s25, 1
      %p64 = por %p62, %p63
      %p65 = scmp.ne.s32.totalorder %s56, %s57
      %p66 = scmp.eq.s32.totalorder %s25, 0
      %p67 = por %p65, %p66
      %p68 = scmp.ne.s32.totalorder %s56, %s57
      %p69 = scmp.eq.s32.totalorder %s26, 1
      %p70 = por %p68, %p69
      %p72 = scmp.ne.s32.totalorder %s57, %s71
      %p73 = scmp.eq.s32.totalorder %s26, 0
      %p74 = por %p72, %p73
      %s76 = sadd.s32 %s75, 1
      %p79 = scmp.eq.s32.totalorder %s20, 1
      %p80 = scmp.ne.s32.totalorder %s75, %s77
      %p81 = scmp.eq.s32.totalorder %s20, 0
      %p82 = por %p80, %p81
      %p83 = scmp.ne.s32.totalorder %s75, %s77
      %p84 = scmp.eq.s32.totalorder %s25, 1
      %p85 = por %p83, %p84
      %p86 = scmp.ne.s32.totalorder %s77, %s78
      %p87 = scmp.eq.s32.totalorder %s25, 0
      %p88 = por %p86, %p87
      %p89 = scmp.ne.s32.totalorder %s77, %s78
      %p90 = scmp.eq.s32.totalorder %s26, 1
      %p91 = por %p89, %p90
      %p93 = scmp.ne.s32.totalorder %s78, %s92
      %p94 = scmp.eq.s32.totalorder %s26, 0
      %p95 = por %p93, %p94
      %s97 = sadd.s32 %s96, 1
      %p100 = scmp.eq.s32.totalorder %s20, 1
      %p101 = scmp.ne.s32.totalorder %s96, %s98
      %p102 = scmp.eq.s32.totalorder %s20, 0
      %p103 = por %p101, %p102
      %p104 = scmp.ne.s32.totalorder %s96, %s98
      %p105 = scmp.eq.s32.totalorder %s25, 1
      %p106 = por %p104, %p105
      %p107 = scmp.ne.s32.totalorder %s98, %s99
      %p108 = scmp.eq.s32.totalorder %s25, 0
      %p109 = por %p107, %p108
      %p110 = scmp.ne.s32.totalorder %s98, %s99
      %p111 = scmp.eq.s32.totalorder %s26, 1
      %p112 = por %p110, %p111
      %p114 = scmp.ne.s32.totalorder %s99, %s113
      %p115 = scmp.eq.s32.totalorder %s26, 0
      %p116 = por %p114, %p115
      %s118 = sadd.s32 %s117, 1
      %p121 = scmp.eq.s32.totalorder %s20, 1
      %p122 = scmp.ne.s32.totalorder %s117, %s119
      %p123 = scmp.eq.s32.totalorder %s20, 0
      %p124 = por %p122, %p123
      %p125 = scmp.ne.s32.totalorder %s117, %s119
      %p126 = scmp.eq.s32.totalorder %s25, 1
      %p127 = por %p125, %p126
      %p128 = scmp.ne.s32.totalorder %s119, %s120
      %p129 = scmp.eq.s32.totalorder %s25, 0
      %p130 = por %p128, %p129
      %p131 = scmp.ne.s32.totalorder %s119, %s120
      %p132 = scmp.eq.s32.totalorder %s26, 1
      %p133 = por %p131, %p132
      %p135 = scmp.ne.s32.totalorder %s120, %s134
      %p136 = scmp.eq.s32.totalorder %s26, 0
      %p137 = por %p135, %p136
      %s139 = sadd.s32 %s138, 1
      %p142 = scmp.eq.s32.totalorder %s20, 1
      %p143 = scmp.ne.s32.totalorder %s138, %s140
      %p144 = scmp.eq.s32.totalorder %s20, 0
      %p145 = por %p143, %p144
      %p146 = scmp.ne.s32.totalorder %s138, %s140
      %p147 = scmp.eq.s32.totalorder %s25, 1
      %p148 = por %p146, %p147
      %p149 = scmp.ne.s32.totalorder %s140, %s141
      %p150 = scmp.eq.s32.totalorder %s25, 0
      %p151 = por %p149, %p150
      %p152 = scmp.ne.s32.totalorder %s140, %s141
      %p153 = scmp.eq.s32.totalorder %s26, 1
      %p154 = por %p152, %p153
      %p156 = scmp.ne.s32.totalorder %s141, %s155
      %p157 = scmp.eq.s32.totalorder %s26, 0
      %p158 = por %p156, %p157
      %s160 = sadd.s32 %s159, 1
      %p163 = scmp.eq.s32.totalorder %s20, 1
      %p164 = scmp.ne.s32.totalorder %s159, %s161
      %p165 = scmp.eq.s32.totalorder %s20, 0
      %p166 = por %p164, %p165
      %p167 = scmp.ne.s32.totalorder %s159, %s161
      %p168 = scmp.eq.s32.totalorder %s25, 1
      %p169 = por %p167, %p168
      %p170 = scmp.ne.s32.totalorder %s161, %s162
      %p171 = scmp.eq.s32.totalorder %s25, 0
      %p172 = por %p170, %p171
      %p173 = scmp.ne.s32.totalorder %s161, %s162
      %p174 = scmp.eq.s32.totalorder %s26, 1
      %p175 = por %p173, %p174
      %p177 = scmp.ne.s32.totalorder %s162, %s176
      %p178 = scmp.eq.s32.totalorder %s26, 0
      %p179 = por %p177, %p178
      %s181 = sadd.s32 %s180, 1
      %p184 = scmp.eq.s32.totalorder %s20, 1
      %p185 = scmp.ne.s32.totalorder %s180, %s182
      %p186 = scmp.eq.s32.totalorder %s20, 0
      %p187 = por %p185, %p186
      %p188 = scmp.ne.s32.totalorder %s180, %s182
      %p189 = scmp.eq.s32.totalorder %s25, 1
      %p190 = por %p188, %p189
      %p191 = scmp.ne.s32.totalorder %s182, %s183
      %p192 = scmp.eq.s32.totalorder %s25, 0
      %p193 = por %p191, %p192
      %p194 = scmp.ne.s32.totalorder %s182, %s183
      %p195 = scmp.eq.s32.totalorder %s26, 1
      %p196 = por %p194, %p195
      %p198 = scmp.ne.s32.totalorder %s183, %s197
      %p199 = scmp.eq.s32.totalorder %s26, 0
      %p200 = por %p198, %p199
      %s202 = sadd.s32 %s201, 1
      %p205 = scmp.eq.s32.totalorder %s20, 1
      %p206 = scmp.ne.s32.totalorder %s201, %s203
      %p207 = scmp.eq.s32.totalorder %s20, 0
      %p208 = por %p206, %p207
      %p209 = scmp.ne.s32.totalorder %s201, %s203
      %p210 = scmp.eq.s32.totalorder %s25, 1
      %p211 = por %p209, %p210
      %p212 = scmp.ne.s32.totalorder %s203, %s204
      %p213 = scmp.eq.s32.totalorder %s25, 0
      %p214 = por %p212, %p213
      %p215 = scmp.ne.s32.totalorder %s203, %s204
      %p216 = scmp.eq.s32.totalorder %s26, 1
      %p217 = por %p215, %p216
      %p219 = scmp.ne.s32.totalorder %s204, %s218
      %p220 = scmp.eq.s32.totalorder %s26, 0
      %p221 = por %p219, %p220
      %s223 = sadd.s32 %s222, 1
      %p226 = scmp.eq.s32.totalorder %s20, 1
      %p227 = scmp.ne.s32.totalorder %s222, %s224
      %p228 = scmp.eq.s32.totalorder %s20, 0
      %p229 = por %p227, %p228
      %p230 = scmp.ne.s32.totalorder %s222, %s224
      %p231 = scmp.eq.s32.totalorder %s25, 1
      %p232 = por %p230, %p231
      %p233 = scmp.ne.s32.totalorder %s224, %s225
      %p234 = scmp.eq.s32.totalorder %s25, 0
      %p235 = por %p233, %p234
      %p236 = scmp.ne.s32.totalorder %s224, %s225
      %p237 = scmp.eq.s32.totalorder %s26, 1
      %p238 = por %p236, %p237
      %p240 = scmp.ne.s32.totalorder %s225, %s239
      %p241 = scmp.eq.s32.totalorder %s26, 0
      %p242 = por %p240, %p241
      %s244 = sadd.s32 %s243, 1
      %p247 = scmp.eq.s32.totalorder %s20, 1
      %p248 = scmp.ne.s32.totalorder %s243, %s245
      %p249 = scmp.eq.s32.totalorder %s20, 0
      %p250 = por %p248, %p249
      %p251 = scmp.ne.s32.totalorder %s243, %s245
      %p252 = scmp.eq.s32.totalorder %s25, 1
      %p253 = por %p251, %p252
      %p254 = scmp.ne.s32.totalorder %s245, %s246
      %p255 = scmp.eq.s32.totalorder %s25, 0
      %p256 = por %p254, %p255
      %p257 = scmp.ne.s32.totalorder %s245, %s246
      %p258 = scmp.eq.s32.totalorder %s26, 1
      %p259 = por %p257, %p258
      %p261 = scmp.ne.s32.totalorder %s246, %s260
      %p262 = scmp.eq.s32.totalorder %s26, 0
      %p263 = por %p261, %p262
      %s264 = ssub.s32 %s20, %s27
      %p265 = scmp.eq.s32.totalorder %s264, 0
      %s267 = sadd.s32 %s266, 1
      %s268 = scalar_select %p265, %s266, %s267
      %p271 = pneg %p265
      %p272 = scmp.eq.s32.totalorder %s20, 1
      %p273 = por %p271, %p272
      %p274 = scmp.ne.s32.totalorder %s266, %s269
      %p275 = scmp.eq.s32.totalorder %s20, 0
      %p276 = por %p274, %p275
      %p277 = scmp.ne.s32.totalorder %s266, %s269
      %p278 = scmp.eq.s32.totalorder %s25, 1
      %p279 = por %p277, %p278
      %p280 = scmp.ne.s32.totalorder %s269, %s270
      %p281 = scmp.eq.s32.totalorder %s25, 0
      %p282 = por %p280, %p281
      %p283 = scmp.ne.s32.totalorder %s269, %s270
      %p284 = scmp.eq.s32.totalorder %s26, 1
      %p285 = por %p283, %p284
      %p287 = scmp.ne.s32.totalorder %s270, %s286
      %p288 = scmp.eq.s32.totalorder %s26, 0
      %p289 = por %p287, %p288
      %p290 = scmp.le.s32.totalorder 1, %s20
      %p291 = scmp.lt.s32.totalorder %s20, 3
      %p292 = pnand %p290, %p291
      %p293 = pneg %p292
      // Predicated region
      $region9: #{cnn_fmnist_forward.1} parent=5 // pred_check
        _
      $region10: #{cnn_fmnist_forward.1} parent=5 // pred_check_branch
        %295 = sbr.rel (%p292) target = $region12
      $region11: #{cnn_fmnist_forward.1} parent=5 // pred_region
        %s296 = ssub.s32 %s20, 1
        // Predicated region
        $region13: #{cnn_fmnist_forward.1} parent=11 // pred_check
          %p297 = pneg %p67
        $region14: #{cnn_fmnist_forward.1} parent=11 // pred_check_branch
          %299 = sbr.rel (%p297) target = $region16
        $region15: #{cnn_fmnist_forward.1} parent=11 // pred_region
          _
        $region16: #{cnn_fmnist_forward.1} parent=11 // pred_fallthru
          _
        // Predicated region
        $region17: #{cnn_fmnist_forward.1} parent=11 // pred_check
          %p300 = pneg %p88
        $region18: #{cnn_fmnist_forward.1} parent=11 // pred_check_branch
          %302 = sbr.rel (%p300) target = $region20
        $region19: #{cnn_fmnist_forward.1} parent=11 // pred_region
          _
        $region20: #{cnn_fmnist_forward.1} parent=11 // pred_fallthru
          _
        // Predicated region
        $region21: #{cnn_fmnist_forward.1} parent=11 // pred_check
          %p303 = pneg %p109
        $region22: #{cnn_fmnist_forward.1} parent=11 // pred_check_branch
          %305 = sbr.rel (%p303) target = $region24
        $region23: #{cnn_fmnist_forward.1} parent=11 // pred_region
          _
        $region24: #{cnn_fmnist_forward.1} parent=11 // pred_fallthru
          _
        // Predicated region
        $region25: #{cnn_fmnist_forward.1} parent=11 // pred_check
          %p306 = pneg %p130
        $region26: #{cnn_fmnist_forward.1} parent=11 // pred_check_branch
          %308 = sbr.rel (%p306) target = $region28
        $region27: #{cnn_fmnist_forward.1} parent=11 // pred_region
          _
        $region28: #{cnn_fmnist_forward.1} parent=11 // pred_fallthru
          _
        // Predicated region
        $region29: #{cnn_fmnist_forward.1} parent=11 // pred_check
          %p309 = pneg %p151
        $region30: #{cnn_fmnist_forward.1} parent=11 // pred_check_branch
          %311 = sbr.rel (%p309) target = $region32
        $region31: #{cnn_fmnist_forward.1} parent=11 // pred_region
          _
        $region32: #{cnn_fmnist_forward.1} parent=11 // pred_fallthru
          _
        // Predicated region
        $region33: #{cnn_fmnist_forward.1} parent=11 // pred_check
          %p312 = pneg %p172
        $region34: #{cnn_fmnist_forward.1} parent=11 // pred_check_branch
          %314 = sbr.rel (%p312) target = $region36
        $region35: #{cnn_fmnist_forward.1} parent=11 // pred_region
          _
        $region36: #{cnn_fmnist_forward.1} parent=11 // pred_fallthru
          _
        // Predicated region
        $region37: #{cnn_fmnist_forward.1} parent=11 // pred_check
          %p315 = pneg %p193
        $region38: #{cnn_fmnist_forward.1} parent=11 // pred_check_branch
          %317 = sbr.rel (%p315) target = $region40
        $region39: #{cnn_fmnist_forward.1} parent=11 // pred_region
          _
        $region40: #{cnn_fmnist_forward.1} parent=11 // pred_fallthru
          _
        // Predicated region
        $region41: #{cnn_fmnist_forward.1} parent=11 // pred_check
          %p318 = pneg %p214
        $region42: #{cnn_fmnist_forward.1} parent=11 // pred_check_branch
          %320 = sbr.rel (%p318) target = $region44
        $region43: #{cnn_fmnist_forward.1} parent=11 // pred_region
          _
        $region44: #{cnn_fmnist_forward.1} parent=11 // pred_fallthru
          _
        // Predicated region
        $region45: #{cnn_fmnist_forward.1} parent=11 // pred_check
          %p321 = pneg %p235
        $region46: #{cnn_fmnist_forward.1} parent=11 // pred_check_branch
          %323 = sbr.rel (%p321) target = $region48
        $region47: #{cnn_fmnist_forward.1} parent=11 // pred_region
          _
        $region48: #{cnn_fmnist_forward.1} parent=11 // pred_fallthru
          _
        // Predicated region
        $region49: #{cnn_fmnist_forward.1} parent=11 // pred_check
          %p324 = pneg %p256
        $region50: #{cnn_fmnist_forward.1} parent=11 // pred_check_branch
          %326 = sbr.rel (%p324) target = $region52
        $region51: #{cnn_fmnist_forward.1} parent=11 // pred_region
          _
        $region52: #{cnn_fmnist_forward.1} parent=11 // pred_fallthru
          _
      $region12: #{cnn_fmnist_forward.1} parent=5 // pred_fallthru
        _
      %p327 = scmp.lt.s32.totalorder %s20, 2
      // Predicated region
      $region53: #{cnn_fmnist_forward.1} parent=5 // pred_check
        %p328 = pneg %p327
      $region54: #{cnn_fmnist_forward.1} parent=5 // pred_check_branch
        %330 = sbr.rel (%p328) target = $region56
      $region55: #{cnn_fmnist_forward.1} parent=5 // pred_region
        // Predicated region
        $region57: #{cnn_fmnist_forward.1} parent=55 // pred_check
          %p331 = pneg %p40
        $region58: #{cnn_fmnist_forward.1} parent=55 // pred_check_branch
          %333 = sbr.rel (%p331) target = $region60
        $region59: #{cnn_fmnist_forward.1} parent=55 // pred_region
          %s334 = smul.u32 14, %s20
          %p335 = scmp.lt.s32.totalorder %s334, 27
          %s336 = scalar_select %p335, %s334, 27
          %s337 = smul.addr %s336, 3
          %s338 = smul.addr %s337, 4
          %s339 = scalar_lea.vmem %s0, %s338
          %s340 = smul.u32 14, %s20
        $region60: #{cnn_fmnist_forward.1} parent=55 // pred_fallthru
          _
      $region56: #{cnn_fmnist_forward.1} parent=5 // pred_fallthru
        _
      %p341 = scmp.le.s32.totalorder 1, %s20
      %p342 = scmp.lt.s32.totalorder %s20, 3
      %p343 = pnand %p341, %p342
      %p344 = pneg %p343
      // Predicated region
      $region61: #{cnn_fmnist_forward.1} parent=5 // pred_check
        _
      $region62: #{cnn_fmnist_forward.1} parent=5 // pred_check_branch
        %346 = sbr.rel (%p343) target = $region64
      $region63: #{cnn_fmnist_forward.1} parent=5 // pred_region
        %s347 = ssub.s32 %s20, 1
        %s348 = smul.u32 14, %s25
        %p349 = scmp.lt.s32.totalorder %s348, 27
        %s350 = scalar_select %p349, %s348, 27
        %s351 = smul.addr %s350, 3
        %s352 = smul.addr %s351, 4
        %s353 = scalar_lea.vmem %s0, %s352
        %p354 = pneg %p46
        %p355 = pneg %p43
        %p356 = pneg %p67
        %p357 = pneg %p64
        %p358 = pneg %p88
        %p359 = pneg %p85
        %p360 = pneg %p109
        %p361 = pneg %p106
        %p362 = pneg %p130
        %p363 = pneg %p127
        %p364 = pneg %p151
        %p365 = pneg %p148
        %p366 = pneg %p172
        %p367 = pneg %p169
        %p368 = pneg %p193
        %p369 = pneg %p190
        %p370 = pneg %p214
        %p371 = pneg %p211
        %p372 = pneg %p235
        %p373 = pneg %p232
        %p374 = pneg %p256
        %p375 = pneg %p253
        %p376 = pneg %p282
        %p377 = pneg %p279
        %s378 = sand.u32 %s269, 1
        %s379 = scalar_lea.sflag [#allocation5], %s378
        %s380 = sand.u32 %s269, 1
        %s381 = smul.addr %s380, 8
        %s382 = scalar_lea.vmem [#allocation4], %s381
        %s383 = smul.u32 14, %s25
        %p384 = scmp.lt.s32.totalorder %s383, 27
        %s385 = scalar_select %p384, %s383, 27
        %s386 = smul.addr %s385, 3
        %s387 = smul.addr %s386, 4
        %s388 = scalar_lea.vmem %s0, %s387
        %s389 = smul.u32 14, %s25
        %v391 = vld [vmem:[%s388] sm:$0xff]
        %v392 = vld [vmem:[%s388 + $0xc] sm:$0xff]
        %v393 = vld [vmem:[%s388 + $0x18] sm:$0xff]
        %v394 = vld [vmem:[%s388 + $0x24] sm:$0xff]
        %v395 = vld [vmem:[%s388 + $0x30] sm:$0xff]
        %v396 = vld [vmem:[%s388 + $0x3c] sm:$0xff]
        %v397 = vld [vmem:[%s388 + $0x48] sm:$0xff]
        %v398 = vld [vmem:[%s388 + $0x54] sm:$0xff]
        %v399 = vld [vmem:[%s388 + $0x60] sm:$0xff]
        %v400 = vld [vmem:[%s388 + $0x6c] sm:$0xff]
        %v401 = vld [vmem:[%s388 + $0x78] sm:$0xff]
        %v402 = vld [vmem:[%s388 + $0x84] sm:$0xff]
        %v403 = vld [vmem:[%s388 + $0x90] sm:$0xff]
        %v404 = vld [vmem:[%s388 + $0x9c] sm:$0xff]
        %v405 = vld [vmem:[%s388 + $0x4] sm:$0xff]
        %v406 = vld [vmem:[%s388 + $0x10] sm:$0xff]
        %v407 = vld [vmem:[%s388 + $0x1c] sm:$0xff]
        %v408 = vld [vmem:[%s388 + $0x28] sm:$0xff]
        %v409 = vld [vmem:[%s388 + $0x34] sm:$0xff]
        %v410 = vld [vmem:[%s388 + $0x40] sm:$0xff]
        %v411 = vld [vmem:[%s388 + $0x4c] sm:$0xff]
        %v412 = vld [vmem:[%s388 + $0x58] sm:$0xff]
        %v413 = vld [vmem:[%s388 + $0x64] sm:$0xff]
        %v414 = vld [vmem:[%s388 + $0x70] sm:$0xff]
        %v415 = vld [vmem:[%s388 + $0x7c] sm:$0xff]
        %v416 = vld [vmem:[%s388 + $0x88] sm:$0xff]
        %v417 = vld [vmem:[%s388 + $0x94] sm:$0xff]
        %v418 = vld [vmem:[%s388 + $0xa0] sm:$0xff]
        %v419 = vld [vmem:[%s1] sm:$0xff]
        %v420 = vld [vmem:[%s1 + $0x8] sm:$0xff]
        %v421 = vld [vmem:[%s1 + $0x10] sm:$0xff]
        %v422 = vld [vmem:[%s1 + $0x18] sm:$0xff]
        %v423 = vld [vmem:[%s1 + $0x20] sm:$0xff]
        %v424 = vld [vmem:[%s1 + $0x28] sm:$0xff]
        %v425 = vld [vmem:[%s1 + $0x30] sm:$0xff]
        %v426 = vld [vmem:[%s1 + $0x38] sm:$0xff]
        %v427 = vld [vmem:[%s1 + $0x40] sm:$0xff]
        %v428 = vld [vmem:[%s1 + $0x48] sm:$0xff]
        %v429 = vld [vmem:[%s1 + $0x50] sm:$0xff]
        %v430 = vld [vmem:[%s1 + $0x58] sm:$0xff]
        %v431 = vld [vmem:[%s1 + $0x60] sm:$0xff]
        %v432 = vld [vmem:[%s1 + $0x68] sm:$0xff]
        %v433 = vld [vmem:[%s1 + $0x70] sm:$0xff]
        %v434 = vld [vmem:[%s1 + $0x78] sm:$0xff]
        %v435 = vld [vmem:[%s1 + $0x80] sm:$0xff]
        %v436 = vld [vmem:[%s1 + $0x88] sm:$0xff]
        %v437 = vld [vmem:[%s1 + $0x90] sm:$0xff]
        %v438 = vld [vmem:[%s1 + $0x98] sm:$0xff]
        %v453 = vunpack.c.l.b16 %v391
        %v454 = vunpack.c.h.b16 %v391
        %v455 = vunpack.c.l.b16 %v392
        %v456 = vunpack.c.h.b16 %v392
        %v457 = vunpack.c.l.b16 %v393
        %v458 = vunpack.c.h.b16 %v393
        %v459 = vunpack.c.l.b16 %v394
        %v460 = vunpack.c.h.b16 %v394
        %v461 = vunpack.c.l.b16 %v395
        %v462 = vunpack.c.h.b16 %v395
        %v463 = vunpack.c.l.b16 %v396
        %v464 = vunpack.c.h.b16 %v396
        %v465 = vunpack.c.l.b16 %v397
        %v466 = vunpack.c.h.b16 %v397
        %v467 = vunpack.c.l.b16 %v398
        %v468 = vunpack.c.h.b16 %v398
        %v469 = vunpack.c.l.b16 %v399
        %v470 = vunpack.c.h.b16 %v399
        %v471 = vunpack.c.l.b16 %v400
        %v472 = vunpack.c.h.b16 %v400
        %v473 = vunpack.c.l.b16 %v401
        %v474 = vunpack.c.h.b16 %v401
        %v475 = vunpack.c.l.b16 %v402
        %v476 = vunpack.c.h.b16 %v402
        %v477 = vunpack.c.l.b16 %v403
        %v478 = vunpack.c.h.b16 %v403
        %v479 = vunpack.c.l.b16 %v404
        %v480 = vunpack.c.h.b16 %v404
        %v481 = vpack.c.b16 %v455, %v453
        %v482 = vpack.c.b16 %v456, %v454
        %v483 = vpack.c.b16 %v459, %v457
        %v484 = vpack.c.b16 %v460, %v458
        %v485 = vpack.c.b16 %v463, %v461
        %v486 = vpack.c.b16 %v464, %v462
        %v487 = vpack.c.b16 %v467, %v465
        %v488 = vpack.c.b16 %v468, %v466
        %v489 = vpack.c.b16 %v471, %v469
        %v490 = vpack.c.b16 %v472, %v470
        %v491 = vpack.c.b16 %v475, %v473
        %v492 = vpack.c.b16 %v476, %v474
        %v493 = vpack.c.b16 %v479, %v477
        %v494 = vpack.c.b16 %v480, %v478
        %v522 = vunpack.c.l.b16 %v419
        %v523 = vunpack.c.h.b16 %v419
        %v524 = vunpack.c.l.b16 %v420
        %v525 = vunpack.c.h.b16 %v420
        %v526 = vunpack.c.l.b16 %v421
        %v527 = vunpack.c.h.b16 %v421
        %v528 = vunpack.c.l.b16 %v422
        %v529 = vunpack.c.h.b16 %v422
        %v530 = vunpack.c.l.b16 %v423
        %v531 = vunpack.c.h.b16 %v423
        %v532 = vunpack.c.l.b16 %v424
        %v533 = vunpack.c.h.b16 %v424
        %v534 = vunpack.c.l.b16 %v425
        %v535 = vunpack.c.h.b16 %v425
        %v536 = vunpack.c.l.b16 %v426
        %v537 = vunpack.c.h.b16 %v426
        %v538 = vunpack.c.l.b16 %v427
        %v539 = vunpack.c.h.b16 %v427
        %v540 = vunpack.c.l.b16 %v428
        %v541 = vunpack.c.h.b16 %v428
        %v542 = vunpack.c.l.b16 %v429
        %v543 = vunpack.c.h.b16 %v429
        %v544 = vunpack.c.l.b16 %v430
        %v545 = vunpack.c.h.b16 %v430
        %v546 = vunpack.c.l.b16 %v431
        %v547 = vunpack.c.h.b16 %v431
        %v548 = vunpack.c.l.b16 %v432
        %v549 = vunpack.c.h.b16 %v432
        %v550 = vunpack.c.l.b16 %v433
        %v551 = vunpack.c.h.b16 %v433
        %v552 = vunpack.c.l.b16 %v434
        %v553 = vunpack.c.h.b16 %v434
        %v554 = vunpack.c.l.b16 %v435
        %v555 = vunpack.c.h.b16 %v435
        %v556 = vunpack.c.l.b16 %v436
        %v557 = vunpack.c.h.b16 %v436
        %v558 = vunpack.c.l.b16 %v437
        %v559 = vunpack.c.h.b16 %v437
        %v560 = vunpack.c.l.b16 %v438
        %v561 = vunpack.c.h.b16 %v438
        %v562 = vpack.c.b16 %v524, %v522
        %v563 = vpack.c.b16 %v525, %v523
        %v564 = vpack.c.b16 %v528, %v526
        %v565 = vpack.c.b16 %v529, %v527
        %v566 = vpack.c.b16 %v532, %v530
        %v567 = vpack.c.b16 %v533, %v531
        %v568 = vpack.c.b16 %v536, %v534
        %v569 = vpack.c.b16 %v537, %v535
        %v570 = vpack.c.b16 %v540, %v538
        %v571 = vpack.c.b16 %v541, %v539
        %v572 = vpack.c.b16 %v544, %v542
        %v573 = vpack.c.b16 %v545, %v543
        %v574 = vpack.c.b16 %v548, %v546
        %v575 = vpack.c.b16 %v549, %v547
        %v576 = vpack.c.b16 %v552, %v550
        %v577 = vpack.c.b16 %v553, %v551
        %v578 = vpack.c.b16 %v556, %v554
        %v579 = vpack.c.b16 %v557, %v555
        %v580 = vpack.c.b16 %v560, %v558
        %v581 = vpack.c.b16 %v561, %v559
        %vm602 = vcmask 261120
        %v604 = vsel %vm602, %v482, 0
        %v607 = vsel %vm602, %v484, 0
        %v610 = vsel %vm602, %v486, 0
        %v613 = vsel %vm602, %v488, 0
        %v616 = vsel %vm602, %v490, 0
        %v619 = vsel %vm602, %v492, 0
        %v622 = vsel %vm602, %v494, 0
        %624 = vmatprep.subr.bf16.mxu0 %v563
        %625 = vmatpush1.bf16.msra.mxu0 %v562
        %626 = vmatprep.subr.bf16.mxu0 %v565
        %627 = vmatpush1.bf16.msra.mxu0 %v564
        %628 = vmatprep.subr.bf16.mxu0 %v567
        %629 = vmatpush1.bf16.msra.mxu0 %v566
        %630 = vmatprep.subr.bf16.mxu0 %v569
        %631 = vmatpush1.bf16.msra.mxu0 %v568
        %632 = vmatprep.subr.bf16.mxu0 %v571
        %633 = vmatpush1.bf16.msra.mxu0 %v570
        %634 = vmatprep.subr.bf16.mxu0 %v573
        %635 = vmatpush1.bf16.msra.mxu0 %v572
        %636 = vmatprep.subr.bf16.mxu0 %v575
        %637 = vmatpush1.bf16.msra.mxu0 %v574
        %638 = vmatprep.subr.bf16.mxu0 %v577
        %639 = vmatpush1.bf16.msra.mxu0 %v576
        %640 = vmatprep.subr.bf16.mxu0 %v579
        %641 = vmatpush1.bf16.msra.mxu0 %v578
        %642 = vmatprep.subr.bf16.mxu0 %v581
        %643 = vmatpush1.bf16.msra.mxu0 %v580
        %644 = vmatprep.subr.bf16.mxu0 0
        %645 = vmatpush1.bf16.msra.mxu0 0
        %646 = vmatprep.subr.bf16.mxu0 0
        %647 = vmatpush1.bf16.msra.mxu0 0
        %648 = vmatprep.subr.bf16.mxu0 0
        %649 = vmatpush1.bf16.msra.mxu0 0
        %650 = vmatprep.subr.bf16.mxu0 0
        %651 = vmatpush1.bf16.msra.mxu0 0
        %652 = vmatprep.subr.bf16.mxu0 0
        %653 = vmatpush1.bf16.msra.mxu0 0
        %654 = vmatprep.subr.bf16.mxu0 0
        %655 = vmatpush1.bf16.msra.mxu0 0
        %656 = vmatprep.mubr.bf16.mxu0 %v604
        %657 = vmatmul.mubr.bf16.gmra.mrb[0].mxu0 %v481
        %v658 = vpop.f32.mrb[0].mxu0
        %v659 = vadd.f32 0.0, %v658
        %v660 = vpop.f32.mrb[0].mxu0
        %v661 = vadd.f32 0.0, %v660
        %v662 = vpop.f32.mrb[0].mxu0
        %v663 = vadd.f32 0.0, %v662
        %v664 = vpop.f32.mrb[0].mxu0
        %v665 = vadd.f32 0.0, %v664
        %666 = vmatprep.mubr.bf16.mxu0 %v607
        %667 = vmatmul.mubr.bf16.gmra.mrb[0].mxu0 %v483
        %v668 = vpop.f32.mrb[0].mxu0
        %v669 = vadd.f32 0.0, %v668
        %v670 = vpop.f32.mrb[0].mxu0
        %v671 = vadd.f32 0.0, %v670
        %v672 = vpop.f32.mrb[0].mxu0
        %v673 = vadd.f32 0.0, %v672
        %v674 = vpop.f32.mrb[0].mxu0
        %v675 = vadd.f32 0.0, %v674
        %676 = vmatprep.mubr.bf16.mxu0 %v610
        %677 = vmatmul.mubr.bf16.gmra.mrb[0].mxu0 %v485
        %v678 = vpop.f32.mrb[0].mxu0
        %v679 = vadd.f32 0.0, %v678
        %v680 = vpop.f32.mrb[0].mxu0
        %v681 = vadd.f32 0.0, %v680
        %v682 = vpop.f32.mrb[0].mxu0
        %v683 = vadd.f32 0.0, %v682
        %v684 = vpop.f32.mrb[0].mxu0
        %v685 = vadd.f32 0.0, %v684
        %686 = vmatprep.mubr.bf16.mxu0 %v613
        %687 = vmatmul.mubr.bf16.gmra.mrb[0].mxu0 %v487
        %v688 = vpop.f32.mrb[0].mxu0
        %v689 = vadd.f32 0.0, %v688
        %v690 = vpop.f32.mrb[0].mxu0
        %v691 = vadd.f32 0.0, %v690
        %v692 = vpop.f32.mrb[0].mxu0
        %v693 = vadd.f32 0.0, %v692
        %v694 = vpop.f32.mrb[0].mxu0
        %v695 = vadd.f32 0.0, %v694
        %696 = vmatprep.mubr.bf16.mxu0 %v616
        %697 = vmatmul.mubr.bf16.gmra.mrb[0].mxu0 %v489
        %v698 = vpop.f32.mrb[0].mxu0
        %v699 = vadd.f32 0.0, %v698
        %v700 = vpop.f32.mrb[0].mxu0
        %v701 = vadd.f32 0.0, %v700
        %v702 = vpop.f32.mrb[0].mxu0
        %v703 = vadd.f32 0.0, %v702
        %v704 = vpop.f32.mrb[0].mxu0
        %v705 = vadd.f32 0.0, %v704
        %706 = vmatprep.mubr.bf16.mxu0 %v619
        %707 = vmatmul.mubr.bf16.gmra.mrb[0].mxu0 %v491
        %v708 = vpop.f32.mrb[0].mxu0
        %v709 = vadd.f32 0.0, %v708
        %v710 = vpop.f32.mrb[0].mxu0
        %v711 = vadd.f32 0.0, %v710
        %v712 = vpop.f32.mrb[0].mxu0
        %v713 = vadd.f32 0.0, %v712
        %v714 = vpop.f32.mrb[0].mxu0
        %v715 = vadd.f32 0.0, %v714
        %716 = vmatprep.mubr.bf16.mxu0 %v622
        %717 = vmatmul.mubr.bf16.gmra.mrb[0].mxu0 %v493
        %v718 = vpop.f32.mrb[0].mxu0
        %v719 = vadd.f32 0.0, %v718
        %v720 = vpop.f32.mrb[0].mxu0
        %v721 = vadd.f32 0.0, %v720
        %v722 = vpop.f32.mrb[0].mxu0
        %v723 = vadd.f32 0.0, %v722
        %v724 = vpop.f32.mrb[0].mxu0
        %v725 = vadd.f32 0.0, %v724
        %726 = vdwg.mxu0
        %s727 = scalar_lea.vmem %s1, 160
        %v728 = vld [vmem:[%s727] sm:$0xff]
        %v729 = vld [vmem:[%s727 + $0x8] sm:$0xff]
        %v730 = vld [vmem:[%s727 + $0x10] sm:$0xff]
        %v731 = vld [vmem:[%s727 + $0x18] sm:$0xff]
        %v732 = vld [vmem:[%s727 + $0x20] sm:$0xff]
        %v733 = vld [vmem:[%s727 + $0x28] sm:$0xff]
        %v734 = vld [vmem:[%s727 + $0x30] sm:$0xff]
        %v735 = vld [vmem:[%s727 + $0x38] sm:$0xff]
        %v736 = vld [vmem:[%s727 + $0x40] sm:$0xff]
        %v737 = vld [vmem:[%s727 + $0x48] sm:$0xff]
        %v738 = vld [vmem:[%s727 + $0x50] sm:$0xff]
        %v739 = vld [vmem:[%s727 + $0x58] sm:$0xff]
        %v740 = vld [vmem:[%s727 + $0x60] sm:$0xff]
        %v741 = vld [vmem:[%s727 + $0x68] sm:$0xff]
        %v742 = vld [vmem:[%s727 + $0x70] sm:$0xff]
        %v743 = vld [vmem:[%s727 + $0x78] sm:$0xff]
        %v744 = vld [vmem:[%s727 + $0x80] sm:$0xff]
        %v745 = vld [vmem:[%s727 + $0x88] sm:$0xff]
        %v746 = vld [vmem:[%s727 + $0x90] sm:$0xff]
        %v747 = vld [vmem:[%s727 + $0x98] sm:$0xff]
        %v768 = vunpack.c.l.b16 %v728
        %v769 = vunpack.c.h.b16 %v728
        %v770 = vunpack.c.l.b16 %v729
        %v771 = vunpack.c.h.b16 %v729
        %v772 = vunpack.c.l.b16 %v730
        %v773 = vunpack.c.h.b16 %v730
        %v774 = vunpack.c.l.b16 %v731
        %v775 = vunpack.c.h.b16 %v731
        %v776 = vunpack.c.l.b16 %v732
        %v777 = vunpack.c.h.b16 %v732
        %v778 = vunpack.c.l.b16 %v733
        %v779 = vunpack.c.h.b16 %v733
        %v780 = vunpack.c.l.b16 %v734
        %v781 = vunpack.c.h.b16 %v734
        %v782 = vunpack.c.l.b16 %v735
        %v783 = vunpack.c.h.b16 %v735
        %v784 = vunpack.c.l.b16 %v736
        %v785 = vunpack.c.h.b16 %v736
        %v786 = vunpack.c.l.b16 %v737
        %v787 = vunpack.c.h.b16 %v737
        %v788 = vunpack.c.l.b16 %v738
        %v789 = vunpack.c.h.b16 %v738
        %v790 = vunpack.c.l.b16 %v739
        %v791 = vunpack.c.h.b16 %v739
        %v792 = vunpack.c.l.b16 %v740
        %v793 = vunpack.c.h.b16 %v740
        %v794 = vunpack.c.l.b16 %v741
        %v795 = vunpack.c.h.b16 %v741
        %v796 = vunpack.c.l.b16 %v742
        %v797 = vunpack.c.h.b16 %v742
        %v798 = vunpack.c.l.b16 %v743
        %v799 = vunpack.c.h.b16 %v743
        %v800 = vunpack.c.l.b16 %v744
        %v801 = vunpack.c.h.b16 %v744
        %v802 = vunpack.c.l.b16 %v745
        %v803 = vunpack.c.h.b16 %v745
        %v804 = vunpack.c.l.b16 %v746
        %v805 = vunpack.c.h.b16 %v746
        %v806 = vunpack.c.l.b16 %v747
        %v807 = vunpack.c.h.b16 %v747
        %v808 = vpack.c.b16 %v770, %v768
        %v809 = vpack.c.b16 %v771, %v769
        %v810 = vpack.c.b16 %v774, %v772
        %v811 = vpack.c.b16 %v775, %v773
        %v812 = vpack.c.b16 %v778, %v776
        %v813 = vpack.c.b16 %v779, %v777
        %v814 = vpack.c.b16 %v782, %v780
        %v815 = vpack.c.b16 %v783, %v781
        %v816 = vpack.c.b16 %v786, %v784
        %v817 = vpack.c.b16 %v787, %v785
        %v818 = vpack.c.b16 %v790, %v788
        %v819 = vpack.c.b16 %v791, %v789
        %v820 = vpack.c.b16 %v794, %v792
        %v821 = vpack.c.b16 %v795, %v793
        %v822 = vpack.c.b16 %v798, %v796
        %v823 = vpack.c.b16 %v799, %v797
        %v824 = vpack.c.b16 %v802, %v800
        %v825 = vpack.c.b16 %v803, %v801
        %v826 = vpack.c.b16 %v806, %v804
        %v827 = vpack.c.b16 %v807, %v805
        %848 = vmatprep.subr.bf16.mxu0 %v809
        %849 = vmatpush1.bf16.msra.mxu0 %v808
        %850 = vmatprep.subr.bf16.mxu0 %v811
        %851 = vmatpush1.bf16.msra.mxu0 %v810
        %852 = vmatprep.subr.bf16.mxu0 %v813
        %853 = vmatpush1.bf16.msra.mxu0 %v812
        %854 = vmatprep.subr.bf16.mxu0 %v815
        %855 = vmatpush1.bf16.msra.mxu0 %v814
        %856 = vmatprep.subr.bf16.mxu0 %v817
        %857 = vmatpush1.bf16.msra.mxu0 %v816
        %858 = vmatprep.subr.bf16.mxu0 %v819
        %859 = vmatpush1.bf16.msra.mxu0 %v818
        %860 = vmatprep.subr.bf16.mxu0 %v821
        %861 = vmatpush1.bf16.msra.mxu0 %v820
        %862 = vmatprep.subr.bf16.mxu0 %v823
        %863 = vmatpush1.bf16.msra.mxu0 %v822
        %864 = vmatprep.subr.bf16.mxu0 %v825
        %865 = vmatpush1.bf16.msra.mxu0 %v824
        %866 = vmatprep.subr.bf16.mxu0 %v827
        %867 = vmatpush1.bf16.msra.mxu0 %v826
        %868 = vmatprep.subr.bf16.mxu0 0
        %869 = vmatpush1.bf16.msra.mxu0 0
        %870 = vmatprep.subr.bf16.mxu0 0
        %871 = vmatpush1.bf16.msra.mxu0 0
        %872 = vmatprep.subr.bf16.mxu0 0
        %873 = vmatpush1.bf16.msra.mxu0 0
        %874 = vmatprep.subr.bf16.mxu0 0
        %875 = vmatpush1.bf16.msra.mxu0 0
        %876 = vmatprep.subr.bf16.mxu0 0
        %877 = vmatpush1.bf16.msra.mxu0 0
        %878 = vmatprep.subr.bf16.mxu0 0
        %879 = vmatpush1.bf16.msra.mxu0 0
        %880 = vmatprep.mubr.bf16.mxu0 %v604
        %881 = vmatmul.mubr.bf16.gmra.mrb[0].mxu0 %v481
        %v882 = vpop.f32.mrb[0].mxu0
        %v883 = vadd.f32 0.0, %v882
        %v884 = vpop.f32.mrb[0].mxu0
        %v885 = vadd.f32 0.0, %v884
        %v886 = vpop.f32.mrb[0].mxu0
        %v887 = vadd.f32 0.0, %v886
        %v888 = vpop.f32.mrb[0].mxu0
        %v889 = vadd.f32 0.0, %v888
        %890 = vmatprep.mubr.bf16.mxu0 %v607
        %891 = vmatmul.mubr.bf16.gmra.mrb[0].mxu0 %v483
        %v892 = vpop.f32.mrb[0].mxu0
        %v893 = vadd.f32 0.0, %v892
        %v894 = vpop.f32.mrb[0].mxu0
        %v895 = vadd.f32 0.0, %v894
        %v896 = vpop.f32.mrb[0].mxu0
        %v897 = vadd.f32 0.0, %v896
        %v898 = vpop.f32.mrb[0].mxu0
        %v899 = vadd.f32 0.0, %v898
        %900 = vmatprep.mubr.bf16.mxu0 %v610
        %901 = vmatmul.mubr.bf16.gmra.mrb[0].mxu0 %v485
        %v902 = vpop.f32.mrb[0].mxu0
        %v903 = vadd.f32 0.0, %v902
        %v904 = vpop.f32.mrb[0].mxu0
        %v905 = vadd.f32 0.0, %v904
        %v906 = vpop.f32.mrb[0].mxu0
        %v907 = vadd.f32 0.0, %v906
        %v908 = vpop.f32.mrb[0].mxu0
        %v909 = vadd.f32 0.0, %v908
        %910 = vmatprep.mubr.bf16.mxu0 %v613
        %911 = vmatmul.mubr.bf16.gmra.mrb[0].mxu0 %v487
        %v912 = vpop.f32.mrb[0].mxu0
        %v913 = vadd.f32 0.0, %v912
        %v914 = vpop.f32.mrb[0].mxu0
        %v915 = vadd.f32 0.0, %v914
        %v916 = vpop.f32.mrb[0].mxu0
        %v917 = vadd.f32 0.0, %v916
        %v918 = vpop.f32.mrb[0].mxu0
        %v919 = vadd.f32 0.0, %v918
        %920 = vmatprep.mubr.bf16.mxu0 %v616
        %921 = vmatmul.mubr.bf16.gmra.mrb[0].mxu0 %v489
        %v922 = vpop.f32.mrb[0].mxu0
        %v923 = vadd.f32 0.0, %v922
        %v924 = vpop.f32.mrb[0].mxu0
        %v925 = vadd.f32 0.0, %v924
        %v926 = vpop.f32.mrb[0].mxu0
        %v927 = vadd.f32 0.0, %v926
        %v928 = vpop.f32.mrb[0].mxu0
        %v929 = vadd.f32 0.0, %v928
        %930 = vmatprep.mubr.bf16.mxu0 %v619
        %931 = vmatmul.mubr.bf16.gmra.mrb[0].mxu0 %v491
        %v932 = vpop.f32.mrb[0].mxu0
        %v933 = vadd.f32 0.0, %v932
        %v934 = vpop.f32.mrb[0].mxu0
        %v935 = vadd.f32 0.0, %v934
        %v936 = vpop.f32.mrb[0].mxu0
        %v937 = vadd.f32 0.0, %v936
        %v938 = vpop.f32.mrb[0].mxu0
        %v939 = vadd.f32 0.0, %v938
        %940 = vmatprep.mubr.bf16.mxu0 %v622
        %941 = vmatmul.mubr.bf16.gmra.mrb[0].mxu0 %v493
        %v942 = vpop.f32.mrb[0].mxu0
        %v943 = vadd.f32 0.0, %v942
        %v944 = vpop.f32.mrb[0].mxu0
        %v945 = vadd.f32 0.0, %v944
        %v946 = vpop.f32.mrb[0].mxu0
        %v947 = vadd.f32 0.0, %v946
        %v948 = vpop.f32.mrb[0].mxu0
        %v949 = vadd.f32 0.0, %v948
        %950 = vdwg.mxu0
        %v951 = vmax.f32 %v659, %v883
        %v952 = vmax.f32 %v661, %v885
        %v953 = vmax.f32 %v663, %v887
        %v954 = vmax.f32 %v665, %v889
        %v955 = vmax.f32 %v669, %v893
        %v956 = vmax.f32 %v671, %v895
        %v957 = vmax.f32 %v673, %v897
        %v958 = vmax.f32 %v675, %v899
        %v959 = vmax.f32 %v679, %v903
        %v960 = vmax.f32 %v681, %v905
        %v961 = vmax.f32 %v683, %v907
        %v962 = vmax.f32 %v685, %v909
        %v963 = vmax.f32 %v689, %v913
        %v964 = vmax.f32 %v691, %v915
        %v965 = vmax.f32 %v693, %v917
        %v966 = vmax.f32 %v695, %v919
        %v967 = vmax.f32 %v699, %v923
        %v968 = vmax.f32 %v701, %v925
        %v969 = vmax.f32 %v703, %v927
        %v970 = vmax.f32 %v705, %v929
        %v971 = vmax.f32 %v709, %v933
        %v972 = vmax.f32 %v711, %v935
        %v973 = vmax.f32 %v713, %v937
        %v974 = vmax.f32 %v715, %v939
        %v975 = vmax.f32 %v719, %v943
        %v976 = vmax.f32 %v721, %v945
        %v977 = vmax.f32 %v723, %v947
        %v978 = vmax.f32 %v725, %v949
        %v993 = vunpack.c.l.b16 %v405
        %v994 = vunpack.c.h.b16 %v405
        %v995 = vunpack.c.l.b16 %v406
        %v996 = vunpack.c.h.b16 %v406
        %v997 = vunpack.c.l.b16 %v407
        %v998 = vunpack.c.h.b16 %v407
        %v999 = vunpack.c.l.b16 %v408
        %v1000 = vunpack.c.h.b16 %v408
        %v1001 = vunpack.c.l.b16 %v409
        %v1002 = vunpack.c.h.b16 %v409
        %v1003 = vunpack.c.l.b16 %v410
        %v1004 = vunpack.c.h.b16 %v410
        %v1005 = vunpack.c.l.b16 %v411
        %v1006 = vunpack.c.h.b16 %v411
        %v1007 = vunpack.c.l.b16 %v412
        %v1008 = vunpack.c.h.b16 %v412
        %v1009 = vunpack.c.l.b16 %v413
        %v1010 = vunpack.c.h.b16 %v413
        %v1011 = vunpack.c.l.b16 %v414
        %v1012 = vunpack.c.h.b16 %v414
        %v1013 = vunpack.c.l.b16 %v415
        %v1014 = vunpack.c.h.b16 %v415
        %v1015 = vunpack.c.l.b16 %v416
        %v1016 = vunpack.c.h.b16 %v416
        %v1017 = vunpack.c.l.b16 %v417
        %v1018 = vunpack.c.h.b16 %v417
        %v1019 = vunpack.c.l.b16 %v418
        %v1020 = vunpack.c.h.b16 %v418
        %v1021 = vpack.c.b16 %v995, %v993
        %v1022 = vpack.c.b16 %v996, %v994
        %v1023 = vpack.c.b16 %v999, %v997
        %v1024 = vpack.c.b16 %v1000, %v998
        %v1025 = vpack.c.b16 %v1003, %v1001
        %v1026 = vpack.c.b16 %v1004, %v1002
        %v1027 = vpack.c.b16 %v1007, %v1005
        %v1028 = vpack.c.b16 %v1008, %v1006
        %v1029 = vpack.c.b16 %v1011, %v1009
        %v1030 = vpack.c.b16 %v1012, %v1010
        %v1031 = vpack.c.b16 %v1015, %v1013
        %v1032 = vpack.c.b16 %v1016, %v1014
        %v1033 = vpack.c.b16 %v1019, %v1017
        %v1034 = vpack.c.b16 %v1020, %v1018
        %1035 = vrot.lane.b32.xlu0 %v1021, 96
        %v1036 = vpop.permute.xlu0 %1035
        %1037 = vrot.lane.b32.xlu0 %v1022, 96
        %v1038 = vpop.permute.xlu0 %1037
        %1039 = vrot.lane.b32.xlu0 %v1023, 96
        %v1040 = vpop.permute.xlu0 %1039
        %1041 = vrot.lane.b32.xlu0 %v1024, 96
        %v1042 = vpop.permute.xlu0 %1041
        %1043 = vrot.lane.b32.xlu0 %v1025, 96
        %v1044 = vpop.permute.xlu0 %1043
        %1045 = vrot.lane.b32.xlu0 %v1026, 96
        %v1046 = vpop.permute.xlu0 %1045
        %1047 = vrot.lane.b32.xlu0 %v1027, 96
        %v1048 = vpop.permute.xlu0 %1047
        %1049 = vrot.lane.b32.xlu0 %v1028, 96
        %v1050 = vpop.permute.xlu0 %1049
        %1051 = vrot.lane.b32.xlu0 %v1029, 96
        %v1052 = vpop.permute.xlu0 %1051
        %1053 = vrot.lane.b32.xlu0 %v1030, 96
        %v1054 = vpop.permute.xlu0 %1053
        %1055 = vrot.lane.b32.xlu0 %v1031, 96
        %v1056 = vpop.permute.xlu0 %1055
        %1057 = vrot.lane.b32.xlu0 %v1032, 96
        %v1058 = vpop.permute.xlu0 %1057
        %1059 = vrot.lane.b32.xlu0 %v1033, 96
        %v1060 = vpop.permute.xlu0 %1059
        %1061 = vrot.lane.b32.xlu0 %v1034, 96
        %v1062 = vpop.permute.xlu0 %1061
        %vm1063 = vcmask 785408
        %v1064 = vsel %vm1063, %v1036, %v1038
        %v1065 = vsel %vm1063, %v1040, %v1042
        %v1066 = vsel %vm1063, %v1044, %v1046
        %v1067 = vsel %vm1063, %v1048, %v1050
        %v1068 = vsel %vm1063, %v1052, %v1054
        %v1069 = vsel %vm1063, %v1056, %v1058
        %v1070 = vsel %vm1063, %v1060, %v1062
        %v1079 = vsel %vm602, %v1038, 0
        %v1082 = vsel %vm602, %v1042, 0
        %v1085 = vsel %vm602, %v1046, 0
        %v1088 = vsel %vm602, %v1050, 0
        %v1091 = vsel %vm602, %v1054, 0
        %v1094 = vsel %vm602, %v1058, 0
        %v1097 = vsel %vm602, %v1062, 0
        %1099 = vmatprep.subr.bf16.mxu0 %v563
        %1100 = vmatpush1.bf16.msra.mxu0 %v562
        %1101 = vmatprep.subr.bf16.mxu0 %v565
        %1102 = vmatpush1.bf16.msra.mxu0 %v564
        %1103 = vmatprep.subr.bf16.mxu0 %v567
        %1104 = vmatpush1.bf16.msra.mxu0 %v566
        %1105 = vmatprep.subr.bf16.mxu0 %v569
        %1106 = vmatpush1.bf16.msra.mxu0 %v568
        %1107 = vmatprep.subr.bf16.mxu0 %v571
        %1108 = vmatpush1.bf16.msra.mxu0 %v570
        %1109 = vmatprep.subr.bf16.mxu0 %v573
        %1110 = vmatpush1.bf16.msra.mxu0 %v572
        %1111 = vmatprep.subr.bf16.mxu0 %v575
        %1112 = vmatpush1.bf16.msra.mxu0 %v574
        %1113 = vmatprep.subr.bf16.mxu0 %v577
        %1114 = vmatpush1.bf16.msra.mxu0 %v576
        %1115 = vmatprep.subr.bf16.mxu0 %v579
        %1116 = vmatpush1.bf16.msra.mxu0 %v578
        %1117 = vmatprep.subr.bf16.mxu0 %v581
        %1118 = vmatpush1.bf16.msra.mxu0 %v580
        %1119 = vmatprep.subr.bf16.mxu0 0
        %1120 = vmatpush1.bf16.msra.mxu0 0
        %1121 = vmatprep.subr.bf16.mxu0 0
        %1122 = vmatpush1.bf16.msra.mxu0 0
        %1123 = vmatprep.subr.bf16.mxu0 0
        %1124 = vmatpush1.bf16.msra.mxu0 0
        %1125 = vmatprep.subr.bf16.mxu0 0
        %1126 = vmatpush1.bf16.msra.mxu0 0
        %1127 = vmatprep.subr.bf16.mxu0 0
        %1128 = vmatpush1.bf16.msra.mxu0 0
        %1129 = vmatprep.subr.bf16.mxu0 0
        %1130 = vmatpush1.bf16.msra.mxu0 0
        %1131 = vmatprep.mubr.bf16.mxu0 %v1079
        %1132 = vmatmul.mubr.bf16.gmra.mrb[0].mxu0 %v1064
        %v1133 = vpop.f32.mrb[0].mxu0
        %v1134 = vadd.f32 0.0, %v1133
        %v1135 = vpop.f32.mrb[0].mxu0
        %v1136 = vadd.f32 0.0, %v1135
        %v1137 = vpop.f32.mrb[0].mxu0
        %v1138 = vadd.f32 0.0, %v1137
        %v1139 = vpop.f32.mrb[0].mxu0
        %v1140 = vadd.f32 0.0, %v1139
        %1141 = vmatprep.mubr.bf16.mxu0 %v1082
        %1142 = vmatmul.mubr.bf16.gmra.mrb[0].mxu0 %v1065
        %v1143 = vpop.f32.mrb[0].mxu0
        %v1144 = vadd.f32 0.0, %v1143
        %v1145 = vpop.f32.mrb[0].mxu0
        %v1146 = vadd.f32 0.0, %v1145
        %v1147 = vpop.f32.mrb[0].mxu0
        %v1148 = vadd.f32 0.0, %v1147
        %v1149 = vpop.f32.mrb[0].mxu0
        %v1150 = vadd.f32 0.0, %v1149
        %1151 = vmatprep.mubr.bf16.mxu0 %v1085
        %1152 = vmatmul.mubr.bf16.gmra.mrb[0].mxu0 %v1066
        %v1153 = vpop.f32.mrb[0].mxu0
        %v1154 = vadd.f32 0.0, %v1153
        %v1155 = vpop.f32.mrb[0].mxu0
        %v1156 = vadd.f32 0.0, %v1155
        %v1157 = vpop.f32.mrb[0].mxu0
        %v1158 = vadd.f32 0.0, %v1157
        %v1159 = vpop.f32.mrb[0].mxu0
        %v1160 = vadd.f32 0.0, %v1159
        %1161 = vmatprep.mubr.bf16.mxu0 %v1088
        %1162 = vmatmul.mubr.bf16.gmra.mrb[0].mxu0 %v1067
        %v1163 = vpop.f32.mrb[0].mxu0
        %v1164 = vadd.f32 0.0, %v1163
        %v1165 = vpop.f32.mrb[0].mxu0
        %v1166 = vadd.f32 0.0, %v1165
        %v1167 = vpop.f32.mrb[0].mxu0
        %v1168 = vadd.f32 0.0, %v1167
        %v1169 = vpop.f32.mrb[0].mxu0
        %v1170 = vadd.f32 0.0, %v1169
        %1171 = vmatprep.mubr.bf16.mxu0 %v1091
        %1172 = vmatmul.mubr.bf16.gmra.mrb[0].mxu0 %v1068
        %v1173 = vpop.f32.mrb[0].mxu0
        %v1174 = vadd.f32 0.0, %v1173
        %v1175 = vpop.f32.mrb[0].mxu0
        %v1176 = vadd.f32 0.0, %v1175
        %v1177 = vpop.f32.mrb[0].mxu0
        %v1178 = vadd.f32 0.0, %v1177
        %v1179 = vpop.f32.mrb[0].mxu0
        %v1180 = vadd.f32 0.0, %v1179
        %1181 = vmatprep.mubr.bf16.mxu0 %v1094
        %1182 = vmatmul.mubr.bf16.gmra.mrb[0].mxu0 %v1069
        %v1183 = vpop.f32.mrb[0].mxu0
        %v1184 = vadd.f32 0.0, %v1183
        %v1185 = vpop.f32.mrb[0].mxu0
        %v1186 = vadd.f32 0.0, %v1185
        %v1187 = vpop.f32.mrb[0].mxu0
        %v1188 = vadd.f32 0.0, %v1187
        %v1189 = vpop.f32.mrb[0].mxu0
        %v1190 = vadd.f32 0.0, %v1189
        %1191 = vmatprep.mubr.bf16.mxu0 %v1097
        %1192 = vmatmul.mubr.bf16.gmra.mrb[0].mxu0 %v1070
        %v1193 = vpop.f32.mrb[0].mxu0
        %v1194 = vadd.f32 0.0, %v1193
        %v1195 = vpop.f32.mrb[0].mxu0
        %v1196 = vadd.f32 0.0, %v1195
        %v1197 = vpop.f32.mrb[0].mxu0
        %v1198 = vadd.f32 0.0, %v1197
        %v1199 = vpop.f32.mrb[0].mxu0
        %v1200 = vadd.f32 0.0, %v1199
        %1201 = vdwg.mxu0
        %v1202 = vmax.f32 %v951, %v1134
        %v1203 = vmax.f32 %v952, %v1136
        %v1204 = vmax.f32 %v953, %v1138
        %v1205 = vmax.f32 %v954, %v1140
        %v1206 = vmax.f32 %v955, %v1144
        %v1207 = vmax.f32 %v956, %v1146
        %v1208 = vmax.f32 %v957, %v1148
        %v1209 = vmax.f32 %v958, %v1150
        %v1210 = vmax.f32 %v959, %v1154
        %v1211 = vmax.f32 %v960, %v1156
        %v1212 = vmax.f32 %v961, %v1158
        %v1213 = vmax.f32 %v962, %v1160
        %v1214 = vmax.f32 %v963, %v1164
        %v1215 = vmax.f32 %v964, %v1166
        %v1216 = vmax.f32 %v965, %v1168
        %v1217 = vmax.f32 %v966, %v1170
        %v1218 = vmax.f32 %v967, %v1174
        %v1219 = vmax.f32 %v968, %v1176
        %v1220 = vmax.f32 %v969, %v1178
        %v1221 = vmax.f32 %v970, %v1180
        %v1222 = vmax.f32 %v971, %v1184
        %v1223 = vmax.f32 %v972, %v1186
        %v1224 = vmax.f32 %v973, %v1188
        %v1225 = vmax.f32 %v974, %v1190
        %v1226 = vmax.f32 %v975, %v1194
        %v1227 = vmax.f32 %v976, %v1196
        %v1228 = vmax.f32 %v977, %v1198
        %v1229 = vmax.f32 %v978, %v1200
        %1230 = vmatprep.subr.bf16.mxu0 %v809
        %1231 = vmatpush1.bf16.msra.mxu0 %v808
        %1232 = vmatprep.subr.bf16.mxu0 %v811
        %1233 = vmatpush1.bf16.msra.mxu0 %v810
        %1234 = vmatprep.subr.bf16.mxu0 %v813
        %1235 = vmatpush1.bf16.msra.mxu0 %v812
        %1236 = vmatprep.subr.bf16.mxu0 %v815
        %1237 = vmatpush1.bf16.msra.mxu0 %v814
        %1238 = vmatprep.subr.bf16.mxu0 %v817
        %1239 = vmatpush1.bf16.msra.mxu0 %v816
        %1240 = vmatprep.subr.bf16.mxu0 %v819
        %1241 = vmatpush1.bf16.msra.mxu0 %v818
        %1242 = vmatprep.subr.bf16.mxu0 %v821
        %1243 = vmatpush1.bf16.msra.mxu0 %v820
        %1244 = vmatprep.subr.bf16.mxu0 %v823
        %1245 = vmatpush1.bf16.msra.mxu0 %v822
        %1246 = vmatprep.subr.bf16.mxu0 %v825
        %1247 = vmatpush1.bf16.msra.mxu0 %v824
        %1248 = vmatprep.subr.bf16.mxu0 %v827
        %1249 = vmatpush1.bf16.msra.mxu0 %v826
        %1250 = vmatprep.subr.bf16.mxu0 0
        %1251 = vmatpush1.bf16.msra.mxu0 0
        %1252 = vmatprep.subr.bf16.mxu0 0
        %1253 = vmatpush1.bf16.msra.mxu0 0
        %1254 = vmatprep.subr.bf16.mxu0 0
        %1255 = vmatpush1.bf16.msra.mxu0 0
        %1256 = vmatprep.subr.bf16.mxu0 0
        %1257 = vmatpush1.bf16.msra.mxu0 0
        %1258 = vmatprep.subr.bf16.mxu0 0
        %1259 = vmatpush1.bf16.msra.mxu0 0
        %1260 = vmatprep.subr.bf16.mxu0 0
        %1261 = vmatpush1.bf16.msra.mxu0 0
        %1262 = vmatprep.mubr.bf16.mxu0 %v1079
        %1263 = vmatmul.mubr.bf16.gmra.mrb[0].mxu0 %v1064
        %v1264 = vpop.f32.mrb[0].mxu0
        %v1265 = vadd.f32 0.0, %v1264
        %v1266 = vpop.f32.mrb[0].mxu0
        %v1267 = vadd.f32 0.0, %v1266
        %v1268 = vpop.f32.mrb[0].mxu0
        %v1269 = vadd.f32 0.0, %v1268
        %v1270 = vpop.f32.mrb[0].mxu0
        %v1271 = vadd.f32 0.0, %v1270
        %1272 = vmatprep.mubr.bf16.mxu0 %v1082
        %1273 = vmatmul.mubr.bf16.gmra.mrb[0].mxu0 %v1065
        %v1274 = vpop.f32.mrb[0].mxu0
        %v1275 = vadd.f32 0.0, %v1274
        %v1276 = vpop.f32.mrb[0].mxu0
        %v1277 = vadd.f32 0.0, %v1276
        %v1278 = vpop.f32.mrb[0].mxu0
        %v1279 = vadd.f32 0.0, %v1278
        %v1280 = vpop.f32.mrb[0].mxu0
        %v1281 = vadd.f32 0.0, %v1280
        %1282 = vmatprep.mubr.bf16.mxu0 %v1085
        %1283 = vmatmul.mubr.bf16.gmra.mrb[0].mxu0 %v1066
        %v1284 = vpop.f32.mrb[0].mxu0
        %v1285 = vadd.f32 0.0, %v1284
        %v1286 = vpop.f32.mrb[0].mxu0
        %v1287 = vadd.f32 0.0, %v1286
        %v1288 = vpop.f32.mrb[0].mxu0
        %v1289 = vadd.f32 0.0, %v1288
        %v1290 = vpop.f32.mrb[0].mxu0
        %v1291 = vadd.f32 0.0, %v1290
        %1292 = vmatprep.mubr.bf16.mxu0 %v1088
        %1293 = vmatmul.mubr.bf16.gmra.mrb[0].mxu0 %v1067
        %v1294 = vpop.f32.mrb[0].mxu0
        %v1295 = vadd.f32 0.0, %v1294
        %v1296 = vpop.f32.mrb[0].mxu0
        %v1297 = vadd.f32 0.0, %v1296
        %v1298 = vpop.f32.mrb[0].mxu0
        %v1299 = vadd.f32 0.0, %v1298
        %v1300 = vpop.f32.mrb[0].mxu0
        %v1301 = vadd.f32 0.0, %v1300
        %1302 = vmatprep.mubr.bf16.mxu0 %v1091
        %1303 = vmatmul.mubr.bf16.gmra.mrb[0].mxu0 %v1068
        %v1304 = vpop.f32.mrb[0].mxu0
        %v1305 = vadd.f32 0.0, %v1304
        %v1306 = vpop.f32.mrb[0].mxu0
        %v1307 = vadd.f32 0.0, %v1306
        %v1308 = vpop.f32.mrb[0].mxu0
        %v1309 = vadd.f32 0.0, %v1308
        %v1310 = vpop.f32.mrb[0].mxu0
        %v1311 = vadd.f32 0.0, %v1310
        %1312 = vmatprep.mubr.bf16.mxu0 %v1094
        %1313 = vmatmul.mubr.bf16.gmra.mrb[0].mxu0 %v1069
        %v1314 = vpop.f32.mrb[0].mxu0
        %v1315 = vadd.f32 0.0, %v1314
        %v1316 = vpop.f32.mrb[0].mxu0
        %v1317 = vadd.f32 0.0, %v1316
        %v1318 = vpop.f32.mrb[0].mxu0
        %v1319 = vadd.f32 0.0, %v1318
        %v1320 = vpop.f32.mrb[0].mxu0
        %v1321 = vadd.f32 0.0, %v1320
        %1322 = vmatprep.mubr.bf16.mxu0 %v1097
        %1323 = vmatmul.mubr.bf16.gmra.mrb[0].mxu0 %v1070
        %v1324 = vpop.f32.mrb[0].mxu0
        %v1325 = vadd.f32 0.0, %v1324
        %v1326 = vpop.f32.mrb[0].mxu0
        %v1327 = vadd.f32 0.0, %v1326
        %v1328 = vpop.f32.mrb[0].mxu0
        %v1329 = vadd.f32 0.0, %v1328
        %v1330 = vpop.f32.mrb[0].mxu0
        %v1331 = vadd.f32 0.0, %v1330
        %1332 = vdwg.mxu0
        %v1333 = vmax.f32 %v1202, %v1265
        %v1334 = vmax.f32 %v1203, %v1267
        %v1335 = vmax.f32 %v1204, %v1269
        %v1336 = vmax.f32 %v1205, %v1271
        %v1337 = vmax.f32 %v1206, %v1275
        %v1338 = vmax.f32 %v1207, %v1277
        %v1339 = vmax.f32 %v1208, %v1279
        %v1340 = vmax.f32 %v1209, %v1281
        %v1341 = vmax.f32 %v1210, %v1285
        %v1342 = vmax.f32 %v1211, %v1287
        %v1343 = vmax.f32 %v1212, %v1289
        %v1344 = vmax.f32 %v1213, %v1291
        %v1345 = vmax.f32 %v1214, %v1295
        %v1346 = vmax.f32 %v1215, %v1297
        %v1347 = vmax.f32 %v1216, %v1299
        %v1348 = vmax.f32 %v1217, %v1301
        %v1349 = vmax.f32 %v1218, %v1305
        %v1350 = vmax.f32 %v1219, %v1307
        %v1351 = vmax.f32 %v1220, %v1309
        %v1352 = vmax.f32 %v1221, %v1311
        %v1353 = vmax.f32 %v1222, %v1315
        %v1354 = vmax.f32 %v1223, %v1317
        %v1355 = vmax.f32 %v1224, %v1319
        %v1356 = vmax.f32 %v1225, %v1321
        %v1357 = vmax.f32 %v1226, %v1325
        %v1358 = vmax.f32 %v1227, %v1327
        %v1359 = vmax.f32 %v1228, %v1329
        %v1360 = vmax.f32 %v1229, %v1331
        %v1361 = vld [vmem:[%s2] sm:$0x3]
        %v1363 = vlaneseq
        %v1364 = vshrl.u32 %v1363, 7
        %v1365 = vsub.s32 0, %v1364
        %v1366 = vrot.slane %v1361, %v1365
        %v1367 = vlaneseq
        %v1368 = vshrl.u32 %v1367, 7
        %v1369 = vsub.s32 1, %v1368
        %v1370 = vrot.slane %v1361, %v1369
        %v1373 = vadd.f32 %v1333, %v1366
        %v1374 = vadd.f32 %v1334, %v1370
        %v1375 = vadd.f32 %v1335, %v1366
        %v1376 = vadd.f32 %v1336, %v1370
        %v1377 = vadd.f32 %v1337, %v1366
        %v1378 = vadd.f32 %v1338, %v1370
        %v1379 = vadd.f32 %v1339, %v1366
        %v1380 = vadd.f32 %v1340, %v1370
        %v1381 = vadd.f32 %v1341, %v1366
        %v1382 = vadd.f32 %v1342, %v1370
        %v1383 = vadd.f32 %v1343, %v1366
        %v1384 = vadd.f32 %v1344, %v1370
        %v1385 = vadd.f32 %v1345, %v1366
        %v1386 = vadd.f32 %v1346, %v1370
        %v1387 = vadd.f32 %v1347, %v1366
        %v1388 = vadd.f32 %v1348, %v1370
        %v1389 = vadd.f32 %v1349, %v1366
        %v1390 = vadd.f32 %v1350, %v1370
        %v1391 = vadd.f32 %v1351, %v1366
        %v1392 = vadd.f32 %v1352, %v1370
        %v1393 = vadd.f32 %v1353, %v1366
        %v1394 = vadd.f32 %v1354, %v1370
        %v1395 = vadd.f32 %v1355, %v1366
        %v1396 = vadd.f32 %v1356, %v1370
        %v1397 = vadd.f32 %v1357, %v1366
        %v1398 = vadd.f32 %v1358, %v1370
        %v1399 = vadd.f32 %v1359, %v1366
        %v1400 = vadd.f32 %v1360, %v1370
        %v1401 = vmax.f32 %v1373, 0.0
        %v1402 = vmax.f32 %v1374, 0.0
        %v1403 = vmax.f32 %v1375, 0.0
        %v1404 = vmax.f32 %v1376, 0.0
        %v1405 = vmax.f32 %v1377, 0.0
        %v1406 = vmax.f32 %v1378, 0.0
        %v1407 = vmax.f32 %v1379, 0.0
        %v1408 = vmax.f32 %v1380, 0.0
        %v1409 = vmax.f32 %v1381, 0.0
        %v1410 = vmax.f32 %v1382, 0.0
        %v1411 = vmax.f32 %v1383, 0.0
        %v1412 = vmax.f32 %v1384, 0.0
        %v1413 = vmax.f32 %v1385, 0.0
        %v1414 = vmax.f32 %v1386, 0.0
        %v1415 = vmax.f32 %v1387, 0.0
        %v1416 = vmax.f32 %v1388, 0.0
        %v1417 = vmax.f32 %v1389, 0.0
        %v1418 = vmax.f32 %v1390, 0.0
        %v1419 = vmax.f32 %v1391, 0.0
        %v1420 = vmax.f32 %v1392, 0.0
        %v1421 = vmax.f32 %v1393, 0.0
        %v1422 = vmax.f32 %v1394, 0.0
        %v1423 = vmax.f32 %v1395, 0.0
        %v1424 = vmax.f32 %v1396, 0.0
        %v1425 = vmax.f32 %v1397, 0.0
        %v1426 = vmax.f32 %v1398, 0.0
        %v1427 = vmax.f32 %v1399, 0.0
        %v1428 = vmax.f32 %v1400, 0.0
        %v1429 = vpack.c.bf16 %v1403, %v1401
        %v1430 = vpack.c.bf16 %v1404, %v1402
        %v1431 = vpack.c.bf16 %v1407, %v1405
        %v1432 = vpack.c.bf16 %v1408, %v1406
        %v1433 = vpack.c.bf16 %v1411, %v1409
        %v1434 = vpack.c.bf16 %v1412, %v1410
        %v1435 = vpack.c.bf16 %v1415, %v1413
        %v1436 = vpack.c.bf16 %v1416, %v1414
        %v1437 = vpack.c.bf16 %v1419, %v1417
        %v1438 = vpack.c.bf16 %v1420, %v1418
        %v1439 = vpack.c.bf16 %v1423, %v1421
        %v1440 = vpack.c.bf16 %v1424, %v1422
        %v1441 = vpack.c.bf16 %v1427, %v1425
        %v1442 = vpack.c.bf16 %v1428, %v1426
        %v1457 = vunpack.c.l.b16 %v1429
        %v1458 = vunpack.c.l.b16 %v1430
        %v1459 = vunpack.c.h.b16 %v1429
        %v1460 = vunpack.c.h.b16 %v1430
        %v1461 = vunpack.c.l.b16 %v1431
        %v1462 = vunpack.c.l.b16 %v1432
        %v1463 = vunpack.c.h.b16 %v1431
        %v1464 = vunpack.c.h.b16 %v1432
        %v1465 = vunpack.c.l.b16 %v1433
        %v1466 = vunpack.c.l.b16 %v1434
        %v1467 = vunpack.c.h.b16 %v1433
        %v1468 = vunpack.c.h.b16 %v1434
        %v1469 = vunpack.c.l.b16 %v1435
        %v1470 = vunpack.c.l.b16 %v1436
        %v1471 = vunpack.c.h.b16 %v1435
        %v1472 = vunpack.c.h.b16 %v1436
        %v1473 = vunpack.c.l.b16 %v1437
        %v1474 = vunpack.c.l.b16 %v1438
        %v1475 = vunpack.c.h.b16 %v1437
        %v1476 = vunpack.c.h.b16 %v1438
        %v1477 = vunpack.c.l.b16 %v1439
        %v1478 = vunpack.c.l.b16 %v1440
        %v1479 = vunpack.c.h.b16 %v1439
        %v1480 = vunpack.c.h.b16 %v1440
        %v1481 = vunpack.c.l.b16 %v1441
        %v1482 = vunpack.c.l.b16 %v1442
        %v1483 = vunpack.c.h.b16 %v1441
        %v1484 = vunpack.c.h.b16 %v1442
        %v1485 = vpack.c.b16 %v1458, %v1457
        %v1486 = vpack.c.b16 %v1460, %v1459
        %v1487 = vpack.c.b16 %v1462, %v1461
        %v1488 = vpack.c.b16 %v1464, %v1463
        %v1489 = vpack.c.b16 %v1466, %v1465
        %v1490 = vpack.c.b16 %v1468, %v1467
        %v1491 = vpack.c.b16 %v1470, %v1469
        %v1492 = vpack.c.b16 %v1472, %v1471
        %v1493 = vpack.c.b16 %v1474, %v1473
        %v1494 = vpack.c.b16 %v1476, %v1475
        %v1495 = vpack.c.b16 %v1478, %v1477
        %v1496 = vpack.c.b16 %v1480, %v1479
        %v1497 = vpack.c.b16 %v1482, %v1481
        %v1498 = vpack.c.b16 %v1484, %v1483
        %1513 = vst [vmem:[#allocation2] sm:$0xff] %v1485
        %1514 = vst [vmem:[#allocation2 + $0x8] sm:$0xff] %v1486
        %1515 = vst [vmem:[#allocation2 + $0x10] sm:$0xff] %v1487
        %1516 = vst [vmem:[#allocation2 + $0x18] sm:$0xff] %v1488
        %1517 = vst [vmem:[#allocation2 + $0x20] sm:$0xff] %v1489
        %1518 = vst [vmem:[#allocation2 + $0x28] sm:$0xff] %v1490
        %1519 = vst [vmem:[#allocation2 + $0x30] sm:$0xff] %v1491
        %1520 = vst [vmem:[#allocation2 + $0x38] sm:$0xff] %v1492
        %1521 = vst [vmem:[#allocation2 + $0x40] sm:$0xff] %v1493
        %1522 = vst [vmem:[#allocation2 + $0x48] sm:$0xff] %v1494
        %1523 = vst [vmem:[#allocation2 + $0x50] sm:$0xff] %v1495
        %1524 = vst [vmem:[#allocation2 + $0x58] sm:$0xff] %v1496
        %1525 = vst [vmem:[#allocation2 + $0x60] sm:$0xff] %v1497
        %1526 = vst [vmem:[#allocation2 + $0x68] sm:$0xff] %v1498
        %1527 = vst [vmem:[#allocation2 + $0x70] sm:$0xff] 0
        %v1528 = vld [vmem:[#allocation2] sm:$0xff]
        %v1529 = vld [vmem:[#allocation2 + $0x8] sm:$0xff]
        %v1530 = vld [vmem:[#allocation2 + $0x10] sm:$0xff]
        %v1531 = vld [vmem:[#allocation2 + $0x18] sm:$0xff]
        %v1532 = vld [vmem:[#allocation2 + $0x20] sm:$0xff]
        %v1533 = vld [vmem:[#allocation2 + $0x28] sm:$0xff]
        %v1534 = vld [vmem:[#allocation2 + $0x30] sm:$0xff]
        %v1535 = vld [vmem:[#allocation2 + $0x38] sm:$0xff]
        %v1536 = vld [vmem:[#allocation2 + $0x40] sm:$0xff]
        %v1537 = vld [vmem:[#allocation2 + $0x48] sm:$0xff]
        %v1538 = vld [vmem:[#allocation2 + $0x50] sm:$0xff]
        %v1539 = vld [vmem:[#allocation2 + $0x58] sm:$0xff]
        %v1540 = vld [vmem:[#allocation2 + $0x60] sm:$0xff]
        %v1541 = vld [vmem:[#allocation2 + $0x68] sm:$0xff]
        %v1542 = vld [vmem:[#allocation2] sm:$0xff]
        %v1543 = vld [vmem:[#allocation2 + $0x8] sm:$0xff]
        %v1544 = vld [vmem:[#allocation2 + $0x10] sm:$0xff]
        %v1545 = vld [vmem:[#allocation2 + $0x18] sm:$0xff]
        %v1546 = vld [vmem:[#allocation2 + $0x20] sm:$0xff]
        %v1547 = vld [vmem:[#allocation2 + $0x28] sm:$0xff]
        %v1548 = vld [vmem:[#allocation2 + $0x30] sm:$0xff]
        %v1549 = vld [vmem:[#allocation2 + $0x38] sm:$0xff]
        %v1550 = vld [vmem:[#allocation2 + $0x40] sm:$0xff]
        %v1551 = vld [vmem:[#allocation2 + $0x48] sm:$0xff]
        %v1552 = vld [vmem:[#allocation2 + $0x50] sm:$0xff]
        %v1553 = vld [vmem:[#allocation2 + $0x58] sm:$0xff]
        %v1554 = vld [vmem:[#allocation2 + $0x60] sm:$0xff]
        %v1555 = vld [vmem:[#allocation2 + $0x68] sm:$0xff]
        %v1556 = vld [vmem:[#allocation2 + $0x70] sm:$0x11]
        %v1557 = vld [vmem:[#allocation2] sm:$0xee]
        %v1572 = vunpack.c.l.b16 %v1528
        %v1573 = vunpack.c.h.b16 %v1528
        %v1574 = vunpack.c.l.b16 %v1529
        %v1575 = vunpack.c.h.b16 %v1529
        %v1576 = vunpack.c.l.b16 %v1530
        %v1577 = vunpack.c.h.b16 %v1530
        %v1578 = vunpack.c.l.b16 %v1531
        %v1579 = vunpack.c.h.b16 %v1531
        %v1580 = vunpack.c.l.b16 %v1532
        %v1581 = vunpack.c.h.b16 %v1532
        %v1582 = vunpack.c.l.b16 %v1533
        %v1583 = vunpack.c.h.b16 %v1533
        %v1584 = vunpack.c.l.b16 %v1534
        %v1585 = vunpack.c.h.b16 %v1534
        %v1586 = vunpack.c.l.b16 %v1535
        %v1587 = vunpack.c.h.b16 %v1535
        %v1588 = vunpack.c.l.b16 %v1536
        %v1589 = vunpack.c.h.b16 %v1536
        %v1590 = vunpack.c.l.b16 %v1537
        %v1591 = vunpack.c.h.b16 %v1537
        %v1592 = vunpack.c.l.b16 %v1538
        %v1593 = vunpack.c.h.b16 %v1538
        %v1594 = vunpack.c.l.b16 %v1539
        %v1595 = vunpack.c.h.b16 %v1539
        %v1596 = vunpack.c.l.b16 %v1540
        %v1597 = vunpack.c.h.b16 %v1540
        %v1598 = vunpack.c.l.b16 %v1541
        %v1599 = vunpack.c.h.b16 %v1541
        %v1600 = vpack.c.b16 %v1574, %v1572
        %v1601 = vpack.c.b16 %v1575, %v1573
        %v1602 = vpack.c.b16 %v1578, %v1576
        %v1603 = vpack.c.b16 %v1579, %v1577
        %v1604 = vpack.c.b16 %v1582, %v1580
        %v1605 = vpack.c.b16 %v1583, %v1581
        %v1606 = vpack.c.b16 %v1586, %v1584
        %v1607 = vpack.c.b16 %v1587, %v1585
        %v1608 = vpack.c.b16 %v1590, %v1588
        %v1609 = vpack.c.b16 %v1591, %v1589
        %v1610 = vpack.c.b16 %v1594, %v1592
        %v1611 = vpack.c.b16 %v1595, %v1593
        %v1612 = vpack.c.b16 %v1598, %v1596
        %v1613 = vpack.c.b16 %v1599, %v1597
        %v1643 = vunpack.c.l.b16 %v1542
        %v1644 = vunpack.c.h.b16 %v1542
        %v1645 = vunpack.c.l.b16 %v1543
        %v1646 = vunpack.c.h.b16 %v1543
        %v1647 = vunpack.c.l.b16 %v1544
        %v1648 = vunpack.c.h.b16 %v1544
        %v1649 = vunpack.c.l.b16 %v1545
        %v1650 = vunpack.c.h.b16 %v1545
        %v1651 = vunpack.c.l.b16 %v1546
        %v1652 = vunpack.c.h.b16 %v1546
        %v1653 = vunpack.c.l.b16 %v1547
        %v1654 = vunpack.c.h.b16 %v1547
        %v1655 = vunpack.c.l.b16 %v1548
        %v1656 = vunpack.c.h.b16 %v1548
        %v1657 = vunpack.c.l.b16 %v1549
        %v1658 = vunpack.c.h.b16 %v1549
        %v1659 = vunpack.c.l.b16 %v1550
        %v1660 = vunpack.c.h.b16 %v1550
        %v1661 = vunpack.c.l.b16 %v1551
        %v1662 = vunpack.c.h.b16 %v1551
        %v1663 = vunpack.c.l.b16 %v1552
        %v1664 = vunpack.c.h.b16 %v1552
        %v1665 = vunpack.c.l.b16 %v1553
        %v1666 = vunpack.c.h.b16 %v1553
        %v1667 = vunpack.c.l.b16 %v1554
        %v1668 = vunpack.c.h.b16 %v1554
        %v1669 = vunpack.c.l.b16 %v1555
        %v1670 = vunpack.c.h.b16 %v1555
        %v1671 = vunpack.c.l.b16 %v1556
        %v1672 = vunpack.c.h.b16 %v1556
        %v1673 = vpack.c.b16 %v1645, %v1643
        %v1674 = vpack.c.b16 %v1646, %v1644
        %v1675 = vpack.c.b16 %v1649, %v1647
        %v1676 = vpack.c.b16 %v1650, %v1648
        %v1677 = vpack.c.b16 %v1653, %v1651
        %v1678 = vpack.c.b16 %v1654, %v1652
        %v1679 = vpack.c.b16 %v1657, %v1655
        %v1680 = vpack.c.b16 %v1658, %v1656
        %v1681 = vpack.c.b16 %v1661, %v1659
        %v1682 = vpack.c.b16 %v1662, %v1660
        %v1683 = vpack.c.b16 %v1665, %v1663
        %v1684 = vpack.c.b16 %v1666, %v1664
        %v1685 = vpack.c.b16 %v1669, %v1667
        %v1686 = vpack.c.b16 %v1670, %v1668
        %v1687 = vpack.c.b16 %v1671, %v1671
        %v1688 = vpack.c.b16 %v1672, %v1672
        %vm1689 = vsmask.f32 7424
        %v1691 = vshrl.u32 %v1673, 16
        %v1693 = vshll.u32 %v1673, 16
        %v1695 = vrot.slane %v1693, 1
        %v1696 = vor.u32 %v1691, %v1695
        %v1698 = vshll.u32 %v1675, 16
        %v1700 = vrot.slane %v1698, 1
        %v1701 = vsel %vm1689, %v1696, %v1700
        %v1703 = vshrl.u32 %v1674, 16
        %v1705 = vshll.u32 %v1674, 16
        %v1707 = vrot.slane %v1705, 1
        %v1708 = vor.u32 %v1703, %v1707
        %v1710 = vshll.u32 %v1676, 16
        %v1712 = vrot.slane %v1710, 1
        %v1713 = vsel %vm1689, %v1708, %v1712
        %v1714 = vshrl.u32 %v1675, 16
        %v1716 = vor.u32 %v1714, %v1700
        %v1718 = vshll.u32 %v1677, 16
        %v1720 = vrot.slane %v1718, 1
        %v1721 = vsel %vm1689, %v1716, %v1720
        %v1722 = vshrl.u32 %v1676, 16
        %v1724 = vor.u32 %v1722, %v1712
        %v1726 = vshll.u32 %v1678, 16
        %v1728 = vrot.slane %v1726, 1
        %v1729 = vsel %vm1689, %v1724, %v1728
        %v1730 = vshrl.u32 %v1677, 16
        %v1732 = vor.u32 %v1730, %v1720
        %v1734 = vshll.u32 %v1679, 16
        %v1736 = vrot.slane %v1734, 1
        %v1737 = vsel %vm1689, %v1732, %v1736
        %v1738 = vshrl.u32 %v1678, 16
        %v1740 = vor.u32 %v1738, %v1728
        %v1742 = vshll.u32 %v1680, 16
        %v1744 = vrot.slane %v1742, 1
        %v1745 = vsel %vm1689, %v1740, %v1744
        %v1746 = vshrl.u32 %v1679, 16
        %v1748 = vor.u32 %v1746, %v1736
        %v1750 = vshll.u32 %v1681, 16
        %v1752 = vrot.slane %v1750, 1
        %v1753 = vsel %vm1689, %v1748, %v1752
        %v1754 = vshrl.u32 %v1680, 16
        %v1756 = vor.u32 %v1754, %v1744
        %v1758 = vshll.u32 %v1682, 16
        %v1760 = vrot.slane %v1758, 1
        %v1761 = vsel %vm1689, %v1756, %v1760
        %v1762 = vshrl.u32 %v1681, 16
        %v1764 = vor.u32 %v1762, %v1752
        %v1766 = vshll.u32 %v1683, 16
        %v1768 = vrot.slane %v1766, 1
        %v1769 = vsel %vm1689, %v1764, %v1768
        %v1770 = vshrl.u32 %v1682, 16
        %v1772 = vor.u32 %v1770, %v1760
        %v1774 = vshll.u32 %v1684, 16
        %v1776 = vrot.slane %v1774, 1
        %v1777 = vsel %vm1689, %v1772, %v1776
        %v1778 = vshrl.u32 %v1683, 16
        %v1780 = vor.u32 %v1778, %v1768
        %v1782 = vshll.u32 %v1685, 16
        %v1784 = vrot.slane %v1782, 1
        %v1785 = vsel %vm1689, %v1780, %v1784
        %v1786 = vshrl.u32 %v1684, 16
        %v1788 = vor.u32 %v1786, %v1776
        %v1790 = vshll.u32 %v1686, 16
        %v1792 = vrot.slane %v1790, 1
        %v1793 = vsel %vm1689, %v1788, %v1792
        %v1794 = vshrl.u32 %v1685, 16
        %v1796 = vor.u32 %v1794, %v1784
        %v1798 = vshll.u32 %v1687, 16
        %v1800 = vrot.slane %v1798, 1
        %v1801 = vsel %vm1689, %v1796, %v1800
        %v1802 = vshrl.u32 %v1686, 16
        %v1804 = vor.u32 %v1802, %v1792
        %v1806 = vshll.u32 %v1688, 16
        %v1808 = vrot.slane %v1806, 1
        %v1809 = vsel %vm1689, %v1804, %v1808
        %v1825 = vunpack.c.l.b16 %v1557
        %v1826 = vunpack.c.h.b16 %v1557
        %v1827 = vpack.c.b16 %v1645, %v1825
        %v1828 = vpack.c.b16 %v1646, %v1826
        %vm1829 = vcmask 1046528
        %v1830 = vrot.slane %v1827, 1
        %v1831 = vrot.slane %v1675, 1
        %v1832 = vsel %vm1829, %v1830, %v1831
        %v1833 = vrot.slane %v1828, 1
        %v1834 = vrot.slane %v1676, 1
        %v1835 = vsel %vm1829, %v1833, %v1834
        %v1836 = vrot.slane %v1677, 1
        %v1837 = vsel %vm1829, %v1831, %v1836
        %v1838 = vrot.slane %v1678, 1
        %v1839 = vsel %vm1829, %v1834, %v1838
        %v1840 = vrot.slane %v1679, 1
        %v1841 = vsel %vm1829, %v1836, %v1840
        %v1842 = vrot.slane %v1680, 1
        %v1843 = vsel %vm1829, %v1838, %v1842
        %v1844 = vrot.slane %v1681, 1
        %v1845 = vsel %vm1829, %v1840, %v1844
        %v1846 = vrot.slane %v1682, 1
        %v1847 = vsel %vm1829, %v1842, %v1846
        %v1848 = vrot.slane %v1683, 1
        %v1849 = vsel %vm1829, %v1844, %v1848
        %v1850 = vrot.slane %v1684, 1
        %v1851 = vsel %vm1829, %v1846, %v1850
        %v1852 = vrot.slane %v1685, 1
        %v1853 = vsel %vm1829, %v1848, %v1852
        %v1854 = vrot.slane %v1686, 1
        %v1855 = vsel %vm1829, %v1850, %v1854
        %v1856 = vrot.slane %v1687, 1
        %v1857 = vsel %vm1829, %v1852, %v1856
        %v1858 = vrot.slane %v1688, 1
        %v1859 = vsel %vm1829, %v1854, %v1858
        %v1874 = vld [vmem:[%s3] sm:$0xff]
        %v1875 = vld [vmem:[%s3 + $0x8] sm:$0xf]
        %v1876 = vld [vmem:[%s3 + $0xc] sm:$0xff]
        %v1877 = vld [vmem:[%s3 + $0x14] sm:$0xf]
        %v1878 = vld [vmem:[%s3 + $0x18] sm:$0xff]
        %v1879 = vld [vmem:[%s3 + $0x20] sm:$0xf]
        %v1880 = vld [vmem:[%s3 + $0x24] sm:$0xff]
        %v1881 = vld [vmem:[%s3 + $0x2c] sm:$0xf]
        %v1882 = vld [vmem:[%s3 + $0x30] sm:$0xff]
        %v1883 = vld [vmem:[%s3 + $0x38] sm:$0xf]
        %v1884 = vld [vmem:[%s3 + $0x3c] sm:$0xff]
        %v1885 = vld [vmem:[%s3 + $0x44] sm:$0xf]
        %v1886 = vld [vmem:[%s3 + $0x48] sm:$0xff]
        %v1887 = vld [vmem:[%s3 + $0x50] sm:$0xf]
        %v1888 = vld [vmem:[%s3 + $0x54] sm:$0xff]
        %v1889 = vld [vmem:[%s3 + $0x5c] sm:$0xf]
        %v1890 = vld [vmem:[%s3 + $0x60] sm:$0xff]
        %v1891 = vld [vmem:[%s3 + $0x68] sm:$0xf]
        %v1892 = vld [vmem:[%s3 + $0x6c] sm:$0xff]
        %v1893 = vld [vmem:[%s3 + $0x74] sm:$0xf]
        %v1894 = vld [vmem:[%s3 + $0x78] sm:$0xff]
        %v1895 = vld [vmem:[%s3 + $0x80] sm:$0xf]
        %v1896 = vld [vmem:[%s3 + $0x84] sm:$0xff]
        %v1897 = vld [vmem:[%s3 + $0x8c] sm:$0xf]
        %v1898 = vld [vmem:[%s3 + $0x90] sm:$0xff]
        %v1899 = vld [vmem:[%s3 + $0x98] sm:$0xf]
        %v1900 = vld [vmem:[%s3 + $0x9c] sm:$0xff]
        %v1901 = vld [vmem:[%s3 + $0xa4] sm:$0xf]
        %v1902 = vld [vmem:[%s3 + $0xa8] sm:$0xff]
        %v1903 = vld [vmem:[%s3 + $0xb0] sm:$0xf]
        %v1904 = vld [vmem:[%s3 + $0xb4] sm:$0xff]
        %v1905 = vld [vmem:[%s3 + $0xbc] sm:$0xf]
        %v1906 = vld [vmem:[%s3 + $0xc0] sm:$0xff]
        %v1907 = vld [vmem:[%s3 + $0xc8] sm:$0xf]
        %v1908 = vld [vmem:[%s3 + $0xcc] sm:$0xff]
        %v1909 = vld [vmem:[%s3 + $0xd4] sm:$0xf]
        %v1910 = vld [vmem:[%s3 + $0xd8] sm:$0xff]
        %v1911 = vld [vmem:[%s3 + $0xe0] sm:$0xf]
        %v1912 = vld [vmem:[%s3 + $0xe4] sm:$0xff]
        %v1913 = vld [vmem:[%s3 + $0xec] sm:$0xf]
        %v1914 = vld [vmem:[%s3 + $0xf0] sm:$0xff]
        %v1915 = vld [vmem:[%s3 + $0xf8] sm:$0xf]
        %v1916 = vld [vmem:[%s3 + $0xfc] sm:$0xff]
        %v1917 = vld [vmem:[%s3 + $0x104] sm:$0xf]
        %v1918 = vld [vmem:[%s3 + $0x108] sm:$0xff]
        %v1919 = vld [vmem:[%s3 + $0x110] sm:$0xf]
        %v1920 = vld [vmem:[%s3 + $0x114] sm:$0xff]
        %v1921 = vld [vmem:[%s3 + $0x11c] sm:$0xf]
        %v1922 = vld [vmem:[%s3 + $0x120] sm:$0xff]
        %v1923 = vld [vmem:[%s3 + $0x128] sm:$0xf]
        %v1924 = vld [vmem:[%s3 + $0x12c] sm:$0xff]
        %v1925 = vld [vmem:[%s3 + $0x134] sm:$0xf]
        %v1926 = vld [vmem:[%s3 + $0x138] sm:$0xff]
        %v1927 = vld [vmem:[%s3 + $0x140] sm:$0xf]
        %v1928 = vld [vmem:[%s3 + $0x144] sm:$0xff]
        %v1929 = vld [vmem:[%s3 + $0x14c] sm:$0xf]
        %v1930 = vld [vmem:[%s3 + $0x150] sm:$0xff]
        %v1931 = vld [vmem:[%s3 + $0x158] sm:$0xf]
        %v1932 = vld [vmem:[%s3 + $0x15c] sm:$0xff]
        %v1933 = vld [vmem:[%s3 + $0x164] sm:$0xf]
        %v1934 = vld [vmem:[%s3 + $0x168] sm:$0xff]
        %v1935 = vld [vmem:[%s3 + $0x170] sm:$0xf]
        %v1936 = vld [vmem:[%s3 + $0x174] sm:$0xff]
        %v1937 = vld [vmem:[%s3 + $0x17c] sm:$0xf]
        %v1938 = vld [vmem:[%s3 + $0x180] sm:$0xff]
        %v1939 = vld [vmem:[%s3 + $0x188] sm:$0xf]
        %v1940 = vld [vmem:[%s3 + $0x18c] sm:$0xff]
        %v1941 = vld [vmem:[%s3 + $0x194] sm:$0xf]
        %v1942 = vld [vmem:[%s3 + $0x198] sm:$0xff]
        %v1943 = vld [vmem:[%s3 + $0x1a0] sm:$0xf]
        %v1944 = vld [vmem:[%s3 + $0x1a4] sm:$0xff]
        %v1945 = vld [vmem:[%s3 + $0x1ac] sm:$0xf]
        %v1946 = vld [vmem:[%s3 + $0x1b0] sm:$0xff]
        %v1947 = vld [vmem:[%s3 + $0x1b8] sm:$0xf]
        %v1948 = vld [vmem:[%s3 + $0x1bc] sm:$0xff]
        %v1949 = vld [vmem:[%s3 + $0x1c4] sm:$0xf]
        %v1950 = vld [vmem:[%s3 + $0x1c8] sm:$0xff]
        %v1951 = vld [vmem:[%s3 + $0x1d0] sm:$0xf]
        %v1952 = vld [vmem:[%s3 + $0x1d4] sm:$0xff]
        %v1953 = vld [vmem:[%s3 + $0x1dc] sm:$0xf]
        %v1954 = vld [vmem:[%s3 + $0x1e0] sm:$0xff]
        %v1955 = vld [vmem:[%s3 + $0x1e8] sm:$0xf]
        %v1956 = vld [vmem:[%s3 + $0x1ec] sm:$0xff]
        %v1957 = vld [vmem:[%s3 + $0x1f4] sm:$0xf]
        %v1958 = vld [vmem:[%s3 + $0x1f8] sm:$0xff]
        %v1959 = vld [vmem:[%s3 + $0x200] sm:$0xf]
        %v1960 = vld [vmem:[%s3 + $0x204] sm:$0xff]
        %v1961 = vld [vmem:[%s3 + $0x20c] sm:$0xf]
        %v1962 = vld [vmem:[%s3 + $0x210] sm:$0xff]
        %v1963 = vld [vmem:[%s3 + $0x218] sm:$0xf]
        %v1964 = vld [vmem:[%s3 + $0x21c] sm:$0xff]
        %v1965 = vld [vmem:[%s3 + $0x224] sm:$0xf]
        %v1966 = vld [vmem:[%s3 + $0x228] sm:$0xff]
        %v1967 = vld [vmem:[%s3 + $0x230] sm:$0xf]
        %v1968 = vld [vmem:[%s3 + $0x234] sm:$0xff]
        %v1969 = vld [vmem:[%s3 + $0x23c] sm:$0xf]
        %v1970 = vld [vmem:[%s3 + $0x240] sm:$0xff]
        %v1971 = vld [vmem:[%s3 + $0x248] sm:$0xf]
        %v1972 = vld [vmem:[%s3 + $0x24c] sm:$0xff]
        %v1973 = vld [vmem:[%s3 + $0x254] sm:$0xf]
        %v1974 = vld [vmem:[%s3 + $0x258] sm:$0xff]
        %v1975 = vld [vmem:[%s3 + $0x260] sm:$0xf]
        %v1976 = vld [vmem:[%s3 + $0x264] sm:$0xff]
        %v1977 = vld [vmem:[%s3 + $0x26c] sm:$0xf]
        %v1978 = vld [vmem:[%s3 + $0x270] sm:$0xff]
        %v1979 = vld [vmem:[%s3 + $0x278] sm:$0xf]
        %v1980 = vld [vmem:[%s3 + $0x27c] sm:$0xff]
        %v1981 = vld [vmem:[%s3 + $0x284] sm:$0xf]
        %v1982 = vld [vmem:[%s3 + $0x288] sm:$0xff]
        %v1983 = vld [vmem:[%s3 + $0x290] sm:$0xf]
        %v1984 = vld [vmem:[%s3 + $0x294] sm:$0xff]
        %v1985 = vld [vmem:[%s3 + $0x29c] sm:$0xf]
        %v1986 = vld [vmem:[%s3 + $0x2a0] sm:$0xff]
        %v1987 = vld [vmem:[%s3 + $0x2a8] sm:$0xf]
        %v1988 = vld [vmem:[%s3 + $0x2ac] sm:$0xff]
        %v1989 = vld [vmem:[%s3 + $0x2b4] sm:$0xf]
        %v1990 = vld [vmem:[%s3 + $0x2b8] sm:$0xff]
        %v1991 = vld [vmem:[%s3 + $0x2c0] sm:$0xf]
        %v1992 = vld [vmem:[%s3 + $0x2c4] sm:$0xff]
        %v1993 = vld [vmem:[%s3 + $0x2cc] sm:$0xf]
        %v1994 = vld [vmem:[%s3 + $0x2d0] sm:$0xff]
        %v1995 = vld [vmem:[%s3 + $0x2d8] sm:$0xf]
        %v1996 = vld [vmem:[%s3 + $0x2dc] sm:$0xff]
        %v1997 = vld [vmem:[%s3 + $0x2e4] sm:$0xf]
        %v1998 = vld [vmem:[%s3 + $0x2e8] sm:$0xff]
        %v1999 = vld [vmem:[%s3 + $0x2f0] sm:$0xf]
        %v2000 = vld [vmem:[%s3 + $0x2f4] sm:$0xff]
        %v2001 = vld [vmem:[%s3 + $0x2fc] sm:$0xf]
        %v2002 = vld [vmem:[%s3 + $0x300] sm:$0xff]
        %v2003 = vld [vmem:[%s3 + $0x308] sm:$0xf]
        %v2004 = vld [vmem:[%s3 + $0x30c] sm:$0xff]
        %v2005 = vld [vmem:[%s3 + $0x314] sm:$0xf]
        %v2006 = vld [vmem:[%s3 + $0x318] sm:$0xff]
        %v2007 = vld [vmem:[%s3 + $0x320] sm:$0xf]
        %v2008 = vld [vmem:[%s3 + $0x324] sm:$0xff]
        %v2009 = vld [vmem:[%s3 + $0x32c] sm:$0xf]
        %v2010 = vld [vmem:[%s3 + $0x330] sm:$0xff]
        %v2011 = vld [vmem:[%s3 + $0x338] sm:$0xf]
        %v2012 = vld [vmem:[%s3 + $0x33c] sm:$0xff]
        %v2013 = vld [vmem:[%s3 + $0x344] sm:$0xf]
        %v2014 = vld [vmem:[%s3 + $0x348] sm:$0xff]
        %v2015 = vld [vmem:[%s3 + $0x350] sm:$0xf]
        %v2016 = vld [vmem:[%s3 + $0x354] sm:$0xff]
        %v2017 = vld [vmem:[%s3 + $0x35c] sm:$0xf]
        %v2018 = vld [vmem:[%s3 + $0x360] sm:$0xff]
        %v2019 = vld [vmem:[%s3 + $0x368] sm:$0xf]
        %v2020 = vld [vmem:[%s3 + $0x36c] sm:$0xff]
        %v2021 = vld [vmem:[%s3 + $0x374] sm:$0xf]
        %v2022 = vld [vmem:[%s3 + $0x378] sm:$0xff]
        %v2023 = vld [vmem:[%s3 + $0x380] sm:$0xf]
        %v2024 = vld [vmem:[%s3 + $0x384] sm:$0xff]
        %v2025 = vld [vmem:[%s3 + $0x38c] sm:$0xf]
        %v2026 = vld [vmem:[%s3 + $0x390] sm:$0xff]
        %v2027 = vld [vmem:[%s3 + $0x398] sm:$0xf]
        %v2028 = vld [vmem:[%s3 + $0x39c] sm:$0xff]
        %v2029 = vld [vmem:[%s3 + $0x3a4] sm:$0xf]
        %v2030 = vld [vmem:[%s3 + $0x3a8] sm:$0xff]
        %v2031 = vld [vmem:[%s3 + $0x3b0] sm:$0xf]
        %v2032 = vld [vmem:[%s3 + $0x3b4] sm:$0xff]
        %v2033 = vld [vmem:[%s3 + $0x3bc] sm:$0xf]
        %v2034 = vld [vmem:[%s3 + $0x3c0] sm:$0xff]
        %v2035 = vld [vmem:[%s3 + $0x3c8] sm:$0xf]
        %v2036 = vld [vmem:[%s3 + $0x3cc] sm:$0xff]
        %v2037 = vld [vmem:[%s3 + $0x3d4] sm:$0xf]
        %v2038 = vld [vmem:[%s3 + $0x3d8] sm:$0xff]
        %v2039 = vld [vmem:[%s3 + $0x3e0] sm:$0xf]
        %v2040 = vld [vmem:[%s3 + $0x3e4] sm:$0xff]
        %v2041 = vld [vmem:[%s3 + $0x3ec] sm:$0xf]
        %v2042 = vld [vmem:[%s3 + $0x3f0] sm:$0xff]
        %v2043 = vld [vmem:[%s3 + $0x3f8] sm:$0xf]
        %v2044 = vld [vmem:[%s3 + $0x3fc] sm:$0xff]
        %v2045 = vld [vmem:[%s3 + $0x404] sm:$0xf]
        %v2046 = vld [vmem:[%s3 + $0x408] sm:$0xff]
        %v2047 = vld [vmem:[%s3 + $0x410] sm:$0xf]
        %v2048 = vld [vmem:[%s3 + $0x414] sm:$0xff]
        %v2049 = vld [vmem:[%s3 + $0x41c] sm:$0xf]
        %v2050 = vld [vmem:[%s3 + $0x420] sm:$0xff]
        %v2051 = vld [vmem:[%s3 + $0x428] sm:$0xf]
        %v2052 = vld [vmem:[%s3 + $0x42c] sm:$0xff]
        %v2053 = vld [vmem:[%s3 + $0x434] sm:$0xf]
        %v2054 = vld [vmem:[%s3 + $0x438] sm:$0xff]
        %v2055 = vld [vmem:[%s3 + $0x440] sm:$0xf]
        %v2056 = vld [vmem:[%s3 + $0x444] sm:$0xff]
        %v2057 = vld [vmem:[%s3 + $0x44c] sm:$0xf]
        %v2058 = vld [vmem:[%s3 + $0x450] sm:$0xff]
        %v2059 = vld [vmem:[%s3 + $0x458] sm:$0xf]
        %v2060 = vld [vmem:[%s3 + $0x45c] sm:$0xff]
        %v2061 = vld [vmem:[%s3 + $0x464] sm:$0xf]
        %v2062 = vld [vmem:[%s3 + $0x468] sm:$0xff]
        %v2063 = vld [vmem:[%s3 + $0x470] sm:$0xf]
        %v2064 = vld [vmem:[%s3 + $0x474] sm:$0xff]
        %v2065 = vld [vmem:[%s3 + $0x47c] sm:$0xf]
        %v2066 = vld [vmem:[%s4] sm:$0x7]
        %v2068 = vlaneseq
        %v2069 = vshrl.u32 %v2068, 7
        %v2070 = vsub.s32 0, %v2069
        %v2071 = vrot.slane %v2066, %v2070
        %v2072 = vlaneseq
        %v2073 = vshrl.u32 %v2072, 7
        %v2074 = vsub.s32 1, %v2073
        %v2075 = vrot.slane %v2066, %v2074
        %v2076 = vlaneseq
        %v2077 = vshrl.u32 %v2076, 7
        %v2078 = vsub.s32 2, %v2077
        %v2079 = vrot.slane %v2066, %v2078
        %v2275 = vunpack.c.l.b16 %v1874
        %v2276 = vunpack.c.h.b16 %v1874
        %v2277 = vunpack.c.l.b16 %v1875
        %v2278 = vunpack.c.l.b16 %v1876
        %v2279 = vunpack.c.h.b16 %v1876
        %v2280 = vunpack.c.l.b16 %v1877
        %v2281 = vunpack.c.l.b16 %v1878
        %v2282 = vunpack.c.h.b16 %v1878
        %v2283 = vunpack.c.l.b16 %v1879
        %v2284 = vunpack.c.l.b16 %v1880
        %v2285 = vunpack.c.h.b16 %v1880
        %v2286 = vunpack.c.l.b16 %v1881
        %v2287 = vunpack.c.l.b16 %v1882
        %v2288 = vunpack.c.h.b16 %v1882
        %v2289 = vunpack.c.l.b16 %v1883
        %v2290 = vunpack.c.l.b16 %v1884
        %v2291 = vunpack.c.h.b16 %v1884
        %v2292 = vunpack.c.l.b16 %v1885
        %v2293 = vunpack.c.l.b16 %v1886
        %v2294 = vunpack.c.h.b16 %v1886
        %v2295 = vunpack.c.l.b16 %v1887
        %v2296 = vunpack.c.l.b16 %v1888
        %v2297 = vunpack.c.h.b16 %v1888
        %v2298 = vunpack.c.l.b16 %v1889
        %v2299 = vunpack.c.l.b16 %v1890
        %v2300 = vunpack.c.h.b16 %v1890
        %v2301 = vunpack.c.l.b16 %v1891
        %v2302 = vunpack.c.l.b16 %v1892
        %v2303 = vunpack.c.h.b16 %v1892
        %v2304 = vunpack.c.l.b16 %v1893
        %v2305 = vunpack.c.l.b16 %v1894
        %v2306 = vunpack.c.h.b16 %v1894
        %v2307 = vunpack.c.l.b16 %v1895
        %v2308 = vunpack.c.l.b16 %v1896
        %v2309 = vunpack.c.h.b16 %v1896
        %v2310 = vunpack.c.l.b16 %v1897
        %v2311 = vunpack.c.l.b16 %v1898
        %v2312 = vunpack.c.h.b16 %v1898
        %v2313 = vunpack.c.l.b16 %v1899
        %v2314 = vunpack.c.l.b16 %v1900
        %v2315 = vunpack.c.h.b16 %v1900
        %v2316 = vunpack.c.l.b16 %v1901
        %v2317 = vunpack.c.l.b16 %v1902
        %v2318 = vunpack.c.h.b16 %v1902
        %v2319 = vunpack.c.l.b16 %v1903
        %v2320 = vunpack.c.l.b16 %v1904
        %v2321 = vunpack.c.h.b16 %v1904
        %v2322 = vunpack.c.l.b16 %v1905
        %v2323 = vunpack.c.l.b16 %v1906
        %v2324 = vunpack.c.h.b16 %v1906
        %v2325 = vunpack.c.l.b16 %v1907
        %v2326 = vunpack.c.l.b16 %v1908
        %v2327 = vunpack.c.h.b16 %v1908
        %v2328 = vunpack.c.l.b16 %v1909
        %v2329 = vunpack.c.l.b16 %v1910
        %v2330 = vunpack.c.h.b16 %v1910
        %v2331 = vunpack.c.l.b16 %v1911
        %v2332 = vunpack.c.l.b16 %v1912
        %v2333 = vunpack.c.h.b16 %v1912
        %v2334 = vunpack.c.l.b16 %v1913
        %v2335 = vunpack.c.l.b16 %v1914
        %v2336 = vunpack.c.h.b16 %v1914
        %v2337 = vunpack.c.l.b16 %v1915
        %v2338 = vunpack.c.l.b16 %v1916
        %v2339 = vunpack.c.h.b16 %v1916
        %v2340 = vunpack.c.l.b16 %v1917
        %v2341 = vunpack.c.l.b16 %v1918
        %v2342 = vunpack.c.h.b16 %v1918
        %v2343 = vunpack.c.l.b16 %v1919
        %v2344 = vunpack.c.l.b16 %v1920
        %v2345 = vunpack.c.h.b16 %v1920
        %v2346 = vunpack.c.l.b16 %v1921
        %v2347 = vunpack.c.l.b16 %v1922
        %v2348 = vunpack.c.h.b16 %v1922
        %v2349 = vunpack.c.l.b16 %v1923
        %v2350 = vunpack.c.l.b16 %v1924
        %v2351 = vunpack.c.h.b16 %v1924
        %v2352 = vunpack.c.l.b16 %v1925
        %v2353 = vunpack.c.l.b16 %v1926
        %v2354 = vunpack.c.h.b16 %v1926
        %v2355 = vunpack.c.l.b16 %v1927
        %v2356 = vunpack.c.l.b16 %v1928
        %v2357 = vunpack.c.h.b16 %v1928
        %v2358 = vunpack.c.l.b16 %v1929
        %v2359 = vunpack.c.l.b16 %v1930
        %v2360 = vunpack.c.h.b16 %v1930
        %v2361 = vunpack.c.l.b16 %v1931
        %v2362 = vunpack.c.l.b16 %v1932
        %v2363 = vunpack.c.h.b16 %v1932
        %v2364 = vunpack.c.l.b16 %v1933
        %v2365 = vunpack.c.l.b16 %v1934
        %v2366 = vunpack.c.h.b16 %v1934
        %v2367 = vunpack.c.l.b16 %v1935
        %v2368 = vunpack.c.l.b16 %v1936
        %v2369 = vunpack.c.h.b16 %v1936
        %v2370 = vunpack.c.l.b16 %v1937
        %v2371 = vunpack.c.l.b16 %v1938
        %v2372 = vunpack.c.h.b16 %v1938
        %v2373 = vunpack.c.l.b16 %v1939
        %v2374 = vunpack.c.l.b16 %v1940
        %v2375 = vunpack.c.h.b16 %v1940
        %v2376 = vunpack.c.l.b16 %v1941
        %v2377 = vunpack.c.l.b16 %v1942
        %v2378 = vunpack.c.h.b16 %v1942
        %v2379 = vunpack.c.l.b16 %v1943
        %v2380 = vunpack.c.l.b16 %v1944
        %v2381 = vunpack.c.h.b16 %v1944
        %v2382 = vunpack.c.l.b16 %v1945
        %v2383 = vunpack.c.l.b16 %v1946
        %v2384 = vunpack.c.h.b16 %v1946
        %v2385 = vunpack.c.l.b16 %v1947
        %v2386 = vunpack.c.l.b16 %v1948
        %v2387 = vunpack.c.h.b16 %v1948
        %v2388 = vunpack.c.l.b16 %v1949
        %v2389 = vunpack.c.l.b16 %v1950
        %v2390 = vunpack.c.h.b16 %v1950
        %v2391 = vunpack.c.l.b16 %v1951
        %v2392 = vunpack.c.l.b16 %v1952
        %v2393 = vunpack.c.h.b16 %v1952
        %v2394 = vunpack.c.l.b16 %v1953
        %v2395 = vunpack.c.l.b16 %v1954
        %v2396 = vunpack.c.h.b16 %v1954
        %v2397 = vunpack.c.l.b16 %v1955
        %v2398 = vunpack.c.l.b16 %v1956
        %v2399 = vunpack.c.h.b16 %v1956
        %v2400 = vunpack.c.l.b16 %v1957
        %v2401 = vunpack.c.l.b16 %v1958
        %v2402 = vunpack.c.h.b16 %v1958
        %v2403 = vunpack.c.l.b16 %v1959
        %v2404 = vunpack.c.l.b16 %v1960
        %v2405 = vunpack.c.h.b16 %v1960
        %v2406 = vunpack.c.l.b16 %v1961
        %v2407 = vunpack.c.l.b16 %v1962
        %v2408 = vunpack.c.h.b16 %v1962
        %v2409 = vunpack.c.l.b16 %v1963
        %v2410 = vunpack.c.l.b16 %v1964
        %v2411 = vunpack.c.h.b16 %v1964
        %v2412 = vunpack.c.l.b16 %v1965
        %v2413 = vunpack.c.l.b16 %v1966
        %v2414 = vunpack.c.h.b16 %v1966
        %v2415 = vunpack.c.l.b16 %v1967
        %v2416 = vunpack.c.l.b16 %v1968
        %v2417 = vunpack.c.h.b16 %v1968
        %v2418 = vunpack.c.l.b16 %v1969
        %v2419 = vunpack.c.l.b16 %v1970
        %v2420 = vunpack.c.h.b16 %v1970
        %v2421 = vunpack.c.l.b16 %v1971
        %v2422 = vunpack.c.l.b16 %v1972
        %v2423 = vunpack.c.h.b16 %v1972
        %v2424 = vunpack.c.l.b16 %v1973
        %v2425 = vunpack.c.l.b16 %v1974
        %v2426 = vunpack.c.h.b16 %v1974
        %v2427 = vunpack.c.l.b16 %v1975
        %v2428 = vunpack.c.l.b16 %v1976
        %v2429 = vunpack.c.h.b16 %v1976
        %v2430 = vunpack.c.l.b16 %v1977
        %v2431 = vunpack.c.l.b16 %v1978
        %v2432 = vunpack.c.h.b16 %v1978
        %v2433 = vunpack.c.l.b16 %v1979
        %v2434 = vunpack.c.l.b16 %v1980
        %v2435 = vunpack.c.h.b16 %v1980
        %v2436 = vunpack.c.l.b16 %v1981
        %v2437 = vunpack.c.l.b16 %v1982
        %v2438 = vunpack.c.h.b16 %v1982
        %v2439 = vunpack.c.l.b16 %v1983
        %v2440 = vunpack.c.l.b16 %v1984
        %v2441 = vunpack.c.h.b16 %v1984
        %v2442 = vunpack.c.l.b16 %v1985
        %v2443 = vunpack.c.l.b16 %v1986
        %v2444 = vunpack.c.h.b16 %v1986
        %v2445 = vunpack.c.l.b16 %v1987
        %v2446 = vunpack.c.l.b16 %v1988
        %v2447 = vunpack.c.h.b16 %v1988
        %v2448 = vunpack.c.l.b16 %v1989
        %v2449 = vunpack.c.l.b16 %v1990
        %v2450 = vunpack.c.h.b16 %v1990
        %v2451 = vunpack.c.l.b16 %v1991
        %v2452 = vunpack.c.l.b16 %v1992
        %v2453 = vunpack.c.h.b16 %v1992
        %v2454 = vunpack.c.l.b16 %v1993
        %v2455 = vunpack.c.l.b16 %v1994
        %v2456 = vunpack.c.h.b16 %v1994
        %v2457 = vunpack.c.l.b16 %v1995
        %v2458 = vunpack.c.l.b16 %v1996
        %v2459 = vunpack.c.h.b16 %v1996
        %v2460 = vunpack.c.l.b16 %v1997
        %v2461 = vunpack.c.l.b16 %v1998
        %v2462 = vunpack.c.h.b16 %v1998
        %v2463 = vunpack.c.l.b16 %v1999
        %v2464 = vunpack.c.l.b16 %v2000
        %v2465 = vunpack.c.h.b16 %v2000
        %v2466 = vunpack.c.l.b16 %v2001
        %v2467 = vunpack.c.l.b16 %v2002
        %v2468 = vunpack.c.h.b16 %v2002
        %v2469 = vunpack.c.l.b16 %v2003
        %v2470 = vunpack.c.l.b16 %v2004
        %v2471 = vunpack.c.h.b16 %v2004
        %v2472 = vunpack.c.l.b16 %v2005
        %v2473 = vunpack.c.l.b16 %v2006
        %v2474 = vunpack.c.h.b16 %v2006
        %v2475 = vunpack.c.l.b16 %v2007
        %v2476 = vunpack.c.l.b16 %v2008
        %v2477 = vunpack.c.h.b16 %v2008
        %v2478 = vunpack.c.l.b16 %v2009
        %v2479 = vunpack.c.l.b16 %v2010
        %v2480 = vunpack.c.h.b16 %v2010
        %v2481 = vunpack.c.l.b16 %v2011
        %v2482 = vunpack.c.l.b16 %v2012
        %v2483 = vunpack.c.h.b16 %v2012
        %v2484 = vunpack.c.l.b16 %v2013
        %v2485 = vunpack.c.l.b16 %v2014
        %v2486 = vunpack.c.h.b16 %v2014
        %v2487 = vunpack.c.l.b16 %v2015
        %v2488 = vunpack.c.l.b16 %v2016
        %v2489 = vunpack.c.h.b16 %v2016
        %v2490 = vunpack.c.l.b16 %v2017
        %v2491 = vunpack.c.l.b16 %v2018
        %v2492 = vunpack.c.h.b16 %v2018
        %v2493 = vunpack.c.l.b16 %v2019
        %v2494 = vunpack.c.l.b16 %v2020
        %v2495 = vunpack.c.h.b16 %v2020
        %v2496 = vunpack.c.l.b16 %v2021
        %v2497 = vunpack.c.l.b16 %v2022
        %v2498 = vunpack.c.h.b16 %v2022
        %v2499 = vunpack.c.l.b16 %v2023
        %v2500 = vunpack.c.l.b16 %v2024
        %v2501 = vunpack.c.h.b16 %v2024
        %v2502 = vunpack.c.l.b16 %v2025
        %v2503 = vunpack.c.l.b16 %v2026
        %v2504 = vunpack.c.h.b16 %v2026
        %v2505 = vunpack.c.l.b16 %v2027
        %v2506 = vunpack.c.l.b16 %v2028
        %v2507 = vunpack.c.h.b16 %v2028
        %v2508 = vunpack.c.l.b16 %v2029
        %v2509 = vunpack.c.l.b16 %v2030
        %v2510 = vunpack.c.h.b16 %v2030
        %v2511 = vunpack.c.l.b16 %v2031
        %v2512 = vunpack.c.l.b16 %v2032
        %v2513 = vunpack.c.h.b16 %v2032
        %v2514 = vunpack.c.l.b16 %v2033
        %v2515 = vunpack.c.l.b16 %v2034
        %v2516 = vunpack.c.h.b16 %v2034
        %v2517 = vunpack.c.l.b16 %v2035
        %v2518 = vunpack.c.l.b16 %v2036
        %v2519 = vunpack.c.h.b16 %v2036
        %v2520 = vunpack.c.l.b16 %v2037
        %v2521 = vunpack.c.l.b16 %v2038
        %v2522 = vunpack.c.h.b16 %v2038
        %v2523 = vunpack.c.l.b16 %v2039
        %v2524 = vunpack.c.l.b16 %v2040
        %v2525 = vunpack.c.h.b16 %v2040
        %v2526 = vunpack.c.l.b16 %v2041
        %v2527 = vunpack.c.l.b16 %v2042
        %v2528 = vunpack.c.h.b16 %v2042
        %v2529 = vunpack.c.l.b16 %v2043
        %v2530 = vunpack.c.l.b16 %v2044
        %v2531 = vunpack.c.h.b16 %v2044
        %v2532 = vunpack.c.l.b16 %v2045
        %v2533 = vunpack.c.l.b16 %v2046
        %v2534 = vunpack.c.h.b16 %v2046
        %v2535 = vunpack.c.l.b16 %v2047
        %v2536 = vunpack.c.l.b16 %v2048
        %v2537 = vunpack.c.h.b16 %v2048
        %v2538 = vunpack.c.l.b16 %v2049
        %v2539 = vunpack.c.l.b16 %v2050
        %v2540 = vunpack.c.h.b16 %v2050
        %v2541 = vunpack.c.l.b16 %v2051
        %v2542 = vunpack.c.l.b16 %v2052
        %v2543 = vunpack.c.h.b16 %v2052
        %v2544 = vunpack.c.l.b16 %v2053
        %v2545 = vunpack.c.l.b16 %v2054
        %v2546 = vunpack.c.h.b16 %v2054
        %v2547 = vunpack.c.l.b16 %v2055
        %v2548 = vunpack.c.l.b16 %v2056
        %v2549 = vunpack.c.h.b16 %v2056
        %v2550 = vunpack.c.l.b16 %v2057
        %v2551 = vunpack.c.l.b16 %v2058
        %v2552 = vunpack.c.h.b16 %v2058
        %v2553 = vunpack.c.l.b16 %v2059
        %v2554 = vunpack.c.l.b16 %v2060
        %v2555 = vunpack.c.h.b16 %v2060
        %v2556 = vunpack.c.l.b16 %v2061
        %v2557 = vunpack.c.l.b16 %v2062
        %v2558 = vunpack.c.h.b16 %v2062
        %v2559 = vunpack.c.l.b16 %v2063
        %v2560 = vunpack.c.l.b16 %v2064
        %v2561 = vunpack.c.h.b16 %v2064
        %v2562 = vunpack.c.l.b16 %v2065
        %v2563 = vpack.c.b16 %v2278, %v2275
        %v2564 = vpack.c.b16 %v2279, %v2276
        %v2565 = vpack.c.b16 %v2280, %v2277
        %v2566 = vpack.c.b16 %v2284, %v2281
        %v2567 = vpack.c.b16 %v2285, %v2282
        %v2568 = vpack.c.b16 %v2286, %v2283
        %v2569 = vpack.c.b16 %v2290, %v2287
        %v2570 = vpack.c.b16 %v2291, %v2288
        %v2571 = vpack.c.b16 %v2292, %v2289
        %v2572 = vpack.c.b16 %v2296, %v2293
        %v2573 = vpack.c.b16 %v2297, %v2294
        %v2574 = vpack.c.b16 %v2298, %v2295
        %v2575 = vpack.c.b16 %v2302, %v2299
        %v2576 = vpack.c.b16 %v2303, %v2300
        %v2577 = vpack.c.b16 %v2304, %v2301
        %v2578 = vpack.c.b16 %v2308, %v2305
        %v2579 = vpack.c.b16 %v2309, %v2306
        %v2580 = vpack.c.b16 %v2310, %v2307
        %v2581 = vpack.c.b16 %v2314, %v2311
        %v2582 = vpack.c.b16 %v2315, %v2312
        %v2583 = vpack.c.b16 %v2316, %v2313
        %v2584 = vpack.c.b16 %v2320, %v2317
        %v2585 = vpack.c.b16 %v2321, %v2318
        %v2586 = vpack.c.b16 %v2322, %v2319
        %v2587 = vpack.c.b16 %v2326, %v2323
        %v2588 = vpack.c.b16 %v2327, %v2324
        %v2589 = vpack.c.b16 %v2328, %v2325
        %v2590 = vpack.c.b16 %v2332, %v2329
        %v2591 = vpack.c.b16 %v2333, %v2330
        %v2592 = vpack.c.b16 %v2334, %v2331
        %v2593 = vpack.c.b16 %v2338, %v2335
        %v2594 = vpack.c.b16 %v2339, %v2336
        %v2595 = vpack.c.b16 %v2340, %v2337
        %v2596 = vpack.c.b16 %v2344, %v2341
        %v2597 = vpack.c.b16 %v2345, %v2342
        %v2598 = vpack.c.b16 %v2346, %v2343
        %v2599 = vpack.c.b16 %v2350, %v2347
        %v2600 = vpack.c.b16 %v2351, %v2348
        %v2601 = vpack.c.b16 %v2352, %v2349
        %v2602 = vpack.c.b16 %v2356, %v2353
        %v2603 = vpack.c.b16 %v2357, %v2354
        %v2604 = vpack.c.b16 %v2358, %v2355
        %v2605 = vpack.c.b16 %v2362, %v2359
        %v2606 = vpack.c.b16 %v2363, %v2360
        %v2607 = vpack.c.b16 %v2364, %v2361
        %v2608 = vpack.c.b16 %v2368, %v2365
        %v2609 = vpack.c.b16 %v2369, %v2366
        %v2610 = vpack.c.b16 %v2370, %v2367
        %v2611 = vpack.c.b16 %v2374, %v2371
        %v2612 = vpack.c.b16 %v2375, %v2372
        %v2613 = vpack.c.b16 %v2376, %v2373
        %v2614 = vpack.c.b16 %v2380, %v2377
        %v2615 = vpack.c.b16 %v2381, %v2378
        %v2616 = vpack.c.b16 %v2382, %v2379
        %v2617 = vpack.c.b16 %v2386, %v2383
        %v2618 = vpack.c.b16 %v2387, %v2384
        %v2619 = vpack.c.b16 %v2388, %v2385
        %v2620 = vpack.c.b16 %v2392, %v2389
        %v2621 = vpack.c.b16 %v2393, %v2390
        %v2622 = vpack.c.b16 %v2394, %v2391
        %v2623 = vpack.c.b16 %v2398, %v2395
        %v2624 = vpack.c.b16 %v2399, %v2396
        %v2625 = vpack.c.b16 %v2400, %v2397
        %v2626 = vpack.c.b16 %v2404, %v2401
        %v2627 = vpack.c.b16 %v2405, %v2402
        %v2628 = vpack.c.b16 %v2406, %v2403
        %v2629 = vpack.c.b16 %v2410, %v2407
        %v2630 = vpack.c.b16 %v2411, %v2408
        %v2631 = vpack.c.b16 %v2412, %v2409
        %v2632 = vpack.c.b16 %v2416, %v2413
        %v2633 = vpack.c.b16 %v2417, %v2414
        %v2634 = vpack.c.b16 %v2418, %v2415
        %v2635 = vpack.c.b16 %v2422, %v2419
        %v2636 = vpack.c.b16 %v2423, %v2420
        %v2637 = vpack.c.b16 %v2424, %v2421
        %v2638 = vpack.c.b16 %v2428, %v2425
        %v2639 = vpack.c.b16 %v2429, %v2426
        %v2640 = vpack.c.b16 %v2430, %v2427
        %v2641 = vpack.c.b16 %v2434, %v2431
        %v2642 = vpack.c.b16 %v2435, %v2432
        %v2643 = vpack.c.b16 %v2436, %v2433
        %v2644 = vpack.c.b16 %v2440, %v2437
        %v2645 = vpack.c.b16 %v2441, %v2438
        %v2646 = vpack.c.b16 %v2442, %v2439
        %v2647 = vpack.c.b16 %v2446, %v2443
        %v2648 = vpack.c.b16 %v2447, %v2444
        %v2649 = vpack.c.b16 %v2448, %v2445
        %v2650 = vpack.c.b16 %v2452, %v2449
        %v2651 = vpack.c.b16 %v2453, %v2450
        %v2652 = vpack.c.b16 %v2454, %v2451
        %v2653 = vpack.c.b16 %v2458, %v2455
        %v2654 = vpack.c.b16 %v2459, %v2456
        %v2655 = vpack.c.b16 %v2460, %v2457
        %v2656 = vpack.c.b16 %v2464, %v2461
        %v2657 = vpack.c.b16 %v2465, %v2462
        %v2658 = vpack.c.b16 %v2466, %v2463
        %v2659 = vpack.c.b16 %v2470, %v2467
        %v2660 = vpack.c.b16 %v2471, %v2468
        %v2661 = vpack.c.b16 %v2472, %v2469
        %v2662 = vpack.c.b16 %v2476, %v2473
        %v2663 = vpack.c.b16 %v2477, %v2474
        %v2664 = vpack.c.b16 %v2478, %v2475
        %v2665 = vpack.c.b16 %v2482, %v2479
        %v2666 = vpack.c.b16 %v2483, %v2480
        %v2667 = vpack.c.b16 %v2484, %v2481
        %v2668 = vpack.c.b16 %v2488, %v2485
        %v2669 = vpack.c.b16 %v2489, %v2486
        %v2670 = vpack.c.b16 %v2490, %v2487
        %v2671 = vpack.c.b16 %v2494, %v2491
        %v2672 = vpack.c.b16 %v2495, %v2492
        %v2673 = vpack.c.b16 %v2496, %v2493
        %v2674 = vpack.c.b16 %v2500, %v2497
        %v2675 = vpack.c.b16 %v2501, %v2498
        %v2676 = vpack.c.b16 %v2502, %v2499
        %v2677 = vpack.c.b16 %v2506, %v2503
        %v2678 = vpack.c.b16 %v2507, %v2504
        %v2679 = vpack.c.b16 %v2508, %v2505
        %v2680 = vpack.c.b16 %v2512, %v2509
        %v2681 = vpack.c.b16 %v2513, %v2510
        %v2682 = vpack.c.b16 %v2514, %v2511
        %v2683 = vpack.c.b16 %v2518, %v2515
        %v2684 = vpack.c.b16 %v2519, %v2516
        %v2685 = vpack.c.b16 %v2520, %v2517
        %v2686 = vpack.c.b16 %v2524, %v2521
        %v2687 = vpack.c.b16 %v2525, %v2522
        %v2688 = vpack.c.b16 %v2526, %v2523
        %v2689 = vpack.c.b16 %v2530, %v2527
        %v2690 = vpack.c.b16 %v2531, %v2528
        %v2691 = vpack.c.b16 %v2532, %v2529
        %v2692 = vpack.c.b16 %v2536, %v2533
        %v2693 = vpack.c.b16 %v2537, %v2534
        %v2694 = vpack.c.b16 %v2538, %v2535
        %v2695 = vpack.c.b16 %v2542, %v2539
        %v2696 = vpack.c.b16 %v2543, %v2540
        %v2697 = vpack.c.b16 %v2544, %v2541
        %v2698 = vpack.c.b16 %v2548, %v2545
        %v2699 = vpack.c.b16 %v2549, %v2546
        %v2700 = vpack.c.b16 %v2550, %v2547
        %v2701 = vpack.c.b16 %v2554, %v2551
        %v2702 = vpack.c.b16 %v2555, %v2552
        %v2703 = vpack.c.b16 %v2556, %v2553
        %v2704 = vpack.c.b16 %v2560, %v2557
        %v2705 = vpack.c.b16 %v2561, %v2558
        %v2706 = vpack.c.b16 %v2562, %v2559
        %2851 = vmatprep.subr.bf16.mxu0 %v2564
        %2852 = vmatpush1.bf16.msra.mxu0 %v2563
        %2853 = vmatprep.subr.bf16.mxu0 %v2567
        %2854 = vmatpush1.bf16.msra.mxu0 %v2566
        %2855 = vmatprep.subr.bf16.mxu0 %v2570
        %2856 = vmatpush1.bf16.msra.mxu0 %v2569
        %2857 = vmatprep.subr.bf16.mxu0 %v2573
        %2858 = vmatpush1.bf16.msra.mxu0 %v2572
        %2859 = vmatprep.subr.bf16.mxu0 %v2576
        %2860 = vmatpush1.bf16.msra.mxu0 %v2575
        %2861 = vmatprep.subr.bf16.mxu0 %v2579
        %2862 = vmatpush1.bf16.msra.mxu0 %v2578
        %2863 = vmatprep.subr.bf16.mxu0 %v2582
        %2864 = vmatpush1.bf16.msra.mxu0 %v2581
        %2865 = vmatprep.subr.bf16.mxu0 %v2585
        %2866 = vmatpush1.bf16.msra.mxu0 %v2584
        %2867 = vmatprep.subr.bf16.mxu0 %v2588
        %2868 = vmatpush1.bf16.msra.mxu0 %v2587
        %2869 = vmatprep.subr.bf16.mxu0 %v2591
        %2870 = vmatpush1.bf16.msra.mxu0 %v2590
        %2871 = vmatprep.subr.bf16.mxu0 %v2594
        %2872 = vmatpush1.bf16.msra.mxu0 %v2593
        %2873 = vmatprep.subr.bf16.mxu0 %v2597
        %2874 = vmatpush1.bf16.msra.mxu0 %v2596
        %2875 = vmatprep.subr.bf16.mxu0 %v2600
        %2876 = vmatpush1.bf16.msra.mxu0 %v2599
        %2877 = vmatprep.subr.bf16.mxu0 %v2603
        %2878 = vmatpush1.bf16.msra.mxu0 %v2602
        %2879 = vmatprep.subr.bf16.mxu0 %v2606
        %2880 = vmatpush1.bf16.msra.mxu0 %v2605
        %2881 = vmatprep.subr.bf16.mxu0 %v2609
        %2882 = vmatpush1.bf16.msra.mxu0 %v2608
        %2883 = vmatprep.mubr.bf16.mxu0 %v1601
        %2884 = vmatmul.mubr.bf16.gmra.mrb[0].mxu0 %v1600
        %v2885 = vpop.f32.mrb[0].mxu0
        %v2886 = vadd.f32 %v2071, %v2885
        %v2887 = vpop.f32.mrb[0].mxu0
        %v2888 = vadd.f32 %v2075, %v2887
        %v2889 = vpop.f32.mrb[0].mxu0
        %v2890 = vadd.f32 %v2071, %v2889
        %v2891 = vpop.f32.mrb[0].mxu0
        %v2892 = vadd.f32 %v2075, %v2891
        %2893 = vmatprep.mubr.bf16.mxu0 %v1603
        %2894 = vmatmul.mubr.bf16.gmra.mrb[0].mxu0 %v1602
        %v2895 = vpop.f32.mrb[0].mxu0
        %v2896 = vadd.f32 %v2071, %v2895
        %v2897 = vpop.f32.mrb[0].mxu0
        %v2898 = vadd.f32 %v2075, %v2897
        %v2899 = vpop.f32.mrb[0].mxu0
        %v2900 = vadd.f32 %v2071, %v2899
        %v2901 = vpop.f32.mrb[0].mxu0
        %v2902 = vadd.f32 %v2075, %v2901
        %2903 = vmatprep.mubr.bf16.mxu0 %v1605
        %2904 = vmatmul.mubr.bf16.gmra.mrb[0].mxu0 %v1604
        %v2905 = vpop.f32.mrb[0].mxu0
        %v2906 = vadd.f32 %v2071, %v2905
        %v2907 = vpop.f32.mrb[0].mxu0
        %v2908 = vadd.f32 %v2075, %v2907
        %v2909 = vpop.f32.mrb[0].mxu0
        %v2910 = vadd.f32 %v2071, %v2909
        %v2911 = vpop.f32.mrb[0].mxu0
        %v2912 = vadd.f32 %v2075, %v2911
        %2913 = vmatprep.mubr.bf16.mxu0 %v1607
        %2914 = vmatmul.mubr.bf16.gmra.mrb[0].mxu0 %v1606
        %v2915 = vpop.f32.mrb[0].mxu0
        %v2916 = vadd.f32 %v2071, %v2915
        %v2917 = vpop.f32.mrb[0].mxu0
        %v2918 = vadd.f32 %v2075, %v2917
        %v2919 = vpop.f32.mrb[0].mxu0
        %v2920 = vadd.f32 %v2071, %v2919
        %v2921 = vpop.f32.mrb[0].mxu0
        %v2922 = vadd.f32 %v2075, %v2921
        %2923 = vmatprep.mubr.bf16.mxu0 %v1609
        %2924 = vmatmul.mubr.bf16.gmra.mrb[0].mxu0 %v1608
        %v2925 = vpop.f32.mrb[0].mxu0
        %v2926 = vadd.f32 %v2071, %v2925
        %v2927 = vpop.f32.mrb[0].mxu0
        %v2928 = vadd.f32 %v2075, %v2927
        %v2929 = vpop.f32.mrb[0].mxu0
        %v2930 = vadd.f32 %v2071, %v2929
        %v2931 = vpop.f32.mrb[0].mxu0
        %v2932 = vadd.f32 %v2075, %v2931
        %2933 = vmatprep.mubr.bf16.mxu0 %v1611
        %2934 = vmatmul.mubr.bf16.gmra.mrb[0].mxu0 %v1610
        %v2935 = vpop.f32.mrb[0].mxu0
        %v2936 = vadd.f32 %v2071, %v2935
        %v2937 = vpop.f32.mrb[0].mxu0
        %v2938 = vadd.f32 %v2075, %v2937
        %v2939 = vpop.f32.mrb[0].mxu0
        %v2940 = vadd.f32 %v2071, %v2939
        %v2941 = vpop.f32.mrb[0].mxu0
        %v2942 = vadd.f32 %v2075, %v2941
        %2943 = vmatprep.mubr.bf16.mxu0 %v1613
        %2944 = vmatmul.mubr.bf16.gmra.mrb[0].mxu0 %v1612
        %v2945 = vpop.f32.mrb[0].mxu0
        %v2946 = vadd.f32 %v2071, %v2945
        %v2947 = vpop.f32.mrb[0].mxu0
        %v2948 = vadd.f32 %v2075, %v2947
        %v2949 = vpop.f32.mrb[0].mxu0
        %v2950 = vadd.f32 %v2071, %v2949
        %v2951 = vpop.f32.mrb[0].mxu0
        %v2952 = vadd.f32 %v2075, %v2951
        %2953 = vdwg.mxu0
        %2954 = vmatprep.subr.bf16.mxu0 %v2612
        %2955 = vmatpush1.bf16.msra.mxu0 %v2611
        %2956 = vmatprep.subr.bf16.mxu0 %v2615
        %2957 = vmatpush1.bf16.msra.mxu0 %v2614
        %2958 = vmatprep.subr.bf16.mxu0 %v2618
        %2959 = vmatpush1.bf16.msra.mxu0 %v2617
        %2960 = vmatprep.subr.bf16.mxu0 %v2621
        %2961 = vmatpush1.bf16.msra.mxu0 %v2620
        %2962 = vmatprep.subr.bf16.mxu0 %v2624
        %2963 = vmatpush1.bf16.msra.mxu0 %v2623
        %2964 = vmatprep.subr.bf16.mxu0 %v2627
        %2965 = vmatpush1.bf16.msra.mxu0 %v2626
        %2966 = vmatprep.subr.bf16.mxu0 %v2630
        %2967 = vmatpush1.bf16.msra.mxu0 %v2629
        %2968 = vmatprep.subr.bf16.mxu0 %v2633
        %2969 = vmatpush1.bf16.msra.mxu0 %v2632
        %2970 = vmatprep.subr.bf16.mxu0 %v2636
        %2971 = vmatpush1.bf16.msra.mxu0 %v2635
        %2972 = vmatprep.subr.bf16.mxu0 %v2639
        %2973 = vmatpush1.bf16.msra.mxu0 %v2638
        %2974 = vmatprep.subr.bf16.mxu0 %v2642
        %2975 = vmatpush1.bf16.msra.mxu0 %v2641
        %2976 = vmatprep.subr.bf16.mxu0 %v2645
        %2977 = vmatpush1.bf16.msra.mxu0 %v2644
        %2978 = vmatprep.subr.bf16.mxu0 %v2648
        %2979 = vmatpush1.bf16.msra.mxu0 %v2647
        %2980 = vmatprep.subr.bf16.mxu0 %v2651
        %2981 = vmatpush1.bf16.msra.mxu0 %v2650
        %2982 = vmatprep.subr.bf16.mxu0 %v2654
        %2983 = vmatpush1.bf16.msra.mxu0 %v2653
        %2984 = vmatprep.subr.bf16.mxu0 %v2657
        %2985 = vmatpush1.bf16.msra.mxu0 %v2656
        %2986 = vmatprep.mubr.bf16.mxu0 %v1713
        %2987 = vmatmul.mubr.bf16.gmra.mrb[0].mxu0 %v1701
        %v2988 = vpop.f32.mrb[0].mxu0
        %v2989 = vadd.f32 %v2886, %v2988
        %v2990 = vpop.f32.mrb[0].mxu0
        %v2991 = vadd.f32 %v2888, %v2990
        %v2992 = vpop.f32.mrb[0].mxu0
        %v2993 = vadd.f32 %v2890, %v2992
        %v2994 = vpop.f32.mrb[0].mxu0
        %v2995 = vadd.f32 %v2892, %v2994
        %2996 = vmatprep.mubr.bf16.mxu0 %v1729
        %2997 = vmatmul.mubr.bf16.gmra.mrb[0].mxu0 %v1721
        %v2998 = vpop.f32.mrb[0].mxu0
        %v2999 = vadd.f32 %v2896, %v2998
        %v3000 = vpop.f32.mrb[0].mxu0
        %v3001 = vadd.f32 %v2898, %v3000
        %v3002 = vpop.f32.mrb[0].mxu0
        %v3003 = vadd.f32 %v2900, %v3002
        %v3004 = vpop.f32.mrb[0].mxu0
        %v3005 = vadd.f32 %v2902, %v3004
        %3006 = vmatprep.mubr.bf16.mxu0 %v1745
        %3007 = vmatmul.mubr.bf16.gmra.mrb[0].mxu0 %v1737
        %v3008 = vpop.f32.mrb[0].mxu0
        %v3009 = vadd.f32 %v2906, %v3008
        %v3010 = vpop.f32.mrb[0].mxu0
        %v3011 = vadd.f32 %v2908, %v3010
        %v3012 = vpop.f32.mrb[0].mxu0
        %v3013 = vadd.f32 %v2910, %v3012
        %v3014 = vpop.f32.mrb[0].mxu0
        %v3015 = vadd.f32 %v2912, %v3014
        %3016 = vmatprep.mubr.bf16.mxu0 %v1761
        %3017 = vmatmul.mubr.bf16.gmra.mrb[0].mxu0 %v1753
        %v3018 = vpop.f32.mrb[0].mxu0
        %v3019 = vadd.f32 %v2916, %v3018
        %v3020 = vpop.f32.mrb[0].mxu0
        %v3021 = vadd.f32 %v2918, %v3020
        %v3022 = vpop.f32.mrb[0].mxu0
        %v3023 = vadd.f32 %v2920, %v3022
        %v3024 = vpop.f32.mrb[0].mxu0
        %v3025 = vadd.f32 %v2922, %v3024
        %3026 = vmatprep.mubr.bf16.mxu0 %v1777
        %3027 = vmatmul.mubr.bf16.gmra.mrb[0].mxu0 %v1769
        %v3028 = vpop.f32.mrb[0].mxu0
        %v3029 = vadd.f32 %v2926, %v3028
        %v3030 = vpop.f32.mrb[0].mxu0
        %v3031 = vadd.f32 %v2928, %v3030
        %v3032 = vpop.f32.mrb[0].mxu0
        %v3033 = vadd.f32 %v2930, %v3032
        %v3034 = vpop.f32.mrb[0].mxu0
        %v3035 = vadd.f32 %v2932, %v3034
        %3036 = vmatprep.mubr.bf16.mxu0 %v1793
        %3037 = vmatmul.mubr.bf16.gmra.mrb[0].mxu0 %v1785
        %v3038 = vpop.f32.mrb[0].mxu0
        %v3039 = vadd.f32 %v2936, %v3038
        %v3040 = vpop.f32.mrb[0].mxu0
        %v3041 = vadd.f32 %v2938, %v3040
        %v3042 = vpop.f32.mrb[0].mxu0
        %v3043 = vadd.f32 %v2940, %v3042
        %v3044 = vpop.f32.mrb[0].mxu0
        %v3045 = vadd.f32 %v2942, %v3044
        %3046 = vmatprep.mubr.bf16.mxu0 %v1809
        %3047 = vmatmul.mubr.bf16.gmra.mrb[0].mxu0 %v1801
        %v3048 = vpop.f32.mrb[0].mxu0
        %v3049 = vadd.f32 %v2946, %v3048
        %v3050 = vpop.f32.mrb[0].mxu0
        %v3051 = vadd.f32 %v2948, %v3050
        %v3052 = vpop.f32.mrb[0].mxu0
        %v3053 = vadd.f32 %v2950, %v3052
        %v3054 = vpop.f32.mrb[0].mxu0
        %v3055 = vadd.f32 %v2952, %v3054
        %3056 = vdwg.mxu0
        %3057 = vmatprep.subr.bf16.mxu0 %v2660
        %3058 = vmatpush1.bf16.msra.mxu0 %v2659
        %3059 = vmatprep.subr.bf16.mxu0 %v2663
        %3060 = vmatpush1.bf16.msra.mxu0 %v2662
        %3061 = vmatprep.subr.bf16.mxu0 %v2666
        %3062 = vmatpush1.bf16.msra.mxu0 %v2665
        %3063 = vmatprep.subr.bf16.mxu0 %v2669
        %3064 = vmatpush1.bf16.msra.mxu0 %v2668
        %3065 = vmatprep.subr.bf16.mxu0 %v2672
        %3066 = vmatpush1.bf16.msra.mxu0 %v2671
        %3067 = vmatprep.subr.bf16.mxu0 %v2675
        %3068 = vmatpush1.bf16.msra.mxu0 %v2674
        %3069 = vmatprep.subr.bf16.mxu0 %v2678
        %3070 = vmatpush1.bf16.msra.mxu0 %v2677
        %3071 = vmatprep.subr.bf16.mxu0 %v2681
        %3072 = vmatpush1.bf16.msra.mxu0 %v2680
        %3073 = vmatprep.subr.bf16.mxu0 %v2684
        %3074 = vmatpush1.bf16.msra.mxu0 %v2683
        %3075 = vmatprep.subr.bf16.mxu0 %v2687
        %3076 = vmatpush1.bf16.msra.mxu0 %v2686
        %3077 = vmatprep.subr.bf16.mxu0 %v2690
        %3078 = vmatpush1.bf16.msra.mxu0 %v2689
        %3079 = vmatprep.subr.bf16.mxu0 %v2693
        %3080 = vmatpush1.bf16.msra.mxu0 %v2692
        %3081 = vmatprep.subr.bf16.mxu0 %v2696
        %3082 = vmatpush1.bf16.msra.mxu0 %v2695
        %3083 = vmatprep.subr.bf16.mxu0 %v2699
        %3084 = vmatpush1.bf16.msra.mxu0 %v2698
        %3085 = vmatprep.subr.bf16.mxu0 %v2702
        %3086 = vmatpush1.bf16.msra.mxu0 %v2701
        %3087 = vmatprep.subr.bf16.mxu0 %v2705
        %3088 = vmatpush1.bf16.msra.mxu0 %v2704
        %3089 = vmatprep.mubr.bf16.mxu0 %v1835
        %3090 = vmatmul.mubr.bf16.gmra.mrb[0].mxu0 %v1832
        %v3091 = vpop.f32.mrb[0].mxu0
        %v3092 = vadd.f32 %v2989, %v3091
        %v3093 = vpop.f32.mrb[0].mxu0
        %v3094 = vadd.f32 %v2991, %v3093
        %v3095 = vpop.f32.mrb[0].mxu0
        %v3096 = vadd.f32 %v2993, %v3095
        %v3097 = vpop.f32.mrb[0].mxu0
        %v3098 = vadd.f32 %v2995, %v3097
        %3099 = vmatprep.mubr.bf16.mxu0 %v1839
        %3100 = vmatmul.mubr.bf16.gmra.mrb[0].mxu0 %v1837
        %v3101 = vpop.f32.mrb[0].mxu0
        %v3102 = vadd.f32 %v2999, %v3101
        %v3103 = vpop.f32.mrb[0].mxu0
        %v3104 = vadd.f32 %v3001, %v3103
        %v3105 = vpop.f32.mrb[0].mxu0
        %v3106 = vadd.f32 %v3003, %v3105
        %v3107 = vpop.f32.mrb[0].mxu0
        %v3108 = vadd.f32 %v3005, %v3107
        %3109 = vmatprep.mubr.bf16.mxu0 %v1843
        %3110 = vmatmul.mubr.bf16.gmra.mrb[0].mxu0 %v1841
        %v3111 = vpop.f32.mrb[0].mxu0
        %v3112 = vadd.f32 %v3009, %v3111
        %v3113 = vpop.f32.mrb[0].mxu0
        %v3114 = vadd.f32 %v3011, %v3113
        %v3115 = vpop.f32.mrb[0].mxu0
        %v3116 = vadd.f32 %v3013, %v3115
        %v3117 = vpop.f32.mrb[0].mxu0
        %v3118 = vadd.f32 %v3015, %v3117
        %3119 = vmatprep.mubr.bf16.mxu0 %v1847
        %3120 = vmatmul.mubr.bf16.gmra.mrb[0].mxu0 %v1845
        %v3121 = vpop.f32.mrb[0].mxu0
        %v3122 = vadd.f32 %v3019, %v3121
        %v3123 = vpop.f32.mrb[0].mxu0
        %v3124 = vadd.f32 %v3021, %v3123
        %v3125 = vpop.f32.mrb[0].mxu0
        %v3126 = vadd.f32 %v3023, %v3125
        %v3127 = vpop.f32.mrb[0].mxu0
        %v3128 = vadd.f32 %v3025, %v3127
        %3129 = vmatprep.mubr.bf16.mxu0 %v1851
        %3130 = vmatmul.mubr.bf16.gmra.mrb[0].mxu0 %v1849
        %v3131 = vpop.f32.mrb[0].mxu0
        %v3132 = vadd.f32 %v3029, %v3131
        %v3133 = vpop.f32.mrb[0].mxu0
        %v3134 = vadd.f32 %v3031, %v3133
        %v3135 = vpop.f32.mrb[0].mxu0
        %v3136 = vadd.f32 %v3033, %v3135
        %v3137 = vpop.f32.mrb[0].mxu0
        %v3138 = vadd.f32 %v3035, %v3137
        %3139 = vmatprep.mubr.bf16.mxu0 %v1855
        %3140 = vmatmul.mubr.bf16.gmra.mrb[0].mxu0 %v1853
        %v3141 = vpop.f32.mrb[0].mxu0
        %v3142 = vadd.f32 %v3039, %v3141
        %v3143 = vpop.f32.mrb[0].mxu0
        %v3144 = vadd.f32 %v3041, %v3143
        %v3145 = vpop.f32.mrb[0].mxu0
        %v3146 = vadd.f32 %v3043, %v3145
        %v3147 = vpop.f32.mrb[0].mxu0
        %v3148 = vadd.f32 %v3045, %v3147
        %3149 = vmatprep.mubr.bf16.mxu0 %v1859
        %3150 = vmatmul.mubr.bf16.gmra.mrb[0].mxu0 %v1857
        %v3151 = vpop.f32.mrb[0].mxu0
        %v3152 = vadd.f32 %v3049, %v3151
        %v3153 = vpop.f32.mrb[0].mxu0
        %v3154 = vadd.f32 %v3051, %v3153
        %v3155 = vpop.f32.mrb[0].mxu0
        %v3156 = vadd.f32 %v3053, %v3155
        %v3157 = vpop.f32.mrb[0].mxu0
        %v3158 = vadd.f32 %v3055, %v3157
        %3159 = vdwg.mxu0
        %3160 = vmatprep.subr.bf16.mxu0 0
        %3161 = vmatpush1.bf16.msra.mxu0 %v2565
        %3162 = vmatprep.subr.bf16.mxu0 0
        %3163 = vmatpush1.bf16.msra.mxu0 %v2568
        %3164 = vmatprep.subr.bf16.mxu0 0
        %3165 = vmatpush1.bf16.msra.mxu0 %v2571
        %3166 = vmatprep.subr.bf16.mxu0 0
        %3167 = vmatpush1.bf16.msra.mxu0 %v2574
        %3168 = vmatprep.subr.bf16.mxu0 0
        %3169 = vmatpush1.bf16.msra.mxu0 %v2577
        %3170 = vmatprep.subr.bf16.mxu0 0
        %3171 = vmatpush1.bf16.msra.mxu0 %v2580
        %3172 = vmatprep.subr.bf16.mxu0 0
        %3173 = vmatpush1.bf16.msra.mxu0 %v2583
        %3174 = vmatprep.subr.bf16.mxu0 0
        %3175 = vmatpush1.bf16.msra.mxu0 %v2586
        %3176 = vmatprep.subr.bf16.mxu0 0
        %3177 = vmatpush1.bf16.msra.mxu0 %v2589
        %3178 = vmatprep.subr.bf16.mxu0 0
        %3179 = vmatpush1.bf16.msra.mxu0 %v2592
        %3180 = vmatprep.subr.bf16.mxu0 0
        %3181 = vmatpush1.bf16.msra.mxu0 %v2595
        %3182 = vmatprep.subr.bf16.mxu0 0
        %3183 = vmatpush1.bf16.msra.mxu0 %v2598
        %3184 = vmatprep.subr.bf16.mxu0 0
        %3185 = vmatpush1.bf16.msra.mxu0 %v2601
        %3186 = vmatprep.subr.bf16.mxu0 0
        %3187 = vmatpush1.bf16.msra.mxu0 %v2604
        %3188 = vmatprep.subr.bf16.mxu0 0
        %3189 = vmatpush1.bf16.msra.mxu0 %v2607
        %3190 = vmatprep.subr.bf16.mxu0 0
        %3191 = vmatpush1.bf16.msra.mxu0 %v2610
        %3192 = vmatprep.mubr.bf16.mxu0 %v1601
        %3193 = vmatmul.mubr.bf16.gmra.mrb[0].mxu0 %v1600
        %v3194 = vpop.f32.mrb[0].mxu0
        %v3195 = vadd.f32 %v2079, %v3194
        %v3196 = vpop.f32.mrb[0].mxu0
        %v3197 = vpop.f32.mrb[0].mxu0
        %v3198 = vadd.f32 %v2079, %v3197
        %v3199 = vpop.f32.mrb[0].mxu0
        %3200 = vmatprep.mubr.bf16.mxu0 %v1603
        %3201 = vmatmul.mubr.bf16.gmra.mrb[0].mxu0 %v1602
        %v3202 = vpop.f32.mrb[0].mxu0
        %v3203 = vadd.f32 %v2079, %v3202
        %v3204 = vpop.f32.mrb[0].mxu0
        %v3205 = vpop.f32.mrb[0].mxu0
        %v3206 = vadd.f32 %v2079, %v3205
        %v3207 = vpop.f32.mrb[0].mxu0
        %3208 = vmatprep.mubr.bf16.mxu0 %v1605
        %3209 = vmatmul.mubr.bf16.gmra.mrb[0].mxu0 %v1604
        %v3210 = vpop.f32.mrb[0].mxu0
        %v3211 = vadd.f32 %v2079, %v3210
        %v3212 = vpop.f32.mrb[0].mxu0
        %v3213 = vpop.f32.mrb[0].mxu0
        %v3214 = vadd.f32 %v2079, %v3213
        %v3215 = vpop.f32.mrb[0].mxu0
        %3216 = vmatprep.mubr.bf16.mxu0 %v1607
        %3217 = vmatmul.mubr.bf16.gmra.mrb[0].mxu0 %v1606
        %v3218 = vpop.f32.mrb[0].mxu0
        %v3219 = vadd.f32 %v2079, %v3218
        %v3220 = vpop.f32.mrb[0].mxu0
        %v3221 = vpop.f32.mrb[0].mxu0
        %v3222 = vadd.f32 %v2079, %v3221
        %v3223 = vpop.f32.mrb[0].mxu0
        %3224 = vmatprep.mubr.bf16.mxu0 %v1609
        %3225 = vmatmul.mubr.bf16.gmra.mrb[0].mxu0 %v1608
        %v3226 = vpop.f32.mrb[0].mxu0
        %v3227 = vadd.f32 %v2079, %v3226
        %v3228 = vpop.f32.mrb[0].mxu0
        %v3229 = vpop.f32.mrb[0].mxu0
        %v3230 = vadd.f32 %v2079, %v3229
        %v3231 = vpop.f32.mrb[0].mxu0
        %3232 = vmatprep.mubr.bf16.mxu0 %v1611
        %3233 = vmatmul.mubr.bf16.gmra.mrb[0].mxu0 %v1610
        %v3234 = vpop.f32.mrb[0].mxu0
        %v3235 = vadd.f32 %v2079, %v3234
        %v3236 = vpop.f32.mrb[0].mxu0
        %v3237 = vpop.f32.mrb[0].mxu0
        %v3238 = vadd.f32 %v2079, %v3237
        %v3239 = vpop.f32.mrb[0].mxu0
        %3240 = vmatprep.mubr.bf16.mxu0 %v1613
        %3241 = vmatmul.mubr.bf16.gmra.mrb[0].mxu0 %v1612
        %v3242 = vpop.f32.mrb[0].mxu0
        %v3243 = vadd.f32 %v2079, %v3242
        %v3244 = vpop.f32.mrb[0].mxu0
        %v3245 = vpop.f32.mrb[0].mxu0
        %v3246 = vadd.f32 %v2079, %v3245
        %v3247 = vpop.f32.mrb[0].mxu0
        %3248 = vdwg.mxu0
        %3249 = vmatprep.subr.bf16.mxu0 0
        %3250 = vmatpush1.bf16.msra.mxu0 %v2613
        %3251 = vmatprep.subr.bf16.mxu0 0
        %3252 = vmatpush1.bf16.msra.mxu0 %v2616
        %3253 = vmatprep.subr.bf16.mxu0 0
        %3254 = vmatpush1.bf16.msra.mxu0 %v2619
        %3255 = vmatprep.subr.bf16.mxu0 0
        %3256 = vmatpush1.bf16.msra.mxu0 %v2622
        %3257 = vmatprep.subr.bf16.mxu0 0
        %3258 = vmatpush1.bf16.msra.mxu0 %v2625
        %3259 = vmatprep.subr.bf16.mxu0 0
        %3260 = vmatpush1.bf16.msra.mxu0 %v2628
        %3261 = vmatprep.subr.bf16.mxu0 0
        %3262 = vmatpush1.bf16.msra.mxu0 %v2631
        %3263 = vmatprep.subr.bf16.mxu0 0
        %3264 = vmatpush1.bf16.msra.mxu0 %v2634
        %3265 = vmatprep.subr.bf16.mxu0 0
        %3266 = vmatpush1.bf16.msra.mxu0 %v2637
        %3267 = vmatprep.subr.bf16.mxu0 0
        %3268 = vmatpush1.bf16.msra.mxu0 %v2640
        %3269 = vmatprep.subr.bf16.mxu0 0
        %3270 = vmatpush1.bf16.msra.mxu0 %v2643
        %3271 = vmatprep.subr.bf16.mxu0 0
        %3272 = vmatpush1.bf16.msra.mxu0 %v2646
        %3273 = vmatprep.subr.bf16.mxu0 0
        %3274 = vmatpush1.bf16.msra.mxu0 %v2649
        %3275 = vmatprep.subr.bf16.mxu0 0
        %3276 = vmatpush1.bf16.msra.mxu0 %v2652
        %3277 = vmatprep.subr.bf16.mxu0 0
        %3278 = vmatpush1.bf16.msra.mxu0 %v2655
        %3279 = vmatprep.subr.bf16.mxu0 0
        %3280 = vmatpush1.bf16.msra.mxu0 %v2658
        %3281 = vmatprep.mubr.bf16.mxu0 %v1713
        %3282 = vmatmul.mubr.bf16.gmra.mrb[0].mxu0 %v1701
        %v3283 = vpop.f32.mrb[0].mxu0
        %v3284 = vadd.f32 %v3195, %v3283
        %v3285 = vpop.f32.mrb[0].mxu0
        %v3286 = vpop.f32.mrb[0].mxu0
        %v3287 = vadd.f32 %v3198, %v3286
        %v3288 = vpop.f32.mrb[0].mxu0
        %3289 = vmatprep.mubr.bf16.mxu0 %v1729
        %3290 = vmatmul.mubr.bf16.gmra.mrb[0].mxu0 %v1721
        %v3291 = vpop.f32.mrb[0].mxu0
        %v3292 = vadd.f32 %v3203, %v3291
        %v3293 = vpop.f32.mrb[0].mxu0
        %v3294 = vpop.f32.mrb[0].mxu0
        %v3295 = vadd.f32 %v3206, %v3294
        %v3296 = vpop.f32.mrb[0].mxu0
        %3297 = vmatprep.mubr.bf16.mxu0 %v1745
        %3298 = vmatmul.mubr.bf16.gmra.mrb[0].mxu0 %v1737
        %v3299 = vpop.f32.mrb[0].mxu0
        %v3300 = vadd.f32 %v3211, %v3299
        %v3301 = vpop.f32.mrb[0].mxu0
        %v3302 = vpop.f32.mrb[0].mxu0
        %v3303 = vadd.f32 %v3214, %v3302
        %v3304 = vpop.f32.mrb[0].mxu0
        %3305 = vmatprep.mubr.bf16.mxu0 %v1761
        %3306 = vmatmul.mubr.bf16.gmra.mrb[0].mxu0 %v1753
        %v3307 = vpop.f32.mrb[0].mxu0
        %v3308 = vadd.f32 %v3219, %v3307
        %v3309 = vpop.f32.mrb[0].mxu0
        %v3310 = vpop.f32.mrb[0].mxu0
        %v3311 = vadd.f32 %v3222, %v3310
        %v3312 = vpop.f32.mrb[0].mxu0
        %3313 = vmatprep.mubr.bf16.mxu0 %v1777
        %3314 = vmatmul.mubr.bf16.gmra.mrb[0].mxu0 %v1769
        %v3315 = vpop.f32.mrb[0].mxu0
        %v3316 = vadd.f32 %v3227, %v3315
        %v3317 = vpop.f32.mrb[0].mxu0
        %v3318 = vpop.f32.mrb[0].mxu0
        %v3319 = vadd.f32 %v3230, %v3318
        %v3320 = vpop.f32.mrb[0].mxu0
        %3321 = vmatprep.mubr.bf16.mxu0 %v1793
        %3322 = vmatmul.mubr.bf16.gmra.mrb[0].mxu0 %v1785
        %v3323 = vpop.f32.mrb[0].mxu0
        %v3324 = vadd.f32 %v3235, %v3323
        %v3325 = vpop.f32.mrb[0].mxu0
        %v3326 = vpop.f32.mrb[0].mxu0
        %v3327 = vadd.f32 %v3238, %v3326
        %v3328 = vpop.f32.mrb[0].mxu0
        %3329 = vmatprep.mubr.bf16.mxu0 %v1809
        %3330 = vmatmul.mubr.bf16.gmra.mrb[0].mxu0 %v1801
        %v3331 = vpop.f32.mrb[0].mxu0
        %v3332 = vadd.f32 %v3243, %v3331
        %v3333 = vpop.f32.mrb[0].mxu0
        %v3334 = vpop.f32.mrb[0].mxu0
        %v3335 = vadd.f32 %v3246, %v3334
        %v3336 = vpop.f32.mrb[0].mxu0
        %3337 = vdwg.mxu0
        %3338 = vmatprep.subr.bf16.mxu0 0
        %3339 = vmatpush1.bf16.msra.mxu0 %v2661
        %3340 = vmatprep.subr.bf16.mxu0 0
        %3341 = vmatpush1.bf16.msra.mxu0 %v2664
        %3342 = vmatprep.subr.bf16.mxu0 0
        %3343 = vmatpush1.bf16.msra.mxu0 %v2667
        %3344 = vmatprep.subr.bf16.mxu0 0
        %3345 = vmatpush1.bf16.msra.mxu0 %v2670
        %3346 = vmatprep.subr.bf16.mxu0 0
        %3347 = vmatpush1.bf16.msra.mxu0 %v2673
        %3348 = vmatprep.subr.bf16.mxu0 0
        %3349 = vmatpush1.bf16.msra.mxu0 %v2676
        %3350 = vmatprep.subr.bf16.mxu0 0
        %3351 = vmatpush1.bf16.msra.mxu0 %v2679
        %3352 = vmatprep.subr.bf16.mxu0 0
        %3353 = vmatpush1.bf16.msra.mxu0 %v2682
        %3354 = vmatprep.subr.bf16.mxu0 0
        %3355 = vmatpush1.bf16.msra.mxu0 %v2685
        %3356 = vmatprep.subr.bf16.mxu0 0
        %3357 = vmatpush1.bf16.msra.mxu0 %v2688
        %3358 = vmatprep.subr.bf16.mxu0 0
        %3359 = vmatpush1.bf16.msra.mxu0 %v2691
        %3360 = vmatprep.subr.bf16.mxu0 0
        %3361 = vmatpush1.bf16.msra.mxu0 %v2694
        %3362 = vmatprep.subr.bf16.mxu0 0
        %3363 = vmatpush1.bf16.msra.mxu0 %v2697
        %3364 = vmatprep.subr.bf16.mxu0 0
        %3365 = vmatpush1.bf16.msra.mxu0 %v2700
        %3366 = vmatprep.subr.bf16.mxu0 0
        %3367 = vmatpush1.bf16.msra.mxu0 %v2703
        %3368 = vmatprep.subr.bf16.mxu0 0
        %3369 = vmatpush1.bf16.msra.mxu0 %v2706
        %3370 = vmatprep.mubr.bf16.mxu0 %v1835
        %3371 = vmatmul.mubr.bf16.gmra.mrb[0].mxu0 %v1832
        %v3372 = vpop.f32.mrb[0].mxu0
        %v3373 = vadd.f32 %v3284, %v3372
        %v3374 = vpop.f32.mrb[0].mxu0
        %v3375 = vpop.f32.mrb[0].mxu0
        %v3376 = vadd.f32 %v3287, %v3375
        %v3377 = vpop.f32.mrb[0].mxu0
        %3378 = vmatprep.mubr.bf16.mxu0 %v1839
        %3379 = vmatmul.mubr.bf16.gmra.mrb[0].mxu0 %v1837
        %v3380 = vpop.f32.mrb[0].mxu0
        %v3381 = vadd.f32 %v3292, %v3380
        %v3382 = vpop.f32.mrb[0].mxu0
        %v3383 = vpop.f32.mrb[0].mxu0
        %v3384 = vadd.f32 %v3295, %v3383
        %v3385 = vpop.f32.mrb[0].mxu0
        %3386 = vmatprep.mubr.bf16.mxu0 %v1843
        %3387 = vmatmul.mubr.bf16.gmra.mrb[0].mxu0 %v1841
        %v3388 = vpop.f32.mrb[0].mxu0
        %v3389 = vadd.f32 %v3300, %v3388
        %v3390 = vpop.f32.mrb[0].mxu0
        %v3391 = vpop.f32.mrb[0].mxu0
        %v3392 = vadd.f32 %v3303, %v3391
        %v3393 = vpop.f32.mrb[0].mxu0
        %3394 = vmatprep.mubr.bf16.mxu0 %v1847
        %3395 = vmatmul.mubr.bf16.gmra.mrb[0].mxu0 %v1845
        %v3396 = vpop.f32.mrb[0].mxu0
        %v3397 = vadd.f32 %v3308, %v3396
        %v3398 = vpop.f32.mrb[0].mxu0
        %v3399 = vpop.f32.mrb[0].mxu0
        %v3400 = vadd.f32 %v3311, %v3399
        %v3401 = vpop.f32.mrb[0].mxu0
        %3402 = vmatprep.mubr.bf16.mxu0 %v1851
        %3403 = vmatmul.mubr.bf16.gmra.mrb[0].mxu0 %v1849
        %v3404 = vpop.f32.mrb[0].mxu0
        %v3405 = vadd.f32 %v3316, %v3404
        %v3406 = vpop.f32.mrb[0].mxu0
        %v3407 = vpop.f32.mrb[0].mxu0
        %v3408 = vadd.f32 %v3319, %v3407
        %v3409 = vpop.f32.mrb[0].mxu0
        %3410 = vmatprep.mubr.bf16.mxu0 %v1855
        %3411 = vmatmul.mubr.bf16.gmra.mrb[0].mxu0 %v1853
        %v3412 = vpop.f32.mrb[0].mxu0
        %v3413 = vadd.f32 %v3324, %v3412
        %v3414 = vpop.f32.mrb[0].mxu0
        %v3415 = vpop.f32.mrb[0].mxu0
        %v3416 = vadd.f32 %v3327, %v3415
        %v3417 = vpop.f32.mrb[0].mxu0
        %3418 = vmatprep.mubr.bf16.mxu0 %v1859
        %3419 = vmatmul.mubr.bf16.gmra.mrb[0].mxu0 %v1857
        %v3420 = vpop.f32.mrb[0].mxu0
        %v3421 = vadd.f32 %v3332, %v3420
        %v3422 = vpop.f32.mrb[0].mxu0
        %v3423 = vpop.f32.mrb[0].mxu0
        %v3424 = vadd.f32 %v3335, %v3423
        %v3425 = vpop.f32.mrb[0].mxu0
        %3426 = vdwg.mxu0
        %v3427 = vmax.f32 %v3092, 0.0
        %v3428 = vmax.f32 %v3094, 0.0
        %v3429 = vmax.f32 %v3373, 0.0
        %v3430 = vmax.f32 %v3096, 0.0
        %v3431 = vmax.f32 %v3098, 0.0
        %v3432 = vmax.f32 %v3376, 0.0
        %v3433 = vmax.f32 %v3102, 0.0
        %v3434 = vmax.f32 %v3104, 0.0
        %v3435 = vmax.f32 %v3381, 0.0
        %v3436 = vmax.f32 %v3106, 0.0
        %v3437 = vmax.f32 %v3108, 0.0
        %v3438 = vmax.f32 %v3384, 0.0
        %v3439 = vmax.f32 %v3112, 0.0
        %v3440 = vmax.f32 %v3114, 0.0
        %v3441 = vmax.f32 %v3389, 0.0
        %v3442 = vmax.f32 %v3116, 0.0
        %v3443 = vmax.f32 %v3118, 0.0
        %v3444 = vmax.f32 %v3392, 0.0
        %v3445 = vmax.f32 %v3122, 0.0
        %v3446 = vmax.f32 %v3124, 0.0
        %v3447 = vmax.f32 %v3397, 0.0
        %v3448 = vmax.f32 %v3126, 0.0
        %v3449 = vmax.f32 %v3128, 0.0
        %v3450 = vmax.f32 %v3400, 0.0
        %v3451 = vmax.f32 %v3132, 0.0
        %v3452 = vmax.f32 %v3134, 0.0
        %v3453 = vmax.f32 %v3405, 0.0
        %v3454 = vmax.f32 %v3136, 0.0
        %v3455 = vmax.f32 %v3138, 0.0
        %v3456 = vmax.f32 %v3408, 0.0
        %v3457 = vmax.f32 %v3142, 0.0
        %v3458 = vmax.f32 %v3144, 0.0
        %v3459 = vmax.f32 %v3413, 0.0
        %v3460 = vmax.f32 %v3146, 0.0
        %v3461 = vmax.f32 %v3148, 0.0
        %v3462 = vmax.f32 %v3416, 0.0
        %v3463 = vmax.f32 %v3152, 0.0
        %v3464 = vmax.f32 %v3154, 0.0
        %v3465 = vmax.f32 %v3421, 0.0
        %v3466 = vmax.f32 %v3156, 0.0
        %v3467 = vmax.f32 %v3158, 0.0
        %v3468 = vmax.f32 %v3424, 0.0
        %v3469 = vpack.c.bf16 %v3430, %v3427
        %v3470 = vpack.c.bf16 %v3431, %v3428
        %v3471 = vpack.c.bf16 %v3432, %v3429
        %v3472 = vpack.c.bf16 %v3436, %v3433
        %v3473 = vpack.c.bf16 %v3437, %v3434
        %v3474 = vpack.c.bf16 %v3438, %v3435
        %v3475 = vpack.c.bf16 %v3442, %v3439
        %v3476 = vpack.c.bf16 %v3443, %v3440
        %v3477 = vpack.c.bf16 %v3444, %v3441
        %v3478 = vpack.c.bf16 %v3448, %v3445
        %v3479 = vpack.c.bf16 %v3449, %v3446
        %v3480 = vpack.c.bf16 %v3450, %v3447
        %v3481 = vpack.c.bf16 %v3454, %v3451
        %v3482 = vpack.c.bf16 %v3455, %v3452
        %v3483 = vpack.c.bf16 %v3456, %v3453
        %v3484 = vpack.c.bf16 %v3460, %v3457
        %v3485 = vpack.c.bf16 %v3461, %v3458
        %v3486 = vpack.c.bf16 %v3462, %v3459
        %v3487 = vpack.c.bf16 %v3466, %v3463
        %v3488 = vpack.c.bf16 %v3467, %v3464
        %v3489 = vpack.c.bf16 %v3468, %v3465
        %v3511 = vunpack.c.l.b16 %v3469
        %v3512 = vunpack.c.l.b16 %v3470
        %v3513 = vunpack.c.l.b16 %v3471
        %v3514 = vunpack.c.h.b16 %v3469
        %v3515 = vunpack.c.h.b16 %v3470
        %v3516 = vunpack.c.h.b16 %v3471
        %v3517 = vunpack.c.l.b16 %v3472
        %v3518 = vunpack.c.l.b16 %v3473
        %v3519 = vunpack.c.l.b16 %v3474
        %v3520 = vunpack.c.h.b16 %v3472
        %v3521 = vunpack.c.h.b16 %v3473
        %v3522 = vunpack.c.h.b16 %v3474
        %v3523 = vunpack.c.l.b16 %v3475
        %v3524 = vunpack.c.l.b16 %v3476
        %v3525 = vunpack.c.l.b16 %v3477
        %v3526 = vunpack.c.h.b16 %v3475
        %v3527 = vunpack.c.h.b16 %v3476
        %v3528 = vunpack.c.h.b16 %v3477
        %v3529 = vunpack.c.l.b16 %v3478
        %v3530 = vunpack.c.l.b16 %v3479
        %v3531 = vunpack.c.l.b16 %v3480
        %v3532 = vunpack.c.h.b16 %v3478
        %v3533 = vunpack.c.h.b16 %v3479
        %v3534 = vunpack.c.h.b16 %v3480
        %v3535 = vunpack.c.l.b16 %v3481
        %v3536 = vunpack.c.l.b16 %v3482
        %v3537 = vunpack.c.l.b16 %v3483
        %v3538 = vunpack.c.h.b16 %v3481
        %v3539 = vunpack.c.h.b16 %v3482
        %v3540 = vunpack.c.h.b16 %v3483
        %v3541 = vunpack.c.l.b16 %v3484
        %v3542 = vunpack.c.l.b16 %v3485
        %v3543 = vunpack.c.l.b16 %v3486
        %v3544 = vunpack.c.h.b16 %v3484
        %v3545 = vunpack.c.h.b16 %v3485
        %v3546 = vunpack.c.h.b16 %v3486
        %v3547 = vunpack.c.l.b16 %v3487
        %v3548 = vunpack.c.l.b16 %v3488
        %v3549 = vunpack.c.l.b16 %v3489
        %v3550 = vunpack.c.h.b16 %v3487
        %v3551 = vunpack.c.h.b16 %v3488
        %v3552 = vunpack.c.h.b16 %v3489
        %v3553 = vpack.c.b16 %v3512, %v3511
        %v3554 = vpack.c.b16 %v3513, %v3513
        %v3555 = vpack.c.b16 %v3515, %v3514
        %v3556 = vpack.c.b16 %v3516, %v3516
        %v3557 = vpack.c.b16 %v3518, %v3517
        %v3558 = vpack.c.b16 %v3519, %v3519
        %v3559 = vpack.c.b16 %v3521, %v3520
        %v3560 = vpack.c.b16 %v3522, %v3522
        %v3561 = vpack.c.b16 %v3524, %v3523
        %v3562 = vpack.c.b16 %v3525, %v3525
        %v3563 = vpack.c.b16 %v3527, %v3526
        %v3564 = vpack.c.b16 %v3528, %v3528
        %v3565 = vpack.c.b16 %v3530, %v3529
        %v3566 = vpack.c.b16 %v3531, %v3531
        %v3567 = vpack.c.b16 %v3533, %v3532
        %v3568 = vpack.c.b16 %v3534, %v3534
        %v3569 = vpack.c.b16 %v3536, %v3535
        %v3570 = vpack.c.b16 %v3537, %v3537
        %v3571 = vpack.c.b16 %v3539, %v3538
        %v3572 = vpack.c.b16 %v3540, %v3540
        %v3573 = vpack.c.b16 %v3542, %v3541
        %v3574 = vpack.c.b16 %v3543, %v3543
        %v3575 = vpack.c.b16 %v3545, %v3544
        %v3576 = vpack.c.b16 %v3546, %v3546
        %v3577 = vpack.c.b16 %v3548, %v3547
        %v3578 = vpack.c.b16 %v3549, %v3549
        %v3579 = vpack.c.b16 %v3551, %v3550
        %v3580 = vpack.c.b16 %v3552, %v3552
        %3609 = vst [vmem:[#allocation3] sm:$0xff] %v3553
        %3610 = vst [vmem:[#allocation3 + $0x8] sm:$0xf] %v3554
        %3611 = vst [vmem:[#allocation3 + $0xc] sm:$0xff] %v3555
        %3612 = vst [vmem:[#allocation3 + $0x14] sm:$0xf] %v3556
        %3613 = vst [vmem:[#allocation3 + $0x18] sm:$0xff] %v3557
        %3614 = vst [vmem:[#allocation3 + $0x20] sm:$0xf] %v3558
        %3615 = vst [vmem:[#allocation3 + $0x24] sm:$0xff] %v3559
        %3616 = vst [vmem:[#allocation3 + $0x2c] sm:$0xf] %v3560
        %3617 = vst [vmem:[#allocation3 + $0x30] sm:$0xff] %v3561
        %3618 = vst [vmem:[#allocation3 + $0x38] sm:$0xf] %v3562
        %3619 = vst [vmem:[#allocation3 + $0x3c] sm:$0xff] %v3563
        %3620 = vst [vmem:[#allocation3 + $0x44] sm:$0xf] %v3564
        %3621 = vst [vmem:[#allocation3 + $0x48] sm:$0xff] %v3565
        %3622 = vst [vmem:[#allocation3 + $0x50] sm:$0xf] %v3566
        %3623 = vst [vmem:[#allocation3 + $0x54] sm:$0xff] %v3567
        %3624 = vst [vmem:[#allocation3 + $0x5c] sm:$0xf] %v3568
        %3625 = vst [vmem:[#allocation3 + $0x60] sm:$0xff] %v3569
        %3626 = vst [vmem:[#allocation3 + $0x68] sm:$0xf] %v3570
        %3627 = vst [vmem:[#allocation3 + $0x6c] sm:$0xff] %v3571
        %3628 = vst [vmem:[#allocation3 + $0x74] sm:$0xf] %v3572
        %3629 = vst [vmem:[#allocation3 + $0x78] sm:$0xff] %v3573
        %3630 = vst [vmem:[#allocation3 + $0x80] sm:$0xf] %v3574
        %3631 = vst [vmem:[#allocation3 + $0x84] sm:$0xff] %v3575
        %3632 = vst [vmem:[#allocation3 + $0x8c] sm:$0xf] %v3576
        %3633 = vst [vmem:[#allocation3 + $0x90] sm:$0xff] %v3577
        %3634 = vst [vmem:[#allocation3 + $0x98] sm:$0xf] %v3578
        %3635 = vst [vmem:[#allocation3 + $0x9c] sm:$0xff] %v3579
        %3636 = vst [vmem:[#allocation3 + $0xa4] sm:$0xf] %v3580
        %3637 = vst [vmem:[#allocation3 + $0xa8] sm:$0xff] 0
        %3638 = vst [vmem:[#allocation3 + $0xb0] sm:$0xf] 0
        %v3639 = vld [vmem:[#allocation3] sm:$0xff]
        %v3640 = vld [vmem:[#allocation3 + $0x8] sm:$0xf]
        %v3641 = vld [vmem:[#allocation3 + $0xc] sm:$0xff]
        %v3642 = vld [vmem:[#allocation3 + $0x14] sm:$0xf]
        %v3643 = vld [vmem:[#allocation3 + $0x18] sm:$0xff]
        %v3644 = vld [vmem:[#allocation3 + $0x20] sm:$0xf]
        %v3645 = vld [vmem:[#allocation3 + $0x24] sm:$0xff]
        %v3646 = vld [vmem:[#allocation3 + $0x2c] sm:$0xf]
        %v3647 = vld [vmem:[#allocation3 + $0x30] sm:$0xff]
        %v3648 = vld [vmem:[#allocation3 + $0x38] sm:$0xf]
        %v3649 = vld [vmem:[#allocation3 + $0x3c] sm:$0xff]
        %v3650 = vld [vmem:[#allocation3 + $0x44] sm:$0xf]
        %v3651 = vld [vmem:[#allocation3 + $0x48] sm:$0xff]
        %v3652 = vld [vmem:[#allocation3 + $0x50] sm:$0xf]
        %v3653 = vld [vmem:[#allocation3 + $0x54] sm:$0xff]
        %v3654 = vld [vmem:[#allocation3 + $0x5c] sm:$0xf]
        %v3655 = vld [vmem:[#allocation3 + $0x60] sm:$0xff]
        %v3656 = vld [vmem:[#allocation3 + $0x68] sm:$0xf]
        %v3657 = vld [vmem:[#allocation3 + $0x6c] sm:$0xff]
        %v3658 = vld [vmem:[#allocation3 + $0x74] sm:$0xf]
        %v3659 = vld [vmem:[#allocation3 + $0x78] sm:$0xff]
        %v3660 = vld [vmem:[#allocation3 + $0x80] sm:$0xf]
        %v3661 = vld [vmem:[#allocation3 + $0x84] sm:$0xff]
        %v3662 = vld [vmem:[#allocation3 + $0x8c] sm:$0xf]
        %v3663 = vld [vmem:[#allocation3 + $0x90] sm:$0xff]
        %v3664 = vld [vmem:[#allocation3 + $0x98] sm:$0xf]
        %v3665 = vld [vmem:[#allocation3 + $0x9c] sm:$0xff]
        %v3666 = vld [vmem:[#allocation3 + $0xa4] sm:$0xf]
        %v3667 = vld [vmem:[#allocation3] sm:$0xff]
        %v3668 = vld [vmem:[#allocation3 + $0x8] sm:$0xf]
        %v3669 = vld [vmem:[#allocation3 + $0xc] sm:$0xff]
        %v3670 = vld [vmem:[#allocation3 + $0x14] sm:$0xf]
        %v3671 = vld [vmem:[#allocation3 + $0x18] sm:$0xff]
        %v3672 = vld [vmem:[#allocation3 + $0x20] sm:$0xf]
        %v3673 = vld [vmem:[#allocation3 + $0x24] sm:$0xff]
        %v3674 = vld [vmem:[#allocation3 + $0x2c] sm:$0xf]
        %v3675 = vld [vmem:[#allocation3 + $0x30] sm:$0xff]
        %v3676 = vld [vmem:[#allocation3 + $0x38] sm:$0xf]
        %v3677 = vld [vmem:[#allocation3 + $0x3c] sm:$0xff]
        %v3678 = vld [vmem:[#allocation3 + $0x44] sm:$0xf]
        %v3679 = vld [vmem:[#allocation3 + $0x48] sm:$0xff]
        %v3680 = vld [vmem:[#allocation3 + $0x50] sm:$0xf]
        %v3681 = vld [vmem:[#allocation3 + $0x54] sm:$0xff]
        %v3682 = vld [vmem:[#allocation3 + $0x5c] sm:$0xf]
        %v3683 = vld [vmem:[#allocation3 + $0x60] sm:$0xff]
        %v3684 = vld [vmem:[#allocation3 + $0x68] sm:$0xf]
        %v3685 = vld [vmem:[#allocation3 + $0x6c] sm:$0xff]
        %v3686 = vld [vmem:[#allocation3 + $0x74] sm:$0xf]
        %v3687 = vld [vmem:[#allocation3 + $0x78] sm:$0xff]
        %v3688 = vld [vmem:[#allocation3 + $0x80] sm:$0xf]
        %v3689 = vld [vmem:[#allocation3 + $0x84] sm:$0xff]
        %v3690 = vld [vmem:[#allocation3 + $0x8c] sm:$0xf]
        %v3691 = vld [vmem:[#allocation3 + $0x90] sm:$0xff]
        %v3692 = vld [vmem:[#allocation3 + $0x98] sm:$0xf]
        %v3693 = vld [vmem:[#allocation3 + $0x9c] sm:$0xff]
        %v3694 = vld [vmem:[#allocation3 + $0xa4] sm:$0xf]
        %v3695 = vld [vmem:[#allocation3 + $0xa8] sm:$0x11]
        %v3696 = vld [vmem:[#allocation3 + $0xb0] sm:$0x1]
        %v3697 = vld [vmem:[#allocation3] sm:$0xee]
        %v3698 = vld [vmem:[#allocation3 + $0x8] sm:$0xe]
        %v3727 = vunpack.c.l.b16 %v3639
        %v3728 = vunpack.c.h.b16 %v3639
        %v3729 = vunpack.c.l.b16 %v3640
        %v3730 = vunpack.c.l.b16 %v3641
        %v3731 = vunpack.c.h.b16 %v3641
        %v3732 = vunpack.c.l.b16 %v3642
        %v3733 = vunpack.c.l.b16 %v3643
        %v3734 = vunpack.c.h.b16 %v3643
        %v3735 = vunpack.c.l.b16 %v3644
        %v3736 = vunpack.c.l.b16 %v3645
        %v3737 = vunpack.c.h.b16 %v3645
        %v3738 = vunpack.c.l.b16 %v3646
        %v3739 = vunpack.c.l.b16 %v3647
        %v3740 = vunpack.c.h.b16 %v3647
        %v3741 = vunpack.c.l.b16 %v3648
        %v3742 = vunpack.c.l.b16 %v3649
        %v3743 = vunpack.c.h.b16 %v3649
        %v3744 = vunpack.c.l.b16 %v3650
        %v3745 = vunpack.c.l.b16 %v3651
        %v3746 = vunpack.c.h.b16 %v3651
        %v3747 = vunpack.c.l.b16 %v3652
        %v3748 = vunpack.c.l.b16 %v3653
        %v3749 = vunpack.c.h.b16 %v3653
        %v3750 = vunpack.c.l.b16 %v3654
        %v3751 = vunpack.c.l.b16 %v3655
        %v3752 = vunpack.c.h.b16 %v3655
        %v3753 = vunpack.c.l.b16 %v3656
        %v3754 = vunpack.c.l.b16 %v3657
        %v3755 = vunpack.c.h.b16 %v3657
        %v3756 = vunpack.c.l.b16 %v3658
        %v3757 = vunpack.c.l.b16 %v3659
        %v3758 = vunpack.c.h.b16 %v3659
        %v3759 = vunpack.c.l.b16 %v3660
        %v3760 = vunpack.c.l.b16 %v3661
        %v3761 = vunpack.c.h.b16 %v3661
        %v3762 = vunpack.c.l.b16 %v3662
        %v3763 = vunpack.c.l.b16 %v3663
        %v3764 = vunpack.c.h.b16 %v3663
        %v3765 = vunpack.c.l.b16 %v3664
        %v3766 = vunpack.c.l.b16 %v3665
        %v3767 = vunpack.c.h.b16 %v3665
        %v3768 = vunpack.c.l.b16 %v3666
        %v3769 = vpack.c.b16 %v3730, %v3727
        %v3770 = vpack.c.b16 %v3731, %v3728
        %v3771 = vpack.c.b16 %v3732, %v3729
        %v3772 = vpack.c.b16 %v3736, %v3733
        %v3773 = vpack.c.b16 %v3737, %v3734
        %v3774 = vpack.c.b16 %v3738, %v3735
        %v3775 = vpack.c.b16 %v3742, %v3739
        %v3776 = vpack.c.b16 %v3743, %v3740
        %v3777 = vpack.c.b16 %v3744, %v3741
        %v3778 = vpack.c.b16 %v3748, %v3745
        %v3779 = vpack.c.b16 %v3749, %v3746
        %v3780 = vpack.c.b16 %v3750, %v3747
        %v3781 = vpack.c.b16 %v3754, %v3751
        %v3782 = vpack.c.b16 %v3755, %v3752
        %v3783 = vpack.c.b16 %v3756, %v3753
        %v3784 = vpack.c.b16 %v3760, %v3757
        %v3785 = vpack.c.b16 %v3761, %v3758
        %v3786 = vpack.c.b16 %v3762, %v3759
        %v3787 = vpack.c.b16 %v3766, %v3763
        %v3788 = vpack.c.b16 %v3767, %v3764
        %v3789 = vpack.c.b16 %v3768, %v3765
        %v3841 = vunpack.c.l.b16 %v3667
        %v3842 = vunpack.c.h.b16 %v3667
        %v3843 = vunpack.c.l.b16 %v3668
        %v3844 = vunpack.c.l.b16 %v3669
        %v3845 = vunpack.c.h.b16 %v3669
        %v3846 = vunpack.c.l.b16 %v3670
        %v3847 = vunpack.c.l.b16 %v3671
        %v3848 = vunpack.c.h.b16 %v3671
        %v3849 = vunpack.c.l.b16 %v3672
        %v3850 = vunpack.c.l.b16 %v3673
        %v3851 = vunpack.c.h.b16 %v3673
        %v3852 = vunpack.c.l.b16 %v3674
        %v3853 = vunpack.c.l.b16 %v3675
        %v3854 = vunpack.c.h.b16 %v3675
        %v3855 = vunpack.c.l.b16 %v3676
        %v3856 = vunpack.c.l.b16 %v3677
        %v3857 = vunpack.c.h.b16 %v3677
        %v3858 = vunpack.c.l.b16 %v3678
        %v3859 = vunpack.c.l.b16 %v3679
        %v3860 = vunpack.c.h.b16 %v3679
        %v3861 = vunpack.c.l.b16 %v3680
        %v3862 = vunpack.c.l.b16 %v3681
        %v3863 = vunpack.c.h.b16 %v3681
        %v3864 = vunpack.c.l.b16 %v3682
        %v3865 = vunpack.c.l.b16 %v3683
        %v3866 = vunpack.c.h.b16 %v3683
        %v3867 = vunpack.c.l.b16 %v3684
        %v3868 = vunpack.c.l.b16 %v3685
        %v3869 = vunpack.c.h.b16 %v3685
        %v3870 = vunpack.c.l.b16 %v3686
        %v3871 = vunpack.c.l.b16 %v3687
        %v3872 = vunpack.c.h.b16 %v3687
        %v3873 = vunpack.c.l.b16 %v3688
        %v3874 = vunpack.c.l.b16 %v3689
        %v3875 = vunpack.c.h.b16 %v3689
        %v3876 = vunpack.c.l.b16 %v3690
        %v3877 = vunpack.c.l.b16 %v3691
        %v3878 = vunpack.c.h.b16 %v3691
        %v3879 = vunpack.c.l.b16 %v3692
        %v3880 = vunpack.c.l.b16 %v3693
        %v3881 = vunpack.c.h.b16 %v3693
        %v3882 = vunpack.c.l.b16 %v3694
        %v3883 = vunpack.c.l.b16 %v3695
        %v3884 = vunpack.c.h.b16 %v3695
        %v3885 = vunpack.c.l.b16 %v3696
        %v3886 = vpack.c.b16 %v3844, %v3841
        %v3887 = vpack.c.b16 %v3845, %v3842
        %v3888 = vpack.c.b16 %v3846, %v3843
        %v3889 = vpack.c.b16 %v3850, %v3847
        %v3890 = vpack.c.b16 %v3851, %v3848
        %v3891 = vpack.c.b16 %v3852, %v3849
        %v3892 = vpack.c.b16 %v3856, %v3853
        %v3893 = vpack.c.b16 %v3857, %v3854
        %v3894 = vpack.c.b16 %v3858, %v3855
        %v3895 = vpack.c.b16 %v3862, %v3859
        %v3896 = vpack.c.b16 %v3863, %v3860
        %v3897 = vpack.c.b16 %v3864, %v3861
        %v3898 = vpack.c.b16 %v3868, %v3865
        %v3899 = vpack.c.b16 %v3869, %v3866
        %v3900 = vpack.c.b16 %v3870, %v3867
        %v3901 = vpack.c.b16 %v3874, %v3871
        %v3902 = vpack.c.b16 %v3875, %v3872
        %v3903 = vpack.c.b16 %v3876, %v3873
        %v3904 = vpack.c.b16 %v3880, %v3877
        %v3905 = vpack.c.b16 %v3881, %v3878
        %v3906 = vpack.c.b16 %v3882, %v3879
        %v3907 = vpack.c.b16 %v3883, %v3883
        %v3908 = vpack.c.b16 %v3884, %v3884
        %v3909 = vpack.c.b16 %v3885, %v3885
        %v3911 = vshrl.u32 %v3886, 16
        %v3913 = vshll.u32 %v3886, 16
        %v3915 = vrot.slane %v3913, 1
        %v3916 = vor.u32 %v3911, %v3915
        %v3918 = vshll.u32 %v3889, 16
        %v3920 = vrot.slane %v3918, 1
        %v3921 = vsel %vm1689, %v3916, %v3920
        %v3923 = vshrl.u32 %v3887, 16
        %v3925 = vshll.u32 %v3887, 16
        %v3927 = vrot.slane %v3925, 1
        %v3928 = vor.u32 %v3923, %v3927
        %v3930 = vshll.u32 %v3890, 16
        %v3932 = vrot.slane %v3930, 1
        %v3933 = vsel %vm1689, %v3928, %v3932
        %v3935 = vshrl.u32 %v3888, 16
        %v3937 = vshll.u32 %v3888, 16
        %v3939 = vrot.slane %v3937, 1
        %v3940 = vor.u32 %v3935, %v3939
        %v3942 = vshll.u32 %v3891, 16
        %v3944 = vrot.slane %v3942, 1
        %v3945 = vsel %vm1689, %v3940, %v3944
        %v3946 = vshrl.u32 %v3889, 16
        %v3948 = vor.u32 %v3946, %v3920
        %v3950 = vshll.u32 %v3892, 16
        %v3952 = vrot.slane %v3950, 1
        %v3953 = vsel %vm1689, %v3948, %v3952
        %v3954 = vshrl.u32 %v3890, 16
        %v3956 = vor.u32 %v3954, %v3932
        %v3958 = vshll.u32 %v3893, 16
        %v3960 = vrot.slane %v3958, 1
        %v3961 = vsel %vm1689, %v3956, %v3960
        %v3962 = vshrl.u32 %v3891, 16
        %v3964 = vor.u32 %v3962, %v3944
        %v3966 = vshll.u32 %v3894, 16
        %v3968 = vrot.slane %v3966, 1
        %v3969 = vsel %vm1689, %v3964, %v3968
        %v3970 = vshrl.u32 %v3892, 16
        %v3972 = vor.u32 %v3970, %v3952
        %v3974 = vshll.u32 %v3895, 16
        %v3976 = vrot.slane %v3974, 1
        %v3977 = vsel %vm1689, %v3972, %v3976
        %v3978 = vshrl.u32 %v3893, 16
        %v3980 = vor.u32 %v3978, %v3960
        %v3982 = vshll.u32 %v3896, 16
        %v3984 = vrot.slane %v3982, 1
        %v3985 = vsel %vm1689, %v3980, %v3984
        %v3986 = vshrl.u32 %v3894, 16
        %v3988 = vor.u32 %v3986, %v3968
        %v3990 = vshll.u32 %v3897, 16
        %v3992 = vrot.slane %v3990, 1
        %v3993 = vsel %vm1689, %v3988, %v3992
        %v3994 = vshrl.u32 %v3895, 16
        %v3996 = vor.u32 %v3994, %v3976
        %v3998 = vshll.u32 %v3898, 16
        %v4000 = vrot.slane %v3998, 1
        %v4001 = vsel %vm1689, %v3996, %v4000
        %v4002 = vshrl.u32 %v3896, 16
        %v4004 = vor.u32 %v4002, %v3984
        %v4006 = vshll.u32 %v3899, 16
        %v4008 = vrot.slane %v4006, 1
        %v4009 = vsel %vm1689, %v4004, %v4008
        %v4010 = vshrl.u32 %v3897, 16
        %v4012 = vor.u32 %v4010, %v3992
        %v4014 = vshll.u32 %v3900, 16
        %v4016 = vrot.slane %v4014, 1
        %v4017 = vsel %vm1689, %v4012, %v4016
        %v4018 = vshrl.u32 %v3898, 16
        %v4020 = vor.u32 %v4018, %v4000
        %v4022 = vshll.u32 %v3901, 16
        %v4024 = vrot.slane %v4022, 1
        %v4025 = vsel %vm1689, %v4020, %v4024
        %v4026 = vshrl.u32 %v3899, 16
        %v4028 = vor.u32 %v4026, %v4008
        %v4030 = vshll.u32 %v3902, 16
        %v4032 = vrot.slane %v4030, 1
        %v4033 = vsel %vm1689, %v4028, %v4032
        %v4034 = vshrl.u32 %v3900, 16
        %v4036 = vor.u32 %v4034, %v4016
        %v4038 = vshll.u32 %v3903, 16
        %v4040 = vrot.slane %v4038, 1
        %v4041 = vsel %vm1689, %v4036, %v4040
        %v4042 = vshrl.u32 %v3901, 16
        %v4044 = vor.u32 %v4042, %v4024
        %v4046 = vshll.u32 %v3904, 16
        %v4048 = vrot.slane %v4046, 1
        %v4049 = vsel %vm1689, %v4044, %v4048
        %v4050 = vshrl.u32 %v3902, 16
        %v4052 = vor.u32 %v4050, %v4032
        %v4054 = vshll.u32 %v3905, 16
        %v4056 = vrot.slane %v4054, 1
        %v4057 = vsel %vm1689, %v4052, %v4056
        %v4058 = vshrl.u32 %v3903, 16
        %v4060 = vor.u32 %v4058, %v4040
        %v4062 = vshll.u32 %v3906, 16
        %v4064 = vrot.slane %v4062, 1
        %v4065 = vsel %vm1689, %v4060, %v4064
        %v4066 = vshrl.u32 %v3904, 16
        %v4068 = vor.u32 %v4066, %v4048
        %v4070 = vshll.u32 %v3907, 16
        %v4072 = vrot.slane %v4070, 1
        %v4073 = vsel %vm1689, %v4068, %v4072
        %v4074 = vshrl.u32 %v3905, 16
        %v4076 = vor.u32 %v4074, %v4056
        %v4078 = vshll.u32 %v3908, 16
        %v4080 = vrot.slane %v4078, 1
        %v4081 = vsel %vm1689, %v4076, %v4080
        %v4082 = vshrl.u32 %v3906, 16
        %v4084 = vor.u32 %v4082, %v4064
        %v4086 = vshll.u32 %v3909, 16
        %v4088 = vrot.slane %v4086, 1
        %v4089 = vsel %vm1689, %v4084, %v4088
        %v4113 = vunpack.c.l.b16 %v3697
        %v4114 = vunpack.c.h.b16 %v3697
        %v4115 = vunpack.c.l.b16 %v3698
        %v4116 = vpack.c.b16 %v3844, %v4113
        %v4117 = vpack.c.b16 %v3845, %v4114
        %v4118 = vpack.c.b16 %v3846, %v4115
        %v4119 = vrot.slane %v4116, 1
        %v4120 = vrot.slane %v3889, 1
        %v4121 = vsel %vm1829, %v4119, %v4120
        %v4122 = vrot.slane %v4117, 1
        %v4123 = vrot.slane %v3890, 1
        %v4124 = vsel %vm1829, %v4122, %v4123
        %v4125 = vrot.slane %v4118, 1
        %v4126 = vrot.slane %v3891, 1
        %v4127 = vsel %vm1829, %v4125, %v4126
        %v4128 = vrot.slane %v3892, 1
        %v4129 = vsel %vm1829, %v4120, %v4128
        %v4130 = vrot.slane %v3893, 1
        %v4131 = vsel %vm1829, %v4123, %v4130
        %v4132 = vrot.slane %v3894, 1
        %v4133 = vsel %vm1829, %v4126, %v4132
        %v4134 = vrot.slane %v3895, 1
        %v4135 = vsel %vm1829, %v4128, %v4134
        %v4136 = vrot.slane %v3896, 1
        %v4137 = vsel %vm1829, %v4130, %v4136
        %v4138 = vrot.slane %v3897, 1
        %v4139 = vsel %vm1829, %v4132, %v4138
        %v4140 = vrot.slane %v3898, 1
        %v4141 = vsel %vm1829, %v4134, %v4140
        %v4142 = vrot.slane %v3899, 1
        %v4143 = vsel %vm1829, %v4136, %v4142
        %v4144 = vrot.slane %v3900, 1
        %v4145 = vsel %vm1829, %v4138, %v4144
        %v4146 = vrot.slane %v3901, 1
        %v4147 = vsel %vm1829, %v4140, %v4146
        %v4148 = vrot.slane %v3902, 1
        %v4149 = vsel %vm1829, %v4142, %v4148
        %v4150 = vrot.slane %v3903, 1
        %v4151 = vsel %vm1829, %v4144, %v4150
        %v4152 = vrot.slane %v3904, 1
        %v4153 = vsel %vm1829, %v4146, %v4152
        %v4154 = vrot.slane %v3905, 1
        %v4155 = vsel %vm1829, %v4148, %v4154
        %v4156 = vrot.slane %v3906, 1
        %v4157 = vsel %vm1829, %v4150, %v4156
        %v4158 = vrot.slane %v3907, 1
        %v4159 = vsel %vm1829, %v4152, %v4158
        %v4160 = vrot.slane %v3908, 1
        %v4161 = vsel %vm1829, %v4154, %v4160
        %v4162 = vrot.slane %v3909, 1
        %v4163 = vsel %vm1829, %v4156, %v4162
        %v4185 = vld [vmem:[%s5] sm:$0xff]
        %v4186 = vld [vmem:[%s5 + $0x8] sm:$0xf]
        %v4187 = vld [vmem:[%s5 + $0xc] sm:$0xff]
        %v4188 = vld [vmem:[%s5 + $0x14] sm:$0xf]
        %v4189 = vld [vmem:[%s5 + $0x18] sm:$0xff]
        %v4190 = vld [vmem:[%s5 + $0x20] sm:$0xf]
        %v4191 = vld [vmem:[%s5 + $0x24] sm:$0xff]
        %v4192 = vld [vmem:[%s5 + $0x2c] sm:$0xf]
        %v4193 = vld [vmem:[%s5 + $0x30] sm:$0xff]
        %v4194 = vld [vmem:[%s5 + $0x38] sm:$0xf]
        %v4195 = vld [vmem:[%s5 + $0x3c] sm:$0xff]
        %v4196 = vld [vmem:[%s5 + $0x44] sm:$0xf]
        %v4197 = vld [vmem:[%s5 + $0x48] sm:$0xff]
        %v4198 = vld [vmem:[%s5 + $0x50] sm:$0xf]
        %v4199 = vld [vmem:[%s5 + $0x54] sm:$0xff]
        %v4200 = vld [vmem:[%s5 + $0x5c] sm:$0xf]
        %v4201 = vld [vmem:[%s5 + $0x60] sm:$0xff]
        %v4202 = vld [vmem:[%s5 + $0x68] sm:$0xf]
        %v4203 = vld [vmem:[%s5 + $0x6c] sm:$0xff]
        %v4204 = vld [vmem:[%s5 + $0x74] sm:$0xf]
        %v4205 = vld [vmem:[%s5 + $0x78] sm:$0xff]
        %v4206 = vld [vmem:[%s5 + $0x80] sm:$0xf]
        %v4207 = vld [vmem:[%s5 + $0x84] sm:$0xff]
        %v4208 = vld [vmem:[%s5 + $0x8c] sm:$0xf]
        %v4209 = vld [vmem:[%s5 + $0x90] sm:$0xff]
        %v4210 = vld [vmem:[%s5 + $0x98] sm:$0xf]
        %v4211 = vld [vmem:[%s5 + $0x9c] sm:$0xff]
        %v4212 = vld [vmem:[%s5 + $0xa4] sm:$0xf]
        %v4213 = vld [vmem:[%s5 + $0xa8] sm:$0xff]
        %v4214 = vld [vmem:[%s5 + $0xb0] sm:$0xf]
        %v4215 = vld [vmem:[%s5 + $0xb4] sm:$0xff]
        %v4216 = vld [vmem:[%s5 + $0xbc] sm:$0xf]
        %v4217 = vld [vmem:[%s5 + $0xc0] sm:$0xff]
        %v4218 = vld [vmem:[%s5 + $0xc8] sm:$0xf]
        %v4219 = vld [vmem:[%s5 + $0xcc] sm:$0xff]
        %v4220 = vld [vmem:[%s5 + $0xd4] sm:$0xf]
        %v4221 = vld [vmem:[%s5 + $0xd8] sm:$0xff]
        %v4222 = vld [vmem:[%s5 + $0xe0] sm:$0xf]
        %v4223 = vld [vmem:[%s5 + $0xe4] sm:$0xff]
        %v4224 = vld [vmem:[%s5 + $0xec] sm:$0xf]
        %v4225 = vld [vmem:[%s5 + $0xf0] sm:$0xff]
        %v4226 = vld [vmem:[%s5 + $0xf8] sm:$0xf]
        %v4227 = vld [vmem:[%s5 + $0xfc] sm:$0xff]
        %v4228 = vld [vmem:[%s5 + $0x104] sm:$0xf]
        %v4229 = vld [vmem:[%s5 + $0x108] sm:$0xff]
        %v4230 = vld [vmem:[%s5 + $0x110] sm:$0xf]
        %v4231 = vld [vmem:[%s5 + $0x114] sm:$0xff]
        %v4232 = vld [vmem:[%s5 + $0x11c] sm:$0xf]
        %v4233 = vld [vmem:[%s5 + $0x120] sm:$0xff]
        %v4234 = vld [vmem:[%s5 + $0x128] sm:$0xf]
        %v4235 = vld [vmem:[%s5 + $0x12c] sm:$0xff]
        %v4236 = vld [vmem:[%s5 + $0x134] sm:$0xf]
        %v4237 = vld [vmem:[%s5 + $0x138] sm:$0xff]
        %v4238 = vld [vmem:[%s5 + $0x140] sm:$0xf]
        %v4239 = vld [vmem:[%s5 + $0x144] sm:$0xff]
        %v4240 = vld [vmem:[%s5 + $0x14c] sm:$0xf]
        %v4241 = vld [vmem:[%s5 + $0x150] sm:$0xff]
        %v4242 = vld [vmem:[%s5 + $0x158] sm:$0xf]
        %v4243 = vld [vmem:[%s5 + $0x15c] sm:$0xff]
        %v4244 = vld [vmem:[%s5 + $0x164] sm:$0xf]
        %v4245 = vld [vmem:[%s5 + $0x168] sm:$0xff]
        %v4246 = vld [vmem:[%s5 + $0x170] sm:$0xf]
        %v4247 = vld [vmem:[%s5 + $0x174] sm:$0xff]
        %v4248 = vld [vmem:[%s5 + $0x17c] sm:$0xf]
        %v4249 = vld [vmem:[%s5 + $0x180] sm:$0xff]
        %v4250 = vld [vmem:[%s5 + $0x188] sm:$0xf]
        %v4251 = vld [vmem:[%s5 + $0x18c] sm:$0xff]
        %v4252 = vld [vmem:[%s5 + $0x194] sm:$0xf]
        %v4253 = vld [vmem:[%s5 + $0x198] sm:$0xff]
        %v4254 = vld [vmem:[%s5 + $0x1a0] sm:$0xf]
        %v4255 = vld [vmem:[%s5 + $0x1a4] sm:$0xff]
        %v4256 = vld [vmem:[%s5 + $0x1ac] sm:$0xf]
        %v4257 = vld [vmem:[%s5 + $0x1b0] sm:$0xff]
        %v4258 = vld [vmem:[%s5 + $0x1b8] sm:$0xf]
        %v4259 = vld [vmem:[%s5 + $0x1bc] sm:$0xff]
        %v4260 = vld [vmem:[%s5 + $0x1c4] sm:$0xf]
        %v4261 = vld [vmem:[%s5 + $0x1c8] sm:$0xff]
        %v4262 = vld [vmem:[%s5 + $0x1d0] sm:$0xf]
        %v4263 = vld [vmem:[%s5 + $0x1d4] sm:$0xff]
        %v4264 = vld [vmem:[%s5 + $0x1dc] sm:$0xf]
        %v4265 = vld [vmem:[%s5 + $0x1e0] sm:$0xff]
        %v4266 = vld [vmem:[%s5 + $0x1e8] sm:$0xf]
        %v4267 = vld [vmem:[%s5 + $0x1ec] sm:$0xff]
        %v4268 = vld [vmem:[%s5 + $0x1f4] sm:$0xf]
        %v4269 = vld [vmem:[%s5 + $0x1f8] sm:$0xff]
        %v4270 = vld [vmem:[%s5 + $0x200] sm:$0xf]
        %v4271 = vld [vmem:[%s5 + $0x204] sm:$0xff]
        %v4272 = vld [vmem:[%s5 + $0x20c] sm:$0xf]
        %v4273 = vld [vmem:[%s5 + $0x210] sm:$0xff]
        %v4274 = vld [vmem:[%s5 + $0x218] sm:$0xf]
        %v4275 = vld [vmem:[%s5 + $0x21c] sm:$0xff]
        %v4276 = vld [vmem:[%s5 + $0x224] sm:$0xf]
        %v4277 = vld [vmem:[%s5 + $0x228] sm:$0xff]
        %v4278 = vld [vmem:[%s5 + $0x230] sm:$0xf]
        %v4279 = vld [vmem:[%s5 + $0x234] sm:$0xff]
        %v4280 = vld [vmem:[%s5 + $0x23c] sm:$0xf]
        %v4281 = vld [vmem:[%s5 + $0x240] sm:$0xff]
        %v4282 = vld [vmem:[%s5 + $0x248] sm:$0xf]
        %v4283 = vld [vmem:[%s5 + $0x24c] sm:$0xff]
        %v4284 = vld [vmem:[%s5 + $0x254] sm:$0xf]
        %v4285 = vld [vmem:[%s5 + $0x258] sm:$0xff]
        %v4286 = vld [vmem:[%s5 + $0x260] sm:$0xf]
        %v4287 = vld [vmem:[%s5 + $0x264] sm:$0xff]
        %v4288 = vld [vmem:[%s5 + $0x26c] sm:$0xf]
        %v4289 = vld [vmem:[%s5 + $0x270] sm:$0xff]
        %v4290 = vld [vmem:[%s5 + $0x278] sm:$0xf]
        %v4291 = vld [vmem:[%s5 + $0x27c] sm:$0xff]
        %v4292 = vld [vmem:[%s5 + $0x284] sm:$0xf]
        %v4293 = vld [vmem:[%s5 + $0x288] sm:$0xff]
        %v4294 = vld [vmem:[%s5 + $0x290] sm:$0xf]
        %v4295 = vld [vmem:[%s5 + $0x294] sm:$0xff]
        %v4296 = vld [vmem:[%s5 + $0x29c] sm:$0xf]
        %v4297 = vld [vmem:[%s5 + $0x2a0] sm:$0xff]
        %v4298 = vld [vmem:[%s5 + $0x2a8] sm:$0xf]
        %v4299 = vld [vmem:[%s5 + $0x2ac] sm:$0xff]
        %v4300 = vld [vmem:[%s5 + $0x2b4] sm:$0xf]
        %v4301 = vld [vmem:[%s5 + $0x2b8] sm:$0xff]
        %v4302 = vld [vmem:[%s5 + $0x2c0] sm:$0xf]
        %v4303 = vld [vmem:[%s5 + $0x2c4] sm:$0xff]
        %v4304 = vld [vmem:[%s5 + $0x2cc] sm:$0xf]
        %v4305 = vld [vmem:[%s5 + $0x2d0] sm:$0xff]
        %v4306 = vld [vmem:[%s5 + $0x2d8] sm:$0xf]
        %v4307 = vld [vmem:[%s5 + $0x2dc] sm:$0xff]
        %v4308 = vld [vmem:[%s5 + $0x2e4] sm:$0xf]
        %v4309 = vld [vmem:[%s5 + $0x2e8] sm:$0xff]
        %v4310 = vld [vmem:[%s5 + $0x2f0] sm:$0xf]
        %v4311 = vld [vmem:[%s5 + $0x2f4] sm:$0xff]
        %v4312 = vld [vmem:[%s5 + $0x2fc] sm:$0xf]
        %v4313 = vld [vmem:[%s5 + $0x300] sm:$0xff]
        %v4314 = vld [vmem:[%s5 + $0x308] sm:$0xf]
        %v4315 = vld [vmem:[%s5 + $0x30c] sm:$0xff]
        %v4316 = vld [vmem:[%s5 + $0x314] sm:$0xf]
        %v4317 = vld [vmem:[%s5 + $0x318] sm:$0xff]
        %v4318 = vld [vmem:[%s5 + $0x320] sm:$0xf]
        %v4319 = vld [vmem:[%s5 + $0x324] sm:$0xff]
        %v4320 = vld [vmem:[%s5 + $0x32c] sm:$0xf]
        %v4321 = vld [vmem:[%s5 + $0x330] sm:$0xff]
        %v4322 = vld [vmem:[%s5 + $0x338] sm:$0xf]
        %v4323 = vld [vmem:[%s5 + $0x33c] sm:$0xff]
        %v4324 = vld [vmem:[%s5 + $0x344] sm:$0xf]
        %v4325 = vld [vmem:[%s5 + $0x348] sm:$0xff]
        %v4326 = vld [vmem:[%s5 + $0x350] sm:$0xf]
        %v4327 = vld [vmem:[%s5 + $0x354] sm:$0xff]
        %v4328 = vld [vmem:[%s5 + $0x35c] sm:$0xf]
        %v4329 = vld [vmem:[%s5 + $0x360] sm:$0xff]
        %v4330 = vld [vmem:[%s5 + $0x368] sm:$0xf]
        %v4331 = vld [vmem:[%s5 + $0x36c] sm:$0xff]
        %v4332 = vld [vmem:[%s5 + $0x374] sm:$0xf]
        %v4333 = vld [vmem:[%s5 + $0x378] sm:$0xff]
        %v4334 = vld [vmem:[%s5 + $0x380] sm:$0xf]
        %v4335 = vld [vmem:[%s5 + $0x384] sm:$0xff]
        %v4336 = vld [vmem:[%s5 + $0x38c] sm:$0xf]
        %v4337 = vld [vmem:[%s5 + $0x390] sm:$0xff]
        %v4338 = vld [vmem:[%s5 + $0x398] sm:$0xf]
        %v4339 = vld [vmem:[%s5 + $0x39c] sm:$0xff]
        %v4340 = vld [vmem:[%s5 + $0x3a4] sm:$0xf]
        %v4341 = vld [vmem:[%s5 + $0x3a8] sm:$0xff]
        %v4342 = vld [vmem:[%s5 + $0x3b0] sm:$0xf]
        %v4343 = vld [vmem:[%s5 + $0x3b4] sm:$0xff]
        %v4344 = vld [vmem:[%s5 + $0x3bc] sm:$0xf]
        %v4345 = vld [vmem:[%s5 + $0x3c0] sm:$0xff]
        %v4346 = vld [vmem:[%s5 + $0x3c8] sm:$0xf]
        %v4347 = vld [vmem:[%s5 + $0x3cc] sm:$0xff]
        %v4348 = vld [vmem:[%s5 + $0x3d4] sm:$0xf]
        %v4349 = vld [vmem:[%s5 + $0x3d8] sm:$0xff]
        %v4350 = vld [vmem:[%s5 + $0x3e0] sm:$0xf]
        %v4351 = vld [vmem:[%s5 + $0x3e4] sm:$0xff]
        %v4352 = vld [vmem:[%s5 + $0x3ec] sm:$0xf]
        %v4353 = vld [vmem:[%s5 + $0x3f0] sm:$0xff]
        %v4354 = vld [vmem:[%s5 + $0x3f8] sm:$0xf]
        %v4355 = vld [vmem:[%s5 + $0x3fc] sm:$0xff]
        %v4356 = vld [vmem:[%s5 + $0x404] sm:$0xf]
        %v4357 = vld [vmem:[%s5 + $0x408] sm:$0xff]
        %v4358 = vld [vmem:[%s5 + $0x410] sm:$0xf]
        %v4359 = vld [vmem:[%s5 + $0x414] sm:$0xff]
        %v4360 = vld [vmem:[%s5 + $0x41c] sm:$0xf]
        %v4361 = vld [vmem:[%s5 + $0x420] sm:$0xff]
        %v4362 = vld [vmem:[%s5 + $0x428] sm:$0xf]
        %v4363 = vld [vmem:[%s5 + $0x42c] sm:$0xff]
        %v4364 = vld [vmem:[%s5 + $0x434] sm:$0xf]
        %v4365 = vld [vmem:[%s5 + $0x438] sm:$0xff]
        %v4366 = vld [vmem:[%s5 + $0x440] sm:$0xf]
        %v4367 = vld [vmem:[%s5 + $0x444] sm:$0xff]
        %v4368 = vld [vmem:[%s5 + $0x44c] sm:$0xf]
        %v4369 = vld [vmem:[%s5 + $0x450] sm:$0xff]
        %v4370 = vld [vmem:[%s5 + $0x458] sm:$0xf]
        %v4371 = vld [vmem:[%s5 + $0x45c] sm:$0xff]
        %v4372 = vld [vmem:[%s5 + $0x464] sm:$0xf]
        %v4373 = vld [vmem:[%s5 + $0x468] sm:$0xff]
        %v4374 = vld [vmem:[%s5 + $0x470] sm:$0xf]
        %v4375 = vld [vmem:[%s5 + $0x474] sm:$0xff]
        %v4376 = vld [vmem:[%s5 + $0x47c] sm:$0xf]
        %v4377 = vld [vmem:[%s5 + $0x480] sm:$0xff]
        %v4378 = vld [vmem:[%s5 + $0x488] sm:$0xf]
        %v4379 = vld [vmem:[%s5 + $0x48c] sm:$0xff]
        %v4380 = vld [vmem:[%s5 + $0x494] sm:$0xf]
        %v4381 = vld [vmem:[%s5 + $0x498] sm:$0xff]
        %v4382 = vld [vmem:[%s5 + $0x4a0] sm:$0xf]
        %v4383 = vld [vmem:[%s5 + $0x4a4] sm:$0xff]
        %v4384 = vld [vmem:[%s5 + $0x4ac] sm:$0xf]
        %v4385 = vld [vmem:[%s5 + $0x4b0] sm:$0xff]
        %v4386 = vld [vmem:[%s5 + $0x4b8] sm:$0xf]
        %v4387 = vld [vmem:[%s5 + $0x4bc] sm:$0xff]
        %v4388 = vld [vmem:[%s5 + $0x4c4] sm:$0xf]
        %v4389 = vld [vmem:[%s5 + $0x4c8] sm:$0xff]
        %v4390 = vld [vmem:[%s5 + $0x4d0] sm:$0xf]
        %v4391 = vld [vmem:[%s5 + $0x4d4] sm:$0xff]
        %v4392 = vld [vmem:[%s5 + $0x4dc] sm:$0xf]
        %v4393 = vld [vmem:[%s5 + $0x4e0] sm:$0xff]
        %v4394 = vld [vmem:[%s5 + $0x4e8] sm:$0xf]
        %v4395 = vld [vmem:[%s5 + $0x4ec] sm:$0xff]
        %v4396 = vld [vmem:[%s5 + $0x4f4] sm:$0xf]
        %v4397 = vld [vmem:[%s5 + $0x4f8] sm:$0xff]
        %v4398 = vld [vmem:[%s5 + $0x500] sm:$0xf]
        %v4399 = vld [vmem:[%s5 + $0x504] sm:$0xff]
        %v4400 = vld [vmem:[%s5 + $0x50c] sm:$0xf]
        %v4401 = vld [vmem:[%s5 + $0x510] sm:$0xff]
        %v4402 = vld [vmem:[%s5 + $0x518] sm:$0xf]
        %v4403 = vld [vmem:[%s5 + $0x51c] sm:$0xff]
        %v4404 = vld [vmem:[%s5 + $0x524] sm:$0xf]
        %v4405 = vld [vmem:[%s5 + $0x528] sm:$0xff]
        %v4406 = vld [vmem:[%s5 + $0x530] sm:$0xf]
        %v4407 = vld [vmem:[%s5 + $0x534] sm:$0xff]
        %v4408 = vld [vmem:[%s5 + $0x53c] sm:$0xf]
        %v4409 = vld [vmem:[%s5 + $0x540] sm:$0xff]
        %v4410 = vld [vmem:[%s5 + $0x548] sm:$0xf]
        %v4411 = vld [vmem:[%s5 + $0x54c] sm:$0xff]
        %v4412 = vld [vmem:[%s5 + $0x554] sm:$0xf]
        %v4413 = vld [vmem:[%s5 + $0x558] sm:$0xff]
        %v4414 = vld [vmem:[%s5 + $0x560] sm:$0xf]
        %v4415 = vld [vmem:[%s5 + $0x564] sm:$0xff]
        %v4416 = vld [vmem:[%s5 + $0x56c] sm:$0xf]
        %v4417 = vld [vmem:[%s5 + $0x570] sm:$0xff]
        %v4418 = vld [vmem:[%s5 + $0x578] sm:$0xf]
        %v4419 = vld [vmem:[%s5 + $0x57c] sm:$0xff]
        %v4420 = vld [vmem:[%s5 + $0x584] sm:$0xf]
        %v4421 = vld [vmem:[%s5 + $0x588] sm:$0xff]
        %v4422 = vld [vmem:[%s5 + $0x590] sm:$0xf]
        %v4423 = vld [vmem:[%s5 + $0x594] sm:$0xff]
        %v4424 = vld [vmem:[%s5 + $0x59c] sm:$0xf]
        %v4425 = vld [vmem:[%s5 + $0x5a0] sm:$0xff]
        %v4426 = vld [vmem:[%s5 + $0x5a8] sm:$0xf]
        %v4427 = vld [vmem:[%s5 + $0x5ac] sm:$0xff]
        %v4428 = vld [vmem:[%s5 + $0x5b4] sm:$0xf]
        %v4429 = vld [vmem:[%s5 + $0x5b8] sm:$0xff]
        %v4430 = vld [vmem:[%s5 + $0x5c0] sm:$0xf]
        %v4431 = vld [vmem:[%s5 + $0x5c4] sm:$0xff]
        %v4432 = vld [vmem:[%s5 + $0x5cc] sm:$0xf]
        %v4433 = vld [vmem:[%s5 + $0x5d0] sm:$0xff]
        %v4434 = vld [vmem:[%s5 + $0x5d8] sm:$0xf]
        %v4435 = vld [vmem:[%s5 + $0x5dc] sm:$0xff]
        %v4436 = vld [vmem:[%s5 + $0x5e4] sm:$0xf]
        %v4437 = vld [vmem:[%s5 + $0x5e8] sm:$0xff]
        %v4438 = vld [vmem:[%s5 + $0x5f0] sm:$0xf]
        %v4439 = vld [vmem:[%s5 + $0x5f4] sm:$0xff]
        %v4440 = vld [vmem:[%s5 + $0x5fc] sm:$0xf]
        %v4441 = vld [vmem:[%s5 + $0x600] sm:$0xff]
        %v4442 = vld [vmem:[%s5 + $0x608] sm:$0xf]
        %v4443 = vld [vmem:[%s5 + $0x60c] sm:$0xff]
        %v4444 = vld [vmem:[%s5 + $0x614] sm:$0xf]
        %v4445 = vld [vmem:[%s5 + $0x618] sm:$0xff]
        %v4446 = vld [vmem:[%s5 + $0x620] sm:$0xf]
        %v4447 = vld [vmem:[%s5 + $0x624] sm:$0xff]
        %v4448 = vld [vmem:[%s5 + $0x62c] sm:$0xf]
        %v4449 = vld [vmem:[%s5 + $0x630] sm:$0xff]
        %v4450 = vld [vmem:[%s5 + $0x638] sm:$0xf]
        %v4451 = vld [vmem:[%s5 + $0x63c] sm:$0xff]
        %v4452 = vld [vmem:[%s5 + $0x644] sm:$0xf]
        %v4453 = vld [vmem:[%s5 + $0x648] sm:$0xff]
        %v4454 = vld [vmem:[%s5 + $0x650] sm:$0xf]
        %v4455 = vld [vmem:[%s5 + $0x654] sm:$0xff]
        %v4456 = vld [vmem:[%s5 + $0x65c] sm:$0xf]
        %v4457 = vld [vmem:[%s5 + $0x660] sm:$0xff]
        %v4458 = vld [vmem:[%s5 + $0x668] sm:$0xf]
        %v4459 = vld [vmem:[%s5 + $0x66c] sm:$0xff]
        %v4460 = vld [vmem:[%s5 + $0x674] sm:$0xf]
        %v4461 = vld [vmem:[%s5 + $0x678] sm:$0xff]
        %v4462 = vld [vmem:[%s5 + $0x680] sm:$0xf]
        %v4463 = vld [vmem:[%s5 + $0x684] sm:$0xff]
        %v4464 = vld [vmem:[%s5 + $0x68c] sm:$0xf]
        %v4465 = vld [vmem:[%s5 + $0x690] sm:$0xff]
        %v4466 = vld [vmem:[%s5 + $0x698] sm:$0xf]
        %v4467 = vld [vmem:[%s5 + $0x69c] sm:$0xff]
        %v4468 = vld [vmem:[%s5 + $0x6a4] sm:$0xf]
        %v4469 = vld [vmem:[%s5 + $0x6a8] sm:$0xff]
        %v4470 = vld [vmem:[%s5 + $0x6b0] sm:$0xf]
        %v4471 = vld [vmem:[%s5 + $0x6b4] sm:$0xff]
        %v4472 = vld [vmem:[%s5 + $0x6bc] sm:$0xf]
        %v4473 = vld [vmem:[%s6] sm:$0x7]
        %v4475 = vlaneseq
        %v4476 = vshrl.u32 %v4475, 7
        %v4477 = vsub.s32 0, %v4476
        %v4478 = vrot.slane %v4473, %v4477
        %v4479 = vlaneseq
        %v4480 = vshrl.u32 %v4479, 7
        %v4481 = vsub.s32 1, %v4480
        %v4482 = vrot.slane %v4473, %v4481
        %v4483 = vlaneseq
        %v4484 = vshrl.u32 %v4483, 7
        %v4485 = vsub.s32 2, %v4484
        %v4486 = vrot.slane %v4473, %v4485
        %v4778 = vunpack.c.l.b16 %v4185
        %v4779 = vunpack.c.h.b16 %v4185
        %v4780 = vunpack.c.l.b16 %v4186
        %v4781 = vunpack.c.l.b16 %v4187
        %v4782 = vunpack.c.h.b16 %v4187
        %v4783 = vunpack.c.l.b16 %v4188
        %v4784 = vunpack.c.l.b16 %v4189
        %v4785 = vunpack.c.h.b16 %v4189
        %v4786 = vunpack.c.l.b16 %v4190
        %v4787 = vunpack.c.l.b16 %v4191
        %v4788 = vunpack.c.h.b16 %v4191
        %v4789 = vunpack.c.l.b16 %v4192
        %v4790 = vunpack.c.l.b16 %v4193
        %v4791 = vunpack.c.h.b16 %v4193
        %v4792 = vunpack.c.l.b16 %v4194
        %v4793 = vunpack.c.l.b16 %v4195
        %v4794 = vunpack.c.h.b16 %v4195
        %v4795 = vunpack.c.l.b16 %v4196
        %v4796 = vunpack.c.l.b16 %v4197
        %v4797 = vunpack.c.h.b16 %v4197
        %v4798 = vunpack.c.l.b16 %v4198
        %v4799 = vunpack.c.l.b16 %v4199
        %v4800 = vunpack.c.h.b16 %v4199
        %v4801 = vunpack.c.l.b16 %v4200
        %v4802 = vunpack.c.l.b16 %v4201
        %v4803 = vunpack.c.h.b16 %v4201
        %v4804 = vunpack.c.l.b16 %v4202
        %v4805 = vunpack.c.l.b16 %v4203
        %v4806 = vunpack.c.h.b16 %v4203
        %v4807 = vunpack.c.l.b16 %v4204
        %v4808 = vunpack.c.l.b16 %v4205
        %v4809 = vunpack.c.h.b16 %v4205
        %v4810 = vunpack.c.l.b16 %v4206
        %v4811 = vunpack.c.l.b16 %v4207
        %v4812 = vunpack.c.h.b16 %v4207
        %v4813 = vunpack.c.l.b16 %v4208
        %v4814 = vunpack.c.l.b16 %v4209
        %v4815 = vunpack.c.h.b16 %v4209
        %v4816 = vunpack.c.l.b16 %v4210
        %v4817 = vunpack.c.l.b16 %v4211
        %v4818 = vunpack.c.h.b16 %v4211
        %v4819 = vunpack.c.l.b16 %v4212
        %v4820 = vunpack.c.l.b16 %v4213
        %v4821 = vunpack.c.h.b16 %v4213
        %v4822 = vunpack.c.l.b16 %v4214
        %v4823 = vunpack.c.l.b16 %v4215
        %v4824 = vunpack.c.h.b16 %v4215
        %v4825 = vunpack.c.l.b16 %v4216
        %v4826 = vunpack.c.l.b16 %v4217
        %v4827 = vunpack.c.h.b16 %v4217
        %v4828 = vunpack.c.l.b16 %v4218
        %v4829 = vunpack.c.l.b16 %v4219
        %v4830 = vunpack.c.h.b16 %v4219
        %v4831 = vunpack.c.l.b16 %v4220
        %v4832 = vunpack.c.l.b16 %v4221
        %v4833 = vunpack.c.h.b16 %v4221
        %v4834 = vunpack.c.l.b16 %v4222
        %v4835 = vunpack.c.l.b16 %v4223
        %v4836 = vunpack.c.h.b16 %v4223
        %v4837 = vunpack.c.l.b16 %v4224
        %v4838 = vunpack.c.l.b16 %v4225
        %v4839 = vunpack.c.h.b16 %v4225
        %v4840 = vunpack.c.l.b16 %v4226
        %v4841 = vunpack.c.l.b16 %v4227
        %v4842 = vunpack.c.h.b16 %v4227
        %v4843 = vunpack.c.l.b16 %v4228
        %v4844 = vunpack.c.l.b16 %v4229
        %v4845 = vunpack.c.h.b16 %v4229
        %v4846 = vunpack.c.l.b16 %v4230
        %v4847 = vunpack.c.l.b16 %v4231
        %v4848 = vunpack.c.h.b16 %v4231
        %v4849 = vunpack.c.l.b16 %v4232
        %v4850 = vunpack.c.l.b16 %v4233
        %v4851 = vunpack.c.h.b16 %v4233
        %v4852 = vunpack.c.l.b16 %v4234
        %v4853 = vunpack.c.l.b16 %v4235
        %v4854 = vunpack.c.h.b16 %v4235
        %v4855 = vunpack.c.l.b16 %v4236
        %v4856 = vunpack.c.l.b16 %v4237
        %v4857 = vunpack.c.h.b16 %v4237
        %v4858 = vunpack.c.l.b16 %v4238
        %v4859 = vunpack.c.l.b16 %v4239
        %v4860 = vunpack.c.h.b16 %v4239
        %v4861 = vunpack.c.l.b16 %v4240
        %v4862 = vunpack.c.l.b16 %v4241
        %v4863 = vunpack.c.h.b16 %v4241
        %v4864 = vunpack.c.l.b16 %v4242
        %v4865 = vunpack.c.l.b16 %v4243
        %v4866 = vunpack.c.h.b16 %v4243
        %v4867 = vunpack.c.l.b16 %v4244
        %v4868 = vunpack.c.l.b16 %v4245
        %v4869 = vunpack.c.h.b16 %v4245
        %v4870 = vunpack.c.l.b16 %v4246
        %v4871 = vunpack.c.l.b16 %v4247
        %v4872 = vunpack.c.h.b16 %v4247
        %v4873 = vunpack.c.l.b16 %v4248
        %v4874 = vunpack.c.l.b16 %v4249
        %v4875 = vunpack.c.h.b16 %v4249
        %v4876 = vunpack.c.l.b16 %v4250
        %v4877 = vunpack.c.l.b16 %v4251
        %v4878 = vunpack.c.h.b16 %v4251
        %v4879 = vunpack.c.l.b16 %v4252
        %v4880 = vunpack.c.l.b16 %v4253
        %v4881 = vunpack.c.h.b16 %v4253
        %v4882 = vunpack.c.l.b16 %v4254
        %v4883 = vunpack.c.l.b16 %v4255
        %v4884 = vunpack.c.h.b16 %v4255
        %v4885 = vunpack.c.l.b16 %v4256
        %v4886 = vunpack.c.l.b16 %v4257
        %v4887 = vunpack.c.h.b16 %v4257
        %v4888 = vunpack.c.l.b16 %v4258
        %v4889 = vunpack.c.l.b16 %v4259
        %v4890 = vunpack.c.h.b16 %v4259
        %v4891 = vunpack.c.l.b16 %v4260
        %v4892 = vunpack.c.l.b16 %v4261
        %v4893 = vunpack.c.h.b16 %v4261
        %v4894 = vunpack.c.l.b16 %v4262
        %v4895 = vunpack.c.l.b16 %v4263
        %v4896 = vunpack.c.h.b16 %v4263
        %v4897 = vunpack.c.l.b16 %v4264
        %v4898 = vunpack.c.l.b16 %v4265
        %v4899 = vunpack.c.h.b16 %v4265
        %v4900 = vunpack.c.l.b16 %v4266
        %v4901 = vunpack.c.l.b16 %v4267
        %v4902 = vunpack.c.h.b16 %v4267
        %v4903 = vunpack.c.l.b16 %v4268
        %v4904 = vunpack.c.l.b16 %v4269
        %v4905 = vunpack.c.h.b16 %v4269
        %v4906 = vunpack.c.l.b16 %v4270
        %v4907 = vunpack.c.l.b16 %v4271
        %v4908 = vunpack.c.h.b16 %v4271
        %v4909 = vunpack.c.l.b16 %v4272
        %v4910 = vunpack.c.l.b16 %v4273
        %v4911 = vunpack.c.h.b16 %v4273
        %v4912 = vunpack.c.l.b16 %v4274
        %v4913 = vunpack.c.l.b16 %v4275
        %v4914 = vunpack.c.h.b16 %v4275
        %v4915 = vunpack.c.l.b16 %v4276
        %v4916 = vunpack.c.l.b16 %v4277
        %v4917 = vunpack.c.h.b16 %v4277
        %v4918 = vunpack.c.l.b16 %v4278
        %v4919 = vunpack.c.l.b16 %v4279
        %v4920 = vunpack.c.h.b16 %v4279
        %v4921 = vunpack.c.l.b16 %v4280
        %v4922 = vunpack.c.l.b16 %v4281
        %v4923 = vunpack.c.h.b16 %v4281
        %v4924 = vunpack.c.l.b16 %v4282
        %v4925 = vunpack.c.l.b16 %v4283
        %v4926 = vunpack.c.h.b16 %v4283
        %v4927 = vunpack.c.l.b16 %v4284
        %v4928 = vunpack.c.l.b16 %v4285
        %v4929 = vunpack.c.h.b16 %v4285
        %v4930 = vunpack.c.l.b16 %v4286
        %v4931 = vunpack.c.l.b16 %v4287
        %v4932 = vunpack.c.h.b16 %v4287
        %v4933 = vunpack.c.l.b16 %v4288
        %v4934 = vunpack.c.l.b16 %v4289
        %v4935 = vunpack.c.h.b16 %v4289
        %v4936 = vunpack.c.l.b16 %v4290
        %v4937 = vunpack.c.l.b16 %v4291
        %v4938 = vunpack.c.h.b16 %v4291
        %v4939 = vunpack.c.l.b16 %v4292
        %v4940 = vunpack.c.l.b16 %v4293
        %v4941 = vunpack.c.h.b16 %v4293
        %v4942 = vunpack.c.l.b16 %v4294
        %v4943 = vunpack.c.l.b16 %v4295
        %v4944 = vunpack.c.h.b16 %v4295
        %v4945 = vunpack.c.l.b16 %v4296
        %v4946 = vunpack.c.l.b16 %v4297
        %v4947 = vunpack.c.h.b16 %v4297
        %v4948 = vunpack.c.l.b16 %v4298
        %v4949 = vunpack.c.l.b16 %v4299
        %v4950 = vunpack.c.h.b16 %v4299
        %v4951 = vunpack.c.l.b16 %v4300
        %v4952 = vunpack.c.l.b16 %v4301
        %v4953 = vunpack.c.h.b16 %v4301
        %v4954 = vunpack.c.l.b16 %v4302
        %v4955 = vunpack.c.l.b16 %v4303
        %v4956 = vunpack.c.h.b16 %v4303
        %v4957 = vunpack.c.l.b16 %v4304
        %v4958 = vunpack.c.l.b16 %v4305
        %v4959 = vunpack.c.h.b16 %v4305
        %v4960 = vunpack.c.l.b16 %v4306
        %v4961 = vunpack.c.l.b16 %v4307
        %v4962 = vunpack.c.h.b16 %v4307
        %v4963 = vunpack.c.l.b16 %v4308
        %v4964 = vunpack.c.l.b16 %v4309
        %v4965 = vunpack.c.h.b16 %v4309
        %v4966 = vunpack.c.l.b16 %v4310
        %v4967 = vunpack.c.l.b16 %v4311
        %v4968 = vunpack.c.h.b16 %v4311
        %v4969 = vunpack.c.l.b16 %v4312
        %v4970 = vunpack.c.l.b16 %v4313
        %v4971 = vunpack.c.h.b16 %v4313
        %v4972 = vunpack.c.l.b16 %v4314
        %v4973 = vunpack.c.l.b16 %v4315
        %v4974 = vunpack.c.h.b16 %v4315
        %v4975 = vunpack.c.l.b16 %v4316
        %v4976 = vunpack.c.l.b16 %v4317
        %v4977 = vunpack.c.h.b16 %v4317
        %v4978 = vunpack.c.l.b16 %v4318
        %v4979 = vunpack.c.l.b16 %v4319
        %v4980 = vunpack.c.h.b16 %v4319
        %v4981 = vunpack.c.l.b16 %v4320
        %v4982 = vunpack.c.l.b16 %v4321
        %v4983 = vunpack.c.h.b16 %v4321
        %v4984 = vunpack.c.l.b16 %v4322
        %v4985 = vunpack.c.l.b16 %v4323
        %v4986 = vunpack.c.h.b16 %v4323
        %v4987 = vunpack.c.l.b16 %v4324
        %v4988 = vunpack.c.l.b16 %v4325
        %v4989 = vunpack.c.h.b16 %v4325
        %v4990 = vunpack.c.l.b16 %v4326
        %v4991 = vunpack.c.l.b16 %v4327
        %v4992 = vunpack.c.h.b16 %v4327
        %v4993 = vunpack.c.l.b16 %v4328
        %v4994 = vunpack.c.l.b16 %v4329
        %v4995 = vunpack.c.h.b16 %v4329
        %v4996 = vunpack.c.l.b16 %v4330
        %v4997 = vunpack.c.l.b16 %v4331
        %v4998 = vunpack.c.h.b16 %v4331
        %v4999 = vunpack.c.l.b16 %v4332
        %v5000 = vunpack.c.l.b16 %v4333
        %v5001 = vunpack.c.h.b16 %v4333
        %v5002 = vunpack.c.l.b16 %v4334
        %v5003 = vunpack.c.l.b16 %v4335
        %v5004 = vunpack.c.h.b16 %v4335
        %v5005 = vunpack.c.l.b16 %v4336
        %v5006 = vunpack.c.l.b16 %v4337
        %v5007 = vunpack.c.h.b16 %v4337
        %v5008 = vunpack.c.l.b16 %v4338
        %v5009 = vunpack.c.l.b16 %v4339
        %v5010 = vunpack.c.h.b16 %v4339
        %v5011 = vunpack.c.l.b16 %v4340
        %v5012 = vunpack.c.l.b16 %v4341
        %v5013 = vunpack.c.h.b16 %v4341
        %v5014 = vunpack.c.l.b16 %v4342
        %v5015 = vunpack.c.l.b16 %v4343
        %v5016 = vunpack.c.h.b16 %v4343
        %v5017 = vunpack.c.l.b16 %v4344
        %v5018 = vunpack.c.l.b16 %v4345
        %v5019 = vunpack.c.h.b16 %v4345
        %v5020 = vunpack.c.l.b16 %v4346
        %v5021 = vunpack.c.l.b16 %v4347
        %v5022 = vunpack.c.h.b16 %v4347
        %v5023 = vunpack.c.l.b16 %v4348
        %v5024 = vunpack.c.l.b16 %v4349
        %v5025 = vunpack.c.h.b16 %v4349
        %v5026 = vunpack.c.l.b16 %v4350
        %v5027 = vunpack.c.l.b16 %v4351
        %v5028 = vunpack.c.h.b16 %v4351
        %v5029 = vunpack.c.l.b16 %v4352
        %v5030 = vunpack.c.l.b16 %v4353
        %v5031 = vunpack.c.h.b16 %v4353
        %v5032 = vunpack.c.l.b16 %v4354
        %v5033 = vunpack.c.l.b16 %v4355
        %v5034 = vunpack.c.h.b16 %v4355
        %v5035 = vunpack.c.l.b16 %v4356
        %v5036 = vunpack.c.l.b16 %v4357
        %v5037 = vunpack.c.h.b16 %v4357
        %v5038 = vunpack.c.l.b16 %v4358
        %v5039 = vunpack.c.l.b16 %v4359
        %v5040 = vunpack.c.h.b16 %v4359
        %v5041 = vunpack.c.l.b16 %v4360
        %v5042 = vunpack.c.l.b16 %v4361
        %v5043 = vunpack.c.h.b16 %v4361
        %v5044 = vunpack.c.l.b16 %v4362
        %v5045 = vunpack.c.l.b16 %v4363
        %v5046 = vunpack.c.h.b16 %v4363
        %v5047 = vunpack.c.l.b16 %v4364
        %v5048 = vunpack.c.l.b16 %v4365
        %v5049 = vunpack.c.h.b16 %v4365
        %v5050 = vunpack.c.l.b16 %v4366
        %v5051 = vunpack.c.l.b16 %v4367
        %v5052 = vunpack.c.h.b16 %v4367
        %v5053 = vunpack.c.l.b16 %v4368
        %v5054 = vunpack.c.l.b16 %v4369
        %v5055 = vunpack.c.h.b16 %v4369
        %v5056 = vunpack.c.l.b16 %v4370
        %v5057 = vunpack.c.l.b16 %v4371
        %v5058 = vunpack.c.h.b16 %v4371
        %v5059 = vunpack.c.l.b16 %v4372
        %v5060 = vunpack.c.l.b16 %v4373
        %v5061 = vunpack.c.h.b16 %v4373
        %v5062 = vunpack.c.l.b16 %v4374
        %v5063 = vunpack.c.l.b16 %v4375
        %v5064 = vunpack.c.h.b16 %v4375
        %v5065 = vunpack.c.l.b16 %v4376
        %v5066 = vunpack.c.l.b16 %v4377
        %v5067 = vunpack.c.h.b16 %v4377
        %v5068 = vunpack.c.l.b16 %v4378
        %v5069 = vunpack.c.l.b16 %v4379
        %v5070 = vunpack.c.h.b16 %v4379
        %v5071 = vunpack.c.l.b16 %v4380
        %v5072 = vunpack.c.l.b16 %v4381
        %v5073 = vunpack.c.h.b16 %v4381
        %v5074 = vunpack.c.l.b16 %v4382
        %v5075 = vunpack.c.l.b16 %v4383
        %v5076 = vunpack.c.h.b16 %v4383
        %v5077 = vunpack.c.l.b16 %v4384
        %v5078 = vunpack.c.l.b16 %v4385
        %v5079 = vunpack.c.h.b16 %v4385
        %v5080 = vunpack.c.l.b16 %v4386
        %v5081 = vunpack.c.l.b16 %v4387
        %v5082 = vunpack.c.h.b16 %v4387
        %v5083 = vunpack.c.l.b16 %v4388
        %v5084 = vunpack.c.l.b16 %v4389
        %v5085 = vunpack.c.h.b16 %v4389
        %v5086 = vunpack.c.l.b16 %v4390
        %v5087 = vunpack.c.l.b16 %v4391
        %v5088 = vunpack.c.h.b16 %v4391
        %v5089 = vunpack.c.l.b16 %v4392
        %v5090 = vunpack.c.l.b16 %v4393
        %v5091 = vunpack.c.h.b16 %v4393
        %v5092 = vunpack.c.l.b16 %v4394
        %v5093 = vunpack.c.l.b16 %v4395
        %v5094 = vunpack.c.h.b16 %v4395
        %v5095 = vunpack.c.l.b16 %v4396
        %v5096 = vunpack.c.l.b16 %v4397
        %v5097 = vunpack.c.h.b16 %v4397
        %v5098 = vunpack.c.l.b16 %v4398
        %v5099 = vunpack.c.l.b16 %v4399
        %v5100 = vunpack.c.h.b16 %v4399
        %v5101 = vunpack.c.l.b16 %v4400
        %v5102 = vunpack.c.l.b16 %v4401
        %v5103 = vunpack.c.h.b16 %v4401
        %v5104 = vunpack.c.l.b16 %v4402
        %v5105 = vunpack.c.l.b16 %v4403
        %v5106 = vunpack.c.h.b16 %v4403
        %v5107 = vunpack.c.l.b16 %v4404
        %v5108 = vunpack.c.l.b16 %v4405
        %v5109 = vunpack.c.h.b16 %v4405
        %v5110 = vunpack.c.l.b16 %v4406
        %v5111 = vunpack.c.l.b16 %v4407
        %v5112 = vunpack.c.h.b16 %v4407
        %v5113 = vunpack.c.l.b16 %v4408
        %v5114 = vunpack.c.l.b16 %v4409
        %v5115 = vunpack.c.h.b16 %v4409
        %v5116 = vunpack.c.l.b16 %v4410
        %v5117 = vunpack.c.l.b16 %v4411
        %v5118 = vunpack.c.h.b16 %v4411
        %v5119 = vunpack.c.l.b16 %v4412
        %v5120 = vunpack.c.l.b16 %v4413
        %v5121 = vunpack.c.h.b16 %v4413
        %v5122 = vunpack.c.l.b16 %v4414
        %v5123 = vunpack.c.l.b16 %v4415
        %v5124 = vunpack.c.h.b16 %v4415
        %v5125 = vunpack.c.l.b16 %v4416
        %v5126 = vunpack.c.l.b16 %v4417
        %v5127 = vunpack.c.h.b16 %v4417
        %v5128 = vunpack.c.l.b16 %v4418
        %v5129 = vunpack.c.l.b16 %v4419
        %v5130 = vunpack.c.h.b16 %v4419
        %v5131 = vunpack.c.l.b16 %v4420
        %v5132 = vunpack.c.l.b16 %v4421
        %v5133 = vunpack.c.h.b16 %v4421
        %v5134 = vunpack.c.l.b16 %v4422
        %v5135 = vunpack.c.l.b16 %v4423
        %v5136 = vunpack.c.h.b16 %v4423
        %v5137 = vunpack.c.l.b16 %v4424
        %v5138 = vunpack.c.l.b16 %v4425
        %v5139 = vunpack.c.h.b16 %v4425
        %v5140 = vunpack.c.l.b16 %v4426
        %v5141 = vunpack.c.l.b16 %v4427
        %v5142 = vunpack.c.h.b16 %v4427
        %v5143 = vunpack.c.l.b16 %v4428
        %v5144 = vunpack.c.l.b16 %v4429
        %v5145 = vunpack.c.h.b16 %v4429
        %v5146 = vunpack.c.l.b16 %v4430
        %v5147 = vunpack.c.l.b16 %v4431
        %v5148 = vunpack.c.h.b16 %v4431
        %v5149 = vunpack.c.l.b16 %v4432
        %v5150 = vunpack.c.l.b16 %v4433
        %v5151 = vunpack.c.h.b16 %v4433
        %v5152 = vunpack.c.l.b16 %v4434
        %v5153 = vunpack.c.l.b16 %v4435
        %v5154 = vunpack.c.h.b16 %v4435
        %v5155 = vunpack.c.l.b16 %v4436
        %v5156 = vunpack.c.l.b16 %v4437
        %v5157 = vunpack.c.h.b16 %v4437
        %v5158 = vunpack.c.l.b16 %v4438
        %v5159 = vunpack.c.l.b16 %v4439
        %v5160 = vunpack.c.h.b16 %v4439
        %v5161 = vunpack.c.l.b16 %v4440
        %v5162 = vunpack.c.l.b16 %v4441
        %v5163 = vunpack.c.h.b16 %v4441
        %v5164 = vunpack.c.l.b16 %v4442
        %v5165 = vunpack.c.l.b16 %v4443
        %v5166 = vunpack.c.h.b16 %v4443
        %v5167 = vunpack.c.l.b16 %v4444
        %v5168 = vunpack.c.l.b16 %v4445
        %v5169 = vunpack.c.h.b16 %v4445
        %v5170 = vunpack.c.l.b16 %v4446
        %v5171 = vunpack.c.l.b16 %v4447
        %v5172 = vunpack.c.h.b16 %v4447
        %v5173 = vunpack.c.l.b16 %v4448
        %v5174 = vunpack.c.l.b16 %v4449
        %v5175 = vunpack.c.h.b16 %v4449
        %v5176 = vunpack.c.l.b16 %v4450
        %v5177 = vunpack.c.l.b16 %v4451
        %v5178 = vunpack.c.h.b16 %v4451
        %v5179 = vunpack.c.l.b16 %v4452
        %v5180 = vunpack.c.l.b16 %v4453
        %v5181 = vunpack.c.h.b16 %v4453
        %v5182 = vunpack.c.l.b16 %v4454
        %v5183 = vunpack.c.l.b16 %v4455
        %v5184 = vunpack.c.h.b16 %v4455
        %v5185 = vunpack.c.l.b16 %v4456
        %v5186 = vunpack.c.l.b16 %v4457
        %v5187 = vunpack.c.h.b16 %v4457
        %v5188 = vunpack.c.l.b16 %v4458
        %v5189 = vunpack.c.l.b16 %v4459
        %v5190 = vunpack.c.h.b16 %v4459
        %v5191 = vunpack.c.l.b16 %v4460
        %v5192 = vunpack.c.l.b16 %v4461
        %v5193 = vunpack.c.h.b16 %v4461
        %v5194 = vunpack.c.l.b16 %v4462
        %v5195 = vunpack.c.l.b16 %v4463
        %v5196 = vunpack.c.h.b16 %v4463
        %v5197 = vunpack.c.l.b16 %v4464
        %v5198 = vunpack.c.l.b16 %v4465
        %v5199 = vunpack.c.h.b16 %v4465
        %v5200 = vunpack.c.l.b16 %v4466
        %v5201 = vunpack.c.l.b16 %v4467
        %v5202 = vunpack.c.h.b16 %v4467
        %v5203 = vunpack.c.l.b16 %v4468
        %v5204 = vunpack.c.l.b16 %v4469
        %v5205 = vunpack.c.h.b16 %v4469
        %v5206 = vunpack.c.l.b16 %v4470
        %v5207 = vunpack.c.l.b16 %v4471
        %v5208 = vunpack.c.h.b16 %v4471
        %v5209 = vunpack.c.l.b16 %v4472
        %v5210 = vpack.c.b16 %v4781, %v4778
        %v5211 = vpack.c.b16 %v4782, %v4779
        %v5212 = vpack.c.b16 %v4783, %v4780
        %v5213 = vpack.c.b16 %v4787, %v4784
        %v5214 = vpack.c.b16 %v4788, %v4785
        %v5215 = vpack.c.b16 %v4789, %v4786
        %v5216 = vpack.c.b16 %v4793, %v4790
        %v5217 = vpack.c.b16 %v4794, %v4791
        %v5218 = vpack.c.b16 %v4795, %v4792
        %v5219 = vpack.c.b16 %v4799, %v4796
        %v5220 = vpack.c.b16 %v4800, %v4797
        %v5221 = vpack.c.b16 %v4801, %v4798
        %v5222 = vpack.c.b16 %v4805, %v4802
        %v5223 = vpack.c.b16 %v4806, %v4803
        %v5224 = vpack.c.b16 %v4807, %v4804
        %v5225 = vpack.c.b16 %v4811, %v4808
        %v5226 = vpack.c.b16 %v4812, %v4809
        %v5227 = vpack.c.b16 %v4813, %v4810
        %v5228 = vpack.c.b16 %v4817, %v4814
        %v5229 = vpack.c.b16 %v4818, %v4815
        %v5230 = vpack.c.b16 %v4819, %v4816
        %v5231 = vpack.c.b16 %v4823, %v4820
        %v5232 = vpack.c.b16 %v4824, %v4821
        %v5233 = vpack.c.b16 %v4825, %v4822
        %v5234 = vpack.c.b16 %v4829, %v4826
        %v5235 = vpack.c.b16 %v4830, %v4827
        %v5236 = vpack.c.b16 %v4831, %v4828
        %v5237 = vpack.c.b16 %v4835, %v4832
        %v5238 = vpack.c.b16 %v4836, %v4833
        %v5239 = vpack.c.b16 %v4837, %v4834
        %v5240 = vpack.c.b16 %v4841, %v4838
        %v5241 = vpack.c.b16 %v4842, %v4839
        %v5242 = vpack.c.b16 %v4843, %v4840
        %v5243 = vpack.c.b16 %v4847, %v4844
        %v5244 = vpack.c.b16 %v4848, %v4845
        %v5245 = vpack.c.b16 %v4849, %v4846
        %v5246 = vpack.c.b16 %v4853, %v4850
        %v5247 = vpack.c.b16 %v4854, %v4851
        %v5248 = vpack.c.b16 %v4855, %v4852
        %v5249 = vpack.c.b16 %v4859, %v4856
        %v5250 = vpack.c.b16 %v4860, %v4857
        %v5251 = vpack.c.b16 %v4861, %v4858
        %v5252 = vpack.c.b16 %v4865, %v4862
        %v5253 = vpack.c.b16 %v4866, %v4863
        %v5254 = vpack.c.b16 %v4867, %v4864
        %v5255 = vpack.c.b16 %v4871, %v4868
        %v5256 = vpack.c.b16 %v4872, %v4869
        %v5257 = vpack.c.b16 %v4873, %v4870
        %v5258 = vpack.c.b16 %v4877, %v4874
        %v5259 = vpack.c.b16 %v4878, %v4875
        %v5260 = vpack.c.b16 %v4879, %v4876
        %v5261 = vpack.c.b16 %v4883, %v4880
        %v5262 = vpack.c.b16 %v4884, %v4881
        %v5263 = vpack.c.b16 %v4885, %v4882
        %v5264 = vpack.c.b16 %v4889, %v4886
        %v5265 = vpack.c.b16 %v4890, %v4887
        %v5266 = vpack.c.b16 %v4891, %v4888
        %v5267 = vpack.c.b16 %v4895, %v4892
        %v5268 = vpack.c.b16 %v4896, %v4893
        %v5269 = vpack.c.b16 %v4897, %v4894
        %v5270 = vpack.c.b16 %v4901, %v4898
        %v5271 = vpack.c.b16 %v4902, %v4899
        %v5272 = vpack.c.b16 %v4903, %v4900
        %v5273 = vpack.c.b16 %v4907, %v4904
        %v5274 = vpack.c.b16 %v4908, %v4905
        %v5275 = vpack.c.b16 %v4909, %v4906
        %v5276 = vpack.c.b16 %v4913, %v4910
        %v5277 = vpack.c.b16 %v4914, %v4911
        %v5278 = vpack.c.b16 %v4915, %v4912
        %v5279 = vpack.c.b16 %v4919, %v4916
        %v5280 = vpack.c.b16 %v4920, %v4917
        %v5281 = vpack.c.b16 %v4921, %v4918
        %v5282 = vpack.c.b16 %v4925, %v4922
        %v5283 = vpack.c.b16 %v4926, %v4923
        %v5284 = vpack.c.b16 %v4927, %v4924
        %v5285 = vpack.c.b16 %v4931, %v4928
        %v5286 = vpack.c.b16 %v4932, %v4929
        %v5287 = vpack.c.b16 %v4933, %v4930
        %v5288 = vpack.c.b16 %v4937, %v4934
        %v5289 = vpack.c.b16 %v4938, %v4935
        %v5290 = vpack.c.b16 %v4939, %v4936
        %v5291 = vpack.c.b16 %v4943, %v4940
        %v5292 = vpack.c.b16 %v4944, %v4941
        %v5293 = vpack.c.b16 %v4945, %v4942
        %v5294 = vpack.c.b16 %v4949, %v4946
        %v5295 = vpack.c.b16 %v4950, %v4947
        %v5296 = vpack.c.b16 %v4951, %v4948
        %v5297 = vpack.c.b16 %v4955, %v4952
        %v5298 = vpack.c.b16 %v4956, %v4953
        %v5299 = vpack.c.b16 %v4957, %v4954
        %v5300 = vpack.c.b16 %v4961, %v4958
        %v5301 = vpack.c.b16 %v4962, %v4959
        %v5302 = vpack.c.b16 %v4963, %v4960
        %v5303 = vpack.c.b16 %v4967, %v4964
        %v5304 = vpack.c.b16 %v4968, %v4965
        %v5305 = vpack.c.b16 %v4969, %v4966
        %v5306 = vpack.c.b16 %v4973, %v4970
        %v5307 = vpack.c.b16 %v4974, %v4971
        %v5308 = vpack.c.b16 %v4975, %v4972
        %v5309 = vpack.c.b16 %v4979, %v4976
        %v5310 = vpack.c.b16 %v4980, %v4977
        %v5311 = vpack.c.b16 %v4981, %v4978
        %v5312 = vpack.c.b16 %v4985, %v4982
        %v5313 = vpack.c.b16 %v4986, %v4983
        %v5314 = vpack.c.b16 %v4987, %v4984
        %v5315 = vpack.c.b16 %v4991, %v4988
        %v5316 = vpack.c.b16 %v4992, %v4989
        %v5317 = vpack.c.b16 %v4993, %v4990
        %v5318 = vpack.c.b16 %v4997, %v4994
        %v5319 = vpack.c.b16 %v4998, %v4995
        %v5320 = vpack.c.b16 %v4999, %v4996
        %v5321 = vpack.c.b16 %v5003, %v5000
        %v5322 = vpack.c.b16 %v5004, %v5001
        %v5323 = vpack.c.b16 %v5005, %v5002
        %v5324 = vpack.c.b16 %v5009, %v5006
        %v5325 = vpack.c.b16 %v5010, %v5007
        %v5326 = vpack.c.b16 %v5011, %v5008
        %v5327 = vpack.c.b16 %v5015, %v5012
        %v5328 = vpack.c.b16 %v5016, %v5013
        %v5329 = vpack.c.b16 %v5017, %v5014
        %v5330 = vpack.c.b16 %v5021, %v5018
        %v5331 = vpack.c.b16 %v5022, %v5019
        %v5332 = vpack.c.b16 %v5023, %v5020
        %v5333 = vpack.c.b16 %v5027, %v5024
        %v5334 = vpack.c.b16 %v5028, %v5025
        %v5335 = vpack.c.b16 %v5029, %v5026
        %v5336 = vpack.c.b16 %v5033, %v5030
        %v5337 = vpack.c.b16 %v5034, %v5031
        %v5338 = vpack.c.b16 %v5035, %v5032
        %v5339 = vpack.c.b16 %v5039, %v5036
        %v5340 = vpack.c.b16 %v5040, %v5037
        %v5341 = vpack.c.b16 %v5041, %v5038
        %v5342 = vpack.c.b16 %v5045, %v5042
        %v5343 = vpack.c.b16 %v5046, %v5043
        %v5344 = vpack.c.b16 %v5047, %v5044
        %v5345 = vpack.c.b16 %v5051, %v5048
        %v5346 = vpack.c.b16 %v5052, %v5049
        %v5347 = vpack.c.b16 %v5053, %v5050
        %v5348 = vpack.c.b16 %v5057, %v5054
        %v5349 = vpack.c.b16 %v5058, %v5055
        %v5350 = vpack.c.b16 %v5059, %v5056
        %v5351 = vpack.c.b16 %v5063, %v5060
        %v5352 = vpack.c.b16 %v5064, %v5061
        %v5353 = vpack.c.b16 %v5065, %v5062
        %v5354 = vpack.c.b16 %v5069, %v5066
        %v5355 = vpack.c.b16 %v5070, %v5067
        %v5356 = vpack.c.b16 %v5071, %v5068
        %v5357 = vpack.c.b16 %v5075, %v5072
        %v5358 = vpack.c.b16 %v5076, %v5073
        %v5359 = vpack.c.b16 %v5077, %v5074
        %v5360 = vpack.c.b16 %v5081, %v5078
        %v5361 = vpack.c.b16 %v5082, %v5079
        %v5362 = vpack.c.b16 %v5083, %v5080
        %v5363 = vpack.c.b16 %v5087, %v5084
        %v5364 = vpack.c.b16 %v5088, %v5085
        %v5365 = vpack.c.b16 %v5089, %v5086
        %v5366 = vpack.c.b16 %v5093, %v5090
        %v5367 = vpack.c.b16 %v5094, %v5091
        %v5368 = vpack.c.b16 %v5095, %v5092
        %v5369 = vpack.c.b16 %v5099, %v5096
        %v5370 = vpack.c.b16 %v5100, %v5097
        %v5371 = vpack.c.b16 %v5101, %v5098
        %v5372 = vpack.c.b16 %v5105, %v5102
        %v5373 = vpack.c.b16 %v5106, %v5103
        %v5374 = vpack.c.b16 %v5107, %v5104
        %v5375 = vpack.c.b16 %v5111, %v5108
        %v5376 = vpack.c.b16 %v5112, %v5109
        %v5377 = vpack.c.b16 %v5113, %v5110
        %v5378 = vpack.c.b16 %v5117, %v5114
        %v5379 = vpack.c.b16 %v5118, %v5115
        %v5380 = vpack.c.b16 %v5119, %v5116
        %v5381 = vpack.c.b16 %v5123, %v5120
        %v5382 = vpack.c.b16 %v5124, %v5121
        %v5383 = vpack.c.b16 %v5125, %v5122
        %v5384 = vpack.c.b16 %v5129, %v5126
        %v5385 = vpack.c.b16 %v5130, %v5127
        %v5386 = vpack.c.b16 %v5131, %v5128
        %v5387 = vpack.c.b16 %v5135, %v5132
        %v5388 = vpack.c.b16 %v5136, %v5133
        %v5389 = vpack.c.b16 %v5137, %v5134
        %v5390 = vpack.c.b16 %v5141, %v5138
        %v5391 = vpack.c.b16 %v5142, %v5139
        %v5392 = vpack.c.b16 %v5143, %v5140
        %v5393 = vpack.c.b16 %v5147, %v5144
        %v5394 = vpack.c.b16 %v5148, %v5145
        %v5395 = vpack.c.b16 %v5149, %v5146
        %v5396 = vpack.c.b16 %v5153, %v5150
        %v5397 = vpack.c.b16 %v5154, %v5151
        %v5398 = vpack.c.b16 %v5155, %v5152
        %v5399 = vpack.c.b16 %v5159, %v5156
        %v5400 = vpack.c.b16 %v5160, %v5157
        %v5401 = vpack.c.b16 %v5161, %v5158
        %v5402 = vpack.c.b16 %v5165, %v5162
        %v5403 = vpack.c.b16 %v5166, %v5163
        %v5404 = vpack.c.b16 %v5167, %v5164
        %v5405 = vpack.c.b16 %v5171, %v5168
        %v5406 = vpack.c.b16 %v5172, %v5169
        %v5407 = vpack.c.b16 %v5173, %v5170
        %v5408 = vpack.c.b16 %v5177, %v5174
        %v5409 = vpack.c.b16 %v5178, %v5175
        %v5410 = vpack.c.b16 %v5179, %v5176
        %v5411 = vpack.c.b16 %v5183, %v5180
        %v5412 = vpack.c.b16 %v5184, %v5181
        %v5413 = vpack.c.b16 %v5185, %v5182
        %v5414 = vpack.c.b16 %v5189, %v5186
        %v5415 = vpack.c.b16 %v5190, %v5187
        %v5416 = vpack.c.b16 %v5191, %v5188
        %v5417 = vpack.c.b16 %v5195, %v5192
        %v5418 = vpack.c.b16 %v5196, %v5193
        %v5419 = vpack.c.b16 %v5197, %v5194
        %v5420 = vpack.c.b16 %v5201, %v5198
        %v5421 = vpack.c.b16 %v5202, %v5199
        %v5422 = vpack.c.b16 %v5203, %v5200
        %v5423 = vpack.c.b16 %v5207, %v5204
        %v5424 = vpack.c.b16 %v5208, %v5205
        %v5425 = vpack.c.b16 %v5209, %v5206
        %5642 = vmatprep.subr.bf16.mxu0 %v5211
        %5643 = vmatpush1.bf16.msra.mxu0 %v5210
        %5644 = vmatprep.subr.bf16.mxu0 %v5214
        %5645 = vmatpush1.bf16.msra.mxu0 %v5213
        %5646 = vmatprep.subr.bf16.mxu0 %v5217
        %5647 = vmatpush1.bf16.msra.mxu0 %v5216
        %5648 = vmatprep.subr.bf16.mxu0 %v5220
        %5649 = vmatpush1.bf16.msra.mxu0 %v5219
        %5650 = vmatprep.subr.bf16.mxu0 %v5223
        %5651 = vmatpush1.bf16.msra.mxu0 %v5222
        %5652 = vmatprep.subr.bf16.mxu0 %v5226
        %5653 = vmatpush1.bf16.msra.mxu0 %v5225
        %5654 = vmatprep.subr.bf16.mxu0 %v5229
        %5655 = vmatpush1.bf16.msra.mxu0 %v5228
        %5656 = vmatprep.subr.bf16.mxu0 %v5232
        %5657 = vmatpush1.bf16.msra.mxu0 %v5231
        %5658 = vmatprep.subr.bf16.mxu0 %v5235
        %5659 = vmatpush1.bf16.msra.mxu0 %v5234
        %5660 = vmatprep.subr.bf16.mxu0 %v5238
        %5661 = vmatpush1.bf16.msra.mxu0 %v5237
        %5662 = vmatprep.subr.bf16.mxu0 %v5241
        %5663 = vmatpush1.bf16.msra.mxu0 %v5240
        %5664 = vmatprep.subr.bf16.mxu0 %v5244
        %5665 = vmatpush1.bf16.msra.mxu0 %v5243
        %5666 = vmatprep.subr.bf16.mxu0 %v5247
        %5667 = vmatpush1.bf16.msra.mxu0 %v5246
        %5668 = vmatprep.subr.bf16.mxu0 %v5250
        %5669 = vmatpush1.bf16.msra.mxu0 %v5249
        %5670 = vmatprep.subr.bf16.mxu0 %v5253
        %5671 = vmatpush1.bf16.msra.mxu0 %v5252
        %5672 = vmatprep.subr.bf16.mxu0 %v5256
        %5673 = vmatpush1.bf16.msra.mxu0 %v5255
        %5674 = vmatprep.mubr.bf16.mxu0 %v3770
        %5675 = vmatmul.mubr.bf16.gmra.mrb[0].mxu0 %v3769
        %v5676 = vpop.f32.mrb[0].mxu0
        %v5677 = vadd.f32 %v4478, %v5676
        %v5678 = vpop.f32.mrb[0].mxu0
        %v5679 = vadd.f32 %v4482, %v5678
        %v5680 = vpop.f32.mrb[0].mxu0
        %v5681 = vadd.f32 %v4478, %v5680
        %v5682 = vpop.f32.mrb[0].mxu0
        %v5683 = vadd.f32 %v4482, %v5682
        %5684 = vmatprep.mubr.bf16.mxu0 %v3773
        %5685 = vmatmul.mubr.bf16.gmra.mrb[0].mxu0 %v3772
        %v5686 = vpop.f32.mrb[0].mxu0
        %v5687 = vadd.f32 %v4478, %v5686
        %v5688 = vpop.f32.mrb[0].mxu0
        %v5689 = vadd.f32 %v4482, %v5688
        %v5690 = vpop.f32.mrb[0].mxu0
        %v5691 = vadd.f32 %v4478, %v5690
        %v5692 = vpop.f32.mrb[0].mxu0
        %v5693 = vadd.f32 %v4482, %v5692
        %5694 = vmatprep.mubr.bf16.mxu0 %v3776
        %5695 = vmatmul.mubr.bf16.gmra.mrb[0].mxu0 %v3775
        %v5696 = vpop.f32.mrb[0].mxu0
        %v5697 = vadd.f32 %v4478, %v5696
        %v5698 = vpop.f32.mrb[0].mxu0
        %v5699 = vadd.f32 %v4482, %v5698
        %v5700 = vpop.f32.mrb[0].mxu0
        %v5701 = vadd.f32 %v4478, %v5700
        %v5702 = vpop.f32.mrb[0].mxu0
        %v5703 = vadd.f32 %v4482, %v5702
        %5704 = vmatprep.mubr.bf16.mxu0 %v3779
        %5705 = vmatmul.mubr.bf16.gmra.mrb[0].mxu0 %v3778
        %v5706 = vpop.f32.mrb[0].mxu0
        %v5707 = vadd.f32 %v4478, %v5706
        %v5708 = vpop.f32.mrb[0].mxu0
        %v5709 = vadd.f32 %v4482, %v5708
        %v5710 = vpop.f32.mrb[0].mxu0
        %v5711 = vadd.f32 %v4478, %v5710
        %v5712 = vpop.f32.mrb[0].mxu0
        %v5713 = vadd.f32 %v4482, %v5712
        %5714 = vmatprep.mubr.bf16.mxu0 %v3782
        %5715 = vmatmul.mubr.bf16.gmra.mrb[0].mxu0 %v3781
        %v5716 = vpop.f32.mrb[0].mxu0
        %v5717 = vadd.f32 %v4478, %v5716
        %v5718 = vpop.f32.mrb[0].mxu0
        %v5719 = vadd.f32 %v4482, %v5718
        %v5720 = vpop.f32.mrb[0].mxu0
        %v5721 = vadd.f32 %v4478, %v5720
        %v5722 = vpop.f32.mrb[0].mxu0
        %v5723 = vadd.f32 %v4482, %v5722
        %5724 = vmatprep.mubr.bf16.mxu0 %v3785
        %5725 = vmatmul.mubr.bf16.gmra.mrb[0].mxu0 %v3784
        %v5726 = vpop.f32.mrb[0].mxu0
        %v5727 = vadd.f32 %v4478, %v5726
        %v5728 = vpop.f32.mrb[0].mxu0
        %v5729 = vadd.f32 %v4482, %v5728
        %v5730 = vpop.f32.mrb[0].mxu0
        %v5731 = vadd.f32 %v4478, %v5730
        %v5732 = vpop.f32.mrb[0].mxu0
        %v5733 = vadd.f32 %v4482, %v5732
        %5734 = vmatprep.mubr.bf16.mxu0 %v3788
        %5735 = vmatmul.mubr.bf16.gmra.mrb[0].mxu0 %v3787
        %v5736 = vpop.f32.mrb[0].mxu0
        %v5737 = vadd.f32 %v4478, %v5736
        %v5738 = vpop.f32.mrb[0].mxu0
        %v5739 = vadd.f32 %v4482, %v5738
        %v5740 = vpop.f32.mrb[0].mxu0
        %v5741 = vadd.f32 %v4478, %v5740
        %v5742 = vpop.f32.mrb[0].mxu0
        %v5743 = vadd.f32 %v4482, %v5742
        %5744 = vdwg.mxu0
        %5745 = vmatprep.subr.bf16.mxu0 %v5259
        %5746 = vmatpush1.bf16.msra.mxu0 %v5258
        %5747 = vmatprep.subr.bf16.mxu0 %v5262
        %5748 = vmatpush1.bf16.msra.mxu0 %v5261
        %5749 = vmatprep.subr.bf16.mxu0 %v5265
        %5750 = vmatpush1.bf16.msra.mxu0 %v5264
        %5751 = vmatprep.subr.bf16.mxu0 %v5268
        %5752 = vmatpush1.bf16.msra.mxu0 %v5267
        %5753 = vmatprep.subr.bf16.mxu0 %v5271
        %5754 = vmatpush1.bf16.msra.mxu0 %v5270
        %5755 = vmatprep.subr.bf16.mxu0 %v5274
        %5756 = vmatpush1.bf16.msra.mxu0 %v5273
        %5757 = vmatprep.subr.bf16.mxu0 %v5277
        %5758 = vmatpush1.bf16.msra.mxu0 %v5276
        %5759 = vmatprep.subr.bf16.mxu0 %v5280
        %5760 = vmatpush1.bf16.msra.mxu0 %v5279
        %5761 = vmatprep.subr.bf16.mxu0 %v5283
        %5762 = vmatpush1.bf16.msra.mxu0 %v5282
        %5763 = vmatprep.subr.bf16.mxu0 %v5286
        %5764 = vmatpush1.bf16.msra.mxu0 %v5285
        %5765 = vmatprep.subr.bf16.mxu0 %v5289
        %5766 = vmatpush1.bf16.msra.mxu0 %v5288
        %5767 = vmatprep.subr.bf16.mxu0 %v5292
        %5768 = vmatpush1.bf16.msra.mxu0 %v5291
        %5769 = vmatprep.subr.bf16.mxu0 %v5295
        %5770 = vmatpush1.bf16.msra.mxu0 %v5294
        %5771 = vmatprep.subr.bf16.mxu0 %v5298
        %5772 = vmatpush1.bf16.msra.mxu0 %v5297
        %5773 = vmatprep.subr.bf16.mxu0 %v5301
        %5774 = vmatpush1.bf16.msra.mxu0 %v5300
        %5775 = vmatprep.subr.bf16.mxu0 %v5304
        %5776 = vmatpush1.bf16.msra.mxu0 %v5303
        %5777 = vmatprep.mubr.bf16.mxu0 %v3921
        %5778 = vmatmul.mubr.bf16.gmra.mrb[0].mxu0 %v3771
        %v5779 = vpop.f32.mrb[0].mxu0
        %v5780 = vadd.f32 %v5677, %v5779
        %v5781 = vpop.f32.mrb[0].mxu0
        %v5782 = vadd.f32 %v5679, %v5781
        %v5783 = vpop.f32.mrb[0].mxu0
        %v5784 = vadd.f32 %v5681, %v5783
        %v5785 = vpop.f32.mrb[0].mxu0
        %v5786 = vadd.f32 %v5683, %v5785
        %5787 = vmatprep.mubr.bf16.mxu0 %v3953
        %5788 = vmatmul.mubr.bf16.gmra.mrb[0].mxu0 %v3774
        %v5789 = vpop.f32.mrb[0].mxu0
        %v5790 = vadd.f32 %v5687, %v5789
        %v5791 = vpop.f32.mrb[0].mxu0
        %v5792 = vadd.f32 %v5689, %v5791
        %v5793 = vpop.f32.mrb[0].mxu0
        %v5794 = vadd.f32 %v5691, %v5793
        %v5795 = vpop.f32.mrb[0].mxu0
        %v5796 = vadd.f32 %v5693, %v5795
        %5797 = vmatprep.mubr.bf16.mxu0 %v3977
        %5798 = vmatmul.mubr.bf16.gmra.mrb[0].mxu0 %v3777
        %v5799 = vpop.f32.mrb[0].mxu0
        %v5800 = vadd.f32 %v5697, %v5799
        %v5801 = vpop.f32.mrb[0].mxu0
        %v5802 = vadd.f32 %v5699, %v5801
        %v5803 = vpop.f32.mrb[0].mxu0
        %v5804 = vadd.f32 %v5701, %v5803
        %v5805 = vpop.f32.mrb[0].mxu0
        %v5806 = vadd.f32 %v5703, %v5805
        %5807 = vmatprep.mubr.bf16.mxu0 %v4001
        %5808 = vmatmul.mubr.bf16.gmra.mrb[0].mxu0 %v3780
        %v5809 = vpop.f32.mrb[0].mxu0
        %v5810 = vadd.f32 %v5707, %v5809
        %v5811 = vpop.f32.mrb[0].mxu0
        %v5812 = vadd.f32 %v5709, %v5811
        %v5813 = vpop.f32.mrb[0].mxu0
        %v5814 = vadd.f32 %v5711, %v5813
        %v5815 = vpop.f32.mrb[0].mxu0
        %v5816 = vadd.f32 %v5713, %v5815
        %5817 = vmatprep.mubr.bf16.mxu0 %v4025
        %5818 = vmatmul.mubr.bf16.gmra.mrb[0].mxu0 %v3783
        %v5819 = vpop.f32.mrb[0].mxu0
        %v5820 = vadd.f32 %v5717, %v5819
        %v5821 = vpop.f32.mrb[0].mxu0
        %v5822 = vadd.f32 %v5719, %v5821
        %v5823 = vpop.f32.mrb[0].mxu0
        %v5824 = vadd.f32 %v5721, %v5823
        %v5825 = vpop.f32.mrb[0].mxu0
        %v5826 = vadd.f32 %v5723, %v5825
        %5827 = vmatprep.mubr.bf16.mxu0 %v4049
        %5828 = vmatmul.mubr.bf16.gmra.mrb[0].mxu0 %v3786
        %v5829 = vpop.f32.mrb[0].mxu0
        %v5830 = vadd.f32 %v5727, %v5829
        %v5831 = vpop.f32.mrb[0].mxu0
        %v5832 = vadd.f32 %v5729, %v5831
        %v5833 = vpop.f32.mrb[0].mxu0
        %v5834 = vadd.f32 %v5731, %v5833
        %v5835 = vpop.f32.mrb[0].mxu0
        %v5836 = vadd.f32 %v5733, %v5835
        %5837 = vmatprep.mubr.bf16.mxu0 %v4073
        %5838 = vmatmul.mubr.bf16.gmra.mrb[0].mxu0 %v3789
        %v5839 = vpop.f32.mrb[0].mxu0
        %v5840 = vadd.f32 %v5737, %v5839
        %v5841 = vpop.f32.mrb[0].mxu0
        %v5842 = vadd.f32 %v5739, %v5841
        %v5843 = vpop.f32.mrb[0].mxu0
        %v5844 = vadd.f32 %v5741, %v5843
        %v5845 = vpop.f32.mrb[0].mxu0
        %v5846 = vadd.f32 %v5743, %v5845
        %5847 = vdwg.mxu0
        %5848 = vmatprep.subr.bf16.mxu0 %v5307
        %5849 = vmatpush1.bf16.msra.mxu0 %v5306
        %5850 = vmatprep.subr.bf16.mxu0 %v5310
        %5851 = vmatpush1.bf16.msra.mxu0 %v5309
        %5852 = vmatprep.subr.bf16.mxu0 %v5313
        %5853 = vmatpush1.bf16.msra.mxu0 %v5312
        %5854 = vmatprep.subr.bf16.mxu0 %v5316
        %5855 = vmatpush1.bf16.msra.mxu0 %v5315
        %5856 = vmatprep.subr.bf16.mxu0 %v5319
        %5857 = vmatpush1.bf16.msra.mxu0 %v5318
        %5858 = vmatprep.subr.bf16.mxu0 %v5322
        %5859 = vmatpush1.bf16.msra.mxu0 %v5321
        %5860 = vmatprep.subr.bf16.mxu0 %v5325
        %5861 = vmatpush1.bf16.msra.mxu0 %v5324
        %5862 = vmatprep.subr.bf16.mxu0 %v5328
        %5863 = vmatpush1.bf16.msra.mxu0 %v5327
        %5864 = vmatprep.subr.bf16.mxu0 %v5331
        %5865 = vmatpush1.bf16.msra.mxu0 %v5330
        %5866 = vmatprep.subr.bf16.mxu0 %v5334
        %5867 = vmatpush1.bf16.msra.mxu0 %v5333
        %5868 = vmatprep.subr.bf16.mxu0 %v5337
        %5869 = vmatpush1.bf16.msra.mxu0 %v5336
        %5870 = vmatprep.subr.bf16.mxu0 %v5340
        %5871 = vmatpush1.bf16.msra.mxu0 %v5339
        %5872 = vmatprep.subr.bf16.mxu0 %v5343
        %5873 = vmatpush1.bf16.msra.mxu0 %v5342
        %5874 = vmatprep.subr.bf16.mxu0 %v5346
        %5875 = vmatpush1.bf16.msra.mxu0 %v5345
        %5876 = vmatprep.subr.bf16.mxu0 %v5349
        %5877 = vmatpush1.bf16.msra.mxu0 %v5348
        %5878 = vmatprep.subr.bf16.mxu0 %v5352
        %5879 = vmatpush1.bf16.msra.mxu0 %v5351
        %5880 = vmatprep.mubr.bf16.mxu0 %v3945
        %5881 = vmatmul.mubr.bf16.gmra.mrb[0].mxu0 %v3933
        %v5882 = vpop.f32.mrb[0].mxu0
        %v5883 = vadd.f32 %v5780, %v5882
        %v5884 = vpop.f32.mrb[0].mxu0
        %v5885 = vadd.f32 %v5782, %v5884
        %v5886 = vpop.f32.mrb[0].mxu0
        %v5887 = vadd.f32 %v5784, %v5886
        %v5888 = vpop.f32.mrb[0].mxu0
        %v5889 = vadd.f32 %v5786, %v5888
        %5890 = vmatprep.mubr.bf16.mxu0 %v3969
        %5891 = vmatmul.mubr.bf16.gmra.mrb[0].mxu0 %v3961
        %v5892 = vpop.f32.mrb[0].mxu0
        %v5893 = vadd.f32 %v5790, %v5892
        %v5894 = vpop.f32.mrb[0].mxu0
        %v5895 = vadd.f32 %v5792, %v5894
        %v5896 = vpop.f32.mrb[0].mxu0
        %v5897 = vadd.f32 %v5794, %v5896
        %v5898 = vpop.f32.mrb[0].mxu0
        %v5899 = vadd.f32 %v5796, %v5898
        %5900 = vmatprep.mubr.bf16.mxu0 %v3993
        %5901 = vmatmul.mubr.bf16.gmra.mrb[0].mxu0 %v3985
        %v5902 = vpop.f32.mrb[0].mxu0
        %v5903 = vadd.f32 %v5800, %v5902
        %v5904 = vpop.f32.mrb[0].mxu0
        %v5905 = vadd.f32 %v5802, %v5904
        %v5906 = vpop.f32.mrb[0].mxu0
        %v5907 = vadd.f32 %v5804, %v5906
        %v5908 = vpop.f32.mrb[0].mxu0
        %v5909 = vadd.f32 %v5806, %v5908
        %5910 = vmatprep.mubr.bf16.mxu0 %v4017
        %5911 = vmatmul.mubr.bf16.gmra.mrb[0].mxu0 %v4009
        %v5912 = vpop.f32.mrb[0].mxu0
        %v5913 = vadd.f32 %v5810, %v5912
        %v5914 = vpop.f32.mrb[0].mxu0
        %v5915 = vadd.f32 %v5812, %v5914
        %v5916 = vpop.f32.mrb[0].mxu0
        %v5917 = vadd.f32 %v5814, %v5916
        %v5918 = vpop.f32.mrb[0].mxu0
        %v5919 = vadd.f32 %v5816, %v5918
        %5920 = vmatprep.mubr.bf16.mxu0 %v4041
        %5921 = vmatmul.mubr.bf16.gmra.mrb[0].mxu0 %v4033
        %v5922 = vpop.f32.mrb[0].mxu0
        %v5923 = vadd.f32 %v5820, %v5922
        %v5924 = vpop.f32.mrb[0].mxu0
        %v5925 = vadd.f32 %v5822, %v5924
        %v5926 = vpop.f32.mrb[0].mxu0
        %v5927 = vadd.f32 %v5824, %v5926
        %v5928 = vpop.f32.mrb[0].mxu0
        %v5929 = vadd.f32 %v5826, %v5928
        %5930 = vmatprep.mubr.bf16.mxu0 %v4065
        %5931 = vmatmul.mubr.bf16.gmra.mrb[0].mxu0 %v4057
        %v5932 = vpop.f32.mrb[0].mxu0
        %v5933 = vadd.f32 %v5830, %v5932
        %v5934 = vpop.f32.mrb[0].mxu0
        %v5935 = vadd.f32 %v5832, %v5934
        %v5936 = vpop.f32.mrb[0].mxu0
        %v5937 = vadd.f32 %v5834, %v5936
        %v5938 = vpop.f32.mrb[0].mxu0
        %v5939 = vadd.f32 %v5836, %v5938
        %5940 = vmatprep.mubr.bf16.mxu0 %v4089
        %5941 = vmatmul.mubr.bf16.gmra.mrb[0].mxu0 %v4081
        %v5942 = vpop.f32.mrb[0].mxu0
        %v5943 = vadd.f32 %v5840, %v5942
        %v5944 = vpop.f32.mrb[0].mxu0
        %v5945 = vadd.f32 %v5842, %v5944
        %v5946 = vpop.f32.mrb[0].mxu0
        %v5947 = vadd.f32 %v5844, %v5946
        %v5948 = vpop.f32.mrb[0].mxu0
        %v5949 = vadd.f32 %v5846, %v5948
        %5950 = vdwg.mxu0
        %5951 = vmatprep.subr.bf16.mxu0 %v5355
        %5952 = vmatpush1.bf16.msra.mxu0 %v5354
        %5953 = vmatprep.subr.bf16.mxu0 %v5358
        %5954 = vmatpush1.bf16.msra.mxu0 %v5357
        %5955 = vmatprep.subr.bf16.mxu0 %v5361
        %5956 = vmatpush1.bf16.msra.mxu0 %v5360
        %5957 = vmatprep.subr.bf16.mxu0 %v5364
        %5958 = vmatpush1.bf16.msra.mxu0 %v5363
        %5959 = vmatprep.subr.bf16.mxu0 %v5367
        %5960 = vmatpush1.bf16.msra.mxu0 %v5366
        %5961 = vmatprep.subr.bf16.mxu0 %v5370
        %5962 = vmatpush1.bf16.msra.mxu0 %v5369
        %5963 = vmatprep.subr.bf16.mxu0 %v5373
        %5964 = vmatpush1.bf16.msra.mxu0 %v5372
        %5965 = vmatprep.subr.bf16.mxu0 %v5376
        %5966 = vmatpush1.bf16.msra.mxu0 %v5375
        %5967 = vmatprep.subr.bf16.mxu0 %v5379
        %5968 = vmatpush1.bf16.msra.mxu0 %v5378
        %5969 = vmatprep.subr.bf16.mxu0 %v5382
        %5970 = vmatpush1.bf16.msra.mxu0 %v5381
        %5971 = vmatprep.subr.bf16.mxu0 %v5385
        %5972 = vmatpush1.bf16.msra.mxu0 %v5384
        %5973 = vmatprep.subr.bf16.mxu0 %v5388
        %5974 = vmatpush1.bf16.msra.mxu0 %v5387
        %5975 = vmatprep.subr.bf16.mxu0 %v5391
        %5976 = vmatpush1.bf16.msra.mxu0 %v5390
        %5977 = vmatprep.subr.bf16.mxu0 %v5394
        %5978 = vmatpush1.bf16.msra.mxu0 %v5393
        %5979 = vmatprep.subr.bf16.mxu0 %v5397
        %5980 = vmatpush1.bf16.msra.mxu0 %v5396
        %5981 = vmatprep.subr.bf16.mxu0 %v5400
        %5982 = vmatpush1.bf16.msra.mxu0 %v5399
        %5983 = vmatprep.mubr.bf16.mxu0 %v4124
        %5984 = vmatmul.mubr.bf16.gmra.mrb[0].mxu0 %v4121
        %v5985 = vpop.f32.mrb[0].mxu0
        %v5986 = vadd.f32 %v5883, %v5985
        %v5987 = vpop.f32.mrb[0].mxu0
        %v5988 = vadd.f32 %v5885, %v5987
        %v5989 = vpop.f32.mrb[0].mxu0
        %v5990 = vadd.f32 %v5887, %v5989
        %v5991 = vpop.f32.mrb[0].mxu0
        %v5992 = vadd.f32 %v5889, %v5991
        %5993 = vmatprep.mubr.bf16.mxu0 %v4131
        %5994 = vmatmul.mubr.bf16.gmra.mrb[0].mxu0 %v4129
        %v5995 = vpop.f32.mrb[0].mxu0
        %v5996 = vadd.f32 %v5893, %v5995
        %v5997 = vpop.f32.mrb[0].mxu0
        %v5998 = vadd.f32 %v5895, %v5997
        %v5999 = vpop.f32.mrb[0].mxu0
        %v6000 = vadd.f32 %v5897, %v5999
        %v6001 = vpop.f32.mrb[0].mxu0
        %v6002 = vadd.f32 %v5899, %v6001
        %6003 = vmatprep.mubr.bf16.mxu0 %v4137
        %6004 = vmatmul.mubr.bf16.gmra.mrb[0].mxu0 %v4135
        %v6005 = vpop.f32.mrb[0].mxu0
        %v6006 = vadd.f32 %v5903, %v6005
        %v6007 = vpop.f32.mrb[0].mxu0
        %v6008 = vadd.f32 %v5905, %v6007
        %v6009 = vpop.f32.mrb[0].mxu0
        %v6010 = vadd.f32 %v5907, %v6009
        %v6011 = vpop.f32.mrb[0].mxu0
        %v6012 = vadd.f32 %v5909, %v6011
        %6013 = vmatprep.mubr.bf16.mxu0 %v4143
        %6014 = vmatmul.mubr.bf16.gmra.mrb[0].mxu0 %v4141
        %v6015 = vpop.f32.mrb[0].mxu0
        %v6016 = vadd.f32 %v5913, %v6015
        %v6017 = vpop.f32.mrb[0].mxu0
        %v6018 = vadd.f32 %v5915, %v6017
        %v6019 = vpop.f32.mrb[0].mxu0
        %v6020 = vadd.f32 %v5917, %v6019
        %v6021 = vpop.f32.mrb[0].mxu0
        %v6022 = vadd.f32 %v5919, %v6021
        %6023 = vmatprep.mubr.bf16.mxu0 %v4149
        %6024 = vmatmul.mubr.bf16.gmra.mrb[0].mxu0 %v4147
        %v6025 = vpop.f32.mrb[0].mxu0
        %v6026 = vadd.f32 %v5923, %v6025
        %v6027 = vpop.f32.mrb[0].mxu0
        %v6028 = vadd.f32 %v5925, %v6027
        %v6029 = vpop.f32.mrb[0].mxu0
        %v6030 = vadd.f32 %v5927, %v6029
        %v6031 = vpop.f32.mrb[0].mxu0
        %v6032 = vadd.f32 %v5929, %v6031
        %6033 = vmatprep.mubr.bf16.mxu0 %v4155
        %6034 = vmatmul.mubr.bf16.gmra.mrb[0].mxu0 %v4153
        %v6035 = vpop.f32.mrb[0].mxu0
        %v6036 = vadd.f32 %v5933, %v6035
        %v6037 = vpop.f32.mrb[0].mxu0
        %v6038 = vadd.f32 %v5935, %v6037
        %v6039 = vpop.f32.mrb[0].mxu0
        %v6040 = vadd.f32 %v5937, %v6039
        %v6041 = vpop.f32.mrb[0].mxu0
        %v6042 = vadd.f32 %v5939, %v6041
        %6043 = vmatprep.mubr.bf16.mxu0 %v4161
        %6044 = vmatmul.mubr.bf16.gmra.mrb[0].mxu0 %v4159
        %v6045 = vpop.f32.mrb[0].mxu0
        %v6046 = vadd.f32 %v5943, %v6045
        %v6047 = vpop.f32.mrb[0].mxu0
        %v6048 = vadd.f32 %v5945, %v6047
        %v6049 = vpop.f32.mrb[0].mxu0
        %v6050 = vadd.f32 %v5947, %v6049
        %v6051 = vpop.f32.mrb[0].mxu0
        %v6052 = vadd.f32 %v5949, %v6051
        %6053 = vdwg.mxu0
        %6054 = vmatprep.subr.bf16.mxu0 %v5403
        %6055 = vmatpush1.bf16.msra.mxu0 %v5402
        %6056 = vmatprep.subr.bf16.mxu0 %v5406
        %6057 = vmatpush1.bf16.msra.mxu0 %v5405
        %6058 = vmatprep.subr.bf16.mxu0 %v5409
        %6059 = vmatpush1.bf16.msra.mxu0 %v5408
        %6060 = vmatprep.subr.bf16.mxu0 %v5412
        %6061 = vmatpush1.bf16.msra.mxu0 %v5411
        %6062 = vmatprep.subr.bf16.mxu0 %v5415
        %6063 = vmatpush1.bf16.msra.mxu0 %v5414
        %6064 = vmatprep.subr.bf16.mxu0 %v5418
        %6065 = vmatpush1.bf16.msra.mxu0 %v5417
        %6066 = vmatprep.subr.bf16.mxu0 %v5421
        %6067 = vmatpush1.bf16.msra.mxu0 %v5420
        %6068 = vmatprep.subr.bf16.mxu0 %v5424
        %6069 = vmatpush1.bf16.msra.mxu0 %v5423
        %6070 = vmatprep.subr.bf16.mxu0 0
        %6071 = vmatpush1.bf16.msra.mxu0 0
        %6072 = vmatprep.subr.bf16.mxu0 0
        %6073 = vmatpush1.bf16.msra.mxu0 0
        %6074 = vmatprep.subr.bf16.mxu0 0
        %6075 = vmatpush1.bf16.msra.mxu0 0
        %6076 = vmatprep.subr.bf16.mxu0 0
        %6077 = vmatpush1.bf16.msra.mxu0 0
        %6078 = vmatprep.subr.bf16.mxu0 0
        %6079 = vmatpush1.bf16.msra.mxu0 0
        %6080 = vmatprep.subr.bf16.mxu0 0
        %6081 = vmatpush1.bf16.msra.mxu0 0
        %6082 = vmatprep.subr.bf16.mxu0 0
        %6083 = vmatpush1.bf16.msra.mxu0 0
        %6084 = vmatprep.subr.bf16.mxu0 0
        %6085 = vmatpush1.bf16.msra.mxu0 0
        %6086 = vmatprep.mubr.bf16.mxu0 0
        %6087 = vmatmul.mubr.bf16.gmra.mrb[0].mxu0 %v4127
        %v6088 = vpop.f32.mrb[0].mxu0
        %v6089 = vadd.f32 %v5986, %v6088
        %v6090 = vpop.f32.mrb[0].mxu0
        %v6091 = vadd.f32 %v5988, %v6090
        %v6092 = vpop.f32.mrb[0].mxu0
        %v6093 = vadd.f32 %v5990, %v6092
        %v6094 = vpop.f32.mrb[0].mxu0
        %v6095 = vadd.f32 %v5992, %v6094
        %6096 = vmatprep.mubr.bf16.mxu0 0
        %6097 = vmatmul.mubr.bf16.gmra.mrb[0].mxu0 %v4133
        %v6098 = vpop.f32.mrb[0].mxu0
        %v6099 = vadd.f32 %v5996, %v6098
        %v6100 = vpop.f32.mrb[0].mxu0
        %v6101 = vadd.f32 %v5998, %v6100
        %v6102 = vpop.f32.mrb[0].mxu0
        %v6103 = vadd.f32 %v6000, %v6102
        %v6104 = vpop.f32.mrb[0].mxu0
        %v6105 = vadd.f32 %v6002, %v6104
        %6106 = vmatprep.mubr.bf16.mxu0 0
        %6107 = vmatmul.mubr.bf16.gmra.mrb[0].mxu0 %v4139
        %v6108 = vpop.f32.mrb[0].mxu0
        %v6109 = vadd.f32 %v6006, %v6108
        %v6110 = vpop.f32.mrb[0].mxu0
        %v6111 = vadd.f32 %v6008, %v6110
        %v6112 = vpop.f32.mrb[0].mxu0
        %v6113 = vadd.f32 %v6010, %v6112
        %v6114 = vpop.f32.mrb[0].mxu0
        %v6115 = vadd.f32 %v6012, %v6114
        %6116 = vmatprep.mubr.bf16.mxu0 0
        %6117 = vmatmul.mubr.bf16.gmra.mrb[0].mxu0 %v4145
        %v6118 = vpop.f32.mrb[0].mxu0
        %v6119 = vadd.f32 %v6016, %v6118
        %v6120 = vpop.f32.mrb[0].mxu0
        %v6121 = vadd.f32 %v6018, %v6120
        %v6122 = vpop.f32.mrb[0].mxu0
        %v6123 = vadd.f32 %v6020, %v6122
        %v6124 = vpop.f32.mrb[0].mxu0
        %v6125 = vadd.f32 %v6022, %v6124
        %6126 = vmatprep.mubr.bf16.mxu0 0
        %6127 = vmatmul.mubr.bf16.gmra.mrb[0].mxu0 %v4151
        %v6128 = vpop.f32.mrb[0].mxu0
        %v6129 = vadd.f32 %v6026, %v6128
        %v6130 = vpop.f32.mrb[0].mxu0
        %v6131 = vadd.f32 %v6028, %v6130
        %v6132 = vpop.f32.mrb[0].mxu0
        %v6133 = vadd.f32 %v6030, %v6132
        %v6134 = vpop.f32.mrb[0].mxu0
        %v6135 = vadd.f32 %v6032, %v6134
        %6136 = vmatprep.mubr.bf16.mxu0 0
        %6137 = vmatmul.mubr.bf16.gmra.mrb[0].mxu0 %v4157
        %v6138 = vpop.f32.mrb[0].mxu0
        %v6139 = vadd.f32 %v6036, %v6138
        %v6140 = vpop.f32.mrb[0].mxu0
        %v6141 = vadd.f32 %v6038, %v6140
        %v6142 = vpop.f32.mrb[0].mxu0
        %v6143 = vadd.f32 %v6040, %v6142
        %v6144 = vpop.f32.mrb[0].mxu0
        %v6145 = vadd.f32 %v6042, %v6144
        %6146 = vmatprep.mubr.bf16.mxu0 0
        %6147 = vmatmul.mubr.bf16.gmra.mrb[0].mxu0 %v4163
        %v6148 = vpop.f32.mrb[0].mxu0
        %v6149 = vadd.f32 %v6046, %v6148
        %v6150 = vpop.f32.mrb[0].mxu0
        %v6151 = vadd.f32 %v6048, %v6150
        %v6152 = vpop.f32.mrb[0].mxu0
        %v6153 = vadd.f32 %v6050, %v6152
        %v6154 = vpop.f32.mrb[0].mxu0
        %v6155 = vadd.f32 %v6052, %v6154
        %6156 = vdwg.mxu0
        %6157 = vmatprep.subr.bf16.mxu0 0
        %6158 = vmatpush1.bf16.msra.mxu0 %v5212
        %6159 = vmatprep.subr.bf16.mxu0 0
        %6160 = vmatpush1.bf16.msra.mxu0 %v5215
        %6161 = vmatprep.subr.bf16.mxu0 0
        %6162 = vmatpush1.bf16.msra.mxu0 %v5218
        %6163 = vmatprep.subr.bf16.mxu0 0
        %6164 = vmatpush1.bf16.msra.mxu0 %v5221
        %6165 = vmatprep.subr.bf16.mxu0 0
        %6166 = vmatpush1.bf16.msra.mxu0 %v5224
        %6167 = vmatprep.subr.bf16.mxu0 0
        %6168 = vmatpush1.bf16.msra.mxu0 %v5227
        %6169 = vmatprep.subr.bf16.mxu0 0
        %6170 = vmatpush1.bf16.msra.mxu0 %v5230
        %6171 = vmatprep.subr.bf16.mxu0 0
        %6172 = vmatpush1.bf16.msra.mxu0 %v5233
        %6173 = vmatprep.subr.bf16.mxu0 0
        %6174 = vmatpush1.bf16.msra.mxu0 %v5236
        %6175 = vmatprep.subr.bf16.mxu0 0
        %6176 = vmatpush1.bf16.msra.mxu0 %v5239
        %6177 = vmatprep.subr.bf16.mxu0 0
        %6178 = vmatpush1.bf16.msra.mxu0 %v5242
        %6179 = vmatprep.subr.bf16.mxu0 0
        %6180 = vmatpush1.bf16.msra.mxu0 %v5245
        %6181 = vmatprep.subr.bf16.mxu0 0
        %6182 = vmatpush1.bf16.msra.mxu0 %v5248
        %6183 = vmatprep.subr.bf16.mxu0 0
        %6184 = vmatpush1.bf16.msra.mxu0 %v5251
        %6185 = vmatprep.subr.bf16.mxu0 0
        %6186 = vmatpush1.bf16.msra.mxu0 %v5254
        %6187 = vmatprep.subr.bf16.mxu0 0
        %6188 = vmatpush1.bf16.msra.mxu0 %v5257
        %6189 = vmatprep.mubr.bf16.mxu0 %v3770
        %6190 = vmatmul.mubr.bf16.gmra.mrb[0].mxu0 %v3769
        %v6191 = vpop.f32.mrb[0].mxu0
        %v6192 = vadd.f32 %v4486, %v6191
        %v6193 = vpop.f32.mrb[0].mxu0
        %v6194 = vpop.f32.mrb[0].mxu0
        %v6195 = vadd.f32 %v4486, %v6194
        %v6196 = vpop.f32.mrb[0].mxu0
        %6197 = vmatprep.mubr.bf16.mxu0 %v3773
        %6198 = vmatmul.mubr.bf16.gmra.mrb[0].mxu0 %v3772
        %v6199 = vpop.f32.mrb[0].mxu0
        %v6200 = vadd.f32 %v4486, %v6199
        %v6201 = vpop.f32.mrb[0].mxu0
        %v6202 = vpop.f32.mrb[0].mxu0
        %v6203 = vadd.f32 %v4486, %v6202
        %v6204 = vpop.f32.mrb[0].mxu0
        %6205 = vmatprep.mubr.bf16.mxu0 %v3776
        %6206 = vmatmul.mubr.bf16.gmra.mrb[0].mxu0 %v3775
        %v6207 = vpop.f32.mrb[0].mxu0
        %v6208 = vadd.f32 %v4486, %v6207
        %v6209 = vpop.f32.mrb[0].mxu0
        %v6210 = vpop.f32.mrb[0].mxu0
        %v6211 = vadd.f32 %v4486, %v6210
        %v6212 = vpop.f32.mrb[0].mxu0
        %6213 = vmatprep.mubr.bf16.mxu0 %v3779
        %6214 = vmatmul.mubr.bf16.gmra.mrb[0].mxu0 %v3778
        %v6215 = vpop.f32.mrb[0].mxu0
        %v6216 = vadd.f32 %v4486, %v6215
        %v6217 = vpop.f32.mrb[0].mxu0
        %v6218 = vpop.f32.mrb[0].mxu0
        %v6219 = vadd.f32 %v4486, %v6218
        %v6220 = vpop.f32.mrb[0].mxu0
        %6221 = vmatprep.mubr.bf16.mxu0 %v3782
        %6222 = vmatmul.mubr.bf16.gmra.mrb[0].mxu0 %v3781
        %v6223 = vpop.f32.mrb[0].mxu0
        %v6224 = vadd.f32 %v4486, %v6223
        %v6225 = vpop.f32.mrb[0].mxu0
        %v6226 = vpop.f32.mrb[0].mxu0
        %v6227 = vadd.f32 %v4486, %v6226
        %v6228 = vpop.f32.mrb[0].mxu0
        %6229 = vmatprep.mubr.bf16.mxu0 %v3785
        %6230 = vmatmul.mubr.bf16.gmra.mrb[0].mxu0 %v3784
        %v6231 = vpop.f32.mrb[0].mxu0
        %v6232 = vadd.f32 %v4486, %v6231
        %v6233 = vpop.f32.mrb[0].mxu0
        %v6234 = vpop.f32.mrb[0].mxu0
        %v6235 = vadd.f32 %v4486, %v6234
        %v6236 = vpop.f32.mrb[0].mxu0
        %6237 = vmatprep.mubr.bf16.mxu0 %v3788
        %6238 = vmatmul.mubr.bf16.gmra.mrb[0].mxu0 %v3787
        %v6239 = vpop.f32.mrb[0].mxu0
        %v6240 = vadd.f32 %v4486, %v6239
        %v6241 = vpop.f32.mrb[0].mxu0
        %v6242 = vpop.f32.mrb[0].mxu0
        %v6243 = vadd.f32 %v4486, %v6242
        %v6244 = vpop.f32.mrb[0].mxu0
        %6245 = vdwg.mxu0
        %6246 = vmatprep.subr.bf16.mxu0 0
        %6247 = vmatpush1.bf16.msra.mxu0 %v5260
        %6248 = vmatprep.subr.bf16.mxu0 0
        %6249 = vmatpush1.bf16.msra.mxu0 %v5263
        %6250 = vmatprep.subr.bf16.mxu0 0
        %6251 = vmatpush1.bf16.msra.mxu0 %v5266
        %6252 = vmatprep.subr.bf16.mxu0 0
        %6253 = vmatpush1.bf16.msra.mxu0 %v5269
        %6254 = vmatprep.subr.bf16.mxu0 0
        %6255 = vmatpush1.bf16.msra.mxu0 %v5272
        %6256 = vmatprep.subr.bf16.mxu0 0
        %6257 = vmatpush1.bf16.msra.mxu0 %v5275
        %6258 = vmatprep.subr.bf16.mxu0 0
        %6259 = vmatpush1.bf16.msra.mxu0 %v5278
        %6260 = vmatprep.subr.bf16.mxu0 0
        %6261 = vmatpush1.bf16.msra.mxu0 %v5281
        %6262 = vmatprep.subr.bf16.mxu0 0
        %6263 = vmatpush1.bf16.msra.mxu0 %v5284
        %6264 = vmatprep.subr.bf16.mxu0 0
        %6265 = vmatpush1.bf16.msra.mxu0 %v5287
        %6266 = vmatprep.subr.bf16.mxu0 0
        %6267 = vmatpush1.bf16.msra.mxu0 %v5290
        %6268 = vmatprep.subr.bf16.mxu0 0
        %6269 = vmatpush1.bf16.msra.mxu0 %v5293
        %6270 = vmatprep.subr.bf16.mxu0 0
        %6271 = vmatpush1.bf16.msra.mxu0 %v5296
        %6272 = vmatprep.subr.bf16.mxu0 0
        %6273 = vmatpush1.bf16.msra.mxu0 %v5299
        %6274 = vmatprep.subr.bf16.mxu0 0
        %6275 = vmatpush1.bf16.msra.mxu0 %v5302
        %6276 = vmatprep.subr.bf16.mxu0 0
        %6277 = vmatpush1.bf16.msra.mxu0 %v5305
        %6278 = vmatprep.mubr.bf16.mxu0 %v3921
        %6279 = vmatmul.mubr.bf16.gmra.mrb[0].mxu0 %v3771
        %v6280 = vpop.f32.mrb[0].mxu0
        %v6281 = vadd.f32 %v6192, %v6280
        %v6282 = vpop.f32.mrb[0].mxu0
        %v6283 = vpop.f32.mrb[0].mxu0
        %v6284 = vadd.f32 %v6195, %v6283
        %v6285 = vpop.f32.mrb[0].mxu0
        %6286 = vmatprep.mubr.bf16.mxu0 %v3953
        %6287 = vmatmul.mubr.bf16.gmra.mrb[0].mxu0 %v3774
        %v6288 = vpop.f32.mrb[0].mxu0
        %v6289 = vadd.f32 %v6200, %v6288
        %v6290 = vpop.f32.mrb[0].mxu0
        %v6291 = vpop.f32.mrb[0].mxu0
        %v6292 = vadd.f32 %v6203, %v6291
        %v6293 = vpop.f32.mrb[0].mxu0
        %6294 = vmatprep.mubr.bf16.mxu0 %v3977
        %6295 = vmatmul.mubr.bf16.gmra.mrb[0].mxu0 %v3777
        %v6296 = vpop.f32.mrb[0].mxu0
        %v6297 = vadd.f32 %v6208, %v6296
        %v6298 = vpop.f32.mrb[0].mxu0
        %v6299 = vpop.f32.mrb[0].mxu0
        %v6300 = vadd.f32 %v6211, %v6299
        %v6301 = vpop.f32.mrb[0].mxu0
        %6302 = vmatprep.mubr.bf16.mxu0 %v4001
        %6303 = vmatmul.mubr.bf16.gmra.mrb[0].mxu0 %v3780
        %v6304 = vpop.f32.mrb[0].mxu0
        %v6305 = vadd.f32 %v6216, %v6304
        %v6306 = vpop.f32.mrb[0].mxu0
        %v6307 = vpop.f32.mrb[0].mxu0
        %v6308 = vadd.f32 %v6219, %v6307
        %v6309 = vpop.f32.mrb[0].mxu0
        %6310 = vmatprep.mubr.bf16.mxu0 %v4025
        %6311 = vmatmul.mubr.bf16.gmra.mrb[0].mxu0 %v3783
        %v6312 = vpop.f32.mrb[0].mxu0
        %v6313 = vadd.f32 %v6224, %v6312
        %v6314 = vpop.f32.mrb[0].mxu0
        %v6315 = vpop.f32.mrb[0].mxu0
        %v6316 = vadd.f32 %v6227, %v6315
        %v6317 = vpop.f32.mrb[0].mxu0
        %6318 = vmatprep.mubr.bf16.mxu0 %v4049
        %6319 = vmatmul.mubr.bf16.gmra.mrb[0].mxu0 %v3786
        %v6320 = vpop.f32.mrb[0].mxu0
        %v6321 = vadd.f32 %v6232, %v6320
        %v6322 = vpop.f32.mrb[0].mxu0
        %v6323 = vpop.f32.mrb[0].mxu0
        %v6324 = vadd.f32 %v6235, %v6323
        %v6325 = vpop.f32.mrb[0].mxu0
        %6326 = vmatprep.mubr.bf16.mxu0 %v4073
        %6327 = vmatmul.mubr.bf16.gmra.mrb[0].mxu0 %v3789
        %v6328 = vpop.f32.mrb[0].mxu0
        %v6329 = vadd.f32 %v6240, %v6328
        %v6330 = vpop.f32.mrb[0].mxu0
        %v6331 = vpop.f32.mrb[0].mxu0
        %v6332 = vadd.f32 %v6243, %v6331
        %v6333 = vpop.f32.mrb[0].mxu0
        %6334 = vdwg.mxu0
        %6335 = vmatprep.subr.bf16.mxu0 0
        %6336 = vmatpush1.bf16.msra.mxu0 %v5308
        %6337 = vmatprep.subr.bf16.mxu0 0
        %6338 = vmatpush1.bf16.msra.mxu0 %v5311
        %6339 = vmatprep.subr.bf16.mxu0 0
        %6340 = vmatpush1.bf16.msra.mxu0 %v5314
        %6341 = vmatprep.subr.bf16.mxu0 0
        %6342 = vmatpush1.bf16.msra.mxu0 %v5317
        %6343 = vmatprep.subr.bf16.mxu0 0
        %6344 = vmatpush1.bf16.msra.mxu0 %v5320
        %6345 = vmatprep.subr.bf16.mxu0 0
        %6346 = vmatpush1.bf16.msra.mxu0 %v5323
        %6347 = vmatprep.subr.bf16.mxu0 0
        %6348 = vmatpush1.bf16.msra.mxu0 %v5326
        %6349 = vmatprep.subr.bf16.mxu0 0
        %6350 = vmatpush1.bf16.msra.mxu0 %v5329
        %6351 = vmatprep.subr.bf16.mxu0 0
        %6352 = vmatpush1.bf16.msra.mxu0 %v5332
        %6353 = vmatprep.subr.bf16.mxu0 0
        %6354 = vmatpush1.bf16.msra.mxu0 %v5335
        %6355 = vmatprep.subr.bf16.mxu0 0
        %6356 = vmatpush1.bf16.msra.mxu0 %v5338
        %6357 = vmatprep.subr.bf16.mxu0 0
        %6358 = vmatpush1.bf16.msra.mxu0 %v5341
        %6359 = vmatprep.subr.bf16.mxu0 0
        %6360 = vmatpush1.bf16.msra.mxu0 %v5344
        %6361 = vmatprep.subr.bf16.mxu0 0
        %6362 = vmatpush1.bf16.msra.mxu0 %v5347
        %6363 = vmatprep.subr.bf16.mxu0 0
        %6364 = vmatpush1.bf16.msra.mxu0 %v5350
        %6365 = vmatprep.subr.bf16.mxu0 0
        %6366 = vmatpush1.bf16.msra.mxu0 %v5353
        %6367 = vmatprep.mubr.bf16.mxu0 %v3945
        %6368 = vmatmul.mubr.bf16.gmra.mrb[0].mxu0 %v3933
        %v6369 = vpop.f32.mrb[0].mxu0
        %v6370 = vadd.f32 %v6281, %v6369
        %v6371 = vpop.f32.mrb[0].mxu0
        %v6372 = vpop.f32.mrb[0].mxu0
        %v6373 = vadd.f32 %v6284, %v6372
        %v6374 = vpop.f32.mrb[0].mxu0
        %6375 = vmatprep.mubr.bf16.mxu0 %v3969
        %6376 = vmatmul.mubr.bf16.gmra.mrb[0].mxu0 %v3961
        %v6377 = vpop.f32.mrb[0].mxu0
        %v6378 = vadd.f32 %v6289, %v6377
        %v6379 = vpop.f32.mrb[0].mxu0
        %v6380 = vpop.f32.mrb[0].mxu0
        %v6381 = vadd.f32 %v6292, %v6380
        %v6382 = vpop.f32.mrb[0].mxu0
        %6383 = vmatprep.mubr.bf16.mxu0 %v3993
        %6384 = vmatmul.mubr.bf16.gmra.mrb[0].mxu0 %v3985
        %v6385 = vpop.f32.mrb[0].mxu0
        %v6386 = vadd.f32 %v6297, %v6385
        %v6387 = vpop.f32.mrb[0].mxu0
        %v6388 = vpop.f32.mrb[0].mxu0
        %v6389 = vadd.f32 %v6300, %v6388
        %v6390 = vpop.f32.mrb[0].mxu0
        %6391 = vmatprep.mubr.bf16.mxu0 %v4017
        %6392 = vmatmul.mubr.bf16.gmra.mrb[0].mxu0 %v4009
        %v6393 = vpop.f32.mrb[0].mxu0
        %v6394 = vadd.f32 %v6305, %v6393
        %v6395 = vpop.f32.mrb[0].mxu0
        %v6396 = vpop.f32.mrb[0].mxu0
        %v6397 = vadd.f32 %v6308, %v6396
        %v6398 = vpop.f32.mrb[0].mxu0
        %6399 = vmatprep.mubr.bf16.mxu0 %v4041
        %6400 = vmatmul.mubr.bf16.gmra.mrb[0].mxu0 %v4033
        %v6401 = vpop.f32.mrb[0].mxu0
        %v6402 = vadd.f32 %v6313, %v6401
        %v6403 = vpop.f32.mrb[0].mxu0
        %v6404 = vpop.f32.mrb[0].mxu0
        %v6405 = vadd.f32 %v6316, %v6404
        %v6406 = vpop.f32.mrb[0].mxu0
        %6407 = vmatprep.mubr.bf16.mxu0 %v4065
        %6408 = vmatmul.mubr.bf16.gmra.mrb[0].mxu0 %v4057
        %v6409 = vpop.f32.mrb[0].mxu0
        %v6410 = vadd.f32 %v6321, %v6409
        %v6411 = vpop.f32.mrb[0].mxu0
        %v6412 = vpop.f32.mrb[0].mxu0
        %v6413 = vadd.f32 %v6324, %v6412
        %v6414 = vpop.f32.mrb[0].mxu0
        %6415 = vmatprep.mubr.bf16.mxu0 %v4089
        %6416 = vmatmul.mubr.bf16.gmra.mrb[0].mxu0 %v4081
        %v6417 = vpop.f32.mrb[0].mxu0
        %v6418 = vadd.f32 %v6329, %v6417
        %v6419 = vpop.f32.mrb[0].mxu0
        %v6420 = vpop.f32.mrb[0].mxu0
        %v6421 = vadd.f32 %v6332, %v6420
        %v6422 = vpop.f32.mrb[0].mxu0
        %6423 = vdwg.mxu0
        %6424 = vmatprep.subr.bf16.mxu0 0
        %6425 = vmatpush1.bf16.msra.mxu0 %v5356
        %6426 = vmatprep.subr.bf16.mxu0 0
        %6427 = vmatpush1.bf16.msra.mxu0 %v5359
        %6428 = vmatprep.subr.bf16.mxu0 0
        %6429 = vmatpush1.bf16.msra.mxu0 %v5362
        %6430 = vmatprep.subr.bf16.mxu0 0
        %6431 = vmatpush1.bf16.msra.mxu0 %v5365
        %6432 = vmatprep.subr.bf16.mxu0 0
        %6433 = vmatpush1.bf16.msra.mxu0 %v5368
        %6434 = vmatprep.subr.bf16.mxu0 0
        %6435 = vmatpush1.bf16.msra.mxu0 %v5371
        %6436 = vmatprep.subr.bf16.mxu0 0
        %6437 = vmatpush1.bf16.msra.mxu0 %v5374
        %6438 = vmatprep.subr.bf16.mxu0 0
        %6439 = vmatpush1.bf16.msra.mxu0 %v5377
        %6440 = vmatprep.subr.bf16.mxu0 0
        %6441 = vmatpush1.bf16.msra.mxu0 %v5380
        %6442 = vmatprep.subr.bf16.mxu0 0
        %6443 = vmatpush1.bf16.msra.mxu0 %v5383
        %6444 = vmatprep.subr.bf16.mxu0 0
        %6445 = vmatpush1.bf16.msra.mxu0 %v5386
        %6446 = vmatprep.subr.bf16.mxu0 0
        %6447 = vmatpush1.bf16.msra.mxu0 %v5389
        %6448 = vmatprep.subr.bf16.mxu0 0
        %6449 = vmatpush1.bf16.msra.mxu0 %v5392
        %6450 = vmatprep.subr.bf16.mxu0 0
        %6451 = vmatpush1.bf16.msra.mxu0 %v5395
        %6452 = vmatprep.subr.bf16.mxu0 0
        %6453 = vmatpush1.bf16.msra.mxu0 %v5398
        %6454 = vmatprep.subr.bf16.mxu0 0
        %6455 = vmatpush1.bf16.msra.mxu0 %v5401
        %6456 = vmatprep.mubr.bf16.mxu0 %v4124
        %6457 = vmatmul.mubr.bf16.gmra.mrb[0].mxu0 %v4121
        %v6458 = vpop.f32.mrb[0].mxu0
        %v6459 = vadd.f32 %v6370, %v6458
        %v6460 = vpop.f32.mrb[0].mxu0
        %v6461 = vpop.f32.mrb[0].mxu0
        %v6462 = vadd.f32 %v6373, %v6461
        %v6463 = vpop.f32.mrb[0].mxu0
        %6464 = vmatprep.mubr.bf16.mxu0 %v4131
        %6465 = vmatmul.mubr.bf16.gmra.mrb[0].mxu0 %v4129
        %v6466 = vpop.f32.mrb[0].mxu0
        %v6467 = vadd.f32 %v6378, %v6466
        %v6468 = vpop.f32.mrb[0].mxu0
        %v6469 = vpop.f32.mrb[0].mxu0
        %v6470 = vadd.f32 %v6381, %v6469
        %v6471 = vpop.f32.mrb[0].mxu0
        %6472 = vmatprep.mubr.bf16.mxu0 %v4137
        %6473 = vmatmul.mubr.bf16.gmra.mrb[0].mxu0 %v4135
        %v6474 = vpop.f32.mrb[0].mxu0
        %v6475 = vadd.f32 %v6386, %v6474
        %v6476 = vpop.f32.mrb[0].mxu0
        %v6477 = vpop.f32.mrb[0].mxu0
        %v6478 = vadd.f32 %v6389, %v6477
        %v6479 = vpop.f32.mrb[0].mxu0
        %6480 = vmatprep.mubr.bf16.mxu0 %v4143
        %6481 = vmatmul.mubr.bf16.gmra.mrb[0].mxu0 %v4141
        %v6482 = vpop.f32.mrb[0].mxu0
        %v6483 = vadd.f32 %v6394, %v6482
        %v6484 = vpop.f32.mrb[0].mxu0
        %v6485 = vpop.f32.mrb[0].mxu0
        %v6486 = vadd.f32 %v6397, %v6485
        %v6487 = vpop.f32.mrb[0].mxu0
        %6488 = vmatprep.mubr.bf16.mxu0 %v4149
        %6489 = vmatmul.mubr.bf16.gmra.mrb[0].mxu0 %v4147
        %v6490 = vpop.f32.mrb[0].mxu0
        %v6491 = vadd.f32 %v6402, %v6490
        %v6492 = vpop.f32.mrb[0].mxu0
        %v6493 = vpop.f32.mrb[0].mxu0
        %v6494 = vadd.f32 %v6405, %v6493
        %v6495 = vpop.f32.mrb[0].mxu0
        %6496 = vmatprep.mubr.bf16.mxu0 %v4155
        %6497 = vmatmul.mubr.bf16.gmra.mrb[0].mxu0 %v4153
        %v6498 = vpop.f32.mrb[0].mxu0
        %v6499 = vadd.f32 %v6410, %v6498
        %v6500 = vpop.f32.mrb[0].mxu0
        %v6501 = vpop.f32.mrb[0].mxu0
        %v6502 = vadd.f32 %v6413, %v6501
        %v6503 = vpop.f32.mrb[0].mxu0
        %6504 = vmatprep.mubr.bf16.mxu0 %v4161
        %6505 = vmatmul.mubr.bf16.gmra.mrb[0].mxu0 %v4159
        %v6506 = vpop.f32.mrb[0].mxu0
        %v6507 = vadd.f32 %v6418, %v6506
        %v6508 = vpop.f32.mrb[0].mxu0
        %v6509 = vpop.f32.mrb[0].mxu0
        %v6510 = vadd.f32 %v6421, %v6509
        %v6511 = vpop.f32.mrb[0].mxu0
        %6512 = vdwg.mxu0
        %6513 = vmatprep.subr.bf16.mxu0 0
        %6514 = vmatpush1.bf16.msra.mxu0 %v5404
        %6515 = vmatprep.subr.bf16.mxu0 0
        %6516 = vmatpush1.bf16.msra.mxu0 %v5407
        %6517 = vmatprep.subr.bf16.mxu0 0
        %6518 = vmatpush1.bf16.msra.mxu0 %v5410
        %6519 = vmatprep.subr.bf16.mxu0 0
        %6520 = vmatpush1.bf16.msra.mxu0 %v5413
        %6521 = vmatprep.subr.bf16.mxu0 0
        %6522 = vmatpush1.bf16.msra.mxu0 %v5416
        %6523 = vmatprep.subr.bf16.mxu0 0
        %6524 = vmatpush1.bf16.msra.mxu0 %v5419
        %6525 = vmatprep.subr.bf16.mxu0 0
        %6526 = vmatpush1.bf16.msra.mxu0 %v5422
        %6527 = vmatprep.subr.bf16.mxu0 0
        %6528 = vmatpush1.bf16.msra.mxu0 %v5425
        %6529 = vmatprep.subr.bf16.mxu0 0
        %6530 = vmatpush1.bf16.msra.mxu0 0
        %6531 = vmatprep.subr.bf16.mxu0 0
        %6532 = vmatpush1.bf16.msra.mxu0 0
        %6533 = vmatprep.subr.bf16.mxu0 0
        %6534 = vmatpush1.bf16.msra.mxu0 0
        %6535 = vmatprep.subr.bf16.mxu0 0
        %6536 = vmatpush1.bf16.msra.mxu0 0
        %6537 = vmatprep.subr.bf16.mxu0 0
        %6538 = vmatpush1.bf16.msra.mxu0 0
        %6539 = vmatprep.subr.bf16.mxu0 0
        %6540 = vmatpush1.bf16.msra.mxu0 0
        %6541 = vmatprep.subr.bf16.mxu0 0
        %6542 = vmatpush1.bf16.msra.mxu0 0
        %6543 = vmatprep.subr.bf16.mxu0 0
        %6544 = vmatpush1.bf16.msra.mxu0 0
        %6545 = vmatprep.mubr.bf16.mxu0 0
        %6546 = vmatmul.mubr.bf16.gmra.mrb[0].mxu0 %v4127
        %v6547 = vpop.f32.mrb[0].mxu0
        %v6548 = vadd.f32 %v6459, %v6547
        %v6549 = vpop.f32.mrb[0].mxu0
        %v6550 = vpop.f32.mrb[0].mxu0
        %v6551 = vadd.f32 %v6462, %v6550
        %v6552 = vpop.f32.mrb[0].mxu0
        %6553 = vmatprep.mubr.bf16.mxu0 0
        %6554 = vmatmul.mubr.bf16.gmra.mrb[0].mxu0 %v4133
        %v6555 = vpop.f32.mrb[0].mxu0
        %v6556 = vadd.f32 %v6467, %v6555
        %v6557 = vpop.f32.mrb[0].mxu0
        %v6558 = vpop.f32.mrb[0].mxu0
        %v6559 = vadd.f32 %v6470, %v6558
        %v6560 = vpop.f32.mrb[0].mxu0
        %6561 = vmatprep.mubr.bf16.mxu0 0
        %6562 = vmatmul.mubr.bf16.gmra.mrb[0].mxu0 %v4139
        %v6563 = vpop.f32.mrb[0].mxu0
        %v6564 = vadd.f32 %v6475, %v6563
        %v6565 = vpop.f32.mrb[0].mxu0
        %v6566 = vpop.f32.mrb[0].mxu0
        %v6567 = vadd.f32 %v6478, %v6566
        %v6568 = vpop.f32.mrb[0].mxu0
        %6569 = vmatprep.mubr.bf16.mxu0 0
        %6570 = vmatmul.mubr.bf16.gmra.mrb[0].mxu0 %v4145
        %v6571 = vpop.f32.mrb[0].mxu0
        %v6572 = vadd.f32 %v6483, %v6571
        %v6573 = vpop.f32.mrb[0].mxu0
        %v6574 = vpop.f32.mrb[0].mxu0
        %v6575 = vadd.f32 %v6486, %v6574
        %v6576 = vpop.f32.mrb[0].mxu0
        %6577 = vmatprep.mubr.bf16.mxu0 0
        %6578 = vmatmul.mubr.bf16.gmra.mrb[0].mxu0 %v4151
        %v6579 = vpop.f32.mrb[0].mxu0
        %v6580 = vadd.f32 %v6491, %v6579
        %v6581 = vpop.f32.mrb[0].mxu0
        %v6582 = vpop.f32.mrb[0].mxu0
        %v6583 = vadd.f32 %v6494, %v6582
        %v6584 = vpop.f32.mrb[0].mxu0
        %6585 = vmatprep.mubr.bf16.mxu0 0
        %6586 = vmatmul.mubr.bf16.gmra.mrb[0].mxu0 %v4157
        %v6587 = vpop.f32.mrb[0].mxu0
        %v6588 = vadd.f32 %v6499, %v6587
        %v6589 = vpop.f32.mrb[0].mxu0
        %v6590 = vpop.f32.mrb[0].mxu0
        %v6591 = vadd.f32 %v6502, %v6590
        %v6592 = vpop.f32.mrb[0].mxu0
        %6593 = vmatprep.mubr.bf16.mxu0 0
        %6594 = vmatmul.mubr.bf16.gmra.mrb[0].mxu0 %v4163
        %v6595 = vpop.f32.mrb[0].mxu0
        %v6596 = vadd.f32 %v6507, %v6595
        %v6597 = vpop.f32.mrb[0].mxu0
        %v6598 = vpop.f32.mrb[0].mxu0
        %v6599 = vadd.f32 %v6510, %v6598
        %v6600 = vpop.f32.mrb[0].mxu0
        %6601 = vdwg.mxu0
        %v6602 = vmax.f32 %v6089, 0.0
        %v6603 = vmax.f32 %v6091, 0.0
        %v6604 = vmax.f32 %v6548, 0.0
        %v6605 = vmax.f32 %v6093, 0.0
        %v6606 = vmax.f32 %v6095, 0.0
        %v6607 = vmax.f32 %v6551, 0.0
        %v6608 = vmax.f32 %v6099, 0.0
        %v6609 = vmax.f32 %v6101, 0.0
        %v6610 = vmax.f32 %v6556, 0.0
        %v6611 = vmax.f32 %v6103, 0.0
        %v6612 = vmax.f32 %v6105, 0.0
        %v6613 = vmax.f32 %v6559, 0.0
        %v6614 = vmax.f32 %v6109, 0.0
        %v6615 = vmax.f32 %v6111, 0.0
        %v6616 = vmax.f32 %v6564, 0.0
        %v6617 = vmax.f32 %v6113, 0.0
        %v6618 = vmax.f32 %v6115, 0.0
        %v6619 = vmax.f32 %v6567, 0.0
        %v6620 = vmax.f32 %v6119, 0.0
        %v6621 = vmax.f32 %v6121, 0.0
        %v6622 = vmax.f32 %v6572, 0.0
        %v6623 = vmax.f32 %v6123, 0.0
        %v6624 = vmax.f32 %v6125, 0.0
        %v6625 = vmax.f32 %v6575, 0.0
        %v6626 = vmax.f32 %v6129, 0.0
        %v6627 = vmax.f32 %v6131, 0.0
        %v6628 = vmax.f32 %v6580, 0.0
        %v6629 = vmax.f32 %v6133, 0.0
        %v6630 = vmax.f32 %v6135, 0.0
        %v6631 = vmax.f32 %v6583, 0.0
        %v6632 = vmax.f32 %v6139, 0.0
        %v6633 = vmax.f32 %v6141, 0.0
        %v6634 = vmax.f32 %v6588, 0.0
        %v6635 = vmax.f32 %v6143, 0.0
        %v6636 = vmax.f32 %v6145, 0.0
        %v6637 = vmax.f32 %v6591, 0.0
        %v6638 = vmax.f32 %v6149, 0.0
        %v6639 = vmax.f32 %v6151, 0.0
        %v6640 = vmax.f32 %v6596, 0.0
        %v6641 = vmax.f32 %v6153, 0.0
        %v6642 = vmax.f32 %v6155, 0.0
        %v6643 = vmax.f32 %v6599, 0.0
        %s6644 = scalar_lea.vmem %s5, 1728
        %v6645 = vld [vmem:[%s6644] sm:$0xff]
        %v6646 = vld [vmem:[%s6644 + $0x8] sm:$0xf]
        %v6647 = vld [vmem:[%s6644 + $0xc] sm:$0xff]
        %v6648 = vld [vmem:[%s6644 + $0x14] sm:$0xf]
        %v6649 = vld [vmem:[%s6644 + $0x18] sm:$0xff]
        %v6650 = vld [vmem:[%s6644 + $0x20] sm:$0xf]
        %v6651 = vld [vmem:[%s6644 + $0x24] sm:$0xff]
        %v6652 = vld [vmem:[%s6644 + $0x2c] sm:$0xf]
        %v6653 = vld [vmem:[%s6644 + $0x30] sm:$0xff]
        %v6654 = vld [vmem:[%s6644 + $0x38] sm:$0xf]
        %v6655 = vld [vmem:[%s6644 + $0x3c] sm:$0xff]
        %v6656 = vld [vmem:[%s6644 + $0x44] sm:$0xf]
        %v6657 = vld [vmem:[%s6644 + $0x48] sm:$0xff]
        %v6658 = vld [vmem:[%s6644 + $0x50] sm:$0xf]
        %v6659 = vld [vmem:[%s6644 + $0x54] sm:$0xff]
        %v6660 = vld [vmem:[%s6644 + $0x5c] sm:$0xf]
        %v6661 = vld [vmem:[%s6644 + $0x60] sm:$0xff]
        %v6662 = vld [vmem:[%s6644 + $0x68] sm:$0xf]
        %v6663 = vld [vmem:[%s6644 + $0x6c] sm:$0xff]
        %v6664 = vld [vmem:[%s6644 + $0x74] sm:$0xf]
        %v6665 = vld [vmem:[%s6644 + $0x78] sm:$0xff]
        %v6666 = vld [vmem:[%s6644 + $0x80] sm:$0xf]
        %v6667 = vld [vmem:[%s6644 + $0x84] sm:$0xff]
        %v6668 = vld [vmem:[%s6644 + $0x8c] sm:$0xf]
        %v6669 = vld [vmem:[%s6644 + $0x90] sm:$0xff]
        %v6670 = vld [vmem:[%s6644 + $0x98] sm:$0xf]
        %v6671 = vld [vmem:[%s6644 + $0x9c] sm:$0xff]
        %v6672 = vld [vmem:[%s6644 + $0xa4] sm:$0xf]
        %v6673 = vld [vmem:[%s6644 + $0xa8] sm:$0xff]
        %v6674 = vld [vmem:[%s6644 + $0xb0] sm:$0xf]
        %v6675 = vld [vmem:[%s6644 + $0xb4] sm:$0xff]
        %v6676 = vld [vmem:[%s6644 + $0xbc] sm:$0xf]
        %v6677 = vld [vmem:[%s6644 + $0xc0] sm:$0xff]
        %v6678 = vld [vmem:[%s6644 + $0xc8] sm:$0xf]
        %v6679 = vld [vmem:[%s6644 + $0xcc] sm:$0xff]
        %v6680 = vld [vmem:[%s6644 + $0xd4] sm:$0xf]
        %v6681 = vld [vmem:[%s6644 + $0xd8] sm:$0xff]
        %v6682 = vld [vmem:[%s6644 + $0xe0] sm:$0xf]
        %v6683 = vld [vmem:[%s6644 + $0xe4] sm:$0xff]
        %v6684 = vld [vmem:[%s6644 + $0xec] sm:$0xf]
        %v6685 = vld [vmem:[%s6644 + $0xf0] sm:$0xff]
        %v6686 = vld [vmem:[%s6644 + $0xf8] sm:$0xf]
        %v6687 = vld [vmem:[%s6644 + $0xfc] sm:$0xff]
        %v6688 = vld [vmem:[%s6644 + $0x104] sm:$0xf]
        %v6689 = vld [vmem:[%s6644 + $0x108] sm:$0xff]
        %v6690 = vld [vmem:[%s6644 + $0x110] sm:$0xf]
        %v6691 = vld [vmem:[%s6644 + $0x114] sm:$0xff]
        %v6692 = vld [vmem:[%s6644 + $0x11c] sm:$0xf]
        %v6693 = vld [vmem:[%s6644 + $0x120] sm:$0xff]
        %v6694 = vld [vmem:[%s6644 + $0x128] sm:$0xf]
        %v6695 = vld [vmem:[%s6644 + $0x12c] sm:$0xff]
        %v6696 = vld [vmem:[%s6644 + $0x134] sm:$0xf]
        %v6697 = vld [vmem:[%s6644 + $0x138] sm:$0xff]
        %v6698 = vld [vmem:[%s6644 + $0x140] sm:$0xf]
        %v6699 = vld [vmem:[%s6644 + $0x144] sm:$0xff]
        %v6700 = vld [vmem:[%s6644 + $0x14c] sm:$0xf]
        %v6701 = vld [vmem:[%s6644 + $0x150] sm:$0xff]
        %v6702 = vld [vmem:[%s6644 + $0x158] sm:$0xf]
        %v6703 = vld [vmem:[%s6644 + $0x15c] sm:$0xff]
        %v6704 = vld [vmem:[%s6644 + $0x164] sm:$0xf]
        %v6705 = vld [vmem:[%s6644 + $0x168] sm:$0xff]
        %v6706 = vld [vmem:[%s6644 + $0x170] sm:$0xf]
        %v6707 = vld [vmem:[%s6644 + $0x174] sm:$0xff]
        %v6708 = vld [vmem:[%s6644 + $0x17c] sm:$0xf]
        %v6709 = vld [vmem:[%s6644 + $0x180] sm:$0xff]
        %v6710 = vld [vmem:[%s6644 + $0x188] sm:$0xf]
        %v6711 = vld [vmem:[%s6644 + $0x18c] sm:$0xff]
        %v6712 = vld [vmem:[%s6644 + $0x194] sm:$0xf]
        %v6713 = vld [vmem:[%s6644 + $0x198] sm:$0xff]
        %v6714 = vld [vmem:[%s6644 + $0x1a0] sm:$0xf]
        %v6715 = vld [vmem:[%s6644 + $0x1a4] sm:$0xff]
        %v6716 = vld [vmem:[%s6644 + $0x1ac] sm:$0xf]
        %v6717 = vld [vmem:[%s6644 + $0x1b0] sm:$0xff]
        %v6718 = vld [vmem:[%s6644 + $0x1b8] sm:$0xf]
        %v6719 = vld [vmem:[%s6644 + $0x1bc] sm:$0xff]
        %v6720 = vld [vmem:[%s6644 + $0x1c4] sm:$0xf]
        %v6721 = vld [vmem:[%s6644 + $0x1c8] sm:$0xff]
        %v6722 = vld [vmem:[%s6644 + $0x1d0] sm:$0xf]
        %v6723 = vld [vmem:[%s6644 + $0x1d4] sm:$0xff]
        %v6724 = vld [vmem:[%s6644 + $0x1dc] sm:$0xf]
        %v6725 = vld [vmem:[%s6644 + $0x1e0] sm:$0xff]
        %v6726 = vld [vmem:[%s6644 + $0x1e8] sm:$0xf]
        %v6727 = vld [vmem:[%s6644 + $0x1ec] sm:$0xff]
        %v6728 = vld [vmem:[%s6644 + $0x1f4] sm:$0xf]
        %v6729 = vld [vmem:[%s6644 + $0x1f8] sm:$0xff]
        %v6730 = vld [vmem:[%s6644 + $0x200] sm:$0xf]
        %v6731 = vld [vmem:[%s6644 + $0x204] sm:$0xff]
        %v6732 = vld [vmem:[%s6644 + $0x20c] sm:$0xf]
        %v6733 = vld [vmem:[%s6644 + $0x210] sm:$0xff]
        %v6734 = vld [vmem:[%s6644 + $0x218] sm:$0xf]
        %v6735 = vld [vmem:[%s6644 + $0x21c] sm:$0xff]
        %v6736 = vld [vmem:[%s6644 + $0x224] sm:$0xf]
        %v6737 = vld [vmem:[%s6644 + $0x228] sm:$0xff]
        %v6738 = vld [vmem:[%s6644 + $0x230] sm:$0xf]
        %v6739 = vld [vmem:[%s6644 + $0x234] sm:$0xff]
        %v6740 = vld [vmem:[%s6644 + $0x23c] sm:$0xf]
        %v6741 = vld [vmem:[%s6644 + $0x240] sm:$0xff]
        %v6742 = vld [vmem:[%s6644 + $0x248] sm:$0xf]
        %v6743 = vld [vmem:[%s6644 + $0x24c] sm:$0xff]
        %v6744 = vld [vmem:[%s6644 + $0x254] sm:$0xf]
        %v6745 = vld [vmem:[%s6644 + $0x258] sm:$0xff]
        %v6746 = vld [vmem:[%s6644 + $0x260] sm:$0xf]
        %v6747 = vld [vmem:[%s6644 + $0x264] sm:$0xff]
        %v6748 = vld [vmem:[%s6644 + $0x26c] sm:$0xf]
        %v6749 = vld [vmem:[%s6644 + $0x270] sm:$0xff]
        %v6750 = vld [vmem:[%s6644 + $0x278] sm:$0xf]
        %v6751 = vld [vmem:[%s6644 + $0x27c] sm:$0xff]
        %v6752 = vld [vmem:[%s6644 + $0x284] sm:$0xf]
        %v6753 = vld [vmem:[%s6644 + $0x288] sm:$0xff]
        %v6754 = vld [vmem:[%s6644 + $0x290] sm:$0xf]
        %v6755 = vld [vmem:[%s6644 + $0x294] sm:$0xff]
        %v6756 = vld [vmem:[%s6644 + $0x29c] sm:$0xf]
        %v6757 = vld [vmem:[%s6644 + $0x2a0] sm:$0xff]
        %v6758 = vld [vmem:[%s6644 + $0x2a8] sm:$0xf]
        %v6759 = vld [vmem:[%s6644 + $0x2ac] sm:$0xff]
        %v6760 = vld [vmem:[%s6644 + $0x2b4] sm:$0xf]
        %v6761 = vld [vmem:[%s6644 + $0x2b8] sm:$0xff]
        %v6762 = vld [vmem:[%s6644 + $0x2c0] sm:$0xf]
        %v6763 = vld [vmem:[%s6644 + $0x2c4] sm:$0xff]
        %v6764 = vld [vmem:[%s6644 + $0x2cc] sm:$0xf]
        %v6765 = vld [vmem:[%s6644 + $0x2d0] sm:$0xff]
        %v6766 = vld [vmem:[%s6644 + $0x2d8] sm:$0xf]
        %v6767 = vld [vmem:[%s6644 + $0x2dc] sm:$0xff]
        %v6768 = vld [vmem:[%s6644 + $0x2e4] sm:$0xf]
        %v6769 = vld [vmem:[%s6644 + $0x2e8] sm:$0xff]
        %v6770 = vld [vmem:[%s6644 + $0x2f0] sm:$0xf]
        %v6771 = vld [vmem:[%s6644 + $0x2f4] sm:$0xff]
        %v6772 = vld [vmem:[%s6644 + $0x2fc] sm:$0xf]
        %v6773 = vld [vmem:[%s6644 + $0x300] sm:$0xff]
        %v6774 = vld [vmem:[%s6644 + $0x308] sm:$0xf]
        %v6775 = vld [vmem:[%s6644 + $0x30c] sm:$0xff]
        %v6776 = vld [vmem:[%s6644 + $0x314] sm:$0xf]
        %v6777 = vld [vmem:[%s6644 + $0x318] sm:$0xff]
        %v6778 = vld [vmem:[%s6644 + $0x320] sm:$0xf]
        %v6779 = vld [vmem:[%s6644 + $0x324] sm:$0xff]
        %v6780 = vld [vmem:[%s6644 + $0x32c] sm:$0xf]
        %v6781 = vld [vmem:[%s6644 + $0x330] sm:$0xff]
        %v6782 = vld [vmem:[%s6644 + $0x338] sm:$0xf]
        %v6783 = vld [vmem:[%s6644 + $0x33c] sm:$0xff]
        %v6784 = vld [vmem:[%s6644 + $0x344] sm:$0xf]
        %v6785 = vld [vmem:[%s6644 + $0x348] sm:$0xff]
        %v6786 = vld [vmem:[%s6644 + $0x350] sm:$0xf]
        %v6787 = vld [vmem:[%s6644 + $0x354] sm:$0xff]
        %v6788 = vld [vmem:[%s6644 + $0x35c] sm:$0xf]
        %v6789 = vld [vmem:[%s6644 + $0x360] sm:$0xff]
        %v6790 = vld [vmem:[%s6644 + $0x368] sm:$0xf]
        %v6791 = vld [vmem:[%s6644 + $0x36c] sm:$0xff]
        %v6792 = vld [vmem:[%s6644 + $0x374] sm:$0xf]
        %v6793 = vld [vmem:[%s6644 + $0x378] sm:$0xff]
        %v6794 = vld [vmem:[%s6644 + $0x380] sm:$0xf]
        %v6795 = vld [vmem:[%s6644 + $0x384] sm:$0xff]
        %v6796 = vld [vmem:[%s6644 + $0x38c] sm:$0xf]
        %v6797 = vld [vmem:[%s6644 + $0x390] sm:$0xff]
        %v6798 = vld [vmem:[%s6644 + $0x398] sm:$0xf]
        %v6799 = vld [vmem:[%s6644 + $0x39c] sm:$0xff]
        %v6800 = vld [vmem:[%s6644 + $0x3a4] sm:$0xf]
        %v6801 = vld [vmem:[%s6644 + $0x3a8] sm:$0xff]
        %v6802 = vld [vmem:[%s6644 + $0x3b0] sm:$0xf]
        %v6803 = vld [vmem:[%s6644 + $0x3b4] sm:$0xff]
        %v6804 = vld [vmem:[%s6644 + $0x3bc] sm:$0xf]
        %v6805 = vld [vmem:[%s6644 + $0x3c0] sm:$0xff]
        %v6806 = vld [vmem:[%s6644 + $0x3c8] sm:$0xf]
        %v6807 = vld [vmem:[%s6644 + $0x3cc] sm:$0xff]
        %v6808 = vld [vmem:[%s6644 + $0x3d4] sm:$0xf]
        %v6809 = vld [vmem:[%s6644 + $0x3d8] sm:$0xff]
        %v6810 = vld [vmem:[%s6644 + $0x3e0] sm:$0xf]
        %v6811 = vld [vmem:[%s6644 + $0x3e4] sm:$0xff]
        %v6812 = vld [vmem:[%s6644 + $0x3ec] sm:$0xf]
        %v6813 = vld [vmem:[%s6644 + $0x3f0] sm:$0xff]
        %v6814 = vld [vmem:[%s6644 + $0x3f8] sm:$0xf]
        %v6815 = vld [vmem:[%s6644 + $0x3fc] sm:$0xff]
        %v6816 = vld [vmem:[%s6644 + $0x404] sm:$0xf]
        %v6817 = vld [vmem:[%s6644 + $0x408] sm:$0xff]
        %v6818 = vld [vmem:[%s6644 + $0x410] sm:$0xf]
        %v6819 = vld [vmem:[%s6644 + $0x414] sm:$0xff]
        %v6820 = vld [vmem:[%s6644 + $0x41c] sm:$0xf]
        %v6821 = vld [vmem:[%s6644 + $0x420] sm:$0xff]
        %v6822 = vld [vmem:[%s6644 + $0x428] sm:$0xf]
        %v6823 = vld [vmem:[%s6644 + $0x42c] sm:$0xff]
        %v6824 = vld [vmem:[%s6644 + $0x434] sm:$0xf]
        %v6825 = vld [vmem:[%s6644 + $0x438] sm:$0xff]
        %v6826 = vld [vmem:[%s6644 + $0x440] sm:$0xf]
        %v6827 = vld [vmem:[%s6644 + $0x444] sm:$0xff]
        %v6828 = vld [vmem:[%s6644 + $0x44c] sm:$0xf]
        %v6829 = vld [vmem:[%s6644 + $0x450] sm:$0xff]
        %v6830 = vld [vmem:[%s6644 + $0x458] sm:$0xf]
        %v6831 = vld [vmem:[%s6644 + $0x45c] sm:$0xff]
        %v6832 = vld [vmem:[%s6644 + $0x464] sm:$0xf]
        %v6833 = vld [vmem:[%s6644 + $0x468] sm:$0xff]
        %v6834 = vld [vmem:[%s6644 + $0x470] sm:$0xf]
        %v6835 = vld [vmem:[%s6644 + $0x474] sm:$0xff]
        %v6836 = vld [vmem:[%s6644 + $0x47c] sm:$0xf]
        %v6837 = vld [vmem:[%s6644 + $0x480] sm:$0xff]
        %v6838 = vld [vmem:[%s6644 + $0x488] sm:$0xf]
        %v6839 = vld [vmem:[%s6644 + $0x48c] sm:$0xff]
        %v6840 = vld [vmem:[%s6644 + $0x494] sm:$0xf]
        %v6841 = vld [vmem:[%s6644 + $0x498] sm:$0xff]
        %v6842 = vld [vmem:[%s6644 + $0x4a0] sm:$0xf]
        %v6843 = vld [vmem:[%s6644 + $0x4a4] sm:$0xff]
        %v6844 = vld [vmem:[%s6644 + $0x4ac] sm:$0xf]
        %v6845 = vld [vmem:[%s6644 + $0x4b0] sm:$0xff]
        %v6846 = vld [vmem:[%s6644 + $0x4b8] sm:$0xf]
        %v6847 = vld [vmem:[%s6644 + $0x4bc] sm:$0xff]
        %v6848 = vld [vmem:[%s6644 + $0x4c4] sm:$0xf]
        %v6849 = vld [vmem:[%s6644 + $0x4c8] sm:$0xff]
        %v6850 = vld [vmem:[%s6644 + $0x4d0] sm:$0xf]
        %v6851 = vld [vmem:[%s6644 + $0x4d4] sm:$0xff]
        %v6852 = vld [vmem:[%s6644 + $0x4dc] sm:$0xf]
        %v6853 = vld [vmem:[%s6644 + $0x4e0] sm:$0xff]
        %v6854 = vld [vmem:[%s6644 + $0x4e8] sm:$0xf]
        %v6855 = vld [vmem:[%s6644 + $0x4ec] sm:$0xff]
        %v6856 = vld [vmem:[%s6644 + $0x4f4] sm:$0xf]
        %v6857 = vld [vmem:[%s6644 + $0x4f8] sm:$0xff]
        %v6858 = vld [vmem:[%s6644 + $0x500] sm:$0xf]
        %v6859 = vld [vmem:[%s6644 + $0x504] sm:$0xff]
        %v6860 = vld [vmem:[%s6644 + $0x50c] sm:$0xf]
        %v6861 = vld [vmem:[%s6644 + $0x510] sm:$0xff]
        %v6862 = vld [vmem:[%s6644 + $0x518] sm:$0xf]
        %v6863 = vld [vmem:[%s6644 + $0x51c] sm:$0xff]
        %v6864 = vld [vmem:[%s6644 + $0x524] sm:$0xf]
        %v6865 = vld [vmem:[%s6644 + $0x528] sm:$0xff]
        %v6866 = vld [vmem:[%s6644 + $0x530] sm:$0xf]
        %v6867 = vld [vmem:[%s6644 + $0x534] sm:$0xff]
        %v6868 = vld [vmem:[%s6644 + $0x53c] sm:$0xf]
        %v6869 = vld [vmem:[%s6644 + $0x540] sm:$0xff]
        %v6870 = vld [vmem:[%s6644 + $0x548] sm:$0xf]
        %v6871 = vld [vmem:[%s6644 + $0x54c] sm:$0xff]
        %v6872 = vld [vmem:[%s6644 + $0x554] sm:$0xf]
        %v6873 = vld [vmem:[%s6644 + $0x558] sm:$0xff]
        %v6874 = vld [vmem:[%s6644 + $0x560] sm:$0xf]
        %v6875 = vld [vmem:[%s6644 + $0x564] sm:$0xff]
        %v6876 = vld [vmem:[%s6644 + $0x56c] sm:$0xf]
        %v6877 = vld [vmem:[%s6644 + $0x570] sm:$0xff]
        %v6878 = vld [vmem:[%s6644 + $0x578] sm:$0xf]
        %v6879 = vld [vmem:[%s6644 + $0x57c] sm:$0xff]
        %v6880 = vld [vmem:[%s6644 + $0x584] sm:$0xf]
        %v6881 = vld [vmem:[%s6644 + $0x588] sm:$0xff]
        %v6882 = vld [vmem:[%s6644 + $0x590] sm:$0xf]
        %v6883 = vld [vmem:[%s6644 + $0x594] sm:$0xff]
        %v6884 = vld [vmem:[%s6644 + $0x59c] sm:$0xf]
        %v6885 = vld [vmem:[%s6644 + $0x5a0] sm:$0xff]
        %v6886 = vld [vmem:[%s6644 + $0x5a8] sm:$0xf]
        %v6887 = vld [vmem:[%s6644 + $0x5ac] sm:$0xff]
        %v6888 = vld [vmem:[%s6644 + $0x5b4] sm:$0xf]
        %v6889 = vld [vmem:[%s6644 + $0x5b8] sm:$0xff]
        %v6890 = vld [vmem:[%s6644 + $0x5c0] sm:$0xf]
        %v6891 = vld [vmem:[%s6644 + $0x5c4] sm:$0xff]
        %v6892 = vld [vmem:[%s6644 + $0x5cc] sm:$0xf]
        %v6893 = vld [vmem:[%s6644 + $0x5d0] sm:$0xff]
        %v6894 = vld [vmem:[%s6644 + $0x5d8] sm:$0xf]
        %v6895 = vld [vmem:[%s6644 + $0x5dc] sm:$0xff]
        %v6896 = vld [vmem:[%s6644 + $0x5e4] sm:$0xf]
        %v6897 = vld [vmem:[%s6644 + $0x5e8] sm:$0xff]
        %v6898 = vld [vmem:[%s6644 + $0x5f0] sm:$0xf]
        %v6899 = vld [vmem:[%s6644 + $0x5f4] sm:$0xff]
        %v6900 = vld [vmem:[%s6644 + $0x5fc] sm:$0xf]
        %v6901 = vld [vmem:[%s6644 + $0x600] sm:$0xff]
        %v6902 = vld [vmem:[%s6644 + $0x608] sm:$0xf]
        %v6903 = vld [vmem:[%s6644 + $0x60c] sm:$0xff]
        %v6904 = vld [vmem:[%s6644 + $0x614] sm:$0xf]
        %v6905 = vld [vmem:[%s6644 + $0x618] sm:$0xff]
        %v6906 = vld [vmem:[%s6644 + $0x620] sm:$0xf]
        %v6907 = vld [vmem:[%s6644 + $0x624] sm:$0xff]
        %v6908 = vld [vmem:[%s6644 + $0x62c] sm:$0xf]
        %v6909 = vld [vmem:[%s6644 + $0x630] sm:$0xff]
        %v6910 = vld [vmem:[%s6644 + $0x638] sm:$0xf]
        %v6911 = vld [vmem:[%s6644 + $0x63c] sm:$0xff]
        %v6912 = vld [vmem:[%s6644 + $0x644] sm:$0xf]
        %v6913 = vld [vmem:[%s6644 + $0x648] sm:$0xff]
        %v6914 = vld [vmem:[%s6644 + $0x650] sm:$0xf]
        %v6915 = vld [vmem:[%s6644 + $0x654] sm:$0xff]
        %v6916 = vld [vmem:[%s6644 + $0x65c] sm:$0xf]
        %v6917 = vld [vmem:[%s6644 + $0x660] sm:$0xff]
        %v6918 = vld [vmem:[%s6644 + $0x668] sm:$0xf]
        %v6919 = vld [vmem:[%s6644 + $0x66c] sm:$0xff]
        %v6920 = vld [vmem:[%s6644 + $0x674] sm:$0xf]
        %v6921 = vld [vmem:[%s6644 + $0x678] sm:$0xff]
        %v6922 = vld [vmem:[%s6644 + $0x680] sm:$0xf]
        %v6923 = vld [vmem:[%s6644 + $0x684] sm:$0xff]
        %v6924 = vld [vmem:[%s6644 + $0x68c] sm:$0xf]
        %v6925 = vld [vmem:[%s6644 + $0x690] sm:$0xff]
        %v6926 = vld [vmem:[%s6644 + $0x698] sm:$0xf]
        %v6927 = vld [vmem:[%s6644 + $0x69c] sm:$0xff]
        %v6928 = vld [vmem:[%s6644 + $0x6a4] sm:$0xf]
        %v6929 = vld [vmem:[%s6644 + $0x6a8] sm:$0xff]
        %v6930 = vld [vmem:[%s6644 + $0x6b0] sm:$0xf]
        %v6931 = vld [vmem:[%s6644 + $0x6b4] sm:$0xff]
        %v6932 = vld [vmem:[%s6644 + $0x6bc] sm:$0xf]
        %v7221 = vunpack.c.l.b16 %v6645
        %v7222 = vunpack.c.h.b16 %v6645
        %v7223 = vunpack.c.l.b16 %v6646
        %v7224 = vunpack.c.l.b16 %v6647
        %v7225 = vunpack.c.h.b16 %v6647
        %v7226 = vunpack.c.l.b16 %v6648
        %v7227 = vunpack.c.l.b16 %v6649
        %v7228 = vunpack.c.h.b16 %v6649
        %v7229 = vunpack.c.l.b16 %v6650
        %v7230 = vunpack.c.l.b16 %v6651
        %v7231 = vunpack.c.h.b16 %v6651
        %v7232 = vunpack.c.l.b16 %v6652
        %v7233 = vunpack.c.l.b16 %v6653
        %v7234 = vunpack.c.h.b16 %v6653
        %v7235 = vunpack.c.l.b16 %v6654
        %v7236 = vunpack.c.l.b16 %v6655
        %v7237 = vunpack.c.h.b16 %v6655
        %v7238 = vunpack.c.l.b16 %v6656
        %v7239 = vunpack.c.l.b16 %v6657
        %v7240 = vunpack.c.h.b16 %v6657
        %v7241 = vunpack.c.l.b16 %v6658
        %v7242 = vunpack.c.l.b16 %v6659
        %v7243 = vunpack.c.h.b16 %v6659
        %v7244 = vunpack.c.l.b16 %v6660
        %v7245 = vunpack.c.l.b16 %v6661
        %v7246 = vunpack.c.h.b16 %v6661
        %v7247 = vunpack.c.l.b16 %v6662
        %v7248 = vunpack.c.l.b16 %v6663
        %v7249 = vunpack.c.h.b16 %v6663
        %v7250 = vunpack.c.l.b16 %v6664
        %v7251 = vunpack.c.l.b16 %v6665
        %v7252 = vunpack.c.h.b16 %v6665
        %v7253 = vunpack.c.l.b16 %v6666
        %v7254 = vunpack.c.l.b16 %v6667
        %v7255 = vunpack.c.h.b16 %v6667
        %v7256 = vunpack.c.l.b16 %v6668
        %v7257 = vunpack.c.l.b16 %v6669
        %v7258 = vunpack.c.h.b16 %v6669
        %v7259 = vunpack.c.l.b16 %v6670
        %v7260 = vunpack.c.l.b16 %v6671
        %v7261 = vunpack.c.h.b16 %v6671
        %v7262 = vunpack.c.l.b16 %v6672
        %v7263 = vunpack.c.l.b16 %v6673
        %v7264 = vunpack.c.h.b16 %v6673
        %v7265 = vunpack.c.l.b16 %v6674
        %v7266 = vunpack.c.l.b16 %v6675
        %v7267 = vunpack.c.h.b16 %v6675
        %v7268 = vunpack.c.l.b16 %v6676
        %v7269 = vunpack.c.l.b16 %v6677
        %v7270 = vunpack.c.h.b16 %v6677
        %v7271 = vunpack.c.l.b16 %v6678
        %v7272 = vunpack.c.l.b16 %v6679
        %v7273 = vunpack.c.h.b16 %v6679
        %v7274 = vunpack.c.l.b16 %v6680
        %v7275 = vunpack.c.l.b16 %v6681
        %v7276 = vunpack.c.h.b16 %v6681
        %v7277 = vunpack.c.l.b16 %v6682
        %v7278 = vunpack.c.l.b16 %v6683
        %v7279 = vunpack.c.h.b16 %v6683
        %v7280 = vunpack.c.l.b16 %v6684
        %v7281 = vunpack.c.l.b16 %v6685
        %v7282 = vunpack.c.h.b16 %v6685
        %v7283 = vunpack.c.l.b16 %v6686
        %v7284 = vunpack.c.l.b16 %v6687
        %v7285 = vunpack.c.h.b16 %v6687
        %v7286 = vunpack.c.l.b16 %v6688
        %v7287 = vunpack.c.l.b16 %v6689
        %v7288 = vunpack.c.h.b16 %v6689
        %v7289 = vunpack.c.l.b16 %v6690
        %v7290 = vunpack.c.l.b16 %v6691
        %v7291 = vunpack.c.h.b16 %v6691
        %v7292 = vunpack.c.l.b16 %v6692
        %v7293 = vunpack.c.l.b16 %v6693
        %v7294 = vunpack.c.h.b16 %v6693
        %v7295 = vunpack.c.l.b16 %v6694
        %v7296 = vunpack.c.l.b16 %v6695
        %v7297 = vunpack.c.h.b16 %v6695
        %v7298 = vunpack.c.l.b16 %v6696
        %v7299 = vunpack.c.l.b16 %v6697
        %v7300 = vunpack.c.h.b16 %v6697
        %v7301 = vunpack.c.l.b16 %v6698
        %v7302 = vunpack.c.l.b16 %v6699
        %v7303 = vunpack.c.h.b16 %v6699
        %v7304 = vunpack.c.l.b16 %v6700
        %v7305 = vunpack.c.l.b16 %v6701
        %v7306 = vunpack.c.h.b16 %v6701
        %v7307 = vunpack.c.l.b16 %v6702
        %v7308 = vunpack.c.l.b16 %v6703
        %v7309 = vunpack.c.h.b16 %v6703
        %v7310 = vunpack.c.l.b16 %v6704
        %v7311 = vunpack.c.l.b16 %v6705
        %v7312 = vunpack.c.h.b16 %v6705
        %v7313 = vunpack.c.l.b16 %v6706
        %v7314 = vunpack.c.l.b16 %v6707
        %v7315 = vunpack.c.h.b16 %v6707
        %v7316 = vunpack.c.l.b16 %v6708
        %v7317 = vunpack.c.l.b16 %v6709
        %v7318 = vunpack.c.h.b16 %v6709
        %v7319 = vunpack.c.l.b16 %v6710
        %v7320 = vunpack.c.l.b16 %v6711
        %v7321 = vunpack.c.h.b16 %v6711
        %v7322 = vunpack.c.l.b16 %v6712
        %v7323 = vunpack.c.l.b16 %v6713
        %v7324 = vunpack.c.h.b16 %v6713
        %v7325 = vunpack.c.l.b16 %v6714
        %v7326 = vunpack.c.l.b16 %v6715
        %v7327 = vunpack.c.h.b16 %v6715
        %v7328 = vunpack.c.l.b16 %v6716
        %v7329 = vunpack.c.l.b16 %v6717
        %v7330 = vunpack.c.h.b16 %v6717
        %v7331 = vunpack.c.l.b16 %v6718
        %v7332 = vunpack.c.l.b16 %v6719
        %v7333 = vunpack.c.h.b16 %v6719
        %v7334 = vunpack.c.l.b16 %v6720
        %v7335 = vunpack.c.l.b16 %v6721
        %v7336 = vunpack.c.h.b16 %v6721
        %v7337 = vunpack.c.l.b16 %v6722
        %v7338 = vunpack.c.l.b16 %v6723
        %v7339 = vunpack.c.h.b16 %v6723
        %v7340 = vunpack.c.l.b16 %v6724
        %v7341 = vunpack.c.l.b16 %v6725
        %v7342 = vunpack.c.h.b16 %v6725
        %v7343 = vunpack.c.l.b16 %v6726
        %v7344 = vunpack.c.l.b16 %v6727
        %v7345 = vunpack.c.h.b16 %v6727
        %v7346 = vunpack.c.l.b16 %v6728
        %v7347 = vunpack.c.l.b16 %v6729
        %v7348 = vunpack.c.h.b16 %v6729
        %v7349 = vunpack.c.l.b16 %v6730
        %v7350 = vunpack.c.l.b16 %v6731
        %v7351 = vunpack.c.h.b16 %v6731
        %v7352 = vunpack.c.l.b16 %v6732
        %v7353 = vunpack.c.l.b16 %v6733
        %v7354 = vunpack.c.h.b16 %v6733
        %v7355 = vunpack.c.l.b16 %v6734
        %v7356 = vunpack.c.l.b16 %v6735
        %v7357 = vunpack.c.h.b16 %v6735
        %v7358 = vunpack.c.l.b16 %v6736
        %v7359 = vunpack.c.l.b16 %v6737
        %v7360 = vunpack.c.h.b16 %v6737
        %v7361 = vunpack.c.l.b16 %v6738
        %v7362 = vunpack.c.l.b16 %v6739
        %v7363 = vunpack.c.h.b16 %v6739
        %v7364 = vunpack.c.l.b16 %v6740
        %v7365 = vunpack.c.l.b16 %v6741
        %v7366 = vunpack.c.h.b16 %v6741
        %v7367 = vunpack.c.l.b16 %v6742
        %v7368 = vunpack.c.l.b16 %v6743
        %v7369 = vunpack.c.h.b16 %v6743
        %v7370 = vunpack.c.l.b16 %v6744
        %v7371 = vunpack.c.l.b16 %v6745
        %v7372 = vunpack.c.h.b16 %v6745
        %v7373 = vunpack.c.l.b16 %v6746
        %v7374 = vunpack.c.l.b16 %v6747
        %v7375 = vunpack.c.h.b16 %v6747
        %v7376 = vunpack.c.l.b16 %v6748
        %v7377 = vunpack.c.l.b16 %v6749
        %v7378 = vunpack.c.h.b16 %v6749
        %v7379 = vunpack.c.l.b16 %v6750
        %v7380 = vunpack.c.l.b16 %v6751
        %v7381 = vunpack.c.h.b16 %v6751
        %v7382 = vunpack.c.l.b16 %v6752
        %v7383 = vunpack.c.l.b16 %v6753
        %v7384 = vunpack.c.h.b16 %v6753
        %v7385 = vunpack.c.l.b16 %v6754
        %v7386 = vunpack.c.l.b16 %v6755
        %v7387 = vunpack.c.h.b16 %v6755
        %v7388 = vunpack.c.l.b16 %v6756
        %v7389 = vunpack.c.l.b16 %v6757
        %v7390 = vunpack.c.h.b16 %v6757
        %v7391 = vunpack.c.l.b16 %v6758
        %v7392 = vunpack.c.l.b16 %v6759
        %v7393 = vunpack.c.h.b16 %v6759
        %v7394 = vunpack.c.l.b16 %v6760
        %v7395 = vunpack.c.l.b16 %v6761
        %v7396 = vunpack.c.h.b16 %v6761
        %v7397 = vunpack.c.l.b16 %v6762
        %v7398 = vunpack.c.l.b16 %v6763
        %v7399 = vunpack.c.h.b16 %v6763
        %v7400 = vunpack.c.l.b16 %v6764
        %v7401 = vunpack.c.l.b16 %v6765
        %v7402 = vunpack.c.h.b16 %v6765
        %v7403 = vunpack.c.l.b16 %v6766
        %v7404 = vunpack.c.l.b16 %v6767
        %v7405 = vunpack.c.h.b16 %v6767
        %v7406 = vunpack.c.l.b16 %v6768
        %v7407 = vunpack.c.l.b16 %v6769
        %v7408 = vunpack.c.h.b16 %v6769
        %v7409 = vunpack.c.l.b16 %v6770
        %v7410 = vunpack.c.l.b16 %v6771
        %v7411 = vunpack.c.h.b16 %v6771
        %v7412 = vunpack.c.l.b16 %v6772
        %v7413 = vunpack.c.l.b16 %v6773
        %v7414 = vunpack.c.h.b16 %v6773
        %v7415 = vunpack.c.l.b16 %v6774
        %v7416 = vunpack.c.l.b16 %v6775
        %v7417 = vunpack.c.h.b16 %v6775
        %v7418 = vunpack.c.l.b16 %v6776
        %v7419 = vunpack.c.l.b16 %v6777
        %v7420 = vunpack.c.h.b16 %v6777
        %v7421 = vunpack.c.l.b16 %v6778
        %v7422 = vunpack.c.l.b16 %v6779
        %v7423 = vunpack.c.h.b16 %v6779
        %v7424 = vunpack.c.l.b16 %v6780
        %v7425 = vunpack.c.l.b16 %v6781
        %v7426 = vunpack.c.h.b16 %v6781
        %v7427 = vunpack.c.l.b16 %v6782
        %v7428 = vunpack.c.l.b16 %v6783
        %v7429 = vunpack.c.h.b16 %v6783
        %v7430 = vunpack.c.l.b16 %v6784
        %v7431 = vunpack.c.l.b16 %v6785
        %v7432 = vunpack.c.h.b16 %v6785
        %v7433 = vunpack.c.l.b16 %v6786
        %v7434 = vunpack.c.l.b16 %v6787
        %v7435 = vunpack.c.h.b16 %v6787
        %v7436 = vunpack.c.l.b16 %v6788
        %v7437 = vunpack.c.l.b16 %v6789
        %v7438 = vunpack.c.h.b16 %v6789
        %v7439 = vunpack.c.l.b16 %v6790
        %v7440 = vunpack.c.l.b16 %v6791
        %v7441 = vunpack.c.h.b16 %v6791
        %v7442 = vunpack.c.l.b16 %v6792
        %v7443 = vunpack.c.l.b16 %v6793
        %v7444 = vunpack.c.h.b16 %v6793
        %v7445 = vunpack.c.l.b16 %v6794
        %v7446 = vunpack.c.l.b16 %v6795
        %v7447 = vunpack.c.h.b16 %v6795
        %v7448 = vunpack.c.l.b16 %v6796
        %v7449 = vunpack.c.l.b16 %v6797
        %v7450 = vunpack.c.h.b16 %v6797
        %v7451 = vunpack.c.l.b16 %v6798
        %v7452 = vunpack.c.l.b16 %v6799
        %v7453 = vunpack.c.h.b16 %v6799
        %v7454 = vunpack.c.l.b16 %v6800
        %v7455 = vunpack.c.l.b16 %v6801
        %v7456 = vunpack.c.h.b16 %v6801
        %v7457 = vunpack.c.l.b16 %v6802
        %v7458 = vunpack.c.l.b16 %v6803
        %v7459 = vunpack.c.h.b16 %v6803
        %v7460 = vunpack.c.l.b16 %v6804
        %v7461 = vunpack.c.l.b16 %v6805
        %v7462 = vunpack.c.h.b16 %v6805
        %v7463 = vunpack.c.l.b16 %v6806
        %v7464 = vunpack.c.l.b16 %v6807
        %v7465 = vunpack.c.h.b16 %v6807
        %v7466 = vunpack.c.l.b16 %v6808
        %v7467 = vunpack.c.l.b16 %v6809
        %v7468 = vunpack.c.h.b16 %v6809
        %v7469 = vunpack.c.l.b16 %v6810
        %v7470 = vunpack.c.l.b16 %v6811
        %v7471 = vunpack.c.h.b16 %v6811
        %v7472 = vunpack.c.l.b16 %v6812
        %v7473 = vunpack.c.l.b16 %v6813
        %v7474 = vunpack.c.h.b16 %v6813
        %v7475 = vunpack.c.l.b16 %v6814
        %v7476 = vunpack.c.l.b16 %v6815
        %v7477 = vunpack.c.h.b16 %v6815
        %v7478 = vunpack.c.l.b16 %v6816
        %v7479 = vunpack.c.l.b16 %v6817
        %v7480 = vunpack.c.h.b16 %v6817
        %v7481 = vunpack.c.l.b16 %v6818
        %v7482 = vunpack.c.l.b16 %v6819
        %v7483 = vunpack.c.h.b16 %v6819
        %v7484 = vunpack.c.l.b16 %v6820
        %v7485 = vunpack.c.l.b16 %v6821
        %v7486 = vunpack.c.h.b16 %v6821
        %v7487 = vunpack.c.l.b16 %v6822
        %v7488 = vunpack.c.l.b16 %v6823
        %v7489 = vunpack.c.h.b16 %v6823
        %v7490 = vunpack.c.l.b16 %v6824
        %v7491 = vunpack.c.l.b16 %v6825
        %v7492 = vunpack.c.h.b16 %v6825
        %v7493 = vunpack.c.l.b16 %v6826
        %v7494 = vunpack.c.l.b16 %v6827
        %v7495 = vunpack.c.h.b16 %v6827
        %v7496 = vunpack.c.l.b16 %v6828
        %v7497 = vunpack.c.l.b16 %v6829
        %v7498 = vunpack.c.h.b16 %v6829
        %v7499 = vunpack.c.l.b16 %v6830
        %v7500 = vunpack.c.l.b16 %v6831
        %v7501 = vunpack.c.h.b16 %v6831
        %v7502 = vunpack.c.l.b16 %v6832
        %v7503 = vunpack.c.l.b16 %v6833
        %v7504 = vunpack.c.h.b16 %v6833
        %v7505 = vunpack.c.l.b16 %v6834
        %v7506 = vunpack.c.l.b16 %v6835
        %v7507 = vunpack.c.h.b16 %v6835
        %v7508 = vunpack.c.l.b16 %v6836
        %v7509 = vunpack.c.l.b16 %v6837
        %v7510 = vunpack.c.h.b16 %v6837
        %v7511 = vunpack.c.l.b16 %v6838
        %v7512 = vunpack.c.l.b16 %v6839
        %v7513 = vunpack.c.h.b16 %v6839
        %v7514 = vunpack.c.l.b16 %v6840
        %v7515 = vunpack.c.l.b16 %v6841
        %v7516 = vunpack.c.h.b16 %v6841
        %v7517 = vunpack.c.l.b16 %v6842
        %v7518 = vunpack.c.l.b16 %v6843
        %v7519 = vunpack.c.h.b16 %v6843
        %v7520 = vunpack.c.l.b16 %v6844
        %v7521 = vunpack.c.l.b16 %v6845
        %v7522 = vunpack.c.h.b16 %v6845
        %v7523 = vunpack.c.l.b16 %v6846
        %v7524 = vunpack.c.l.b16 %v6847
        %v7525 = vunpack.c.h.b16 %v6847
        %v7526 = vunpack.c.l.b16 %v6848
        %v7527 = vunpack.c.l.b16 %v6849
        %v7528 = vunpack.c.h.b16 %v6849
        %v7529 = vunpack.c.l.b16 %v6850
        %v7530 = vunpack.c.l.b16 %v6851
        %v7531 = vunpack.c.h.b16 %v6851
        %v7532 = vunpack.c.l.b16 %v6852
        %v7533 = vunpack.c.l.b16 %v6853
        %v7534 = vunpack.c.h.b16 %v6853
        %v7535 = vunpack.c.l.b16 %v6854
        %v7536 = vunpack.c.l.b16 %v6855
        %v7537 = vunpack.c.h.b16 %v6855
        %v7538 = vunpack.c.l.b16 %v6856
        %v7539 = vunpack.c.l.b16 %v6857
        %v7540 = vunpack.c.h.b16 %v6857
        %v7541 = vunpack.c.l.b16 %v6858
        %v7542 = vunpack.c.l.b16 %v6859
        %v7543 = vunpack.c.h.b16 %v6859
        %v7544 = vunpack.c.l.b16 %v6860
        %v7545 = vunpack.c.l.b16 %v6861
        %v7546 = vunpack.c.h.b16 %v6861
        %v7547 = vunpack.c.l.b16 %v6862
        %v7548 = vunpack.c.l.b16 %v6863
        %v7549 = vunpack.c.h.b16 %v6863
        %v7550 = vunpack.c.l.b16 %v6864
        %v7551 = vunpack.c.l.b16 %v6865
        %v7552 = vunpack.c.h.b16 %v6865
        %v7553 = vunpack.c.l.b16 %v6866
        %v7554 = vunpack.c.l.b16 %v6867
        %v7555 = vunpack.c.h.b16 %v6867
        %v7556 = vunpack.c.l.b16 %v6868
        %v7557 = vunpack.c.l.b16 %v6869
        %v7558 = vunpack.c.h.b16 %v6869
        %v7559 = vunpack.c.l.b16 %v6870
        %v7560 = vunpack.c.l.b16 %v6871
        %v7561 = vunpack.c.h.b16 %v6871
        %v7562 = vunpack.c.l.b16 %v6872
        %v7563 = vunpack.c.l.b16 %v6873
        %v7564 = vunpack.c.h.b16 %v6873
        %v7565 = vunpack.c.l.b16 %v6874
        %v7566 = vunpack.c.l.b16 %v6875
        %v7567 = vunpack.c.h.b16 %v6875
        %v7568 = vunpack.c.l.b16 %v6876
        %v7569 = vunpack.c.l.b16 %v6877
        %v7570 = vunpack.c.h.b16 %v6877
        %v7571 = vunpack.c.l.b16 %v6878
        %v7572 = vunpack.c.l.b16 %v6879
        %v7573 = vunpack.c.h.b16 %v6879
        %v7574 = vunpack.c.l.b16 %v6880
        %v7575 = vunpack.c.l.b16 %v6881
        %v7576 = vunpack.c.h.b16 %v6881
        %v7577 = vunpack.c.l.b16 %v6882
        %v7578 = vunpack.c.l.b16 %v6883
        %v7579 = vunpack.c.h.b16 %v6883
        %v7580 = vunpack.c.l.b16 %v6884
        %v7581 = vunpack.c.l.b16 %v6885
        %v7582 = vunpack.c.h.b16 %v6885
        %v7583 = vunpack.c.l.b16 %v6886
        %v7584 = vunpack.c.l.b16 %v6887
        %v7585 = vunpack.c.h.b16 %v6887
        %v7586 = vunpack.c.l.b16 %v6888
        %v7587 = vunpack.c.l.b16 %v6889
        %v7588 = vunpack.c.h.b16 %v6889
        %v7589 = vunpack.c.l.b16 %v6890
        %v7590 = vunpack.c.l.b16 %v6891
        %v7591 = vunpack.c.h.b16 %v6891
        %v7592 = vunpack.c.l.b16 %v6892
        %v7593 = vunpack.c.l.b16 %v6893
        %v7594 = vunpack.c.h.b16 %v6893
        %v7595 = vunpack.c.l.b16 %v6894
        %v7596 = vunpack.c.l.b16 %v6895
        %v7597 = vunpack.c.h.b16 %v6895
        %v7598 = vunpack.c.l.b16 %v6896
        %v7599 = vunpack.c.l.b16 %v6897
        %v7600 = vunpack.c.h.b16 %v6897
        %v7601 = vunpack.c.l.b16 %v6898
        %v7602 = vunpack.c.l.b16 %v6899
        %v7603 = vunpack.c.h.b16 %v6899
        %v7604 = vunpack.c.l.b16 %v6900
        %v7605 = vunpack.c.l.b16 %v6901
        %v7606 = vunpack.c.h.b16 %v6901
        %v7607 = vunpack.c.l.b16 %v6902
        %v7608 = vunpack.c.l.b16 %v6903
        %v7609 = vunpack.c.h.b16 %v6903
        %v7610 = vunpack.c.l.b16 %v6904
        %v7611 = vunpack.c.l.b16 %v6905
        %v7612 = vunpack.c.h.b16 %v6905
        %v7613 = vunpack.c.l.b16 %v6906
        %v7614 = vunpack.c.l.b16 %v6907
        %v7615 = vunpack.c.h.b16 %v6907
        %v7616 = vunpack.c.l.b16 %v6908
        %v7617 = vunpack.c.l.b16 %v6909
        %v7618 = vunpack.c.h.b16 %v6909
        %v7619 = vunpack.c.l.b16 %v6910
        %v7620 = vunpack.c.l.b16 %v6911
        %v7621 = vunpack.c.h.b16 %v6911
        %v7622 = vunpack.c.l.b16 %v6912
        %v7623 = vunpack.c.l.b16 %v6913
        %v7624 = vunpack.c.h.b16 %v6913
        %v7625 = vunpack.c.l.b16 %v6914
        %v7626 = vunpack.c.l.b16 %v6915
        %v7627 = vunpack.c.h.b16 %v6915
        %v7628 = vunpack.c.l.b16 %v6916
        %v7629 = vunpack.c.l.b16 %v6917
        %v7630 = vunpack.c.h.b16 %v6917
        %v7631 = vunpack.c.l.b16 %v6918
        %v7632 = vunpack.c.l.b16 %v6919
        %v7633 = vunpack.c.h.b16 %v6919
        %v7634 = vunpack.c.l.b16 %v6920
        %v7635 = vunpack.c.l.b16 %v6921
        %v7636 = vunpack.c.h.b16 %v6921
        %v7637 = vunpack.c.l.b16 %v6922
        %v7638 = vunpack.c.l.b16 %v6923
        %v7639 = vunpack.c.h.b16 %v6923
        %v7640 = vunpack.c.l.b16 %v6924
        %v7641 = vunpack.c.l.b16 %v6925
        %v7642 = vunpack.c.h.b16 %v6925
        %v7643 = vunpack.c.l.b16 %v6926
        %v7644 = vunpack.c.l.b16 %v6927
        %v7645 = vunpack.c.h.b16 %v6927
        %v7646 = vunpack.c.l.b16 %v6928
        %v7647 = vunpack.c.l.b16 %v6929
        %v7648 = vunpack.c.h.b16 %v6929
        %v7649 = vunpack.c.l.b16 %v6930
        %v7650 = vunpack.c.l.b16 %v6931
        %v7651 = vunpack.c.h.b16 %v6931
        %v7652 = vunpack.c.l.b16 %v6932
        %v7653 = vpack.c.b16 %v7224, %v7221
        %v7654 = vpack.c.b16 %v7225, %v7222
        %v7655 = vpack.c.b16 %v7226, %v7223
        %v7656 = vpack.c.b16 %v7230, %v7227
        %v7657 = vpack.c.b16 %v7231, %v7228
        %v7658 = vpack.c.b16 %v7232, %v7229
        %v7659 = vpack.c.b16 %v7236, %v7233
        %v7660 = vpack.c.b16 %v7237, %v7234
        %v7661 = vpack.c.b16 %v7238, %v7235
        %v7662 = vpack.c.b16 %v7242, %v7239
        %v7663 = vpack.c.b16 %v7243, %v7240
        %v7664 = vpack.c.b16 %v7244, %v7241
        %v7665 = vpack.c.b16 %v7248, %v7245
        %v7666 = vpack.c.b16 %v7249, %v7246
        %v7667 = vpack.c.b16 %v7250, %v7247
        %v7668 = vpack.c.b16 %v7254, %v7251
        %v7669 = vpack.c.b16 %v7255, %v7252
        %v7670 = vpack.c.b16 %v7256, %v7253
        %v7671 = vpack.c.b16 %v7260, %v7257
        %v7672 = vpack.c.b16 %v7261, %v7258
        %v7673 = vpack.c.b16 %v7262, %v7259
        %v7674 = vpack.c.b16 %v7266, %v7263
        %v7675 = vpack.c.b16 %v7267, %v7264
        %v7676 = vpack.c.b16 %v7268, %v7265
        %v7677 = vpack.c.b16 %v7272, %v7269
        %v7678 = vpack.c.b16 %v7273, %v7270
        %v7679 = vpack.c.b16 %v7274, %v7271
        %v7680 = vpack.c.b16 %v7278, %v7275
        %v7681 = vpack.c.b16 %v7279, %v7276
        %v7682 = vpack.c.b16 %v7280, %v7277
        %v7683 = vpack.c.b16 %v7284, %v7281
        %v7684 = vpack.c.b16 %v7285, %v7282
        %v7685 = vpack.c.b16 %v7286, %v7283
        %v7686 = vpack.c.b16 %v7290, %v7287
        %v7687 = vpack.c.b16 %v7291, %v7288
        %v7688 = vpack.c.b16 %v7292, %v7289
        %v7689 = vpack.c.b16 %v7296, %v7293
        %v7690 = vpack.c.b16 %v7297, %v7294
        %v7691 = vpack.c.b16 %v7298, %v7295
        %v7692 = vpack.c.b16 %v7302, %v7299
        %v7693 = vpack.c.b16 %v7303, %v7300
        %v7694 = vpack.c.b16 %v7304, %v7301
        %v7695 = vpack.c.b16 %v7308, %v7305
        %v7696 = vpack.c.b16 %v7309, %v7306
        %v7697 = vpack.c.b16 %v7310, %v7307
        %v7698 = vpack.c.b16 %v7314, %v7311
        %v7699 = vpack.c.b16 %v7315, %v7312
        %v7700 = vpack.c.b16 %v7316, %v7313
        %v7701 = vpack.c.b16 %v7320, %v7317
        %v7702 = vpack.c.b16 %v7321, %v7318
        %v7703 = vpack.c.b16 %v7322, %v7319
        %v7704 = vpack.c.b16 %v7326, %v7323
        %v7705 = vpack.c.b16 %v7327, %v7324
        %v7706 = vpack.c.b16 %v7328, %v7325
        %v7707 = vpack.c.b16 %v7332, %v7329
        %v7708 = vpack.c.b16 %v7333, %v7330
        %v7709 = vpack.c.b16 %v7334, %v7331
        %v7710 = vpack.c.b16 %v7338, %v7335
        %v7711 = vpack.c.b16 %v7339, %v7336
        %v7712 = vpack.c.b16 %v7340, %v7337
        %v7713 = vpack.c.b16 %v7344, %v7341
        %v7714 = vpack.c.b16 %v7345, %v7342
        %v7715 = vpack.c.b16 %v7346, %v7343
        %v7716 = vpack.c.b16 %v7350, %v7347
        %v7717 = vpack.c.b16 %v7351, %v7348
        %v7718 = vpack.c.b16 %v7352, %v7349
        %v7719 = vpack.c.b16 %v7356, %v7353
        %v7720 = vpack.c.b16 %v7357, %v7354
        %v7721 = vpack.c.b16 %v7358, %v7355
        %v7722 = vpack.c.b16 %v7362, %v7359
        %v7723 = vpack.c.b16 %v7363, %v7360
        %v7724 = vpack.c.b16 %v7364, %v7361
        %v7725 = vpack.c.b16 %v7368, %v7365
        %v7726 = vpack.c.b16 %v7369, %v7366
        %v7727 = vpack.c.b16 %v7370, %v7367
        %v7728 = vpack.c.b16 %v7374, %v7371
        %v7729 = vpack.c.b16 %v7375, %v7372
        %v7730 = vpack.c.b16 %v7376, %v7373
        %v7731 = vpack.c.b16 %v7380, %v7377
        %v7732 = vpack.c.b16 %v7381, %v7378
        %v7733 = vpack.c.b16 %v7382, %v7379
        %v7734 = vpack.c.b16 %v7386, %v7383
        %v7735 = vpack.c.b16 %v7387, %v7384
        %v7736 = vpack.c.b16 %v7388, %v7385
        %v7737 = vpack.c.b16 %v7392, %v7389
        %v7738 = vpack.c.b16 %v7393, %v7390
        %v7739 = vpack.c.b16 %v7394, %v7391
        %v7740 = vpack.c.b16 %v7398, %v7395
        %v7741 = vpack.c.b16 %v7399, %v7396
        %v7742 = vpack.c.b16 %v7400, %v7397
        %v7743 = vpack.c.b16 %v7404, %v7401
        %v7744 = vpack.c.b16 %v7405, %v7402
        %v7745 = vpack.c.b16 %v7406, %v7403
        %v7746 = vpack.c.b16 %v7410, %v7407
        %v7747 = vpack.c.b16 %v7411, %v7408
        %v7748 = vpack.c.b16 %v7412, %v7409
        %v7749 = vpack.c.b16 %v7416, %v7413
        %v7750 = vpack.c.b16 %v7417, %v7414
        %v7751 = vpack.c.b16 %v7418, %v7415
        %v7752 = vpack.c.b16 %v7422, %v7419
        %v7753 = vpack.c.b16 %v7423, %v7420
        %v7754 = vpack.c.b16 %v7424, %v7421
        %v7755 = vpack.c.b16 %v7428, %v7425
        %v7756 = vpack.c.b16 %v7429, %v7426
        %v7757 = vpack.c.b16 %v7430, %v7427
        %v7758 = vpack.c.b16 %v7434, %v7431
        %v7759 = vpack.c.b16 %v7435, %v7432
        %v7760 = vpack.c.b16 %v7436, %v7433
        %v7761 = vpack.c.b16 %v7440, %v7437
        %v7762 = vpack.c.b16 %v7441, %v7438
        %v7763 = vpack.c.b16 %v7442, %v7439
        %v7764 = vpack.c.b16 %v7446, %v7443
        %v7765 = vpack.c.b16 %v7447, %v7444
        %v7766 = vpack.c.b16 %v7448, %v7445
        %v7767 = vpack.c.b16 %v7452, %v7449
        %v7768 = vpack.c.b16 %v7453, %v7450
        %v7769 = vpack.c.b16 %v7454, %v7451
        %v7770 = vpack.c.b16 %v7458, %v7455
        %v7771 = vpack.c.b16 %v7459, %v7456
        %v7772 = vpack.c.b16 %v7460, %v7457
        %v7773 = vpack.c.b16 %v7464, %v7461
        %v7774 = vpack.c.b16 %v7465, %v7462
        %v7775 = vpack.c.b16 %v7466, %v7463
        %v7776 = vpack.c.b16 %v7470, %v7467
        %v7777 = vpack.c.b16 %v7471, %v7468
        %v7778 = vpack.c.b16 %v7472, %v7469
        %v7779 = vpack.c.b16 %v7476, %v7473
        %v7780 = vpack.c.b16 %v7477, %v7474
        %v7781 = vpack.c.b16 %v7478, %v7475
        %v7782 = vpack.c.b16 %v7482, %v7479
        %v7783 = vpack.c.b16 %v7483, %v7480
        %v7784 = vpack.c.b16 %v7484, %v7481
        %v7785 = vpack.c.b16 %v7488, %v7485
        %v7786 = vpack.c.b16 %v7489, %v7486
        %v7787 = vpack.c.b16 %v7490, %v7487
        %v7788 = vpack.c.b16 %v7494, %v7491
        %v7789 = vpack.c.b16 %v7495, %v7492
        %v7790 = vpack.c.b16 %v7496, %v7493
        %v7791 = vpack.c.b16 %v7500, %v7497
        %v7792 = vpack.c.b16 %v7501, %v7498
        %v7793 = vpack.c.b16 %v7502, %v7499
        %v7794 = vpack.c.b16 %v7506, %v7503
        %v7795 = vpack.c.b16 %v7507, %v7504
        %v7796 = vpack.c.b16 %v7508, %v7505
        %v7797 = vpack.c.b16 %v7512, %v7509
        %v7798 = vpack.c.b16 %v7513, %v7510
        %v7799 = vpack.c.b16 %v7514, %v7511
        %v7800 = vpack.c.b16 %v7518, %v7515
        %v7801 = vpack.c.b16 %v7519, %v7516
        %v7802 = vpack.c.b16 %v7520, %v7517
        %v7803 = vpack.c.b16 %v7524, %v7521
        %v7804 = vpack.c.b16 %v7525, %v7522
        %v7805 = vpack.c.b16 %v7526, %v7523
        %v7806 = vpack.c.b16 %v7530, %v7527
        %v7807 = vpack.c.b16 %v7531, %v7528
        %v7808 = vpack.c.b16 %v7532, %v7529
        %v7809 = vpack.c.b16 %v7536, %v7533
        %v7810 = vpack.c.b16 %v7537, %v7534
        %v7811 = vpack.c.b16 %v7538, %v7535
        %v7812 = vpack.c.b16 %v7542, %v7539
        %v7813 = vpack.c.b16 %v7543, %v7540
        %v7814 = vpack.c.b16 %v7544, %v7541
        %v7815 = vpack.c.b16 %v7548, %v7545
        %v7816 = vpack.c.b16 %v7549, %v7546
        %v7817 = vpack.c.b16 %v7550, %v7547
        %v7818 = vpack.c.b16 %v7554, %v7551
        %v7819 = vpack.c.b16 %v7555, %v7552
        %v7820 = vpack.c.b16 %v7556, %v7553
        %v7821 = vpack.c.b16 %v7560, %v7557
        %v7822 = vpack.c.b16 %v7561, %v7558
        %v7823 = vpack.c.b16 %v7562, %v7559
        %v7824 = vpack.c.b16 %v7566, %v7563
        %v7825 = vpack.c.b16 %v7567, %v7564
        %v7826 = vpack.c.b16 %v7568, %v7565
        %v7827 = vpack.c.b16 %v7572, %v7569
        %v7828 = vpack.c.b16 %v7573, %v7570
        %v7829 = vpack.c.b16 %v7574, %v7571
        %v7830 = vpack.c.b16 %v7578, %v7575
        %v7831 = vpack.c.b16 %v7579, %v7576
        %v7832 = vpack.c.b16 %v7580, %v7577
        %v7833 = vpack.c.b16 %v7584, %v7581
        %v7834 = vpack.c.b16 %v7585, %v7582
        %v7835 = vpack.c.b16 %v7586, %v7583
        %v7836 = vpack.c.b16 %v7590, %v7587
        %v7837 = vpack.c.b16 %v7591, %v7588
        %v7838 = vpack.c.b16 %v7592, %v7589
        %v7839 = vpack.c.b16 %v7596, %v7593
        %v7840 = vpack.c.b16 %v7597, %v7594
        %v7841 = vpack.c.b16 %v7598, %v7595
        %v7842 = vpack.c.b16 %v7602, %v7599
        %v7843 = vpack.c.b16 %v7603, %v7600
        %v7844 = vpack.c.b16 %v7604, %v7601
        %v7845 = vpack.c.b16 %v7608, %v7605
        %v7846 = vpack.c.b16 %v7609, %v7606
        %v7847 = vpack.c.b16 %v7610, %v7607
        %v7848 = vpack.c.b16 %v7614, %v7611
        %v7849 = vpack.c.b16 %v7615, %v7612
        %v7850 = vpack.c.b16 %v7616, %v7613
        %v7851 = vpack.c.b16 %v7620, %v7617
        %v7852 = vpack.c.b16 %v7621, %v7618
        %v7853 = vpack.c.b16 %v7622, %v7619
        %v7854 = vpack.c.b16 %v7626, %v7623
        %v7855 = vpack.c.b16 %v7627, %v7624
        %v7856 = vpack.c.b16 %v7628, %v7625
        %v7857 = vpack.c.b16 %v7632, %v7629
        %v7858 = vpack.c.b16 %v7633, %v7630
        %v7859 = vpack.c.b16 %v7634, %v7631
        %v7860 = vpack.c.b16 %v7638, %v7635
        %v7861 = vpack.c.b16 %v7639, %v7636
        %v7862 = vpack.c.b16 %v7640, %v7637
        %v7863 = vpack.c.b16 %v7644, %v7641
        %v7864 = vpack.c.b16 %v7645, %v7642
        %v7865 = vpack.c.b16 %v7646, %v7643
        %v7866 = vpack.c.b16 %v7650, %v7647
        %v7867 = vpack.c.b16 %v7651, %v7648
        %v7868 = vpack.c.b16 %v7652, %v7649
        %8085 = vmatprep.subr.bf16.mxu0 %v7654
        %8086 = vmatpush1.bf16.msra.mxu0 %v7653
        %8087 = vmatprep.subr.bf16.mxu0 %v7657
        %8088 = vmatpush1.bf16.msra.mxu0 %v7656
        %8089 = vmatprep.subr.bf16.mxu0 %v7660
        %8090 = vmatpush1.bf16.msra.mxu0 %v7659
        %8091 = vmatprep.subr.bf16.mxu0 %v7663
        %8092 = vmatpush1.bf16.msra.mxu0 %v7662
        %8093 = vmatprep.subr.bf16.mxu0 %v7666
        %8094 = vmatpush1.bf16.msra.mxu0 %v7665
        %8095 = vmatprep.subr.bf16.mxu0 %v7669
        %8096 = vmatpush1.bf16.msra.mxu0 %v7668
        %8097 = vmatprep.subr.bf16.mxu0 %v7672
        %8098 = vmatpush1.bf16.msra.mxu0 %v7671
        %8099 = vmatprep.subr.bf16.mxu0 %v7675
        %8100 = vmatpush1.bf16.msra.mxu0 %v7674
        %8101 = vmatprep.subr.bf16.mxu0 %v7678
        %8102 = vmatpush1.bf16.msra.mxu0 %v7677
        %8103 = vmatprep.subr.bf16.mxu0 %v7681
        %8104 = vmatpush1.bf16.msra.mxu0 %v7680
        %8105 = vmatprep.subr.bf16.mxu0 %v7684
        %8106 = vmatpush1.bf16.msra.mxu0 %v7683
        %8107 = vmatprep.subr.bf16.mxu0 %v7687
        %8108 = vmatpush1.bf16.msra.mxu0 %v7686
        %8109 = vmatprep.subr.bf16.mxu0 %v7690
        %8110 = vmatpush1.bf16.msra.mxu0 %v7689
        %8111 = vmatprep.subr.bf16.mxu0 %v7693
        %8112 = vmatpush1.bf16.msra.mxu0 %v7692
        %8113 = vmatprep.subr.bf16.mxu0 %v7696
        %8114 = vmatpush1.bf16.msra.mxu0 %v7695
        %8115 = vmatprep.subr.bf16.mxu0 %v7699
        %8116 = vmatpush1.bf16.msra.mxu0 %v7698
        %8117 = vmatprep.mubr.bf16.mxu0 %v3770
        %8118 = vmatmul.mubr.bf16.gmra.mrb[0].mxu0 %v3769
        %v8119 = vpop.f32.mrb[0].mxu0
        %v8120 = vadd.f32 %v4478, %v8119
        %v8121 = vpop.f32.mrb[0].mxu0
        %v8122 = vadd.f32 %v4482, %v8121
        %v8123 = vpop.f32.mrb[0].mxu0
        %v8124 = vadd.f32 %v4478, %v8123
        %v8125 = vpop.f32.mrb[0].mxu0
        %v8126 = vadd.f32 %v4482, %v8125
        %8127 = vmatprep.mubr.bf16.mxu0 %v3773
        %8128 = vmatmul.mubr.bf16.gmra.mrb[0].mxu0 %v3772
        %v8129 = vpop.f32.mrb[0].mxu0
        %v8130 = vadd.f32 %v4478, %v8129
        %v8131 = vpop.f32.mrb[0].mxu0
        %v8132 = vadd.f32 %v4482, %v8131
        %v8133 = vpop.f32.mrb[0].mxu0
        %v8134 = vadd.f32 %v4478, %v8133
        %v8135 = vpop.f32.mrb[0].mxu0
        %v8136 = vadd.f32 %v4482, %v8135
        %8137 = vmatprep.mubr.bf16.mxu0 %v3776
        %8138 = vmatmul.mubr.bf16.gmra.mrb[0].mxu0 %v3775
        %v8139 = vpop.f32.mrb[0].mxu0
        %v8140 = vadd.f32 %v4478, %v8139
        %v8141 = vpop.f32.mrb[0].mxu0
        %v8142 = vadd.f32 %v4482, %v8141
        %v8143 = vpop.f32.mrb[0].mxu0
        %v8144 = vadd.f32 %v4478, %v8143
        %v8145 = vpop.f32.mrb[0].mxu0
        %v8146 = vadd.f32 %v4482, %v8145
        %8147 = vmatprep.mubr.bf16.mxu0 %v3779
        %8148 = vmatmul.mubr.bf16.gmra.mrb[0].mxu0 %v3778
        %v8149 = vpop.f32.mrb[0].mxu0
        %v8150 = vadd.f32 %v4478, %v8149
        %v8151 = vpop.f32.mrb[0].mxu0
        %v8152 = vadd.f32 %v4482, %v8151
        %v8153 = vpop.f32.mrb[0].mxu0
        %v8154 = vadd.f32 %v4478, %v8153
        %v8155 = vpop.f32.mrb[0].mxu0
        %v8156 = vadd.f32 %v4482, %v8155
        %8157 = vmatprep.mubr.bf16.mxu0 %v3782
        %8158 = vmatmul.mubr.bf16.gmra.mrb[0].mxu0 %v3781
        %v8159 = vpop.f32.mrb[0].mxu0
        %v8160 = vadd.f32 %v4478, %v8159
        %v8161 = vpop.f32.mrb[0].mxu0
        %v8162 = vadd.f32 %v4482, %v8161
        %v8163 = vpop.f32.mrb[0].mxu0
        %v8164 = vadd.f32 %v4478, %v8163
        %v8165 = vpop.f32.mrb[0].mxu0
        %v8166 = vadd.f32 %v4482, %v8165
        %8167 = vmatprep.mubr.bf16.mxu0 %v3785
        %8168 = vmatmul.mubr.bf16.gmra.mrb[0].mxu0 %v3784
        %v8169 = vpop.f32.mrb[0].mxu0
        %v8170 = vadd.f32 %v4478, %v8169
        %v8171 = vpop.f32.mrb[0].mxu0
        %v8172 = vadd.f32 %v4482, %v8171
        %v8173 = vpop.f32.mrb[0].mxu0
        %v8174 = vadd.f32 %v4478, %v8173
        %v8175 = vpop.f32.mrb[0].mxu0
        %v8176 = vadd.f32 %v4482, %v8175
        %8177 = vmatprep.mubr.bf16.mxu0 %v3788
        %8178 = vmatmul.mubr.bf16.gmra.mrb[0].mxu0 %v3787
        %v8179 = vpop.f32.mrb[0].mxu0
        %v8180 = vadd.f32 %v4478, %v8179
        %v8181 = vpop.f32.mrb[0].mxu0
        %v8182 = vadd.f32 %v4482, %v8181
        %v8183 = vpop.f32.mrb[0].mxu0
        %v8184 = vadd.f32 %v4478, %v8183
        %v8185 = vpop.f32.mrb[0].mxu0
        %v8186 = vadd.f32 %v4482, %v8185
        %8187 = vdwg.mxu0
        %8188 = vmatprep.subr.bf16.mxu0 %v7702
        %8189 = vmatpush1.bf16.msra.mxu0 %v7701
        %8190 = vmatprep.subr.bf16.mxu0 %v7705
        %8191 = vmatpush1.bf16.msra.mxu0 %v7704
        %8192 = vmatprep.subr.bf16.mxu0 %v7708
        %8193 = vmatpush1.bf16.msra.mxu0 %v7707
        %8194 = vmatprep.subr.bf16.mxu0 %v7711
        %8195 = vmatpush1.bf16.msra.mxu0 %v7710
        %8196 = vmatprep.subr.bf16.mxu0 %v7714
        %8197 = vmatpush1.bf16.msra.mxu0 %v7713
        %8198 = vmatprep.subr.bf16.mxu0 %v7717
        %8199 = vmatpush1.bf16.msra.mxu0 %v7716
        %8200 = vmatprep.subr.bf16.mxu0 %v7720
        %8201 = vmatpush1.bf16.msra.mxu0 %v7719
        %8202 = vmatprep.subr.bf16.mxu0 %v7723
        %8203 = vmatpush1.bf16.msra.mxu0 %v7722
        %8204 = vmatprep.subr.bf16.mxu0 %v7726
        %8205 = vmatpush1.bf16.msra.mxu0 %v7725
        %8206 = vmatprep.subr.bf16.mxu0 %v7729
        %8207 = vmatpush1.bf16.msra.mxu0 %v7728
        %8208 = vmatprep.subr.bf16.mxu0 %v7732
        %8209 = vmatpush1.bf16.msra.mxu0 %v7731
        %8210 = vmatprep.subr.bf16.mxu0 %v7735
        %8211 = vmatpush1.bf16.msra.mxu0 %v7734
        %8212 = vmatprep.subr.bf16.mxu0 %v7738
        %8213 = vmatpush1.bf16.msra.mxu0 %v7737
        %8214 = vmatprep.subr.bf16.mxu0 %v7741
        %8215 = vmatpush1.bf16.msra.mxu0 %v7740
        %8216 = vmatprep.subr.bf16.mxu0 %v7744
        %8217 = vmatpush1.bf16.msra.mxu0 %v7743
        %8218 = vmatprep.subr.bf16.mxu0 %v7747
        %8219 = vmatpush1.bf16.msra.mxu0 %v7746
        %8220 = vmatprep.mubr.bf16.mxu0 %v3921
        %8221 = vmatmul.mubr.bf16.gmra.mrb[0].mxu0 %v3771
        %v8222 = vpop.f32.mrb[0].mxu0
        %v8223 = vadd.f32 %v8120, %v8222
        %v8224 = vpop.f32.mrb[0].mxu0
        %v8225 = vadd.f32 %v8122, %v8224
        %v8226 = vpop.f32.mrb[0].mxu0
        %v8227 = vadd.f32 %v8124, %v8226
        %v8228 = vpop.f32.mrb[0].mxu0
        %v8229 = vadd.f32 %v8126, %v8228
        %8230 = vmatprep.mubr.bf16.mxu0 %v3953
        %8231 = vmatmul.mubr.bf16.gmra.mrb[0].mxu0 %v3774
        %v8232 = vpop.f32.mrb[0].mxu0
        %v8233 = vadd.f32 %v8130, %v8232
        %v8234 = vpop.f32.mrb[0].mxu0
        %v8235 = vadd.f32 %v8132, %v8234
        %v8236 = vpop.f32.mrb[0].mxu0
        %v8237 = vadd.f32 %v8134, %v8236
        %v8238 = vpop.f32.mrb[0].mxu0
        %v8239 = vadd.f32 %v8136, %v8238
        %8240 = vmatprep.mubr.bf16.mxu0 %v3977
        %8241 = vmatmul.mubr.bf16.gmra.mrb[0].mxu0 %v3777
        %v8242 = vpop.f32.mrb[0].mxu0
        %v8243 = vadd.f32 %v8140, %v8242
        %v8244 = vpop.f32.mrb[0].mxu0
        %v8245 = vadd.f32 %v8142, %v8244
        %v8246 = vpop.f32.mrb[0].mxu0
        %v8247 = vadd.f32 %v8144, %v8246
        %v8248 = vpop.f32.mrb[0].mxu0
        %v8249 = vadd.f32 %v8146, %v8248
        %8250 = vmatprep.mubr.bf16.mxu0 %v4001
        %8251 = vmatmul.mubr.bf16.gmra.mrb[0].mxu0 %v3780
        %v8252 = vpop.f32.mrb[0].mxu0
        %v8253 = vadd.f32 %v8150, %v8252
        %v8254 = vpop.f32.mrb[0].mxu0
        %v8255 = vadd.f32 %v8152, %v8254
        %v8256 = vpop.f32.mrb[0].mxu0
        %v8257 = vadd.f32 %v8154, %v8256
        %v8258 = vpop.f32.mrb[0].mxu0
        %v8259 = vadd.f32 %v8156, %v8258
        %8260 = vmatprep.mubr.bf16.mxu0 %v4025
        %8261 = vmatmul.mubr.bf16.gmra.mrb[0].mxu0 %v3783
        %v8262 = vpop.f32.mrb[0].mxu0
        %v8263 = vadd.f32 %v8160, %v8262
        %v8264 = vpop.f32.mrb[0].mxu0
        %v8265 = vadd.f32 %v8162, %v8264
        %v8266 = vpop.f32.mrb[0].mxu0
        %v8267 = vadd.f32 %v8164, %v8266
        %v8268 = vpop.f32.mrb[0].mxu0
        %v8269 = vadd.f32 %v8166, %v8268
        %8270 = vmatprep.mubr.bf16.mxu0 %v4049
        %8271 = vmatmul.mubr.bf16.gmra.mrb[0].mxu0 %v3786
        %v8272 = vpop.f32.mrb[0].mxu0
        %v8273 = vadd.f32 %v8170, %v8272
        %v8274 = vpop.f32.mrb[0].mxu0
        %v8275 = vadd.f32 %v8172, %v8274
        %v8276 = vpop.f32.mrb[0].mxu0
        %v8277 = vadd.f32 %v8174, %v8276
        %v8278 = vpop.f32.mrb[0].mxu0
        %v8279 = vadd.f32 %v8176, %v8278
        %8280 = vmatprep.mubr.bf16.mxu0 %v4073
        %8281 = vmatmul.mubr.bf16.gmra.mrb[0].mxu0 %v3789
        %v8282 = vpop.f32.mrb[0].mxu0
        %v8283 = vadd.f32 %v8180, %v8282
        %v8284 = vpop.f32.mrb[0].mxu0
        %v8285 = vadd.f32 %v8182, %v8284
        %v8286 = vpop.f32.mrb[0].mxu0
        %v8287 = vadd.f32 %v8184, %v8286
        %v8288 = vpop.f32.mrb[0].mxu0
        %v8289 = vadd.f32 %v8186, %v8288
        %8290 = vdwg.mxu0
        %8291 = vmatprep.subr.bf16.mxu0 %v7750
        %8292 = vmatpush1.bf16.msra.mxu0 %v7749
        %8293 = vmatprep.subr.bf16.mxu0 %v7753
        %8294 = vmatpush1.bf16.msra.mxu0 %v7752
        %8295 = vmatprep.subr.bf16.mxu0 %v7756
        %8296 = vmatpush1.bf16.msra.mxu0 %v7755
        %8297 = vmatprep.subr.bf16.mxu0 %v7759
        %8298 = vmatpush1.bf16.msra.mxu0 %v7758
        %8299 = vmatprep.subr.bf16.mxu0 %v7762
        %8300 = vmatpush1.bf16.msra.mxu0 %v7761
        %8301 = vmatprep.subr.bf16.mxu0 %v7765
        %8302 = vmatpush1.bf16.msra.mxu0 %v7764
        %8303 = vmatprep.subr.bf16.mxu0 %v7768
        %8304 = vmatpush1.bf16.msra.mxu0 %v7767
        %8305 = vmatprep.subr.bf16.mxu0 %v7771
        %8306 = vmatpush1.bf16.msra.mxu0 %v7770
        %8307 = vmatprep.subr.bf16.mxu0 %v7774
        %8308 = vmatpush1.bf16.msra.mxu0 %v7773
        %8309 = vmatprep.subr.bf16.mxu0 %v7777
        %8310 = vmatpush1.bf16.msra.mxu0 %v7776
        %8311 = vmatprep.subr.bf16.mxu0 %v7780
        %8312 = vmatpush1.bf16.msra.mxu0 %v7779
        %8313 = vmatprep.subr.bf16.mxu0 %v7783
        %8314 = vmatpush1.bf16.msra.mxu0 %v7782
        %8315 = vmatprep.subr.bf16.mxu0 %v7786
        %8316 = vmatpush1.bf16.msra.mxu0 %v7785
        %8317 = vmatprep.subr.bf16.mxu0 %v7789
        %8318 = vmatpush1.bf16.msra.mxu0 %v7788
        %8319 = vmatprep.subr.bf16.mxu0 %v7792
        %8320 = vmatpush1.bf16.msra.mxu0 %v7791
        %8321 = vmatprep.subr.bf16.mxu0 %v7795
        %8322 = vmatpush1.bf16.msra.mxu0 %v7794
        %8323 = vmatprep.mubr.bf16.mxu0 %v3945
        %8324 = vmatmul.mubr.bf16.gmra.mrb[0].mxu0 %v3933
        %v8325 = vpop.f32.mrb[0].mxu0
        %v8326 = vadd.f32 %v8223, %v8325
        %v8327 = vpop.f32.mrb[0].mxu0
        %v8328 = vadd.f32 %v8225, %v8327
        %v8329 = vpop.f32.mrb[0].mxu0
        %v8330 = vadd.f32 %v8227, %v8329
        %v8331 = vpop.f32.mrb[0].mxu0
        %v8332 = vadd.f32 %v8229, %v8331
        %8333 = vmatprep.mubr.bf16.mxu0 %v3969
        %8334 = vmatmul.mubr.bf16.gmra.mrb[0].mxu0 %v3961
        %v8335 = vpop.f32.mrb[0].mxu0
        %v8336 = vadd.f32 %v8233, %v8335
        %v8337 = vpop.f32.mrb[0].mxu0
        %v8338 = vadd.f32 %v8235, %v8337
        %v8339 = vpop.f32.mrb[0].mxu0
        %v8340 = vadd.f32 %v8237, %v8339
        %v8341 = vpop.f32.mrb[0].mxu0
        %v8342 = vadd.f32 %v8239, %v8341
        %8343 = vmatprep.mubr.bf16.mxu0 %v3993
        %8344 = vmatmul.mubr.bf16.gmra.mrb[0].mxu0 %v3985
        %v8345 = vpop.f32.mrb[0].mxu0
        %v8346 = vadd.f32 %v8243, %v8345
        %v8347 = vpop.f32.mrb[0].mxu0
        %v8348 = vadd.f32 %v8245, %v8347
        %v8349 = vpop.f32.mrb[0].mxu0
        %v8350 = vadd.f32 %v8247, %v8349
        %v8351 = vpop.f32.mrb[0].mxu0
        %v8352 = vadd.f32 %v8249, %v8351
        %8353 = vmatprep.mubr.bf16.mxu0 %v4017
        %8354 = vmatmul.mubr.bf16.gmra.mrb[0].mxu0 %v4009
        %v8355 = vpop.f32.mrb[0].mxu0
        %v8356 = vadd.f32 %v8253, %v8355
        %v8357 = vpop.f32.mrb[0].mxu0
        %v8358 = vadd.f32 %v8255, %v8357
        %v8359 = vpop.f32.mrb[0].mxu0
        %v8360 = vadd.f32 %v8257, %v8359
        %v8361 = vpop.f32.mrb[0].mxu0
        %v8362 = vadd.f32 %v8259, %v8361
        %8363 = vmatprep.mubr.bf16.mxu0 %v4041
        %8364 = vmatmul.mubr.bf16.gmra.mrb[0].mxu0 %v4033
        %v8365 = vpop.f32.mrb[0].mxu0
        %v8366 = vadd.f32 %v8263, %v8365
        %v8367 = vpop.f32.mrb[0].mxu0
        %v8368 = vadd.f32 %v8265, %v8367
        %v8369 = vpop.f32.mrb[0].mxu0
        %v8370 = vadd.f32 %v8267, %v8369
        %v8371 = vpop.f32.mrb[0].mxu0
        %v8372 = vadd.f32 %v8269, %v8371
        %8373 = vmatprep.mubr.bf16.mxu0 %v4065
        %8374 = vmatmul.mubr.bf16.gmra.mrb[0].mxu0 %v4057
        %v8375 = vpop.f32.mrb[0].mxu0
        %v8376 = vadd.f32 %v8273, %v8375
        %v8377 = vpop.f32.mrb[0].mxu0
        %v8378 = vadd.f32 %v8275, %v8377
        %v8379 = vpop.f32.mrb[0].mxu0
        %v8380 = vadd.f32 %v8277, %v8379
        %v8381 = vpop.f32.mrb[0].mxu0
        %v8382 = vadd.f32 %v8279, %v8381
        %8383 = vmatprep.mubr.bf16.mxu0 %v4089
        %8384 = vmatmul.mubr.bf16.gmra.mrb[0].mxu0 %v4081
        %v8385 = vpop.f32.mrb[0].mxu0
        %v8386 = vadd.f32 %v8283, %v8385
        %v8387 = vpop.f32.mrb[0].mxu0
        %v8388 = vadd.f32 %v8285, %v8387
        %v8389 = vpop.f32.mrb[0].mxu0
        %v8390 = vadd.f32 %v8287, %v8389
        %v8391 = vpop.f32.mrb[0].mxu0
        %v8392 = vadd.f32 %v8289, %v8391
        %8393 = vdwg.mxu0
        %8394 = vmatprep.subr.bf16.mxu0 %v7798
        %8395 = vmatpush1.bf16.msra.mxu0 %v7797
        %8396 = vmatprep.subr.bf16.mxu0 %v7801
        %8397 = vmatpush1.bf16.msra.mxu0 %v7800
        %8398 = vmatprep.subr.bf16.mxu0 %v7804
        %8399 = vmatpush1.bf16.msra.mxu0 %v7803
        %8400 = vmatprep.subr.bf16.mxu0 %v7807
        %8401 = vmatpush1.bf16.msra.mxu0 %v7806
        %8402 = vmatprep.subr.bf16.mxu0 %v7810
        %8403 = vmatpush1.bf16.msra.mxu0 %v7809
        %8404 = vmatprep.subr.bf16.mxu0 %v7813
        %8405 = vmatpush1.bf16.msra.mxu0 %v7812
        %8406 = vmatprep.subr.bf16.mxu0 %v7816
        %8407 = vmatpush1.bf16.msra.mxu0 %v7815
        %8408 = vmatprep.subr.bf16.mxu0 %v7819
        %8409 = vmatpush1.bf16.msra.mxu0 %v7818
        %8410 = vmatprep.subr.bf16.mxu0 %v7822
        %8411 = vmatpush1.bf16.msra.mxu0 %v7821
        %8412 = vmatprep.subr.bf16.mxu0 %v7825
        %8413 = vmatpush1.bf16.msra.mxu0 %v7824
        %8414 = vmatprep.subr.bf16.mxu0 %v7828
        %8415 = vmatpush1.bf16.msra.mxu0 %v7827
        %8416 = vmatprep.subr.bf16.mxu0 %v7831
        %8417 = vmatpush1.bf16.msra.mxu0 %v7830
        %8418 = vmatprep.subr.bf16.mxu0 %v7834
        %8419 = vmatpush1.bf16.msra.mxu0 %v7833
        %8420 = vmatprep.subr.bf16.mxu0 %v7837
        %8421 = vmatpush1.bf16.msra.mxu0 %v7836
        %8422 = vmatprep.subr.bf16.mxu0 %v7840
        %8423 = vmatpush1.bf16.msra.mxu0 %v7839
        %8424 = vmatprep.subr.bf16.mxu0 %v7843
        %8425 = vmatpush1.bf16.msra.mxu0 %v7842
        %8426 = vmatprep.mubr.bf16.mxu0 %v4124
        %8427 = vmatmul.mubr.bf16.gmra.mrb[0].mxu0 %v4121
        %v8428 = vpop.f32.mrb[0].mxu0
        %v8429 = vadd.f32 %v8326, %v8428
        %v8430 = vpop.f32.mrb[0].mxu0
        %v8431 = vadd.f32 %v8328, %v8430
        %v8432 = vpop.f32.mrb[0].mxu0
        %v8433 = vadd.f32 %v8330, %v8432
        %v8434 = vpop.f32.mrb[0].mxu0
        %v8435 = vadd.f32 %v8332, %v8434
        %8436 = vmatprep.mubr.bf16.mxu0 %v4131
        %8437 = vmatmul.mubr.bf16.gmra.mrb[0].mxu0 %v4129
        %v8438 = vpop.f32.mrb[0].mxu0
        %v8439 = vadd.f32 %v8336, %v8438
        %v8440 = vpop.f32.mrb[0].mxu0
        %v8441 = vadd.f32 %v8338, %v8440
        %v8442 = vpop.f32.mrb[0].mxu0
        %v8443 = vadd.f32 %v8340, %v8442
        %v8444 = vpop.f32.mrb[0].mxu0
        %v8445 = vadd.f32 %v8342, %v8444
        %8446 = vmatprep.mubr.bf16.mxu0 %v4137
        %8447 = vmatmul.mubr.bf16.gmra.mrb[0].mxu0 %v4135
        %v8448 = vpop.f32.mrb[0].mxu0
        %v8449 = vadd.f32 %v8346, %v8448
        %v8450 = vpop.f32.mrb[0].mxu0
        %v8451 = vadd.f32 %v8348, %v8450
        %v8452 = vpop.f32.mrb[0].mxu0
        %v8453 = vadd.f32 %v8350, %v8452
        %v8454 = vpop.f32.mrb[0].mxu0
        %v8455 = vadd.f32 %v8352, %v8454
        %8456 = vmatprep.mubr.bf16.mxu0 %v4143
        %8457 = vmatmul.mubr.bf16.gmra.mrb[0].mxu0 %v4141
        %v8458 = vpop.f32.mrb[0].mxu0
        %v8459 = vadd.f32 %v8356, %v8458
        %v8460 = vpop.f32.mrb[0].mxu0
        %v8461 = vadd.f32 %v8358, %v8460
        %v8462 = vpop.f32.mrb[0].mxu0
        %v8463 = vadd.f32 %v8360, %v8462
        %v8464 = vpop.f32.mrb[0].mxu0
        %v8465 = vadd.f32 %v8362, %v8464
        %8466 = vmatprep.mubr.bf16.mxu0 %v4149
        %8467 = vmatmul.mubr.bf16.gmra.mrb[0].mxu0 %v4147
        %v8468 = vpop.f32.mrb[0].mxu0
        %v8469 = vadd.f32 %v8366, %v8468
        %v8470 = vpop.f32.mrb[0].mxu0
        %v8471 = vadd.f32 %v8368, %v8470
        %v8472 = vpop.f32.mrb[0].mxu0
        %v8473 = vadd.f32 %v8370, %v8472
        %v8474 = vpop.f32.mrb[0].mxu0
        %v8475 = vadd.f32 %v8372, %v8474
        %8476 = vmatprep.mubr.bf16.mxu0 %v4155
        %8477 = vmatmul.mubr.bf16.gmra.mrb[0].mxu0 %v4153
        %v8478 = vpop.f32.mrb[0].mxu0
        %v8479 = vadd.f32 %v8376, %v8478
        %v8480 = vpop.f32.mrb[0].mxu0
        %v8481 = vadd.f32 %v8378, %v8480
        %v8482 = vpop.f32.mrb[0].mxu0
        %v8483 = vadd.f32 %v8380, %v8482
        %v8484 = vpop.f32.mrb[0].mxu0
        %v8485 = vadd.f32 %v8382, %v8484
        %8486 = vmatprep.mubr.bf16.mxu0 %v4161
        %8487 = vmatmul.mubr.bf16.gmra.mrb[0].mxu0 %v4159
        %v8488 = vpop.f32.mrb[0].mxu0
        %v8489 = vadd.f32 %v8386, %v8488
        %v8490 = vpop.f32.mrb[0].mxu0
        %v8491 = vadd.f32 %v8388, %v8490
        %v8492 = vpop.f32.mrb[0].mxu0
        %v8493 = vadd.f32 %v8390, %v8492
        %v8494 = vpop.f32.mrb[0].mxu0
        %v8495 = vadd.f32 %v8392, %v8494
        %8496 = vdwg.mxu0
        %8497 = vmatprep.subr.bf16.mxu0 %v7846
        %8498 = vmatpush1.bf16.msra.mxu0 %v7845
        %8499 = vmatprep.subr.bf16.mxu0 %v7849
        %8500 = vmatpush1.bf16.msra.mxu0 %v7848
        %8501 = vmatprep.subr.bf16.mxu0 %v7852
        %8502 = vmatpush1.bf16.msra.mxu0 %v7851
        %8503 = vmatprep.subr.bf16.mxu0 %v7855
        %8504 = vmatpush1.bf16.msra.mxu0 %v7854
        %8505 = vmatprep.subr.bf16.mxu0 %v7858
        %8506 = vmatpush1.bf16.msra.mxu0 %v7857
        %8507 = vmatprep.subr.bf16.mxu0 %v7861
        %8508 = vmatpush1.bf16.msra.mxu0 %v7860
        %8509 = vmatprep.subr.bf16.mxu0 %v7864
        %8510 = vmatpush1.bf16.msra.mxu0 %v7863
        %8511 = vmatprep.subr.bf16.mxu0 %v7867
        %8512 = vmatpush1.bf16.msra.mxu0 %v7866
        %8513 = vmatprep.subr.bf16.mxu0 0
        %8514 = vmatpush1.bf16.msra.mxu0 0
        %8515 = vmatprep.subr.bf16.mxu0 0
        %8516 = vmatpush1.bf16.msra.mxu0 0
        %8517 = vmatprep.subr.bf16.mxu0 0
        %8518 = vmatpush1.bf16.msra.mxu0 0
        %8519 = vmatprep.subr.bf16.mxu0 0
        %8520 = vmatpush1.bf16.msra.mxu0 0
        %8521 = vmatprep.subr.bf16.mxu0 0
        %8522 = vmatpush1.bf16.msra.mxu0 0
        %8523 = vmatprep.subr.bf16.mxu0 0
        %8524 = vmatpush1.bf16.msra.mxu0 0
        %8525 = vmatprep.subr.bf16.mxu0 0
        %8526 = vmatpush1.bf16.msra.mxu0 0
        %8527 = vmatprep.subr.bf16.mxu0 0
        %8528 = vmatpush1.bf16.msra.mxu0 0
        %8529 = vmatprep.mubr.bf16.mxu0 0
        %8530 = vmatmul.mubr.bf16.gmra.mrb[0].mxu0 %v4127
        %v8531 = vpop.f32.mrb[0].mxu0
        %v8532 = vadd.f32 %v8429, %v8531
        %v8533 = vpop.f32.mrb[0].mxu0
        %v8534 = vadd.f32 %v8431, %v8533
        %v8535 = vpop.f32.mrb[0].mxu0
        %v8536 = vadd.f32 %v8433, %v8535
        %v8537 = vpop.f32.mrb[0].mxu0
        %v8538 = vadd.f32 %v8435, %v8537
        %8539 = vmatprep.mubr.bf16.mxu0 0
        %8540 = vmatmul.mubr.bf16.gmra.mrb[0].mxu0 %v4133
        %v8541 = vpop.f32.mrb[0].mxu0
        %v8542 = vadd.f32 %v8439, %v8541
        %v8543 = vpop.f32.mrb[0].mxu0
        %v8544 = vadd.f32 %v8441, %v8543
        %v8545 = vpop.f32.mrb[0].mxu0
        %v8546 = vadd.f32 %v8443, %v8545
        %v8547 = vpop.f32.mrb[0].mxu0
        %v8548 = vadd.f32 %v8445, %v8547
        %8549 = vmatprep.mubr.bf16.mxu0 0
        %8550 = vmatmul.mubr.bf16.gmra.mrb[0].mxu0 %v4139
        %v8551 = vpop.f32.mrb[0].mxu0
        %v8552 = vadd.f32 %v8449, %v8551
        %v8553 = vpop.f32.mrb[0].mxu0
        %v8554 = vadd.f32 %v8451, %v8553
        %v8555 = vpop.f32.mrb[0].mxu0
        %v8556 = vadd.f32 %v8453, %v8555
        %v8557 = vpop.f32.mrb[0].mxu0
        %v8558 = vadd.f32 %v8455, %v8557
        %8559 = vmatprep.mubr.bf16.mxu0 0
        %8560 = vmatmul.mubr.bf16.gmra.mrb[0].mxu0 %v4145
        %v8561 = vpop.f32.mrb[0].mxu0
        %v8562 = vadd.f32 %v8459, %v8561
        %v8563 = vpop.f32.mrb[0].mxu0
        %v8564 = vadd.f32 %v8461, %v8563
        %v8565 = vpop.f32.mrb[0].mxu0
        %v8566 = vadd.f32 %v8463, %v8565
        %v8567 = vpop.f32.mrb[0].mxu0
        %v8568 = vadd.f32 %v8465, %v8567
        %8569 = vmatprep.mubr.bf16.mxu0 0
        %8570 = vmatmul.mubr.bf16.gmra.mrb[0].mxu0 %v4151
        %v8571 = vpop.f32.mrb[0].mxu0
        %v8572 = vadd.f32 %v8469, %v8571
        %v8573 = vpop.f32.mrb[0].mxu0
        %v8574 = vadd.f32 %v8471, %v8573
        %v8575 = vpop.f32.mrb[0].mxu0
        %v8576 = vadd.f32 %v8473, %v8575
        %v8577 = vpop.f32.mrb[0].mxu0
        %v8578 = vadd.f32 %v8475, %v8577
        %8579 = vmatprep.mubr.bf16.mxu0 0
        %8580 = vmatmul.mubr.bf16.gmra.mrb[0].mxu0 %v4157
        %v8581 = vpop.f32.mrb[0].mxu0
        %v8582 = vadd.f32 %v8479, %v8581
        %v8583 = vpop.f32.mrb[0].mxu0
        %v8584 = vadd.f32 %v8481, %v8583
        %v8585 = vpop.f32.mrb[0].mxu0
        %v8586 = vadd.f32 %v8483, %v8585
        %v8587 = vpop.f32.mrb[0].mxu0
        %v8588 = vadd.f32 %v8485, %v8587
        %8589 = vmatprep.mubr.bf16.mxu0 0
        %8590 = vmatmul.mubr.bf16.gmra.mrb[0].mxu0 %v4163
        %v8591 = vpop.f32.mrb[0].mxu0
        %v8592 = vadd.f32 %v8489, %v8591
        %v8593 = vpop.f32.mrb[0].mxu0
        %v8594 = vadd.f32 %v8491, %v8593
        %v8595 = vpop.f32.mrb[0].mxu0
        %v8596 = vadd.f32 %v8493, %v8595
        %v8597 = vpop.f32.mrb[0].mxu0
        %v8598 = vadd.f32 %v8495, %v8597
        %8599 = vdwg.mxu0
        %8600 = vmatprep.subr.bf16.mxu0 0
        %8601 = vmatpush1.bf16.msra.mxu0 %v7655
        %8602 = vmatprep.subr.bf16.mxu0 0
        %8603 = vmatpush1.bf16.msra.mxu0 %v7658
        %8604 = vmatprep.subr.bf16.mxu0 0
        %8605 = vmatpush1.bf16.msra.mxu0 %v7661
        %8606 = vmatprep.subr.bf16.mxu0 0
        %8607 = vmatpush1.bf16.msra.mxu0 %v7664
        %8608 = vmatprep.subr.bf16.mxu0 0
        %8609 = vmatpush1.bf16.msra.mxu0 %v7667
        %8610 = vmatprep.subr.bf16.mxu0 0
        %8611 = vmatpush1.bf16.msra.mxu0 %v7670
        %8612 = vmatprep.subr.bf16.mxu0 0
        %8613 = vmatpush1.bf16.msra.mxu0 %v7673
        %8614 = vmatprep.subr.bf16.mxu0 0
        %8615 = vmatpush1.bf16.msra.mxu0 %v7676
        %8616 = vmatprep.subr.bf16.mxu0 0
        %8617 = vmatpush1.bf16.msra.mxu0 %v7679
        %8618 = vmatprep.subr.bf16.mxu0 0
        %8619 = vmatpush1.bf16.msra.mxu0 %v7682
        %8620 = vmatprep.subr.bf16.mxu0 0
        %8621 = vmatpush1.bf16.msra.mxu0 %v7685
        %8622 = vmatprep.subr.bf16.mxu0 0
        %8623 = vmatpush1.bf16.msra.mxu0 %v7688
        %8624 = vmatprep.subr.bf16.mxu0 0
        %8625 = vmatpush1.bf16.msra.mxu0 %v7691
        %8626 = vmatprep.subr.bf16.mxu0 0
        %8627 = vmatpush1.bf16.msra.mxu0 %v7694
        %8628 = vmatprep.subr.bf16.mxu0 0
        %8629 = vmatpush1.bf16.msra.mxu0 %v7697
        %8630 = vmatprep.subr.bf16.mxu0 0
        %8631 = vmatpush1.bf16.msra.mxu0 %v7700
        %8632 = vmatprep.mubr.bf16.mxu0 %v3770
        %8633 = vmatmul.mubr.bf16.gmra.mrb[0].mxu0 %v3769
        %v8634 = vpop.f32.mrb[0].mxu0
        %v8635 = vadd.f32 %v4486, %v8634
        %v8636 = vpop.f32.mrb[0].mxu0
        %v8637 = vpop.f32.mrb[0].mxu0
        %v8638 = vadd.f32 %v4486, %v8637
        %v8639 = vpop.f32.mrb[0].mxu0
        %8640 = vmatprep.mubr.bf16.mxu0 %v3773
        %8641 = vmatmul.mubr.bf16.gmra.mrb[0].mxu0 %v3772
        %v8642 = vpop.f32.mrb[0].mxu0
        %v8643 = vadd.f32 %v4486, %v8642
        %v8644 = vpop.f32.mrb[0].mxu0
        %v8645 = vpop.f32.mrb[0].mxu0
        %v8646 = vadd.f32 %v4486, %v8645
        %v8647 = vpop.f32.mrb[0].mxu0
        %8648 = vmatprep.mubr.bf16.mxu0 %v3776
        %8649 = vmatmul.mubr.bf16.gmra.mrb[0].mxu0 %v3775
        %v8650 = vpop.f32.mrb[0].mxu0
        %v8651 = vadd.f32 %v4486, %v8650
        %v8652 = vpop.f32.mrb[0].mxu0
        %v8653 = vpop.f32.mrb[0].mxu0
        %v8654 = vadd.f32 %v4486, %v8653
        %v8655 = vpop.f32.mrb[0].mxu0
        %8656 = vmatprep.mubr.bf16.mxu0 %v3779
        %8657 = vmatmul.mubr.bf16.gmra.mrb[0].mxu0 %v3778
        %v8658 = vpop.f32.mrb[0].mxu0
        %v8659 = vadd.f32 %v4486, %v8658
        %v8660 = vpop.f32.mrb[0].mxu0
        %v8661 = vpop.f32.mrb[0].mxu0
        %v8662 = vadd.f32 %v4486, %v8661
        %v8663 = vpop.f32.mrb[0].mxu0
        %8664 = vmatprep.mubr.bf16.mxu0 %v3782
        %8665 = vmatmul.mubr.bf16.gmra.mrb[0].mxu0 %v3781
        %v8666 = vpop.f32.mrb[0].mxu0
        %v8667 = vadd.f32 %v4486, %v8666
        %v8668 = vpop.f32.mrb[0].mxu0
        %v8669 = vpop.f32.mrb[0].mxu0
        %v8670 = vadd.f32 %v4486, %v8669
        %v8671 = vpop.f32.mrb[0].mxu0
        %8672 = vmatprep.mubr.bf16.mxu0 %v3785
        %8673 = vmatmul.mubr.bf16.gmra.mrb[0].mxu0 %v3784
        %v8674 = vpop.f32.mrb[0].mxu0
        %v8675 = vadd.f32 %v4486, %v8674
        %v8676 = vpop.f32.mrb[0].mxu0
        %v8677 = vpop.f32.mrb[0].mxu0
        %v8678 = vadd.f32 %v4486, %v8677
        %v8679 = vpop.f32.mrb[0].mxu0
        %8680 = vmatprep.mubr.bf16.mxu0 %v3788
        %8681 = vmatmul.mubr.bf16.gmra.mrb[0].mxu0 %v3787
        %v8682 = vpop.f32.mrb[0].mxu0
        %v8683 = vadd.f32 %v4486, %v8682
        %v8684 = vpop.f32.mrb[0].mxu0
        %v8685 = vpop.f32.mrb[0].mxu0
        %v8686 = vadd.f32 %v4486, %v8685
        %v8687 = vpop.f32.mrb[0].mxu0
        %8688 = vdwg.mxu0
        %8689 = vmatprep.subr.bf16.mxu0 0
        %8690 = vmatpush1.bf16.msra.mxu0 %v7703
        %8691 = vmatprep.subr.bf16.mxu0 0
        %8692 = vmatpush1.bf16.msra.mxu0 %v7706
        %8693 = vmatprep.subr.bf16.mxu0 0
        %8694 = vmatpush1.bf16.msra.mxu0 %v7709
        %8695 = vmatprep.subr.bf16.mxu0 0
        %8696 = vmatpush1.bf16.msra.mxu0 %v7712
        %8697 = vmatprep.subr.bf16.mxu0 0
        %8698 = vmatpush1.bf16.msra.mxu0 %v7715
        %8699 = vmatprep.subr.bf16.mxu0 0
        %8700 = vmatpush1.bf16.msra.mxu0 %v7718
        %8701 = vmatprep.subr.bf16.mxu0 0
        %8702 = vmatpush1.bf16.msra.mxu0 %v7721
        %8703 = vmatprep.subr.bf16.mxu0 0
        %8704 = vmatpush1.bf16.msra.mxu0 %v7724
        %8705 = vmatprep.subr.bf16.mxu0 0
        %8706 = vmatpush1.bf16.msra.mxu0 %v7727
        %8707 = vmatprep.subr.bf16.mxu0 0
        %8708 = vmatpush1.bf16.msra.mxu0 %v7730
        %8709 = vmatprep.subr.bf16.mxu0 0
        %8710 = vmatpush1.bf16.msra.mxu0 %v7733
        %8711 = vmatprep.subr.bf16.mxu0 0
        %8712 = vmatpush1.bf16.msra.mxu0 %v7736
        %8713 = vmatprep.subr.bf16.mxu0 0
        %8714 = vmatpush1.bf16.msra.mxu0 %v7739
        %8715 = vmatprep.subr.bf16.mxu0 0
        %8716 = vmatpush1.bf16.msra.mxu0 %v7742
        %8717 = vmatprep.subr.bf16.mxu0 0
        %8718 = vmatpush1.bf16.msra.mxu0 %v7745
        %8719 = vmatprep.subr.bf16.mxu0 0
        %8720 = vmatpush1.bf16.msra.mxu0 %v7748
        %8721 = vmatprep.mubr.bf16.mxu0 %v3921
        %8722 = vmatmul.mubr.bf16.gmra.mrb[0].mxu0 %v3771
        %v8723 = vpop.f32.mrb[0].mxu0
        %v8724 = vadd.f32 %v8635, %v8723
        %v8725 = vpop.f32.mrb[0].mxu0
        %v8726 = vpop.f32.mrb[0].mxu0
        %v8727 = vadd.f32 %v8638, %v8726
        %v8728 = vpop.f32.mrb[0].mxu0
        %8729 = vmatprep.mubr.bf16.mxu0 %v3953
        %8730 = vmatmul.mubr.bf16.gmra.mrb[0].mxu0 %v3774
        %v8731 = vpop.f32.mrb[0].mxu0
        %v8732 = vadd.f32 %v8643, %v8731
        %v8733 = vpop.f32.mrb[0].mxu0
        %v8734 = vpop.f32.mrb[0].mxu0
        %v8735 = vadd.f32 %v8646, %v8734
        %v8736 = vpop.f32.mrb[0].mxu0
        %8737 = vmatprep.mubr.bf16.mxu0 %v3977
        %8738 = vmatmul.mubr.bf16.gmra.mrb[0].mxu0 %v3777
        %v8739 = vpop.f32.mrb[0].mxu0
        %v8740 = vadd.f32 %v8651, %v8739
        %v8741 = vpop.f32.mrb[0].mxu0
        %v8742 = vpop.f32.mrb[0].mxu0
        %v8743 = vadd.f32 %v8654, %v8742
        %v8744 = vpop.f32.mrb[0].mxu0
        %8745 = vmatprep.mubr.bf16.mxu0 %v4001
        %8746 = vmatmul.mubr.bf16.gmra.mrb[0].mxu0 %v3780
        %v8747 = vpop.f32.mrb[0].mxu0
        %v8748 = vadd.f32 %v8659, %v8747
        %v8749 = vpop.f32.mrb[0].mxu0
        %v8750 = vpop.f32.mrb[0].mxu0
        %v8751 = vadd.f32 %v8662, %v8750
        %v8752 = vpop.f32.mrb[0].mxu0
        %8753 = vmatprep.mubr.bf16.mxu0 %v4025
        %8754 = vmatmul.mubr.bf16.gmra.mrb[0].mxu0 %v3783
        %v8755 = vpop.f32.mrb[0].mxu0
        %v8756 = vadd.f32 %v8667, %v8755
        %v8757 = vpop.f32.mrb[0].mxu0
        %v8758 = vpop.f32.mrb[0].mxu0
        %v8759 = vadd.f32 %v8670, %v8758
        %v8760 = vpop.f32.mrb[0].mxu0
        %8761 = vmatprep.mubr.bf16.mxu0 %v4049
        %8762 = vmatmul.mubr.bf16.gmra.mrb[0].mxu0 %v3786
        %v8763 = vpop.f32.mrb[0].mxu0
        %v8764 = vadd.f32 %v8675, %v8763
        %v8765 = vpop.f32.mrb[0].mxu0
        %v8766 = vpop.f32.mrb[0].mxu0
        %v8767 = vadd.f32 %v8678, %v8766
        %v8768 = vpop.f32.mrb[0].mxu0
        %8769 = vmatprep.mubr.bf16.mxu0 %v4073
        %8770 = vmatmul.mubr.bf16.gmra.mrb[0].mxu0 %v3789
        %v8771 = vpop.f32.mrb[0].mxu0
        %v8772 = vadd.f32 %v8683, %v8771
        %v8773 = vpop.f32.mrb[0].mxu0
        %v8774 = vpop.f32.mrb[0].mxu0
        %v8775 = vadd.f32 %v8686, %v8774
        %v8776 = vpop.f32.mrb[0].mxu0
        %8777 = vdwg.mxu0
        %8778 = vmatprep.subr.bf16.mxu0 0
        %8779 = vmatpush1.bf16.msra.mxu0 %v7751
        %8780 = vmatprep.subr.bf16.mxu0 0
        %8781 = vmatpush1.bf16.msra.mxu0 %v7754
        %8782 = vmatprep.subr.bf16.mxu0 0
        %8783 = vmatpush1.bf16.msra.mxu0 %v7757
        %8784 = vmatprep.subr.bf16.mxu0 0
        %8785 = vmatpush1.bf16.msra.mxu0 %v7760
        %8786 = vmatprep.subr.bf16.mxu0 0
        %8787 = vmatpush1.bf16.msra.mxu0 %v7763
        %8788 = vmatprep.subr.bf16.mxu0 0
        %8789 = vmatpush1.bf16.msra.mxu0 %v7766
        %8790 = vmatprep.subr.bf16.mxu0 0
        %8791 = vmatpush1.bf16.msra.mxu0 %v7769
        %8792 = vmatprep.subr.bf16.mxu0 0
        %8793 = vmatpush1.bf16.msra.mxu0 %v7772
        %8794 = vmatprep.subr.bf16.mxu0 0
        %8795 = vmatpush1.bf16.msra.mxu0 %v7775
        %8796 = vmatprep.subr.bf16.mxu0 0
        %8797 = vmatpush1.bf16.msra.mxu0 %v7778
        %8798 = vmatprep.subr.bf16.mxu0 0
        %8799 = vmatpush1.bf16.msra.mxu0 %v7781
        %8800 = vmatprep.subr.bf16.mxu0 0
        %8801 = vmatpush1.bf16.msra.mxu0 %v7784
        %8802 = vmatprep.subr.bf16.mxu0 0
        %8803 = vmatpush1.bf16.msra.mxu0 %v7787
        %8804 = vmatprep.subr.bf16.mxu0 0
        %8805 = vmatpush1.bf16.msra.mxu0 %v7790
        %8806 = vmatprep.subr.bf16.mxu0 0
        %8807 = vmatpush1.bf16.msra.mxu0 %v7793
        %8808 = vmatprep.subr.bf16.mxu0 0
        %8809 = vmatpush1.bf16.msra.mxu0 %v7796
        %8810 = vmatprep.mubr.bf16.mxu0 %v3945
        %8811 = vmatmul.mubr.bf16.gmra.mrb[0].mxu0 %v3933
        %v8812 = vpop.f32.mrb[0].mxu0
        %v8813 = vadd.f32 %v8724, %v8812
        %v8814 = vpop.f32.mrb[0].mxu0
        %v8815 = vpop.f32.mrb[0].mxu0
        %v8816 = vadd.f32 %v8727, %v8815
        %v8817 = vpop.f32.mrb[0].mxu0
        %8818 = vmatprep.mubr.bf16.mxu0 %v3969
        %8819 = vmatmul.mubr.bf16.gmra.mrb[0].mxu0 %v3961
        %v8820 = vpop.f32.mrb[0].mxu0
        %v8821 = vadd.f32 %v8732, %v8820
        %v8822 = vpop.f32.mrb[0].mxu0
        %v8823 = vpop.f32.mrb[0].mxu0
        %v8824 = vadd.f32 %v8735, %v8823
        %v8825 = vpop.f32.mrb[0].mxu0
        %8826 = vmatprep.mubr.bf16.mxu0 %v3993
        %8827 = vmatmul.mubr.bf16.gmra.mrb[0].mxu0 %v3985
        %v8828 = vpop.f32.mrb[0].mxu0
        %v8829 = vadd.f32 %v8740, %v8828
        %v8830 = vpop.f32.mrb[0].mxu0
        %v8831 = vpop.f32.mrb[0].mxu0
        %v8832 = vadd.f32 %v8743, %v8831
        %v8833 = vpop.f32.mrb[0].mxu0
        %8834 = vmatprep.mubr.bf16.mxu0 %v4017
        %8835 = vmatmul.mubr.bf16.gmra.mrb[0].mxu0 %v4009
        %v8836 = vpop.f32.mrb[0].mxu0
        %v8837 = vadd.f32 %v8748, %v8836
        %v8838 = vpop.f32.mrb[0].mxu0
        %v8839 = vpop.f32.mrb[0].mxu0
        %v8840 = vadd.f32 %v8751, %v8839
        %v8841 = vpop.f32.mrb[0].mxu0
        %8842 = vmatprep.mubr.bf16.mxu0 %v4041
        %8843 = vmatmul.mubr.bf16.gmra.mrb[0].mxu0 %v4033
        %v8844 = vpop.f32.mrb[0].mxu0
        %v8845 = vadd.f32 %v8756, %v8844
        %v8846 = vpop.f32.mrb[0].mxu0
        %v8847 = vpop.f32.mrb[0].mxu0
        %v8848 = vadd.f32 %v8759, %v8847
        %v8849 = vpop.f32.mrb[0].mxu0
        %8850 = vmatprep.mubr.bf16.mxu0 %v4065
        %8851 = vmatmul.mubr.bf16.gmra.mrb[0].mxu0 %v4057
        %v8852 = vpop.f32.mrb[0].mxu0
        %v8853 = vadd.f32 %v8764, %v8852
        %v8854 = vpop.f32.mrb[0].mxu0
        %v8855 = vpop.f32.mrb[0].mxu0
        %v8856 = vadd.f32 %v8767, %v8855
        %v8857 = vpop.f32.mrb[0].mxu0
        %8858 = vmatprep.mubr.bf16.mxu0 %v4089
        %8859 = vmatmul.mubr.bf16.gmra.mrb[0].mxu0 %v4081
        %v8860 = vpop.f32.mrb[0].mxu0
        %v8861 = vadd.f32 %v8772, %v8860
        %v8862 = vpop.f32.mrb[0].mxu0
        %v8863 = vpop.f32.mrb[0].mxu0
        %v8864 = vadd.f32 %v8775, %v8863
        %v8865 = vpop.f32.mrb[0].mxu0
        %8866 = vdwg.mxu0
        %8867 = vmatprep.subr.bf16.mxu0 0
        %8868 = vmatpush1.bf16.msra.mxu0 %v7799
        %8869 = vmatprep.subr.bf16.mxu0 0
        %8870 = vmatpush1.bf16.msra.mxu0 %v7802
        %8871 = vmatprep.subr.bf16.mxu0 0
        %8872 = vmatpush1.bf16.msra.mxu0 %v7805
        %8873 = vmatprep.subr.bf16.mxu0 0
        %8874 = vmatpush1.bf16.msra.mxu0 %v7808
        %8875 = vmatprep.subr.bf16.mxu0 0
        %8876 = vmatpush1.bf16.msra.mxu0 %v7811
        %8877 = vmatprep.subr.bf16.mxu0 0
        %8878 = vmatpush1.bf16.msra.mxu0 %v7814
        %8879 = vmatprep.subr.bf16.mxu0 0
        %8880 = vmatpush1.bf16.msra.mxu0 %v7817
        %8881 = vmatprep.subr.bf16.mxu0 0
        %8882 = vmatpush1.bf16.msra.mxu0 %v7820
        %8883 = vmatprep.subr.bf16.mxu0 0
        %8884 = vmatpush1.bf16.msra.mxu0 %v7823
        %8885 = vmatprep.subr.bf16.mxu0 0
        %8886 = vmatpush1.bf16.msra.mxu0 %v7826
        %8887 = vmatprep.subr.bf16.mxu0 0
        %8888 = vmatpush1.bf16.msra.mxu0 %v7829
        %8889 = vmatprep.subr.bf16.mxu0 0
        %8890 = vmatpush1.bf16.msra.mxu0 %v7832
        %8891 = vmatprep.subr.bf16.mxu0 0
        %8892 = vmatpush1.bf16.msra.mxu0 %v7835
        %8893 = vmatprep.subr.bf16.mxu0 0
        %8894 = vmatpush1.bf16.msra.mxu0 %v7838
        %8895 = vmatprep.subr.bf16.mxu0 0
        %8896 = vmatpush1.bf16.msra.mxu0 %v7841
        %8897 = vmatprep.subr.bf16.mxu0 0
        %8898 = vmatpush1.bf16.msra.mxu0 %v7844
        %8899 = vmatprep.mubr.bf16.mxu0 %v4124
        %8900 = vmatmul.mubr.bf16.gmra.mrb[0].mxu0 %v4121
        %v8901 = vpop.f32.mrb[0].mxu0
        %v8902 = vadd.f32 %v8813, %v8901
        %v8903 = vpop.f32.mrb[0].mxu0
        %v8904 = vpop.f32.mrb[0].mxu0
        %v8905 = vadd.f32 %v8816, %v8904
        %v8906 = vpop.f32.mrb[0].mxu0
        %8907 = vmatprep.mubr.bf16.mxu0 %v4131
        %8908 = vmatmul.mubr.bf16.gmra.mrb[0].mxu0 %v4129
        %v8909 = vpop.f32.mrb[0].mxu0
        %v8910 = vadd.f32 %v8821, %v8909
        %v8911 = vpop.f32.mrb[0].mxu0
        %v8912 = vpop.f32.mrb[0].mxu0
        %v8913 = vadd.f32 %v8824, %v8912
        %v8914 = vpop.f32.mrb[0].mxu0
        %8915 = vmatprep.mubr.bf16.mxu0 %v4137
        %8916 = vmatmul.mubr.bf16.gmra.mrb[0].mxu0 %v4135
        %v8917 = vpop.f32.mrb[0].mxu0
        %v8918 = vadd.f32 %v8829, %v8917
        %v8919 = vpop.f32.mrb[0].mxu0
        %v8920 = vpop.f32.mrb[0].mxu0
        %v8921 = vadd.f32 %v8832, %v8920
        %v8922 = vpop.f32.mrb[0].mxu0
        %8923 = vmatprep.mubr.bf16.mxu0 %v4143
        %8924 = vmatmul.mubr.bf16.gmra.mrb[0].mxu0 %v4141
        %v8925 = vpop.f32.mrb[0].mxu0
        %v8926 = vadd.f32 %v8837, %v8925
        %v8927 = vpop.f32.mrb[0].mxu0
        %v8928 = vpop.f32.mrb[0].mxu0
        %v8929 = vadd.f32 %v8840, %v8928
        %v8930 = vpop.f32.mrb[0].mxu0
        %8931 = vmatprep.mubr.bf16.mxu0 %v4149
        %8932 = vmatmul.mubr.bf16.gmra.mrb[0].mxu0 %v4147
        %v8933 = vpop.f32.mrb[0].mxu0
        %v8934 = vadd.f32 %v8845, %v8933
        %v8935 = vpop.f32.mrb[0].mxu0
        %v8936 = vpop.f32.mrb[0].mxu0
        %v8937 = vadd.f32 %v8848, %v8936
        %v8938 = vpop.f32.mrb[0].mxu0
        %8939 = vmatprep.mubr.bf16.mxu0 %v4155
        %8940 = vmatmul.mubr.bf16.gmra.mrb[0].mxu0 %v4153
        %v8941 = vpop.f32.mrb[0].mxu0
        %v8942 = vadd.f32 %v8853, %v8941
        %v8943 = vpop.f32.mrb[0].mxu0
        %v8944 = vpop.f32.mrb[0].mxu0
        %v8945 = vadd.f32 %v8856, %v8944
        %v8946 = vpop.f32.mrb[0].mxu0
        %8947 = vmatprep.mubr.bf16.mxu0 %v4161
        %8948 = vmatmul.mubr.bf16.gmra.mrb[0].mxu0 %v4159
        %v8949 = vpop.f32.mrb[0].mxu0
        %v8950 = vadd.f32 %v8861, %v8949
        %v8951 = vpop.f32.mrb[0].mxu0
        %v8952 = vpop.f32.mrb[0].mxu0
        %v8953 = vadd.f32 %v8864, %v8952
        %v8954 = vpop.f32.mrb[0].mxu0
        %8955 = vdwg.mxu0
        %8956 = vmatprep.subr.bf16.mxu0 0
        %8957 = vmatpush1.bf16.msra.mxu0 %v7847
        %8958 = vmatprep.subr.bf16.mxu0 0
        %8959 = vmatpush1.bf16.msra.mxu0 %v7850
        %8960 = vmatprep.subr.bf16.mxu0 0
        %8961 = vmatpush1.bf16.msra.mxu0 %v7853
        %8962 = vmatprep.subr.bf16.mxu0 0
        %8963 = vmatpush1.bf16.msra.mxu0 %v7856
        %8964 = vmatprep.subr.bf16.mxu0 0
        %8965 = vmatpush1.bf16.msra.mxu0 %v7859
        %8966 = vmatprep.subr.bf16.mxu0 0
        %8967 = vmatpush1.bf16.msra.mxu0 %v7862
        %8968 = vmatprep.subr.bf16.mxu0 0
        %8969 = vmatpush1.bf16.msra.mxu0 %v7865
        %8970 = vmatprep.subr.bf16.mxu0 0
        %8971 = vmatpush1.bf16.msra.mxu0 %v7868
        %8972 = vmatprep.subr.bf16.mxu0 0
        %8973 = vmatpush1.bf16.msra.mxu0 0
        %8974 = vmatprep.subr.bf16.mxu0 0
        %8975 = vmatpush1.bf16.msra.mxu0 0
        %8976 = vmatprep.subr.bf16.mxu0 0
        %8977 = vmatpush1.bf16.msra.mxu0 0
        %8978 = vmatprep.subr.bf16.mxu0 0
        %8979 = vmatpush1.bf16.msra.mxu0 0
        %8980 = vmatprep.subr.bf16.mxu0 0
        %8981 = vmatpush1.bf16.msra.mxu0 0
        %8982 = vmatprep.subr.bf16.mxu0 0
        %8983 = vmatpush1.bf16.msra.mxu0 0
        %8984 = vmatprep.subr.bf16.mxu0 0
        %8985 = vmatpush1.bf16.msra.mxu0 0
        %8986 = vmatprep.subr.bf16.mxu0 0
        %8987 = vmatpush1.bf16.msra.mxu0 0
        %8988 = vmatprep.mubr.bf16.mxu0 0
        %8989 = vmatmul.mubr.bf16.gmra.mrb[0].mxu0 %v4127
        %v8990 = vpop.f32.mrb[0].mxu0
        %v8991 = vadd.f32 %v8902, %v8990
        %v8992 = vpop.f32.mrb[0].mxu0
        %v8993 = vpop.f32.mrb[0].mxu0
        %v8994 = vadd.f32 %v8905, %v8993
        %v8995 = vpop.f32.mrb[0].mxu0
        %8996 = vmatprep.mubr.bf16.mxu0 0
        %8997 = vmatmul.mubr.bf16.gmra.mrb[0].mxu0 %v4133
        %v8998 = vpop.f32.mrb[0].mxu0
        %v8999 = vadd.f32 %v8910, %v8998
        %v9000 = vpop.f32.mrb[0].mxu0
        %v9001 = vpop.f32.mrb[0].mxu0
        %v9002 = vadd.f32 %v8913, %v9001
        %v9003 = vpop.f32.mrb[0].mxu0
        %9004 = vmatprep.mubr.bf16.mxu0 0
        %9005 = vmatmul.mubr.bf16.gmra.mrb[0].mxu0 %v4139
        %v9006 = vpop.f32.mrb[0].mxu0
        %v9007 = vadd.f32 %v8918, %v9006
        %v9008 = vpop.f32.mrb[0].mxu0
        %v9009 = vpop.f32.mrb[0].mxu0
        %v9010 = vadd.f32 %v8921, %v9009
        %v9011 = vpop.f32.mrb[0].mxu0
        %9012 = vmatprep.mubr.bf16.mxu0 0
        %9013 = vmatmul.mubr.bf16.gmra.mrb[0].mxu0 %v4145
        %v9014 = vpop.f32.mrb[0].mxu0
        %v9015 = vadd.f32 %v8926, %v9014
        %v9016 = vpop.f32.mrb[0].mxu0
        %v9017 = vpop.f32.mrb[0].mxu0
        %v9018 = vadd.f32 %v8929, %v9017
        %v9019 = vpop.f32.mrb[0].mxu0
        %9020 = vmatprep.mubr.bf16.mxu0 0
        %9021 = vmatmul.mubr.bf16.gmra.mrb[0].mxu0 %v4151
        %v9022 = vpop.f32.mrb[0].mxu0
        %v9023 = vadd.f32 %v8934, %v9022
        %v9024 = vpop.f32.mrb[0].mxu0
        %v9025 = vpop.f32.mrb[0].mxu0
        %v9026 = vadd.f32 %v8937, %v9025
        %v9027 = vpop.f32.mrb[0].mxu0
        %9028 = vmatprep.mubr.bf16.mxu0 0
        %9029 = vmatmul.mubr.bf16.gmra.mrb[0].mxu0 %v4157
        %v9030 = vpop.f32.mrb[0].mxu0
        %v9031 = vadd.f32 %v8942, %v9030
        %v9032 = vpop.f32.mrb[0].mxu0
        %v9033 = vpop.f32.mrb[0].mxu0
        %v9034 = vadd.f32 %v8945, %v9033
        %v9035 = vpop.f32.mrb[0].mxu0
        %9036 = vmatprep.mubr.bf16.mxu0 0
        %9037 = vmatmul.mubr.bf16.gmra.mrb[0].mxu0 %v4163
        %v9038 = vpop.f32.mrb[0].mxu0
        %v9039 = vadd.f32 %v8950, %v9038
        %v9040 = vpop.f32.mrb[0].mxu0
        %v9041 = vpop.f32.mrb[0].mxu0
        %v9042 = vadd.f32 %v8953, %v9041
        %v9043 = vpop.f32.mrb[0].mxu0
        %9044 = vdwg.mxu0
        %v9045 = vmax.f32 %v8532, 0.0
        %v9046 = vmax.f32 %v8534, 0.0
        %v9047 = vmax.f32 %v8991, 0.0
        %v9048 = vmax.f32 %v8536, 0.0
        %v9049 = vmax.f32 %v8538, 0.0
        %v9050 = vmax.f32 %v8994, 0.0
        %v9051 = vmax.f32 %v8542, 0.0
        %v9052 = vmax.f32 %v8544, 0.0
        %v9053 = vmax.f32 %v8999, 0.0
        %v9054 = vmax.f32 %v8546, 0.0
        %v9055 = vmax.f32 %v8548, 0.0
        %v9056 = vmax.f32 %v9002, 0.0
        %v9057 = vmax.f32 %v8552, 0.0
        %v9058 = vmax.f32 %v8554, 0.0
        %v9059 = vmax.f32 %v9007, 0.0
        %v9060 = vmax.f32 %v8556, 0.0
        %v9061 = vmax.f32 %v8558, 0.0
        %v9062 = vmax.f32 %v9010, 0.0
        %v9063 = vmax.f32 %v8562, 0.0
        %v9064 = vmax.f32 %v8564, 0.0
        %v9065 = vmax.f32 %v9015, 0.0
        %v9066 = vmax.f32 %v8566, 0.0
        %v9067 = vmax.f32 %v8568, 0.0
        %v9068 = vmax.f32 %v9018, 0.0
        %v9069 = vmax.f32 %v8572, 0.0
        %v9070 = vmax.f32 %v8574, 0.0
        %v9071 = vmax.f32 %v9023, 0.0
        %v9072 = vmax.f32 %v8576, 0.0
        %v9073 = vmax.f32 %v8578, 0.0
        %v9074 = vmax.f32 %v9026, 0.0
        %v9075 = vmax.f32 %v8582, 0.0
        %v9076 = vmax.f32 %v8584, 0.0
        %v9077 = vmax.f32 %v9031, 0.0
        %v9078 = vmax.f32 %v8586, 0.0
        %v9079 = vmax.f32 %v8588, 0.0
        %v9080 = vmax.f32 %v9034, 0.0
        %v9081 = vmax.f32 %v8592, 0.0
        %v9082 = vmax.f32 %v8594, 0.0
        %v9083 = vmax.f32 %v9039, 0.0
        %v9084 = vmax.f32 %v8596, 0.0
        %v9085 = vmax.f32 %v8598, 0.0
        %v9086 = vmax.f32 %v9042, 0.0
        %v9087 = vmax.f32 %v6602, %v9045
        %v9088 = vmax.f32 %v6603, %v9046
        %v9089 = vmax.f32 %v6604, %v9047
        %v9090 = vmax.f32 %v6605, %v9048
        %v9091 = vmax.f32 %v6606, %v9049
        %v9092 = vmax.f32 %v6607, %v9050
        %v9093 = vmax.f32 %v6608, %v9051
        %v9094 = vmax.f32 %v6609, %v9052
        %v9095 = vmax.f32 %v6610, %v9053
        %v9096 = vmax.f32 %v6611, %v9054
        %v9097 = vmax.f32 %v6612, %v9055
        %v9098 = vmax.f32 %v6613, %v9056
        %v9099 = vmax.f32 %v6614, %v9057
        %v9100 = vmax.f32 %v6615, %v9058
        %v9101 = vmax.f32 %v6616, %v9059
        %v9102 = vmax.f32 %v6617, %v9060
        %v9103 = vmax.f32 %v6618, %v9061
        %v9104 = vmax.f32 %v6619, %v9062
        %v9105 = vmax.f32 %v6620, %v9063
        %v9106 = vmax.f32 %v6621, %v9064
        %v9107 = vmax.f32 %v6622, %v9065
        %v9108 = vmax.f32 %v6623, %v9066
        %v9109 = vmax.f32 %v6624, %v9067
        %v9110 = vmax.f32 %v6625, %v9068
        %v9111 = vmax.f32 %v6626, %v9069
        %v9112 = vmax.f32 %v6627, %v9070
        %v9113 = vmax.f32 %v6628, %v9071
        %v9114 = vmax.f32 %v6629, %v9072
        %v9115 = vmax.f32 %v6630, %v9073
        %v9116 = vmax.f32 %v6631, %v9074
        %v9117 = vmax.f32 %v6632, %v9075
        %v9118 = vmax.f32 %v6633, %v9076
        %v9119 = vmax.f32 %v6634, %v9077
        %v9120 = vmax.f32 %v6635, %v9078
        %v9121 = vmax.f32 %v6636, %v9079
        %v9122 = vmax.f32 %v6637, %v9080
        %v9123 = vmax.f32 %v6638, %v9081
        %v9124 = vmax.f32 %v6639, %v9082
        %v9125 = vmax.f32 %v6640, %v9083
        %v9126 = vmax.f32 %v6641, %v9084
        %v9127 = vmax.f32 %v6642, %v9085
        %v9128 = vmax.f32 %v6643, %v9086
        %v9129 = vpack.c.bf16 %v9090, %v9087
        %v9130 = vpack.c.bf16 %v9091, %v9088
        %v9131 = vpack.c.bf16 %v9092, %v9089
        %v9132 = vpack.c.bf16 %v9096, %v9093
        %v9133 = vpack.c.bf16 %v9097, %v9094
        %v9134 = vpack.c.bf16 %v9098, %v9095
        %v9135 = vpack.c.bf16 %v9102, %v9099
        %v9136 = vpack.c.bf16 %v9103, %v9100
        %v9137 = vpack.c.bf16 %v9104, %v9101
        %v9138 = vpack.c.bf16 %v9108, %v9105
        %v9139 = vpack.c.bf16 %v9109, %v9106
        %v9140 = vpack.c.bf16 %v9110, %v9107
        %v9141 = vpack.c.bf16 %v9114, %v9111
        %v9142 = vpack.c.bf16 %v9115, %v9112
        %v9143 = vpack.c.bf16 %v9116, %v9113
        %v9144 = vpack.c.bf16 %v9120, %v9117
        %v9145 = vpack.c.bf16 %v9121, %v9118
        %v9146 = vpack.c.bf16 %v9122, %v9119
        %v9147 = vpack.c.bf16 %v9126, %v9123
        %v9148 = vpack.c.bf16 %v9127, %v9124
        %v9149 = vpack.c.bf16 %v9128, %v9125
        %v9150 = vld [vmem:[%s7] sm:$0xf]
        %v9151 = vld [vmem:[%s7 + $0x4] sm:$0xf]
        %v9152 = vld [vmem:[%s7 + $0x8] sm:$0xf]
        %v9153 = vld [vmem:[%s7 + $0xc] sm:$0xf]
        %v9154 = vld [vmem:[%s7 + $0x10] sm:$0xf]
        %v9160 = vunpack.c.l.b16 %v9150
        %v9161 = vunpack.c.l.b16 %v9151
        %v9162 = vunpack.c.l.b16 %v9152
        %v9163 = vunpack.c.l.b16 %v9153
        %v9164 = vunpack.c.l.b16 %v9154
        %v9165 = vpack.c.b16 %v9161, %v9160
        %v9166 = vpack.c.b16 %v9163, %v9162
        %v9167 = vpack.c.b16 %v9164, %v9164
        %vm9168 = vcmask 916480
        %v9170 = vsel %vm9168, %v9165, 0
        %v9173 = vsel %vm9168, %v9166, 0
        %v9176 = vsel %vm9168, %v9167, 0
        %9178 = vmatprep.subr.bf16.mxu0 %v9130
        %9179 = vmatpush1.bf16.msra.mxu0 %v9129
        %9180 = vmatprep.subr.bf16.mxu0 %v9133
        %9181 = vmatpush1.bf16.msra.mxu0 %v9132
        %9182 = vmatprep.subr.bf16.mxu0 %v9136
        %9183 = vmatpush1.bf16.msra.mxu0 %v9135
        %9184 = vmatprep.subr.bf16.mxu0 %v9139
        %9185 = vmatpush1.bf16.msra.mxu0 %v9138
        %9186 = vmatprep.subr.bf16.mxu0 %v9142
        %9187 = vmatpush1.bf16.msra.mxu0 %v9141
        %9188 = vmatprep.subr.bf16.mxu0 %v9145
        %9189 = vmatpush1.bf16.msra.mxu0 %v9144
        %9190 = vmatprep.subr.bf16.mxu0 %v9148
        %9191 = vmatpush1.bf16.msra.mxu0 %v9147
        %9192 = vmatprep.subr.bf16.mxu0 0
        %9193 = vmatpush1.bf16.msra.mxu0 0
        %9194 = vmatprep.subr.bf16.mxu0 0
        %9195 = vmatpush1.bf16.msra.mxu0 0
        %9196 = vmatprep.subr.bf16.mxu0 0
        %9197 = vmatpush1.bf16.msra.mxu0 0
        %9198 = vmatprep.subr.bf16.mxu0 0
        %9199 = vmatpush1.bf16.msra.mxu0 0
        %9200 = vmatprep.subr.bf16.mxu0 0
        %9201 = vmatpush1.bf16.msra.mxu0 0
        %9202 = vmatprep.subr.bf16.mxu0 0
        %9203 = vmatpush1.bf16.msra.mxu0 0
        %9204 = vmatprep.subr.bf16.mxu0 0
        %9205 = vmatpush1.bf16.msra.mxu0 0
        %9206 = vmatprep.subr.bf16.mxu0 0
        %9207 = vmatpush1.bf16.msra.mxu0 0
        %9208 = vmatprep.subr.bf16.mxu0 0
        %9209 = vmatpush1.bf16.msra.mxu0 0
        %9210 = vmatprep.mubr.bf16.mxu0 0
        %9211 = vmatmul.mubr.bf16.gmra.mrb[0].mxu0 %v9170
        %v9212 = vpop.f32.mrb[0].mxu0
        %v9213 = vadd.f32 0.0, %v9212
        %v9214 = vpop.f32.mrb[0].mxu0
        %v9215 = vadd.f32 0.0, %v9214
        %v9216 = vpop.f32.mrb[0].mxu0
        %v9217 = vadd.f32 0.0, %v9216
        %v9218 = vpop.f32.mrb[0].mxu0
        %v9219 = vadd.f32 0.0, %v9218
        %9220 = vmatprep.mubr.bf16.mxu0 0
        %9221 = vmatmul.mubr.bf16.gmra.mrb[0].mxu0 %v9173
        %v9222 = vpop.f32.mrb[0].mxu0
        %v9223 = vadd.f32 0.0, %v9222
        %v9224 = vpop.f32.mrb[0].mxu0
        %v9225 = vadd.f32 0.0, %v9224
        %v9226 = vpop.f32.mrb[0].mxu0
        %v9227 = vadd.f32 0.0, %v9226
        %v9228 = vpop.f32.mrb[0].mxu0
        %v9229 = vadd.f32 0.0, %v9228
        %9230 = vmatprep.mubr.bf16.mxu0 0
        %9231 = vmatmul.mubr.bf16.gmra.mrb[0].mxu0 %v9176
        %v9232 = vpop.f32.mrb[0].mxu0
        %v9233 = vadd.f32 0.0, %v9232
        %v9234 = vpop.f32.mrb[0].mxu0
        %v9235 = vadd.f32 0.0, %v9234
        %v9236 = vpop.f32.mrb[0].mxu0
        %v9237 = vpop.f32.mrb[0].mxu0
        %9238 = vdwg.mxu0
        %9239 = vmatprep.subr.bf16.mxu0 0
        %9240 = vmatpush1.bf16.msra.mxu0 %v9131
        %9241 = vmatprep.subr.bf16.mxu0 0
        %9242 = vmatpush1.bf16.msra.mxu0 %v9134
        %9243 = vmatprep.subr.bf16.mxu0 0
        %9244 = vmatpush1.bf16.msra.mxu0 %v9137
        %9245 = vmatprep.subr.bf16.mxu0 0
        %9246 = vmatpush1.bf16.msra.mxu0 %v9140
        %9247 = vmatprep.subr.bf16.mxu0 0
        %9248 = vmatpush1.bf16.msra.mxu0 %v9143
        %9249 = vmatprep.subr.bf16.mxu0 0
        %9250 = vmatpush1.bf16.msra.mxu0 %v9146
        %9251 = vmatprep.subr.bf16.mxu0 0
        %9252 = vmatpush1.bf16.msra.mxu0 %v9149
        %9253 = vmatprep.subr.bf16.mxu0 0
        %9254 = vmatpush1.bf16.msra.mxu0 0
        %9255 = vmatprep.subr.bf16.mxu0 0
        %9256 = vmatpush1.bf16.msra.mxu0 0
        %9257 = vmatprep.subr.bf16.mxu0 0
        %9258 = vmatpush1.bf16.msra.mxu0 0
        %9259 = vmatprep.subr.bf16.mxu0 0
        %9260 = vmatpush1.bf16.msra.mxu0 0
        %9261 = vmatprep.subr.bf16.mxu0 0
        %9262 = vmatpush1.bf16.msra.mxu0 0
        %9263 = vmatprep.subr.bf16.mxu0 0
        %9264 = vmatpush1.bf16.msra.mxu0 0
        %9265 = vmatprep.subr.bf16.mxu0 0
        %9266 = vmatpush1.bf16.msra.mxu0 0
        %9267 = vmatprep.subr.bf16.mxu0 0
        %9268 = vmatpush1.bf16.msra.mxu0 0
        %9269 = vmatprep.subr.bf16.mxu0 0
        %9270 = vmatpush1.bf16.msra.mxu0 0
        %9271 = vmatprep.mubr.bf16.mxu0 0
        %9272 = vmatmul.mubr.bf16.gmra.mrb[0].mxu0 %v9170
        %v9273 = vpop.f32.mrb[0].mxu0
        %v9274 = vadd.f32 0.0, %v9273
        %v9275 = vpop.f32.mrb[0].mxu0
        %v9276 = vpop.f32.mrb[0].mxu0
        %v9277 = vadd.f32 0.0, %v9276
        %v9278 = vpop.f32.mrb[0].mxu0
        %9279 = vmatprep.mubr.bf16.mxu0 0
        %9280 = vmatmul.mubr.bf16.gmra.mrb[0].mxu0 %v9173
        %v9281 = vpop.f32.mrb[0].mxu0
        %v9282 = vadd.f32 0.0, %v9281
        %v9283 = vpop.f32.mrb[0].mxu0
        %v9284 = vpop.f32.mrb[0].mxu0
        %v9285 = vadd.f32 0.0, %v9284
        %v9286 = vpop.f32.mrb[0].mxu0
        %9287 = vmatprep.mubr.bf16.mxu0 0
        %9288 = vmatmul.mubr.bf16.gmra.mrb[0].mxu0 %v9176
        %v9289 = vpop.f32.mrb[0].mxu0
        %v9290 = vadd.f32 0.0, %v9289
        %v9291 = vpop.f32.mrb[0].mxu0
        %v9292 = vpop.f32.mrb[0].mxu0
        %v9293 = vpop.f32.mrb[0].mxu0
        %9294 = vdwg.mxu0
        %v9295 = vld [vmem:[%s8] sm:$0xf]
        %v9296 = vld [vmem:[%s8 + $0x4] sm:$0xf]
        %v9297 = vld [vmem:[%s8 + $0x8] sm:$0xf]
        %v9298 = vld [vmem:[%s8 + $0xc] sm:$0xf]
        %v9299 = vld [vmem:[%s8 + $0x10] sm:$0xf]
        %v9305 = vunpack.c.l.b16 %v9295
        %v9306 = vunpack.c.l.b16 %v9296
        %v9307 = vunpack.c.l.b16 %v9297
        %v9308 = vunpack.c.l.b16 %v9298
        %v9309 = vunpack.c.l.b16 %v9299
        %v9310 = vpack.c.b16 %v9306, %v9305
        %v9311 = vpack.c.b16 %v9308, %v9307
        %v9312 = vpack.c.b16 %v9309, %v9309
        %v9314 = vsel %vm9168, %v9310, 0
        %v9317 = vsel %vm9168, %v9311, 0
        %v9320 = vsel %vm9168, %v9312, 0
        %9322 = vmatprep.subr.bf16.mxu0 %v9130
        %9323 = vmatpush1.bf16.msra.mxu0 %v9129
        %9324 = vmatprep.subr.bf16.mxu0 %v9133
        %9325 = vmatpush1.bf16.msra.mxu0 %v9132
        %9326 = vmatprep.subr.bf16.mxu0 %v9136
        %9327 = vmatpush1.bf16.msra.mxu0 %v9135
        %9328 = vmatprep.subr.bf16.mxu0 %v9139
        %9329 = vmatpush1.bf16.msra.mxu0 %v9138
        %9330 = vmatprep.subr.bf16.mxu0 %v9142
        %9331 = vmatpush1.bf16.msra.mxu0 %v9141
        %9332 = vmatprep.subr.bf16.mxu0 %v9145
        %9333 = vmatpush1.bf16.msra.mxu0 %v9144
        %9334 = vmatprep.subr.bf16.mxu0 %v9148
        %9335 = vmatpush1.bf16.msra.mxu0 %v9147
        %9336 = vmatprep.subr.bf16.mxu0 0
        %9337 = vmatpush1.bf16.msra.mxu0 0
        %9338 = vmatprep.subr.bf16.mxu0 0
        %9339 = vmatpush1.bf16.msra.mxu0 0
        %9340 = vmatprep.subr.bf16.mxu0 0
        %9341 = vmatpush1.bf16.msra.mxu0 0
        %9342 = vmatprep.subr.bf16.mxu0 0
        %9343 = vmatpush1.bf16.msra.mxu0 0
        %9344 = vmatprep.subr.bf16.mxu0 0
        %9345 = vmatpush1.bf16.msra.mxu0 0
        %9346 = vmatprep.subr.bf16.mxu0 0
        %9347 = vmatpush1.bf16.msra.mxu0 0
        %9348 = vmatprep.subr.bf16.mxu0 0
        %9349 = vmatpush1.bf16.msra.mxu0 0
        %9350 = vmatprep.subr.bf16.mxu0 0
        %9351 = vmatpush1.bf16.msra.mxu0 0
        %9352 = vmatprep.subr.bf16.mxu0 0
        %9353 = vmatpush1.bf16.msra.mxu0 0
        %9354 = vmatprep.mubr.bf16.mxu0 0
        %9355 = vmatmul.mubr.bf16.gmra.mrb[0].mxu0 %v9314
        %v9356 = vpop.f32.mrb[0].mxu0
        %v9357 = vadd.f32 0.0, %v9356
        %v9358 = vpop.f32.mrb[0].mxu0
        %v9359 = vadd.f32 0.0, %v9358
        %v9360 = vpop.f32.mrb[0].mxu0
        %v9361 = vadd.f32 0.0, %v9360
        %v9362 = vpop.f32.mrb[0].mxu0
        %v9363 = vadd.f32 0.0, %v9362
        %9364 = vmatprep.mubr.bf16.mxu0 0
        %9365 = vmatmul.mubr.bf16.gmra.mrb[0].mxu0 %v9317
        %v9366 = vpop.f32.mrb[0].mxu0
        %v9367 = vadd.f32 0.0, %v9366
        %v9368 = vpop.f32.mrb[0].mxu0
        %v9369 = vadd.f32 0.0, %v9368
        %v9370 = vpop.f32.mrb[0].mxu0
        %v9371 = vadd.f32 0.0, %v9370
        %v9372 = vpop.f32.mrb[0].mxu0
        %v9373 = vadd.f32 0.0, %v9372
        %9374 = vmatprep.mubr.bf16.mxu0 0
        %9375 = vmatmul.mubr.bf16.gmra.mrb[0].mxu0 %v9320
        %v9376 = vpop.f32.mrb[0].mxu0
        %v9377 = vadd.f32 0.0, %v9376
        %v9378 = vpop.f32.mrb[0].mxu0
        %v9379 = vadd.f32 0.0, %v9378
        %v9380 = vpop.f32.mrb[0].mxu0
        %v9381 = vpop.f32.mrb[0].mxu0
        %9382 = vdwg.mxu0
        %9383 = vmatprep.subr.bf16.mxu0 0
        %9384 = vmatpush1.bf16.msra.mxu0 %v9131
        %9385 = vmatprep.subr.bf16.mxu0 0
        %9386 = vmatpush1.bf16.msra.mxu0 %v9134
        %9387 = vmatprep.subr.bf16.mxu0 0
        %9388 = vmatpush1.bf16.msra.mxu0 %v9137
        %9389 = vmatprep.subr.bf16.mxu0 0
        %9390 = vmatpush1.bf16.msra.mxu0 %v9140
        %9391 = vmatprep.subr.bf16.mxu0 0
        %9392 = vmatpush1.bf16.msra.mxu0 %v9143
        %9393 = vmatprep.subr.bf16.mxu0 0
        %9394 = vmatpush1.bf16.msra.mxu0 %v9146
        %9395 = vmatprep.subr.bf16.mxu0 0
        %9396 = vmatpush1.bf16.msra.mxu0 %v9149
        %9397 = vmatprep.subr.bf16.mxu0 0
        %9398 = vmatpush1.bf16.msra.mxu0 0
        %9399 = vmatprep.subr.bf16.mxu0 0
        %9400 = vmatpush1.bf16.msra.mxu0 0
        %9401 = vmatprep.subr.bf16.mxu0 0
        %9402 = vmatpush1.bf16.msra.mxu0 0
        %9403 = vmatprep.subr.bf16.mxu0 0
        %9404 = vmatpush1.bf16.msra.mxu0 0
        %9405 = vmatprep.subr.bf16.mxu0 0
        %9406 = vmatpush1.bf16.msra.mxu0 0
        %9407 = vmatprep.subr.bf16.mxu0 0
        %9408 = vmatpush1.bf16.msra.mxu0 0
        %9409 = vmatprep.subr.bf16.mxu0 0
        %9410 = vmatpush1.bf16.msra.mxu0 0
        %9411 = vmatprep.subr.bf16.mxu0 0
        %9412 = vmatpush1.bf16.msra.mxu0 0
        %9413 = vmatprep.subr.bf16.mxu0 0
        %9414 = vmatpush1.bf16.msra.mxu0 0
        %9415 = vmatprep.mubr.bf16.mxu0 0
        %9416 = vmatmul.mubr.bf16.gmra.mrb[0].mxu0 %v9314
        %v9417 = vpop.f32.mrb[0].mxu0
        %v9418 = vadd.f32 0.0, %v9417
        %v9419 = vpop.f32.mrb[0].mxu0
        %v9420 = vpop.f32.mrb[0].mxu0
        %v9421 = vadd.f32 0.0, %v9420
        %v9422 = vpop.f32.mrb[0].mxu0
        %9423 = vmatprep.mubr.bf16.mxu0 0
        %9424 = vmatmul.mubr.bf16.gmra.mrb[0].mxu0 %v9317
        %v9425 = vpop.f32.mrb[0].mxu0
        %v9426 = vadd.f32 0.0, %v9425
        %v9427 = vpop.f32.mrb[0].mxu0
        %v9428 = vpop.f32.mrb[0].mxu0
        %v9429 = vadd.f32 0.0, %v9428
        %v9430 = vpop.f32.mrb[0].mxu0
        %9431 = vmatprep.mubr.bf16.mxu0 0
        %9432 = vmatmul.mubr.bf16.gmra.mrb[0].mxu0 %v9320
        %v9433 = vpop.f32.mrb[0].mxu0
        %v9434 = vadd.f32 0.0, %v9433
        %v9435 = vpop.f32.mrb[0].mxu0
        %v9436 = vpop.f32.mrb[0].mxu0
        %v9437 = vpop.f32.mrb[0].mxu0
        %9438 = vdwg.mxu0
        %v9439 = vmax.f32 %v9213, %v9357
        %v9440 = vmax.f32 %v9215, %v9359
        %v9441 = vmax.f32 %v9274, %v9418
        %v9442 = vmax.f32 %v9217, %v9361
        %v9443 = vmax.f32 %v9219, %v9363
        %v9444 = vmax.f32 %v9277, %v9421
        %v9445 = vmax.f32 %v9223, %v9367
        %v9446 = vmax.f32 %v9225, %v9369
        %v9447 = vmax.f32 %v9282, %v9426
        %v9448 = vmax.f32 %v9227, %v9371
        %v9449 = vmax.f32 %v9229, %v9373
        %v9450 = vmax.f32 %v9285, %v9429
        %v9451 = vmax.f32 %v9233, %v9377
        %v9452 = vmax.f32 %v9235, %v9379
        %v9453 = vmax.f32 %v9290, %v9434
        %9457 = vrot.lane.b32.xlu0 %v9442, 64
        %v9458 = vpop.permute.xlu0 %9457
        %9459 = vrot.lane.b32.xlu0 %v9443, 64
        %v9460 = vpop.permute.xlu0 %9459
        %9461 = vrot.lane.b32.xlu0 %v9444, 64
        %v9462 = vpop.permute.xlu0 %9461
        %vm9463 = vcmask 523264
        %v9464 = vsel %vm9463, %v9458, %v9460
        %v9465 = vsel %vm9463, %v9460, %v9462
        %9472 = vrot.lane.b32.xlu0 %v9448, 64
        %v9473 = vpop.permute.xlu0 %9472
        %9474 = vrot.lane.b32.xlu0 %v9449, 64
        %v9475 = vpop.permute.xlu0 %9474
        %9476 = vrot.lane.b32.xlu0 %v9450, 64
        %v9477 = vpop.permute.xlu0 %9476
        %v9478 = vsel %vm9463, %v9473, %v9475
        %v9479 = vsel %vm9463, %v9475, %v9477
        %v9483 = vsel %vm9463, %v9441, %v9458
        %v9484 = vsel %vm9463, %v9447, %v9473
        %v9485 = vld [vmem:[%s10] sm:$0x1]
        %v9486 = vld [vmem:[%s9] sm:$0xf]
        %v9487 = vld [vmem:[%s9 + $0x4] sm:$0xf]
        %v9488 = vld [vmem:[%s9 + $0x8] sm:$0xf]
        %v9489 = vld [vmem:[%s9 + $0xc] sm:$0xf]
        %v9490 = vld [vmem:[%s9 + $0x10] sm:$0xf]
        %v9491 = vld [vmem:[%s9 + $0x14] sm:$0xf]
        %v9492 = vld [vmem:[%s9 + $0x18] sm:$0xf]
        %v9493 = vld [vmem:[%s9 + $0x1c] sm:$0xf]
        %v9494 = vld [vmem:[%s9 + $0x20] sm:$0xf]
        %v9495 = vld [vmem:[%s9 + $0x24] sm:$0xf]
        %v9496 = vld [vmem:[%s9 + $0x28] sm:$0xf]
        %v9497 = vld [vmem:[%s9 + $0x2c] sm:$0xf]
        %v9498 = vld [vmem:[%s9 + $0x30] sm:$0xf]
        %v9499 = vld [vmem:[%s9 + $0x34] sm:$0xf]
        %v9500 = vld [vmem:[%s9 + $0x38] sm:$0xf]
        %v9501 = vld [vmem:[%s9 + $0x3c] sm:$0xf]
        %v9502 = vld [vmem:[%s9 + $0x40] sm:$0xf]
        %v9503 = vld [vmem:[%s9 + $0x44] sm:$0xf]
        %v9504 = vld [vmem:[%s9 + $0x48] sm:$0xf]
        %v9505 = vld [vmem:[%s9 + $0x4c] sm:$0xf]
        %v9506 = vld [vmem:[%s9 + $0x50] sm:$0xf]
        %v9507 = vld [vmem:[%s9 + $0x54] sm:$0xf]
        %v9508 = vld [vmem:[%s9 + $0x58] sm:$0xf]
        %v9509 = vld [vmem:[%s9 + $0x5c] sm:$0xf]
        %v9510 = vld [vmem:[%s9 + $0x60] sm:$0xf]
        %v9511 = vld [vmem:[%s9 + $0x64] sm:$0xf]
        %v9512 = vld [vmem:[%s9 + $0x68] sm:$0xf]
        %v9513 = vld [vmem:[%s9 + $0x6c] sm:$0xf]
        %v9514 = vld [vmem:[%s9 + $0x70] sm:$0xf]
        %v9515 = vld [vmem:[%s9 + $0x74] sm:$0xf]
        %v9516 = vld [vmem:[%s9 + $0x78] sm:$0xf]
        %v9517 = vld [vmem:[%s9 + $0x7c] sm:$0xf]
        %v9518 = vld [vmem:[%s9 + $0x80] sm:$0xf]
        %v9519 = vld [vmem:[%s9 + $0x84] sm:$0xf]
        %v9520 = vld [vmem:[%s9 + $0x88] sm:$0xf]
        %v9521 = vld [vmem:[%s9 + $0x8c] sm:$0xf]
        %v9522 = vld [vmem:[%s9 + $0x90] sm:$0xf]
        %v9523 = vld [vmem:[%s9 + $0x94] sm:$0xf]
        %v9524 = vld [vmem:[%s9 + $0x98] sm:$0xf]
        %v9525 = vld [vmem:[%s9 + $0x9c] sm:$0xf]
        %v9526 = vld [vmem:[%s9 + $0xa0] sm:$0xf]
        %v9527 = vld [vmem:[%s9 + $0xa4] sm:$0xf]
        %v9528 = vld [vmem:[%s9 + $0xa8] sm:$0xf]
        %v9529 = vld [vmem:[%s9 + $0xac] sm:$0xf]
        %v9530 = vld [vmem:[%s9 + $0xb0] sm:$0xf]
        %v9531 = vld [vmem:[%s9 + $0xb4] sm:$0xf]
        %v9532 = vld [vmem:[%s9 + $0xb8] sm:$0xf]
        %v9533 = vld [vmem:[%s9 + $0xbc] sm:$0xf]
        %v9534 = vld [vmem:[%s9 + $0xc0] sm:$0xf]
        %v9535 = vld [vmem:[%s9 + $0xc4] sm:$0xf]
        %v9536 = vld [vmem:[%s9 + $0xc8] sm:$0xf]
        %v9537 = vld [vmem:[%s9 + $0xcc] sm:$0xf]
        %v9538 = vld [vmem:[%s9 + $0xd0] sm:$0xf]
        %v9539 = vld [vmem:[%s9 + $0xd4] sm:$0xf]
        %v9540 = vld [vmem:[%s9 + $0xd8] sm:$0xf]
        %v9541 = vld [vmem:[%s9 + $0xdc] sm:$0xf]
        %v9542 = vld [vmem:[%s9 + $0xe0] sm:$0xf]
        %v9543 = vld [vmem:[%s9 + $0xe4] sm:$0xf]
        %v9544 = vld [vmem:[%s9 + $0xe8] sm:$0xf]
        %v9545 = vld [vmem:[%s9 + $0xec] sm:$0xf]
        %v9546 = vld [vmem:[%s9 + $0xf0] sm:$0xf]
        %v9547 = vld [vmem:[%s9 + $0xf4] sm:$0xf]
        %v9548 = vld [vmem:[%s9 + $0xf8] sm:$0xf]
        %v9549 = vld [vmem:[%s9 + $0xfc] sm:$0xf]
        %v9550 = vld [vmem:[%s9 + $0x100] sm:$0xf]
        %v9551 = vld [vmem:[%s9 + $0x104] sm:$0xf]
        %v9552 = vld [vmem:[%s9 + $0x108] sm:$0xf]
        %v9553 = vld [vmem:[%s9 + $0x10c] sm:$0xf]
        %v9554 = vld [vmem:[%s9 + $0x110] sm:$0xf]
        %v9555 = vld [vmem:[%s9 + $0x114] sm:$0xf]
        %v9556 = vld [vmem:[%s9 + $0x118] sm:$0xf]
        %v9557 = vld [vmem:[%s9 + $0x11c] sm:$0xf]
        %v9558 = vld [vmem:[%s9 + $0x120] sm:$0xf]
        %v9559 = vld [vmem:[%s9 + $0x124] sm:$0xf]
        %v9560 = vld [vmem:[%s9 + $0x128] sm:$0xf]
        %v9561 = vld [vmem:[%s9 + $0x12c] sm:$0xf]
        %v9562 = vld [vmem:[%s9 + $0x130] sm:$0xf]
        %v9563 = vld [vmem:[%s9 + $0x134] sm:$0xf]
        %v9564 = vld [vmem:[%s9 + $0x138] sm:$0xf]
        %v9565 = vld [vmem:[%s9 + $0x13c] sm:$0xf]
        %v9566 = vld [vmem:[%s9 + $0x140] sm:$0xf]
        %v9567 = vld [vmem:[%s9 + $0x144] sm:$0xf]
        %v9568 = vld [vmem:[%s9 + $0x148] sm:$0xf]
        %v9569 = vld [vmem:[%s9 + $0x14c] sm:$0xf]
        %v9570 = vld [vmem:[%s9 + $0x150] sm:$0xf]
        %v9571 = vld [vmem:[%s9 + $0x154] sm:$0xf]
        %v9572 = vld [vmem:[%s9 + $0x158] sm:$0xf]
        %v9573 = vld [vmem:[%s9 + $0x15c] sm:$0xf]
        %v9574 = vld [vmem:[%s9 + $0x160] sm:$0xf]
        %v9575 = vld [vmem:[%s9 + $0x164] sm:$0xf]
        %v9576 = vld [vmem:[%s9 + $0x168] sm:$0xf]
        %v9577 = vld [vmem:[%s9 + $0x16c] sm:$0xf]
        %v9578 = vld [vmem:[%s9 + $0x170] sm:$0xf]
        %v9579 = vld [vmem:[%s9 + $0x174] sm:$0xf]
        %v9580 = vld [vmem:[%s9 + $0x178] sm:$0xf]
        %v9581 = vld [vmem:[%s9 + $0x17c] sm:$0xf]
        %v9582 = vld [vmem:[%s9 + $0x180] sm:$0xf]
        %v9583 = vld [vmem:[%s9 + $0x184] sm:$0xf]
        %v9584 = vld [vmem:[%s9 + $0x188] sm:$0xf]
        %v9585 = vld [vmem:[%s9 + $0x18c] sm:$0xf]
        %v9586 = vld [vmem:[%s9 + $0x190] sm:$0xf]
        %v9587 = vld [vmem:[%s9 + $0x194] sm:$0xf]
        %v9588 = vld [vmem:[%s9 + $0x198] sm:$0xf]
        %v9589 = vld [vmem:[%s9 + $0x19c] sm:$0xf]
        %v9590 = vld [vmem:[%s9 + $0x1a0] sm:$0xf]
        %v9591 = vld [vmem:[%s9 + $0x1a4] sm:$0xf]
        %v9592 = vld [vmem:[%s9 + $0x1a8] sm:$0xf]
        %v9593 = vld [vmem:[%s9 + $0x1ac] sm:$0xf]
        %v9594 = vld [vmem:[%s9 + $0x1b0] sm:$0xf]
        %v9595 = vld [vmem:[%s9 + $0x1b4] sm:$0xf]
        %v9596 = vld [vmem:[%s9 + $0x1b8] sm:$0xf]
        %v9597 = vld [vmem:[%s9 + $0x1bc] sm:$0xf]
        %v9598 = vld [vmem:[%s9 + $0x1c0] sm:$0xf]
        %v9599 = vld [vmem:[%s9 + $0x1c4] sm:$0xf]
        %v9600 = vld [vmem:[%s9 + $0x1c8] sm:$0xf]
        %v9601 = vld [vmem:[%s9 + $0x1cc] sm:$0xf]
        %v9602 = vld [vmem:[%s9 + $0x1d0] sm:$0xf]
        %v9603 = vld [vmem:[%s9 + $0x1d4] sm:$0xf]
        %v9604 = vld [vmem:[%s9 + $0x1d8] sm:$0xf]
        %v9605 = vld [vmem:[%s9 + $0x1dc] sm:$0xf]
        %v9606 = vld [vmem:[%s9 + $0x1e0] sm:$0xf]
        %v9607 = vld [vmem:[%s9 + $0x1e4] sm:$0xf]
        %v9608 = vld [vmem:[%s9 + $0x1e8] sm:$0xf]
        %v9609 = vld [vmem:[%s9 + $0x1ec] sm:$0xf]
        %v9610 = vld [vmem:[%s9 + $0x1f0] sm:$0xf]
        %v9611 = vld [vmem:[%s9 + $0x1f4] sm:$0xf]
        %v9612 = vld [vmem:[%s9 + $0x1f8] sm:$0xf]
        %v9613 = vld [vmem:[%s9 + $0x1fc] sm:$0xf]
        %v9614 = vld [vmem:[%s9 + $0x200] sm:$0xf]
        %v9615 = vld [vmem:[%s9 + $0x204] sm:$0xf]
        %v9616 = vld [vmem:[%s9 + $0x208] sm:$0xf]
        %v9617 = vld [vmem:[%s9 + $0x20c] sm:$0xf]
        %v9618 = vld [vmem:[%s9 + $0x210] sm:$0xf]
        %v9619 = vld [vmem:[%s9 + $0x214] sm:$0xf]
        %v9620 = vld [vmem:[%s9 + $0x218] sm:$0xf]
        %v9621 = vld [vmem:[%s9 + $0x21c] sm:$0xf]
        %v9622 = vld [vmem:[%s9 + $0x220] sm:$0xf]
        %v9623 = vld [vmem:[%s9 + $0x224] sm:$0xf]
        %v9624 = vld [vmem:[%s9 + $0x228] sm:$0xf]
        %v9625 = vld [vmem:[%s9 + $0x22c] sm:$0xf]
        %v9626 = vld [vmem:[%s9 + $0x230] sm:$0xf]
        %v9627 = vld [vmem:[%s9 + $0x234] sm:$0xf]
        %v9628 = vld [vmem:[%s9 + $0x238] sm:$0xf]
        %v9629 = vld [vmem:[%s9 + $0x23c] sm:$0xf]
        %v9630 = vld [vmem:[%s9 + $0x240] sm:$0xf]
        %v9631 = vld [vmem:[%s9 + $0x244] sm:$0xf]
        %v9632 = vld [vmem:[%s9 + $0x248] sm:$0xf]
        %v9633 = vld [vmem:[%s9 + $0x24c] sm:$0xf]
        %v9634 = vld [vmem:[%s9 + $0x250] sm:$0xf]
        %v9635 = vld [vmem:[%s9 + $0x254] sm:$0xf]
        %v9636 = vld [vmem:[%s9 + $0x258] sm:$0xf]
        %v9637 = vld [vmem:[%s9 + $0x25c] sm:$0xf]
        %v9638 = vld [vmem:[%s9 + $0x260] sm:$0xf]
        %v9639 = vld [vmem:[%s9 + $0x264] sm:$0xf]
        %v9640 = vld [vmem:[%s9 + $0x268] sm:$0xf]
        %v9641 = vld [vmem:[%s9 + $0x26c] sm:$0xf]
        %v9642 = vld [vmem:[%s9 + $0x270] sm:$0xf]
        %v9643 = vld [vmem:[%s9 + $0x274] sm:$0xf]
        %v9644 = vld [vmem:[%s9 + $0x278] sm:$0xf]
        %v9645 = vld [vmem:[%s9 + $0x27c] sm:$0xf]
        %v9646 = vld [vmem:[%s9 + $0x280] sm:$0xf]
        %v9647 = vld [vmem:[%s9 + $0x284] sm:$0xf]
        %v9648 = vld [vmem:[%s9 + $0x288] sm:$0xf]
        %v9649 = vld [vmem:[%s9 + $0x28c] sm:$0xf]
        %v9650 = vld [vmem:[%s9 + $0x290] sm:$0xf]
        %v9651 = vld [vmem:[%s9 + $0x294] sm:$0xf]
        %v9652 = vld [vmem:[%s9 + $0x298] sm:$0xf]
        %v9653 = vld [vmem:[%s9 + $0x29c] sm:$0xf]
        %v9654 = vld [vmem:[%s9 + $0x2a0] sm:$0xf]
        %v9655 = vld [vmem:[%s9 + $0x2a4] sm:$0xf]
        %v9656 = vld [vmem:[%s9 + $0x2a8] sm:$0xf]
        %v9657 = vld [vmem:[%s9 + $0x2ac] sm:$0xf]
        %v9658 = vld [vmem:[%s9 + $0x2b0] sm:$0xf]
        %v9659 = vld [vmem:[%s9 + $0x2b4] sm:$0xf]
        %v9660 = vld [vmem:[%s9 + $0x2b8] sm:$0xf]
        %v9661 = vld [vmem:[%s9 + $0x2bc] sm:$0xf]
        %v9662 = vld [vmem:[%s9 + $0x2c0] sm:$0xf]
        %v9663 = vld [vmem:[%s9 + $0x2c4] sm:$0xf]
        %v9664 = vld [vmem:[%s9 + $0x2c8] sm:$0xf]
        %v9665 = vld [vmem:[%s9 + $0x2cc] sm:$0xf]
        %v9666 = vld [vmem:[%s9 + $0x2d0] sm:$0xf]
        %v9667 = vld [vmem:[%s9 + $0x2d4] sm:$0xf]
        %v9668 = vld [vmem:[%s9 + $0x2d8] sm:$0xf]
        %v9669 = vld [vmem:[%s9 + $0x2dc] sm:$0xf]
        %v9670 = vld [vmem:[%s9 + $0x2e0] sm:$0xf]
        %v9671 = vld [vmem:[%s9 + $0x2e4] sm:$0xf]
        %v9672 = vld [vmem:[%s9 + $0x2e8] sm:$0xf]
        %v9673 = vld [vmem:[%s9 + $0x2ec] sm:$0xf]
        %v9674 = vld [vmem:[%s9 + $0x2f0] sm:$0xf]
        %v9675 = vld [vmem:[%s9 + $0x2f4] sm:$0xf]
        %v9676 = vld [vmem:[%s9 + $0x2f8] sm:$0xf]
        %v9677 = vld [vmem:[%s9 + $0x2fc] sm:$0xf]
        %v9678 = vld [vmem:[%s9 + $0x300] sm:$0xf]
        %v9679 = vld [vmem:[%s9 + $0x304] sm:$0xf]
        %v9680 = vld [vmem:[%s9 + $0x308] sm:$0xf]
        %v9681 = vld [vmem:[%s9 + $0x30c] sm:$0xf]
        %v9682 = vld [vmem:[%s9 + $0x310] sm:$0xf]
        %v9683 = vld [vmem:[%s9 + $0x314] sm:$0xf]
        %v9684 = vld [vmem:[%s9 + $0x318] sm:$0xf]
        %v9685 = vld [vmem:[%s9 + $0x31c] sm:$0xf]
        %v9686 = vpack.c.bf16 %v9439, %v9439
        %v9687 = vpack.c.bf16 %v9440, %v9440
        %v9688 = vpack.c.bf16 %v9483, %v9483
        %v9689 = vpack.c.bf16 %v9464, %v9464
        %v9690 = vpack.c.bf16 %v9465, %v9465
        %v9691 = vpack.c.bf16 %v9445, %v9445
        %v9692 = vpack.c.bf16 %v9446, %v9446
        %v9693 = vpack.c.bf16 %v9484, %v9484
        %v9694 = vpack.c.bf16 %v9478, %v9478
        %v9695 = vpack.c.bf16 %v9479, %v9479
        %v9696 = vpack.c.bf16 %v9451, %v9451
        %v9697 = vpack.c.bf16 %v9452, %v9452
        %v9698 = vpack.c.bf16 %v9453, %v9453
        %v9899 = vunpack.c.l.b16 %v9486
        %v9900 = vunpack.c.l.b16 %v9487
        %v9901 = vunpack.c.l.b16 %v9488
        %v9902 = vunpack.c.l.b16 %v9489
        %v9903 = vunpack.c.l.b16 %v9490
        %v9904 = vunpack.c.l.b16 %v9491
        %v9905 = vunpack.c.l.b16 %v9492
        %v9906 = vunpack.c.l.b16 %v9493
        %v9907 = vunpack.c.l.b16 %v9494
        %v9908 = vunpack.c.l.b16 %v9495
        %v9909 = vunpack.c.l.b16 %v9496
        %v9910 = vunpack.c.l.b16 %v9497
        %v9911 = vunpack.c.l.b16 %v9498
        %v9912 = vunpack.c.l.b16 %v9499
        %v9913 = vunpack.c.l.b16 %v9500
        %v9914 = vunpack.c.l.b16 %v9501
        %v9915 = vunpack.c.l.b16 %v9502
        %v9916 = vunpack.c.l.b16 %v9503
        %v9917 = vunpack.c.l.b16 %v9504
        %v9918 = vunpack.c.l.b16 %v9505
        %v9919 = vunpack.c.l.b16 %v9506
        %v9920 = vunpack.c.l.b16 %v9507
        %v9921 = vunpack.c.l.b16 %v9508
        %v9922 = vunpack.c.l.b16 %v9509
        %v9923 = vunpack.c.l.b16 %v9510
        %v9924 = vunpack.c.l.b16 %v9511
        %v9925 = vunpack.c.l.b16 %v9512
        %v9926 = vunpack.c.l.b16 %v9513
        %v9927 = vunpack.c.l.b16 %v9514
        %v9928 = vunpack.c.l.b16 %v9515
        %v9929 = vunpack.c.l.b16 %v9516
        %v9930 = vunpack.c.l.b16 %v9517
        %v9931 = vunpack.c.l.b16 %v9518
        %v9932 = vunpack.c.l.b16 %v9519
        %v9933 = vunpack.c.l.b16 %v9520
        %v9934 = vunpack.c.l.b16 %v9521
        %v9935 = vunpack.c.l.b16 %v9522
        %v9936 = vunpack.c.l.b16 %v9523
        %v9937 = vunpack.c.l.b16 %v9524
        %v9938 = vunpack.c.l.b16 %v9525
        %v9939 = vunpack.c.l.b16 %v9526
        %v9940 = vunpack.c.l.b16 %v9527
        %v9941 = vunpack.c.l.b16 %v9528
        %v9942 = vunpack.c.l.b16 %v9529
        %v9943 = vunpack.c.l.b16 %v9530
        %v9944 = vunpack.c.l.b16 %v9531
        %v9945 = vunpack.c.l.b16 %v9532
        %v9946 = vunpack.c.l.b16 %v9533
        %v9947 = vunpack.c.l.b16 %v9534
        %v9948 = vunpack.c.l.b16 %v9535
        %v9949 = vunpack.c.l.b16 %v9536
        %v9950 = vunpack.c.l.b16 %v9537
        %v9951 = vunpack.c.l.b16 %v9538
        %v9952 = vunpack.c.l.b16 %v9539
        %v9953 = vunpack.c.l.b16 %v9540
        %v9954 = vunpack.c.l.b16 %v9541
        %v9955 = vunpack.c.l.b16 %v9542
        %v9956 = vunpack.c.l.b16 %v9543
        %v9957 = vunpack.c.l.b16 %v9544
        %v9958 = vunpack.c.l.b16 %v9545
        %v9959 = vunpack.c.l.b16 %v9546
        %v9960 = vunpack.c.l.b16 %v9547
        %v9961 = vunpack.c.l.b16 %v9548
        %v9962 = vunpack.c.l.b16 %v9549
        %v9963 = vunpack.c.l.b16 %v9550
        %v9964 = vunpack.c.l.b16 %v9551
        %v9965 = vunpack.c.l.b16 %v9552
        %v9966 = vunpack.c.l.b16 %v9553
        %v9967 = vunpack.c.l.b16 %v9554
        %v9968 = vunpack.c.l.b16 %v9555
        %v9969 = vunpack.c.l.b16 %v9556
        %v9970 = vunpack.c.l.b16 %v9557
        %v9971 = vunpack.c.l.b16 %v9558
        %v9972 = vunpack.c.l.b16 %v9559
        %v9973 = vunpack.c.l.b16 %v9560
        %v9974 = vunpack.c.l.b16 %v9561
        %v9975 = vunpack.c.l.b16 %v9562
        %v9976 = vunpack.c.l.b16 %v9563
        %v9977 = vunpack.c.l.b16 %v9564
        %v9978 = vunpack.c.l.b16 %v9565
        %v9979 = vunpack.c.l.b16 %v9566
        %v9980 = vunpack.c.l.b16 %v9567
        %v9981 = vunpack.c.l.b16 %v9568
        %v9982 = vunpack.c.l.b16 %v9569
        %v9983 = vunpack.c.l.b16 %v9570
        %v9984 = vunpack.c.l.b16 %v9571
        %v9985 = vunpack.c.l.b16 %v9572
        %v9986 = vunpack.c.l.b16 %v9573
        %v9987 = vunpack.c.l.b16 %v9574
        %v9988 = vunpack.c.l.b16 %v9575
        %v9989 = vunpack.c.l.b16 %v9576
        %v9990 = vunpack.c.l.b16 %v9577
        %v9991 = vunpack.c.l.b16 %v9578
        %v9992 = vunpack.c.l.b16 %v9579
        %v9993 = vunpack.c.l.b16 %v9580
        %v9994 = vunpack.c.l.b16 %v9581
        %v9995 = vunpack.c.l.b16 %v9582
        %v9996 = vunpack.c.l.b16 %v9583
        %v9997 = vunpack.c.l.b16 %v9584
        %v9998 = vunpack.c.l.b16 %v9585
        %v9999 = vunpack.c.l.b16 %v9586
        %v10000 = vunpack.c.l.b16 %v9587
        %v10001 = vunpack.c.l.b16 %v9588
        %v10002 = vunpack.c.l.b16 %v9589
        %v10003 = vunpack.c.l.b16 %v9590
        %v10004 = vunpack.c.l.b16 %v9591
        %v10005 = vunpack.c.l.b16 %v9592
        %v10006 = vunpack.c.l.b16 %v9593
        %v10007 = vunpack.c.l.b16 %v9594
        %v10008 = vunpack.c.l.b16 %v9595
        %v10009 = vunpack.c.l.b16 %v9596
        %v10010 = vunpack.c.l.b16 %v9597
        %v10011 = vunpack.c.l.b16 %v9598
        %v10012 = vunpack.c.l.b16 %v9599
        %v10013 = vunpack.c.l.b16 %v9600
        %v10014 = vunpack.c.l.b16 %v9601
        %v10015 = vunpack.c.l.b16 %v9602
        %v10016 = vunpack.c.l.b16 %v9603
        %v10017 = vunpack.c.l.b16 %v9604
        %v10018 = vunpack.c.l.b16 %v9605
        %v10019 = vunpack.c.l.b16 %v9606
        %v10020 = vunpack.c.l.b16 %v9607
        %v10021 = vunpack.c.l.b16 %v9608
        %v10022 = vunpack.c.l.b16 %v9609
        %v10023 = vunpack.c.l.b16 %v9610
        %v10024 = vunpack.c.l.b16 %v9611
        %v10025 = vunpack.c.l.b16 %v9612
        %v10026 = vunpack.c.l.b16 %v9613
        %v10027 = vunpack.c.l.b16 %v9614
        %v10028 = vunpack.c.l.b16 %v9615
        %v10029 = vunpack.c.l.b16 %v9616
        %v10030 = vunpack.c.l.b16 %v9617
        %v10031 = vunpack.c.l.b16 %v9618
        %v10032 = vunpack.c.l.b16 %v9619
        %v10033 = vunpack.c.l.b16 %v9620
        %v10034 = vunpack.c.l.b16 %v9621
        %v10035 = vunpack.c.l.b16 %v9622
        %v10036 = vunpack.c.l.b16 %v9623
        %v10037 = vunpack.c.l.b16 %v9624
        %v10038 = vunpack.c.l.b16 %v9625
        %v10039 = vunpack.c.l.b16 %v9626
        %v10040 = vunpack.c.l.b16 %v9627
        %v10041 = vunpack.c.l.b16 %v9628
        %v10042 = vunpack.c.l.b16 %v9629
        %v10043 = vunpack.c.l.b16 %v9630
        %v10044 = vunpack.c.l.b16 %v9631
        %v10045 = vunpack.c.l.b16 %v9632
        %v10046 = vunpack.c.l.b16 %v9633
        %v10047 = vunpack.c.l.b16 %v9634
        %v10048 = vunpack.c.l.b16 %v9635
        %v10049 = vunpack.c.l.b16 %v9636
        %v10050 = vunpack.c.l.b16 %v9637
        %v10051 = vunpack.c.l.b16 %v9638
        %v10052 = vunpack.c.l.b16 %v9639
        %v10053 = vunpack.c.l.b16 %v9640
        %v10054 = vunpack.c.l.b16 %v9641
        %v10055 = vunpack.c.l.b16 %v9642
        %v10056 = vunpack.c.l.b16 %v9643
        %v10057 = vunpack.c.l.b16 %v9644
        %v10058 = vunpack.c.l.b16 %v9645
        %v10059 = vunpack.c.l.b16 %v9646
        %v10060 = vunpack.c.l.b16 %v9647
        %v10061 = vunpack.c.l.b16 %v9648
        %v10062 = vunpack.c.l.b16 %v9649
        %v10063 = vunpack.c.l.b16 %v9650
        %v10064 = vunpack.c.l.b16 %v9651
        %v10065 = vunpack.c.l.b16 %v9652
        %v10066 = vunpack.c.l.b16 %v9653
        %v10067 = vunpack.c.l.b16 %v9654
        %v10068 = vunpack.c.l.b16 %v9655
        %v10069 = vunpack.c.l.b16 %v9656
        %v10070 = vunpack.c.l.b16 %v9657
        %v10071 = vunpack.c.l.b16 %v9658
        %v10072 = vunpack.c.l.b16 %v9659
        %v10073 = vunpack.c.l.b16 %v9660
        %v10074 = vunpack.c.l.b16 %v9661
        %v10075 = vunpack.c.l.b16 %v9662
        %v10076 = vunpack.c.l.b16 %v9663
        %v10077 = vunpack.c.l.b16 %v9664
        %v10078 = vunpack.c.l.b16 %v9665
        %v10079 = vunpack.c.l.b16 %v9666
        %v10080 = vunpack.c.l.b16 %v9667
        %v10081 = vunpack.c.l.b16 %v9668
        %v10082 = vunpack.c.l.b16 %v9669
        %v10083 = vunpack.c.l.b16 %v9670
        %v10084 = vunpack.c.l.b16 %v9671
        %v10085 = vunpack.c.l.b16 %v9672
        %v10086 = vunpack.c.l.b16 %v9673
        %v10087 = vunpack.c.l.b16 %v9674
        %v10088 = vunpack.c.l.b16 %v9675
        %v10089 = vunpack.c.l.b16 %v9676
        %v10090 = vunpack.c.l.b16 %v9677
        %v10091 = vunpack.c.l.b16 %v9678
        %v10092 = vunpack.c.l.b16 %v9679
        %v10093 = vunpack.c.l.b16 %v9680
        %v10094 = vunpack.c.l.b16 %v9681
        %v10095 = vunpack.c.l.b16 %v9682
        %v10096 = vunpack.c.l.b16 %v9683
        %v10097 = vunpack.c.l.b16 %v9684
        %v10098 = vunpack.c.l.b16 %v9685
        %v10099 = vpack.c.b16 %v9900, %v9899
        %v10100 = vpack.c.b16 %v9902, %v9901
        %v10101 = vpack.c.b16 %v9904, %v9903
        %v10102 = vpack.c.b16 %v9906, %v9905
        %v10103 = vpack.c.b16 %v9908, %v9907
        %v10104 = vpack.c.b16 %v9910, %v9909
        %v10105 = vpack.c.b16 %v9912, %v9911
        %v10106 = vpack.c.b16 %v9914, %v9913
        %v10107 = vpack.c.b16 %v9916, %v9915
        %v10108 = vpack.c.b16 %v9918, %v9917
        %v10109 = vpack.c.b16 %v9920, %v9919
        %v10110 = vpack.c.b16 %v9922, %v9921
        %v10111 = vpack.c.b16 %v9924, %v9923
        %v10112 = vpack.c.b16 %v9926, %v9925
        %v10113 = vpack.c.b16 %v9928, %v9927
        %v10114 = vpack.c.b16 %v9930, %v9929
        %v10115 = vpack.c.b16 %v9932, %v9931
        %v10116 = vpack.c.b16 %v9934, %v9933
        %v10117 = vpack.c.b16 %v9936, %v9935
        %v10118 = vpack.c.b16 %v9938, %v9937
        %v10119 = vpack.c.b16 %v9940, %v9939
        %v10120 = vpack.c.b16 %v9942, %v9941
        %v10121 = vpack.c.b16 %v9944, %v9943
        %v10122 = vpack.c.b16 %v9946, %v9945
        %v10123 = vpack.c.b16 %v9948, %v9947
        %v10124 = vpack.c.b16 %v9950, %v9949
        %v10125 = vpack.c.b16 %v9952, %v9951
        %v10126 = vpack.c.b16 %v9954, %v9953
        %v10127 = vpack.c.b16 %v9956, %v9955
        %v10128 = vpack.c.b16 %v9958, %v9957
        %v10129 = vpack.c.b16 %v9960, %v9959
        %v10130 = vpack.c.b16 %v9962, %v9961
        %v10131 = vpack.c.b16 %v9964, %v9963
        %v10132 = vpack.c.b16 %v9966, %v9965
        %v10133 = vpack.c.b16 %v9968, %v9967
        %v10134 = vpack.c.b16 %v9970, %v9969
        %v10135 = vpack.c.b16 %v9972, %v9971
        %v10136 = vpack.c.b16 %v9974, %v9973
        %v10137 = vpack.c.b16 %v9976, %v9975
        %v10138 = vpack.c.b16 %v9978, %v9977
        %v10139 = vpack.c.b16 %v9980, %v9979
        %v10140 = vpack.c.b16 %v9982, %v9981
        %v10141 = vpack.c.b16 %v9984, %v9983
        %v10142 = vpack.c.b16 %v9986, %v9985
        %v10143 = vpack.c.b16 %v9988, %v9987
        %v10144 = vpack.c.b16 %v9990, %v9989
        %v10145 = vpack.c.b16 %v9992, %v9991
        %v10146 = vpack.c.b16 %v9994, %v9993
        %v10147 = vpack.c.b16 %v9996, %v9995
        %v10148 = vpack.c.b16 %v9998, %v9997
        %v10149 = vpack.c.b16 %v10000, %v9999
        %v10150 = vpack.c.b16 %v10002, %v10001
        %v10151 = vpack.c.b16 %v10004, %v10003
        %v10152 = vpack.c.b16 %v10006, %v10005
        %v10153 = vpack.c.b16 %v10008, %v10007
        %v10154 = vpack.c.b16 %v10010, %v10009
        %v10155 = vpack.c.b16 %v10012, %v10011
        %v10156 = vpack.c.b16 %v10014, %v10013
        %v10157 = vpack.c.b16 %v10016, %v10015
        %v10158 = vpack.c.b16 %v10018, %v10017
        %v10159 = vpack.c.b16 %v10020, %v10019
        %v10160 = vpack.c.b16 %v10022, %v10021
        %v10161 = vpack.c.b16 %v10024, %v10023
        %v10162 = vpack.c.b16 %v10026, %v10025
        %v10163 = vpack.c.b16 %v10028, %v10027
        %v10164 = vpack.c.b16 %v10030, %v10029
        %v10165 = vpack.c.b16 %v10032, %v10031
        %v10166 = vpack.c.b16 %v10034, %v10033
        %v10167 = vpack.c.b16 %v10036, %v10035
        %v10168 = vpack.c.b16 %v10038, %v10037
        %v10169 = vpack.c.b16 %v10040, %v10039
        %v10170 = vpack.c.b16 %v10042, %v10041
        %v10171 = vpack.c.b16 %v10044, %v10043
        %v10172 = vpack.c.b16 %v10046, %v10045
        %v10173 = vpack.c.b16 %v10048, %v10047
        %v10174 = vpack.c.b16 %v10050, %v10049
        %v10175 = vpack.c.b16 %v10052, %v10051
        %v10176 = vpack.c.b16 %v10054, %v10053
        %v10177 = vpack.c.b16 %v10056, %v10055
        %v10178 = vpack.c.b16 %v10058, %v10057
        %v10179 = vpack.c.b16 %v10060, %v10059
        %v10180 = vpack.c.b16 %v10062, %v10061
        %v10181 = vpack.c.b16 %v10064, %v10063
        %v10182 = vpack.c.b16 %v10066, %v10065
        %v10183 = vpack.c.b16 %v10068, %v10067
        %v10184 = vpack.c.b16 %v10070, %v10069
        %v10185 = vpack.c.b16 %v10072, %v10071
        %v10186 = vpack.c.b16 %v10074, %v10073
        %v10187 = vpack.c.b16 %v10076, %v10075
        %v10188 = vpack.c.b16 %v10078, %v10077
        %v10189 = vpack.c.b16 %v10080, %v10079
        %v10190 = vpack.c.b16 %v10082, %v10081
        %v10191 = vpack.c.b16 %v10084, %v10083
        %v10192 = vpack.c.b16 %v10086, %v10085
        %v10193 = vpack.c.b16 %v10088, %v10087
        %v10194 = vpack.c.b16 %v10090, %v10089
        %v10195 = vpack.c.b16 %v10092, %v10091
        %v10196 = vpack.c.b16 %v10094, %v10093
        %v10197 = vpack.c.b16 %v10096, %v10095
        %v10198 = vpack.c.b16 %v10098, %v10097
        %v10300 = vsel %vm9463, %v9698, 0
        %10302 = vmatprep.subr.bf16.mxu0 0
        %10303 = vmatpush1.bf16.msra.mxu0 %v10099
        %10304 = vmatprep.subr.bf16.mxu0 0
        %10305 = vmatpush1.bf16.msra.mxu0 %v10100
        %10306 = vmatprep.subr.bf16.mxu0 0
        %10307 = vmatpush1.bf16.msra.mxu0 %v10101
        %10308 = vmatprep.subr.bf16.mxu0 0
        %10309 = vmatpush1.bf16.msra.mxu0 %v10102
        %10310 = vmatprep.subr.bf16.mxu0 0
        %10311 = vmatpush1.bf16.msra.mxu0 %v10103
        %10312 = vmatprep.subr.bf16.mxu0 0
        %10313 = vmatpush1.bf16.msra.mxu0 %v10104
        %10314 = vmatprep.subr.bf16.mxu0 0
        %10315 = vmatpush1.bf16.msra.mxu0 %v10105
        %10316 = vmatprep.subr.bf16.mxu0 0
        %10317 = vmatpush1.bf16.msra.mxu0 %v10106
        %10318 = vmatprep.subr.bf16.mxu0 0
        %10319 = vmatpush1.bf16.msra.mxu0 %v10107
        %10320 = vmatprep.subr.bf16.mxu0 0
        %10321 = vmatpush1.bf16.msra.mxu0 %v10108
        %10322 = vmatprep.subr.bf16.mxu0 0
        %10323 = vmatpush1.bf16.msra.mxu0 %v10109
        %10324 = vmatprep.subr.bf16.mxu0 0
        %10325 = vmatpush1.bf16.msra.mxu0 %v10110
        %10326 = vmatprep.subr.bf16.mxu0 0
        %10327 = vmatpush1.bf16.msra.mxu0 %v10111
        %10328 = vmatprep.subr.bf16.mxu0 0
        %10329 = vmatpush1.bf16.msra.mxu0 %v10112
        %10330 = vmatprep.subr.bf16.mxu0 0
        %10331 = vmatpush1.bf16.msra.mxu0 %v10113
        %10332 = vmatprep.subr.bf16.mxu0 0
        %10333 = vmatpush1.bf16.msra.mxu0 %v10114
        %10334 = vmatprep.mubr.bf16.mxu0 %v9687
        %10335 = vmatmul.mubr.bf16.gmra.mrb[0].mxu0 %v9686
        %v10336 = vpop.f32.mrb[0].mxu0
        %v10337 = vadd.f32 0.0, %v10336
        %v10338 = vpop.f32.mrb[0].mxu0
        %v10339 = vpop.f32.mrb[0].mxu0
        %v10340 = vpop.f32.mrb[0].mxu0
        %10341 = vdwg.mxu0
        %10342 = vmatprep.subr.bf16.mxu0 0
        %10343 = vmatpush1.bf16.msra.mxu0 %v10115
        %10344 = vmatprep.subr.bf16.mxu0 0
        %10345 = vmatpush1.bf16.msra.mxu0 %v10116
        %10346 = vmatprep.subr.bf16.mxu0 0
        %10347 = vmatpush1.bf16.msra.mxu0 %v10117
        %10348 = vmatprep.subr.bf16.mxu0 0
        %10349 = vmatpush1.bf16.msra.mxu0 %v10118
        %10350 = vmatprep.subr.bf16.mxu0 0
        %10351 = vmatpush1.bf16.msra.mxu0 %v10119
        %10352 = vmatprep.subr.bf16.mxu0 0
        %10353 = vmatpush1.bf16.msra.mxu0 %v10120
        %10354 = vmatprep.subr.bf16.mxu0 0
        %10355 = vmatpush1.bf16.msra.mxu0 %v10121
        %10356 = vmatprep.subr.bf16.mxu0 0
        %10357 = vmatpush1.bf16.msra.mxu0 %v10122
        %10358 = vmatprep.subr.bf16.mxu0 0
        %10359 = vmatpush1.bf16.msra.mxu0 %v10123
        %10360 = vmatprep.subr.bf16.mxu0 0
        %10361 = vmatpush1.bf16.msra.mxu0 %v10124
        %10362 = vmatprep.subr.bf16.mxu0 0
        %10363 = vmatpush1.bf16.msra.mxu0 %v10125
        %10364 = vmatprep.subr.bf16.mxu0 0
        %10365 = vmatpush1.bf16.msra.mxu0 %v10126
        %10366 = vmatprep.subr.bf16.mxu0 0
        %10367 = vmatpush1.bf16.msra.mxu0 %v10127
        %10368 = vmatprep.subr.bf16.mxu0 0
        %10369 = vmatpush1.bf16.msra.mxu0 %v10128
        %10370 = vmatprep.subr.bf16.mxu0 0
        %10371 = vmatpush1.bf16.msra.mxu0 %v10129
        %10372 = vmatprep.subr.bf16.mxu0 0
        %10373 = vmatpush1.bf16.msra.mxu0 %v10130
        %10374 = vmatprep.mubr.bf16.mxu0 %v9689
        %10375 = vmatmul.mubr.bf16.gmra.mrb[0].mxu0 %v9688
        %v10376 = vpop.f32.mrb[0].mxu0
        %v10377 = vadd.f32 %v10337, %v10376
        %v10378 = vpop.f32.mrb[0].mxu0
        %v10379 = vpop.f32.mrb[0].mxu0
        %v10380 = vpop.f32.mrb[0].mxu0
        %10381 = vdwg.mxu0
        %10382 = vmatprep.subr.bf16.mxu0 0
        %10383 = vmatpush1.bf16.msra.mxu0 %v10131
        %10384 = vmatprep.subr.bf16.mxu0 0
        %10385 = vmatpush1.bf16.msra.mxu0 %v10132
        %10386 = vmatprep.subr.bf16.mxu0 0
        %10387 = vmatpush1.bf16.msra.mxu0 %v10133
        %10388 = vmatprep.subr.bf16.mxu0 0
        %10389 = vmatpush1.bf16.msra.mxu0 %v10134
        %10390 = vmatprep.subr.bf16.mxu0 0
        %10391 = vmatpush1.bf16.msra.mxu0 %v10135
        %10392 = vmatprep.subr.bf16.mxu0 0
        %10393 = vmatpush1.bf16.msra.mxu0 %v10136
        %10394 = vmatprep.subr.bf16.mxu0 0
        %10395 = vmatpush1.bf16.msra.mxu0 %v10137
        %10396 = vmatprep.subr.bf16.mxu0 0
        %10397 = vmatpush1.bf16.msra.mxu0 %v10138
        %10398 = vmatprep.subr.bf16.mxu0 0
        %10399 = vmatpush1.bf16.msra.mxu0 %v10139
        %10400 = vmatprep.subr.bf16.mxu0 0
        %10401 = vmatpush1.bf16.msra.mxu0 %v10140
        %10402 = vmatprep.subr.bf16.mxu0 0
        %10403 = vmatpush1.bf16.msra.mxu0 %v10141
        %10404 = vmatprep.subr.bf16.mxu0 0
        %10405 = vmatpush1.bf16.msra.mxu0 %v10142
        %10406 = vmatprep.subr.bf16.mxu0 0
        %10407 = vmatpush1.bf16.msra.mxu0 %v10143
        %10408 = vmatprep.subr.bf16.mxu0 0
        %10409 = vmatpush1.bf16.msra.mxu0 %v10144
        %10410 = vmatprep.subr.bf16.mxu0 0
        %10411 = vmatpush1.bf16.msra.mxu0 %v10145
        %10412 = vmatprep.subr.bf16.mxu0 0
        %10413 = vmatpush1.bf16.msra.mxu0 %v10146
        %10414 = vmatprep.mubr.bf16.mxu0 %v9691
        %10415 = vmatmul.mubr.bf16.gmra.mrb[0].mxu0 %v9690
        %v10416 = vpop.f32.mrb[0].mxu0
        %v10417 = vadd.f32 %v10377, %v10416
        %v10418 = vpop.f32.mrb[0].mxu0
        %v10419 = vpop.f32.mrb[0].mxu0
        %v10420 = vpop.f32.mrb[0].mxu0
        %10421 = vdwg.mxu0
        %10422 = vmatprep.subr.bf16.mxu0 0
        %10423 = vmatpush1.bf16.msra.mxu0 %v10147
        %10424 = vmatprep.subr.bf16.mxu0 0
        %10425 = vmatpush1.bf16.msra.mxu0 %v10148
        %10426 = vmatprep.subr.bf16.mxu0 0
        %10427 = vmatpush1.bf16.msra.mxu0 %v10149
        %10428 = vmatprep.subr.bf16.mxu0 0
        %10429 = vmatpush1.bf16.msra.mxu0 %v10150
        %10430 = vmatprep.subr.bf16.mxu0 0
        %10431 = vmatpush1.bf16.msra.mxu0 %v10151
        %10432 = vmatprep.subr.bf16.mxu0 0
        %10433 = vmatpush1.bf16.msra.mxu0 %v10152
        %10434 = vmatprep.subr.bf16.mxu0 0
        %10435 = vmatpush1.bf16.msra.mxu0 %v10153
        %10436 = vmatprep.subr.bf16.mxu0 0
        %10437 = vmatpush1.bf16.msra.mxu0 %v10154
        %10438 = vmatprep.subr.bf16.mxu0 0
        %10439 = vmatpush1.bf16.msra.mxu0 %v10155
        %10440 = vmatprep.subr.bf16.mxu0 0
        %10441 = vmatpush1.bf16.msra.mxu0 %v10156
        %10442 = vmatprep.subr.bf16.mxu0 0
        %10443 = vmatpush1.bf16.msra.mxu0 %v10157
        %10444 = vmatprep.subr.bf16.mxu0 0
        %10445 = vmatpush1.bf16.msra.mxu0 %v10158
        %10446 = vmatprep.subr.bf16.mxu0 0
        %10447 = vmatpush1.bf16.msra.mxu0 %v10159
        %10448 = vmatprep.subr.bf16.mxu0 0
        %10449 = vmatpush1.bf16.msra.mxu0 %v10160
        %10450 = vmatprep.subr.bf16.mxu0 0
        %10451 = vmatpush1.bf16.msra.mxu0 %v10161
        %10452 = vmatprep.subr.bf16.mxu0 0
        %10453 = vmatpush1.bf16.msra.mxu0 %v10162
        %10454 = vmatprep.mubr.bf16.mxu0 %v9693
        %10455 = vmatmul.mubr.bf16.gmra.mrb[0].mxu0 %v9692
        %v10456 = vpop.f32.mrb[0].mxu0
        %v10457 = vadd.f32 %v10417, %v10456
        %v10458 = vpop.f32.mrb[0].mxu0
        %v10459 = vpop.f32.mrb[0].mxu0
        %v10460 = vpop.f32.mrb[0].mxu0
        %10461 = vdwg.mxu0
        %10462 = vmatprep.subr.bf16.mxu0 0
        %10463 = vmatpush1.bf16.msra.mxu0 %v10163
        %10464 = vmatprep.subr.bf16.mxu0 0
        %10465 = vmatpush1.bf16.msra.mxu0 %v10164
        %10466 = vmatprep.subr.bf16.mxu0 0
        %10467 = vmatpush1.bf16.msra.mxu0 %v10165
        %10468 = vmatprep.subr.bf16.mxu0 0
        %10469 = vmatpush1.bf16.msra.mxu0 %v10166
        %10470 = vmatprep.subr.bf16.mxu0 0
        %10471 = vmatpush1.bf16.msra.mxu0 %v10167
        %10472 = vmatprep.subr.bf16.mxu0 0
        %10473 = vmatpush1.bf16.msra.mxu0 %v10168
        %10474 = vmatprep.subr.bf16.mxu0 0
        %10475 = vmatpush1.bf16.msra.mxu0 %v10169
        %10476 = vmatprep.subr.bf16.mxu0 0
        %10477 = vmatpush1.bf16.msra.mxu0 %v10170
        %10478 = vmatprep.subr.bf16.mxu0 0
        %10479 = vmatpush1.bf16.msra.mxu0 %v10171
        %10480 = vmatprep.subr.bf16.mxu0 0
        %10481 = vmatpush1.bf16.msra.mxu0 %v10172
        %10482 = vmatprep.subr.bf16.mxu0 0
        %10483 = vmatpush1.bf16.msra.mxu0 %v10173
        %10484 = vmatprep.subr.bf16.mxu0 0
        %10485 = vmatpush1.bf16.msra.mxu0 %v10174
        %10486 = vmatprep.subr.bf16.mxu0 0
        %10487 = vmatpush1.bf16.msra.mxu0 %v10175
        %10488 = vmatprep.subr.bf16.mxu0 0
        %10489 = vmatpush1.bf16.msra.mxu0 %v10176
        %10490 = vmatprep.subr.bf16.mxu0 0
        %10491 = vmatpush1.bf16.msra.mxu0 %v10177
        %10492 = vmatprep.subr.bf16.mxu0 0
        %10493 = vmatpush1.bf16.msra.mxu0 %v10178
        %10494 = vmatprep.mubr.bf16.mxu0 %v9695
        %10495 = vmatmul.mubr.bf16.gmra.mrb[0].mxu0 %v9694
        %v10496 = vpop.f32.mrb[0].mxu0
        %v10497 = vadd.f32 %v10457, %v10496
        %v10498 = vpop.f32.mrb[0].mxu0
        %v10499 = vpop.f32.mrb[0].mxu0
        %v10500 = vpop.f32.mrb[0].mxu0
        %10501 = vdwg.mxu0
        %10502 = vmatprep.subr.bf16.mxu0 0
        %10503 = vmatpush1.bf16.msra.mxu0 %v10179
        %10504 = vmatprep.subr.bf16.mxu0 0
        %10505 = vmatpush1.bf16.msra.mxu0 %v10180
        %10506 = vmatprep.subr.bf16.mxu0 0
        %10507 = vmatpush1.bf16.msra.mxu0 %v10181
        %10508 = vmatprep.subr.bf16.mxu0 0
        %10509 = vmatpush1.bf16.msra.mxu0 %v10182
        %10510 = vmatprep.subr.bf16.mxu0 0
        %10511 = vmatpush1.bf16.msra.mxu0 %v10183
        %10512 = vmatprep.subr.bf16.mxu0 0
        %10513 = vmatpush1.bf16.msra.mxu0 %v10184
        %10514 = vmatprep.subr.bf16.mxu0 0
        %10515 = vmatpush1.bf16.msra.mxu0 %v10185
        %10516 = vmatprep.subr.bf16.mxu0 0
        %10517 = vmatpush1.bf16.msra.mxu0 %v10186
        %10518 = vmatprep.subr.bf16.mxu0 0
        %10519 = vmatpush1.bf16.msra.mxu0 %v10187
        %10520 = vmatprep.subr.bf16.mxu0 0
        %10521 = vmatpush1.bf16.msra.mxu0 %v10188
        %10522 = vmatprep.subr.bf16.mxu0 0
        %10523 = vmatpush1.bf16.msra.mxu0 %v10189
        %10524 = vmatprep.subr.bf16.mxu0 0
        %10525 = vmatpush1.bf16.msra.mxu0 %v10190
        %10526 = vmatprep.subr.bf16.mxu0 0
        %10527 = vmatpush1.bf16.msra.mxu0 %v10191
        %10528 = vmatprep.subr.bf16.mxu0 0
        %10529 = vmatpush1.bf16.msra.mxu0 %v10192
        %10530 = vmatprep.subr.bf16.mxu0 0
        %10531 = vmatpush1.bf16.msra.mxu0 %v10193
        %10532 = vmatprep.subr.bf16.mxu0 0
        %10533 = vmatpush1.bf16.msra.mxu0 %v10194
        %10534 = vmatprep.mubr.bf16.mxu0 %v9697
        %10535 = vmatmul.mubr.bf16.gmra.mrb[0].mxu0 %v9696
        %v10536 = vpop.f32.mrb[0].mxu0
        %v10537 = vadd.f32 %v10497, %v10536
        %v10538 = vpop.f32.mrb[0].mxu0
        %v10539 = vpop.f32.mrb[0].mxu0
        %v10540 = vpop.f32.mrb[0].mxu0
        %10541 = vdwg.mxu0
        %10542 = vmatprep.subr.bf16.mxu0 0
        %10543 = vmatpush1.bf16.msra.mxu0 %v10195
        %10544 = vmatprep.subr.bf16.mxu0 0
        %10545 = vmatpush1.bf16.msra.mxu0 %v10196
        %10546 = vmatprep.subr.bf16.mxu0 0
        %10547 = vmatpush1.bf16.msra.mxu0 %v10197
        %10548 = vmatprep.subr.bf16.mxu0 0
        %10549 = vmatpush1.bf16.msra.mxu0 %v10198
        %10550 = vmatprep.subr.bf16.mxu0 0
        %10551 = vmatpush1.bf16.msra.mxu0 0
        %10552 = vmatprep.subr.bf16.mxu0 0
        %10553 = vmatpush1.bf16.msra.mxu0 0
        %10554 = vmatprep.subr.bf16.mxu0 0
        %10555 = vmatpush1.bf16.msra.mxu0 0
        %10556 = vmatprep.subr.bf16.mxu0 0
        %10557 = vmatpush1.bf16.msra.mxu0 0
        %10558 = vmatprep.subr.bf16.mxu0 0
        %10559 = vmatpush1.bf16.msra.mxu0 0
        %10560 = vmatprep.subr.bf16.mxu0 0
        %10561 = vmatpush1.bf16.msra.mxu0 0
        %10562 = vmatprep.subr.bf16.mxu0 0
        %10563 = vmatpush1.bf16.msra.mxu0 0
        %10564 = vmatprep.subr.bf16.mxu0 0
        %10565 = vmatpush1.bf16.msra.mxu0 0
        %10566 = vmatprep.subr.bf16.mxu0 0
        %10567 = vmatpush1.bf16.msra.mxu0 0
        %10568 = vmatprep.subr.bf16.mxu0 0
        %10569 = vmatpush1.bf16.msra.mxu0 0
        %10570 = vmatprep.subr.bf16.mxu0 0
        %10571 = vmatpush1.bf16.msra.mxu0 0
        %10572 = vmatprep.subr.bf16.mxu0 0
        %10573 = vmatpush1.bf16.msra.mxu0 0
        %10574 = vmatprep.mubr.bf16.mxu0 0
        %10575 = vmatmul.mubr.bf16.gmra.mrb[0].mxu0 %v10300
        %v10576 = vpop.f32.mrb[0].mxu0
        %v10577 = vadd.f32 %v10537, %v10576
        %v10578 = vpop.f32.mrb[0].mxu0
        %v10579 = vpop.f32.mrb[0].mxu0
        %v10580 = vpop.f32.mrb[0].mxu0
        %10581 = vdwg.mxu0
        %v10583 = vlaneseq
        %v10584 = vshrl.u32 %v10583, 7
        %v10585 = vsub.s32 0, %v10584
        %v10586 = vrot.slane %v9485, %v10585
        %v10588 = vadd.f32 %v10586, %v10577
        %10589 = vst [vmem:[%s382] sm:$0xff] %v10588
        %s10590 = sand.u32 %s269, 1
        %s10591 = scalar_lea.sflag [#allocation5], %s10590
        %s10592 = sand.u32 %s269, 1
        %s10593 = smul.addr %s10592, 8
        %s10594 = scalar_lea.vmem [#allocation4], %s10593
        // Predicated region
        $region65: #{cnn_fmnist_forward.1} parent=63 // pred_check
          %p10595 = pneg %p279
        $region66: #{cnn_fmnist_forward.1} parent=63 // pred_check_branch
          %10597 = sbr.rel (%p10595) target = $region68
        $region67: #{cnn_fmnist_forward.1} parent=63 // pred_region
          %s10599 = ssub.s32 128, 128
          %10600 = vsyncadd %s10591, %s10599
          %s10601 = smul.addr %s25, 128
          %s10602 = scalar_lea.hbm %s11, %s10601
          %s10604 = sshll.u32 %s10594, 4
          %s10605 = int_to_ptr.vmem [resolvable:$true] %s10604
          %10607 = dma.vmem_to_hbm [thread:$0]  %s10605, 128, %s10602, %s10591
        $region68: #{cnn_fmnist_forward.1} parent=63 // pred_fallthru
          _
      $region64: #{cnn_fmnist_forward.1} parent=5 // pred_fallthru
        _
      %p10608 = scmp.le.s32.totalorder 2, %s20
      // Predicated region
      $region69: #{cnn_fmnist_forward.1} parent=5 // pred_check
        %p10609 = pneg %p10608
      $region70: #{cnn_fmnist_forward.1} parent=5 // pred_check_branch
        %10611 = sbr.rel (%p10609) target = $region72
      $region71: #{cnn_fmnist_forward.1} parent=5 // pred_region
        %s10612 = ssub.s32 %s20, 2
        // Predicated region
        $region73: #{cnn_fmnist_forward.1} parent=71 // pred_check
          %p10613 = pneg %p285
        $region74: #{cnn_fmnist_forward.1} parent=71 // pred_check_branch
          %10615 = sbr.rel (%p10613) target = $region76
        $region75: #{cnn_fmnist_forward.1} parent=71 // pred_region
          %s10616 = sand.u32 %s270, 1
          %s10617 = scalar_lea.sflag [#allocation5], %s10616
          %s10618 = sand.u32 %s270, 1
          %s10619 = smul.addr %s10618, 8
          %s10620 = scalar_lea.vmem [#allocation4], %s10619
          %10621 = dma.done %s10617, 128
        $region76: #{cnn_fmnist_forward.1} parent=71 // pred_fallthru
          _
      $region72: #{cnn_fmnist_forward.1} parent=5 // pred_fallthru
        _
    $region6: #{cnn_fmnist_forward.1} parent=1 // loop_footer
      %s24 = sadd.s32 1, %s20
    $region7: #{cnn_fmnist_forward.1} parent=1 // loop_footer_branch
      %19 = sbr.rel target = $region3
    $region8: #{cnn_fmnist_forward.1} parent=1 // loop_exit
      _
    %10622 = vsyncpa [#allocation5], 1
    %s10623 = scalar_lea.sflag [#allocation5], 1
    %10624 = vsyncpa %s10623, 1

</llo_original>
